<compile_context>
chip_gen: v7x
topology: tpu7x:2x2x1
jax: 0.10.0
libtpu: 0.0.40
codegen_flags: <defaults>
</compile_context>

<pallas_src>
import jax
import jax.numpy as jnp
from jax.experimental import pallas as pl
from jax.experimental.pallas import tpu as pltpu


D_IN = 768
D_OUT = 256
LAYER_DIMS = [(768, 768), (768, 768), (768, 768), (768, 768), (768, 512), (512, 256)]


# ------------------------------ kernel ------------------------------------


def double_dense_kernel(x_ref,
                        w1, b1, w2, b2, w3, b3, w4, b4, w5, b5, w6, b6,
                        o_ref):
    """One batch tile of the fused 6-layer forward.

    Per layer PyTorch computes  h = round(sigmoid(elu(h*2-1 @ W^T + b))).
    elu preserves sign, sigmoid(y) > 0.5 iff y > 0, and sigmoid(0)=0.5 rounds
    to 0, so each layer is exactly the hard threshold h = (z > 0).  The next
    layer's h*2-1 maps {0,1} -> {-1,+1}, so hidden layers emit +/-1 directly
    in the MXU dtype: the whole elementwise chain is one select per layer.
    """
    wd = w1.dtype  # all weights share one dtype (f32 or bf16)

    def hidden_layer(lhs, w_ref, b_ref):
        z = jnp.dot(lhs, w_ref[...], preferred_element_type=jnp.float32)
        z = z + b_ref[...]                       # (1, out) broadcast over rows
        one = jnp.asarray(1.0, wd)
        return jnp.where(z > 0, one, -one)       # next layer's LHS, MXU dtype

    lhs = (x_ref[...] * 2.0 - 1.0).astype(wd)    # layer-1 LHS (continuous)
    lhs = hidden_layer(lhs, w1, b1)
    lhs = hidden_layer(lhs, w2, b2)
    lhs = hidden_layer(lhs, w3, b3)
    lhs = hidden_layer(lhs, w4, b4)
    lhs = hidden_layer(lhs, w5, b5)

    z = jnp.dot(lhs, w6[...], preferred_element_type=jnp.float32) + b6[...]
    one = jnp.asarray(1.0, o_ref.dtype)
    o_ref[...] = jnp.where(z > 0, one, jnp.zeros_like(one))   # exact 0/1


# ------------------------------ wrapper ------------------------------------


def _round_up(n, m):
    return (n + m - 1) // m * m


def double_dense(x, params, *, block_b=256, weight_dtype=jnp.bfloat16,
                 out_dtype=jnp.float32):
    """Fused DoubleDense forward.

    x            : (B, 768) float32.
    params       : list of 6 (w, b); w is (in, out) [pre-transposed vs torch],
                   b is (out,) or (1, out), float32.
    block_b      : batch-tile rows per grid step (256 feeds the 256-wide MXU
                   on v6e/v7x and amortizes per-step overhead; 128 on v5e is
                   also fine).
    weight_dtype : jnp.bfloat16 (default, native MXU, half the weight DMA) or
                   jnp.float32 (bit-for-bit parity path).
    out_dtype    : output dtype; values are exactly 0/1 so bf16 is lossless.
    """
    B, d = x.shape
    assert d == D_IN, x.shape

    prepped = []
    for (w, b) in params:
        prepped.append((jnp.asarray(w, weight_dtype),
                        jnp.asarray(b, jnp.float32).reshape(1, -1)))

    tb = min(block_b, _round_up(B, 8))
    bp = _round_up(B, tb)
    if bp != B:
        x = jnp.pad(x, ((0, bp - B), (0, 0)))   # padded rows computed, dropped

    args = [x]
    for w, b in prepped:
        args += [w, b]

    n_steps = bp // tb

    # Weights/biases: whole-array operands, resident in VMEM across the grid.
    resident = pl.BlockSpec(memory_space=pltpu.MemorySpace.VMEM)
    in_specs = ([pl.BlockSpec((tb, D_IN), lambda i: (i, 0))]
                + [resident] * (2 * len(prepped)))
    out_specs = pl.BlockSpec((tb, D_OUT), lambda i: (i, 0))

    weight_bytes = sum(int(w.size) * w.dtype.itemsize + int(b.size) * 4
                       for w, b in prepped)
    flops = 2 * bp * sum(di * do for di, do in LAYER_DIMS)
    bytes_accessed = (int(x.size) * x.dtype.itemsize
                      + bp * D_OUT * jnp.dtype(out_dtype).itemsize
                      + weight_bytes)

    # On v7x "parallel" shards the grid across 2 TensorCores and each core then
    # DMAs its own copy of the resident weights; only worth it with enough
    # batch tiles to amortize that duplicated (bottleneck) weight traffic.
    dim_sem = ("parallel",) if n_steps >= 4 else ("arbitrary",)

    # bf16 weights: ~5.8 MiB resident -> 32 MiB is comfortable everywhere.
    # f32 weights: ~11.5 MiB (23 MiB if double-buffered) -> 48 MiB, still
    # within v7x's 64 MiB physical VMEM per core.
    vmem_limit = (48 << 20) if jnp.dtype(weight_dtype) == jnp.dtype(jnp.float32) \
        else (32 << 20)

    out = pl.pallas_call(
        double_dense_kernel,
        out_shape=jax.ShapeDtypeStruct((bp, D_OUT), out_dtype),
        grid=(n_steps,),
        in_specs=in_specs,
        out_specs=out_specs,
        compiler_params=pltpu.CompilerParams(
            dimension_semantics=dim_sem,
            vmem_limit_bytes=vmem_limit,
        ),
        cost_estimate=pl.CostEstimate(
            flops=flops, transcendentals=0, bytes_accessed=bytes_accessed),
    )(*args)
    return out[:B]


# --------------------------- params / reference -----------------------------


def init_params(key):
    """Deterministic synthetic init (shapes from the PyTorch module __init__)."""
    params = []
    for (d_in, d_out) in LAYER_DIMS:
        key, kw, kb = jax.random.split(key, 3)
        # (in, out): pre-transposed relative to torch's (out, in)
        w = (jax.random.uniform(kw, (d_in, d_out), jnp.float32, -1.0, 1.0)
             / jnp.sqrt(jnp.float32(d_in)))
        b = (jax.random.uniform(kb, (1, d_out), jnp.float32, -1.0, 1.0)
             / jnp.sqrt(jnp.float32(d_in)))
        params.append((w, b))
    return params


def _elu(x):
    return jnp.where(x > 0, x, jnp.expm1(x))


def _sigmoid(x):
    return 1.0 / (1.0 + jnp.exp(-x))


def reference(x, params):
    """Faithful pure-JAX version of the PyTorch forward (f32 elu/sigmoid/round)."""
    h = x
    for (w, b) in params:
        h = h * 2.0 - 1.0
        z = _elu(h @ w + b)
        h = jnp.round(_sigmoid(z))
    return h


# ------------------------------ main ---------------------------------------


if __name__ == "__main__":
    key = jax.random.PRNGKey(0)
    key, kx = jax.random.split(key)

    B = 8
    x = jax.random.normal(kx, (B, D_IN), jnp.float32)
    params = init_params(key)

    # f32-weight path: parity with the PyTorch forward semantics.
    out = jax.block_until_ready(
        double_dense(x, params, block_b=128, weight_dtype=jnp.float32))
    ref = reference(x, params)
    assert out.shape == (B, D_OUT), out.shape
    assert bool(jnp.all((out == 0.0) | (out == 1.0)))
    # The z>0 collapse of round(sigmoid(elu(z))) (and MXU-vs-XLA f32
    # accumulation order) can only disagree when |z| is within ~1e-6 of 0; a
    # single such flip cascades through the remaining layers of that row, so
    # budget at most one differing row (a real regression flips ~all rows).
    rows_bad = int(jnp.sum(jnp.any(out != ref, axis=1)))
    assert rows_bad <= 1, f"{rows_bad}/{B} rows mismatch the f32 reference"

    # Default optimized path: bf16 weights for all 6 layers, 256-row tiles,
    # bf16 0/1 output.  Exercises the batch grid (software pipelining) with
    # weights resident in VMEM across grid steps.
    xb = jax.random.normal(jax.random.PRNGKey(1), (512, D_IN), jnp.float32)
    out_fast = jax.block_until_ready(
        double_dense(xb, params, out_dtype=jnp.bfloat16))
    assert out_fast.shape == (512, D_OUT), out_fast.shape
    assert bool(jnp.all((out_fast == 0.0) | (out_fast == 1.0)))

    print("KERNEL_OK")
</pallas_src>

<mosaic_0001>
module attributes {stable_mosaic.version = 11 : i64} {
  func.func @double_dense_kernel(%arg0: i32, %arg1: memref<8x768xf32, #tpu.memory_space<vmem>>, %arg2: memref<768x768xf32, #tpu.memory_space<vmem>>, %arg3: memref<1x768xf32, #tpu.memory_space<vmem>>, %arg4: memref<768x768xf32, #tpu.memory_space<vmem>>, %arg5: memref<1x768xf32, #tpu.memory_space<vmem>>, %arg6: memref<768x768xf32, #tpu.memory_space<vmem>>, %arg7: memref<1x768xf32, #tpu.memory_space<vmem>>, %arg8: memref<768x768xf32, #tpu.memory_space<vmem>>, %arg9: memref<1x768xf32, #tpu.memory_space<vmem>>, %arg10: memref<768x512xf32, #tpu.memory_space<vmem>>, %arg11: memref<1x512xf32, #tpu.memory_space<vmem>>, %arg12: memref<512x256xf32, #tpu.memory_space<vmem>>, %arg13: memref<1x256xf32, #tpu.memory_space<vmem>>, %arg14: memref<8x256xf32, #tpu.memory_space<vmem>>) attributes {dimension_semantics = [#tpu.dimension_semantics<arbitrary>], iteration_bounds = array<i64: 1>, scalar_prefetch = 0 : i64, scratch_operands = 0 : i64, tpu.core_type = #tpu.core_type<tc>, window_params = [{transform_indices = @transform_0, window_bounds = array<i64: 8, 768>}, {pipeline_mode = #tpu.pipeline_mode<synchronous>, transform_indices = @transform_1, window_bounds = array<i64: 768, 768>}, {pipeline_mode = #tpu.pipeline_mode<synchronous>, transform_indices = @transform_2, window_bounds = array<i64: 1, 768>}, {pipeline_mode = #tpu.pipeline_mode<synchronous>, transform_indices = @transform_3, window_bounds = array<i64: 768, 768>}, {pipeline_mode = #tpu.pipeline_mode<synchronous>, transform_indices = @transform_4, window_bounds = array<i64: 1, 768>}, {pipeline_mode = #tpu.pipeline_mode<synchronous>, transform_indices = @transform_5, window_bounds = array<i64: 768, 768>}, {pipeline_mode = #tpu.pipeline_mode<synchronous>, transform_indices = @transform_6, window_bounds = array<i64: 1, 768>}, {pipeline_mode = #tpu.pipeline_mode<synchronous>, transform_indices = @transform_7, window_bounds = array<i64: 768, 768>}, {pipeline_mode = #tpu.pipeline_mode<synchronous>, transform_indices = @transform_8, window_bounds = array<i64: 1, 768>}, {pipeline_mode = #tpu.pipeline_mode<synchronous>, transform_indices = @transform_9, window_bounds = array<i64: 768, 512>}, {pipeline_mode = #tpu.pipeline_mode<synchronous>, transform_indices = @transform_10, window_bounds = array<i64: 1, 512>}, {pipeline_mode = #tpu.pipeline_mode<synchronous>, transform_indices = @transform_11, window_bounds = array<i64: 512, 256>}, {pipeline_mode = #tpu.pipeline_mode<synchronous>, transform_indices = @transform_12, window_bounds = array<i64: 1, 256>}, {transform_indices = @transform_13, window_bounds = array<i64: 8, 256>}]} {
    %c0 = arith.constant 0 : index
    %c0_0 = arith.constant 0 : index
    %0 = vector.load %arg1[%c0, %c0_0] : memref<8x768xf32, #tpu.memory_space<vmem>>, vector<8x768xf32>
    %cst = arith.constant 2.000000e+00 : f32
    %1 = vector.broadcast %cst : f32 to vector<8x768xf32>
    %2 = arith.mulf %0, %1 : vector<8x768xf32>
    %cst_1 = arith.constant 1.000000e+00 : f32
    %3 = vector.broadcast %cst_1 : f32 to vector<8x768xf32>
    %4 = arith.subf %2, %3 : vector<8x768xf32>
    %c0_2 = arith.constant 0 : index
    %c0_3 = arith.constant 0 : index
    %5 = vector.load %arg2[%c0_2, %c0_3] : memref<768x768xf32, #tpu.memory_space<vmem>>, vector<768x768xf32>
    %cst_4 = arith.constant dense<0.000000e+00> : vector<8x768xf32>
    %6 = tpu.matmul %4, %5, %cst_4 {dimension_numbers = #tpu.dot_dimension_numbers<[1], [0], [0], [1], [0, 0, 1, 1], [], []>} : vector<8x768xf32>, vector<768x768xf32>, vector<8x768xf32> -> vector<8x768xf32>
    %c0_5 = arith.constant 0 : index
    %c0_6 = arith.constant 0 : index
    %7 = vector.load %arg3[%c0_5, %c0_6] : memref<1x768xf32, #tpu.memory_space<vmem>>, vector<1x768xf32>
    %8 = vector.broadcast %7 : vector<1x768xf32> to vector<8x768xf32>
    %9 = arith.addf %6, %8 : vector<8x768xf32>
    %cst_7 = arith.constant 0.000000e+00 : f32
    %10 = vector.broadcast %cst_7 : f32 to vector<8x768xf32>
    %11 = arith.cmpf ogt, %9, %10 : vector<8x768xf32>
    %cst_8 = arith.constant 0.000000e+00 : f32
    %cst_9 = arith.constant 1.000000e+00 : f32
    %12 = arith.subf %cst_8, %cst_9 : f32
    %cst_10 = arith.constant 1.000000e+00 : f32
    %13 = vector.broadcast %cst_10 : f32 to vector<8x768xf32>
    %14 = vector.broadcast %12 : f32 to vector<8x768xf32>
    %15 = arith.select %11, %13, %14 : vector<8x768xi1>, vector<8x768xf32>
    %c0_11 = arith.constant 0 : index
    %c0_12 = arith.constant 0 : index
    %16 = vector.load %arg4[%c0_11, %c0_12] : memref<768x768xf32, #tpu.memory_space<vmem>>, vector<768x768xf32>
    %cst_13 = arith.constant dense<0.000000e+00> : vector<8x768xf32>
    %17 = tpu.matmul %15, %16, %cst_13 {dimension_numbers = #tpu.dot_dimension_numbers<[1], [0], [0], [1], [0, 0, 1, 1], [], []>} : vector<8x768xf32>, vector<768x768xf32>, vector<8x768xf32> -> vector<8x768xf32>
    %c0_14 = arith.constant 0 : index
    %c0_15 = arith.constant 0 : index
    %18 = vector.load %arg5[%c0_14, %c0_15] : memref<1x768xf32, #tpu.memory_space<vmem>>, vector<1x768xf32>
    %19 = vector.broadcast %18 : vector<1x768xf32> to vector<8x768xf32>
    %20 = arith.addf %17, %19 : vector<8x768xf32>
    %cst_16 = arith.constant 0.000000e+00 : f32
    %21 = vector.broadcast %cst_16 : f32 to vector<8x768xf32>
    %22 = arith.cmpf ogt, %20, %21 : vector<8x768xf32>
    %cst_17 = arith.constant 0.000000e+00 : f32
    %cst_18 = arith.constant 1.000000e+00 : f32
    %23 = arith.subf %cst_17, %cst_18 : f32
    %cst_19 = arith.constant 1.000000e+00 : f32
    %24 = vector.broadcast %cst_19 : f32 to vector<8x768xf32>
    %25 = vector.broadcast %23 : f32 to vector<8x768xf32>
    %26 = arith.select %22, %24, %25 : vector<8x768xi1>, vector<8x768xf32>
    %c0_20 = arith.constant 0 : index
    %c0_21 = arith.constant 0 : index
    %27 = vector.load %arg6[%c0_20, %c0_21] : memref<768x768xf32, #tpu.memory_space<vmem>>, vector<768x768xf32>
    %cst_22 = arith.constant dense<0.000000e+00> : vector<8x768xf32>
    %28 = tpu.matmul %26, %27, %cst_22 {dimension_numbers = #tpu.dot_dimension_numbers<[1], [0], [0], [1], [0, 0, 1, 1], [], []>} : vector<8x768xf32>, vector<768x768xf32>, vector<8x768xf32> -> vector<8x768xf32>
    %c0_23 = arith.constant 0 : index
    %c0_24 = arith.constant 0 : index
    %29 = vector.load %arg7[%c0_23, %c0_24] : memref<1x768xf32, #tpu.memory_space<vmem>>, vector<1x768xf32>
    %30 = vector.broadcast %29 : vector<1x768xf32> to vector<8x768xf32>
    %31 = arith.addf %28, %30 : vector<8x768xf32>
    %cst_25 = arith.constant 0.000000e+00 : f32
    %32 = vector.broadcast %cst_25 : f32 to vector<8x768xf32>
    %33 = arith.cmpf ogt, %31, %32 : vector<8x768xf32>
    %cst_26 = arith.constant 0.000000e+00 : f32
    %cst_27 = arith.constant 1.000000e+00 : f32
    %34 = arith.subf %cst_26, %cst_27 : f32
    %cst_28 = arith.constant 1.000000e+00 : f32
    %35 = vector.broadcast %cst_28 : f32 to vector<8x768xf32>
    %36 = vector.broadcast %34 : f32 to vector<8x768xf32>
    %37 = arith.select %33, %35, %36 : vector<8x768xi1>, vector<8x768xf32>
    %c0_29 = arith.constant 0 : index
    %c0_30 = arith.constant 0 : index
    %38 = vector.load %arg8[%c0_29, %c0_30] : memref<768x768xf32, #tpu.memory_space<vmem>>, vector<768x768xf32>
    %cst_31 = arith.constant dense<0.000000e+00> : vector<8x768xf32>
    %39 = tpu.matmul %37, %38, %cst_31 {dimension_numbers = #tpu.dot_dimension_numbers<[1], [0], [0], [1], [0, 0, 1, 1], [], []>} : vector<8x768xf32>, vector<768x768xf32>, vector<8x768xf32> -> vector<8x768xf32>
    %c0_32 = arith.constant 0 : index
    %c0_33 = arith.constant 0 : index
    %40 = vector.load %arg9[%c0_32, %c0_33] : memref<1x768xf32, #tpu.memory_space<vmem>>, vector<1x768xf32>
    %41 = vector.broadcast %40 : vector<1x768xf32> to vector<8x768xf32>
    %42 = arith.addf %39, %41 : vector<8x768xf32>
    %cst_34 = arith.constant 0.000000e+00 : f32
    %43 = vector.broadcast %cst_34 : f32 to vector<8x768xf32>
    %44 = arith.cmpf ogt, %42, %43 : vector<8x768xf32>
    %cst_35 = arith.constant 0.000000e+00 : f32
    %cst_36 = arith.constant 1.000000e+00 : f32
    %45 = arith.subf %cst_35, %cst_36 : f32
    %cst_37 = arith.constant 1.000000e+00 : f32
    %46 = vector.broadcast %cst_37 : f32 to vector<8x768xf32>
    %47 = vector.broadcast %45 : f32 to vector<8x768xf32>
    %48 = arith.select %44, %46, %47 : vector<8x768xi1>, vector<8x768xf32>
    %c0_38 = arith.constant 0 : index
    %c0_39 = arith.constant 0 : index
    %49 = vector.load %arg10[%c0_38, %c0_39] : memref<768x512xf32, #tpu.memory_space<vmem>>, vector<768x512xf32>
    %cst_40 = arith.constant dense<0.000000e+00> : vector<8x512xf32>
    %50 = tpu.matmul %48, %49, %cst_40 {dimension_numbers = #tpu.dot_dimension_numbers<[1], [0], [0], [1], [0, 0, 1, 1], [], []>} : vector<8x768xf32>, vector<768x512xf32>, vector<8x512xf32> -> vector<8x512xf32>
    %c0_41 = arith.constant 0 : index
    %c0_42 = arith.constant 0 : index
    %51 = vector.load %arg11[%c0_41, %c0_42] : memref<1x512xf32, #tpu.memory_space<vmem>>, vector<1x512xf32>
    %52 = vector.broadcast %51 : vector<1x512xf32> to vector<8x512xf32>
    %53 = arith.addf %50, %52 : vector<8x512xf32>
    %cst_43 = arith.constant 0.000000e+00 : f32
    %54 = vector.broadcast %cst_43 : f32 to vector<8x512xf32>
    %55 = arith.cmpf ogt, %53, %54 : vector<8x512xf32>
    %cst_44 = arith.constant 0.000000e+00 : f32
    %cst_45 = arith.constant 1.000000e+00 : f32
    %56 = arith.subf %cst_44, %cst_45 : f32
    %cst_46 = arith.constant 1.000000e+00 : f32
    %57 = vector.broadcast %cst_46 : f32 to vector<8x512xf32>
    %58 = vector.broadcast %56 : f32 to vector<8x512xf32>
    %59 = arith.select %55, %57, %58 : vector<8x512xi1>, vector<8x512xf32>
    %c0_47 = arith.constant 0 : index
    %c0_48 = arith.constant 0 : index
    %60 = vector.load %arg12[%c0_47, %c0_48] : memref<512x256xf32, #tpu.memory_space<vmem>>, vector<512x256xf32>
    %cst_49 = arith.constant dense<0.000000e+00> : vector<8x256xf32>
    %61 = tpu.matmul %59, %60, %cst_49 {dimension_numbers = #tpu.dot_dimension_numbers<[1], [0], [0], [1], [0, 0, 1, 1], [], []>} : vector<8x512xf32>, vector<512x256xf32>, vector<8x256xf32> -> vector<8x256xf32>
    %c0_50 = arith.constant 0 : index
    %c0_51 = arith.constant 0 : index
    %62 = vector.load %arg13[%c0_50, %c0_51] : memref<1x256xf32, #tpu.memory_space<vmem>>, vector<1x256xf32>
    %63 = vector.broadcast %62 : vector<1x256xf32> to vector<8x256xf32>
    %64 = arith.addf %61, %63 : vector<8x256xf32>
    %cst_52 = arith.constant 0.000000e+00 : f32
    %65 = vector.broadcast %cst_52 : f32 to vector<8x256xf32>
    %66 = arith.cmpf ogt, %64, %65 : vector<8x256xf32>
    %cst_53 = arith.constant 1.000000e+00 : f32
    %cst_54 = arith.constant 0.000000e+00 : f32
    %67 = vector.broadcast %cst_53 : f32 to vector<8x256xf32>
    %68 = vector.broadcast %cst_54 : f32 to vector<8x256xf32>
    %69 = arith.select %66, %67, %68 : vector<8x256xi1>, vector<8x256xf32>
    %c0_55 = arith.constant 0 : index
    %c0_56 = arith.constant 0 : index
    %70 = vector.load %arg14[%c0_55, %c0_56] : memref<8x256xf32, #tpu.memory_space<vmem>>, vector<8x256xf32>
    tpu.vector_store %arg14[%c0_55, %c0_56], %69 {strides = array<i32>} : memref<8x256xf32, #tpu.memory_space<vmem>>, vector<8x256xf32>,
    return
  }
  func.func @transform_0(%arg0: i32) -> (i32, i32) {
    %c0_i32 = arith.constant 0 : i32
    %c0_i32_0 = arith.constant 0 : i32
    return %arg0, %c0_i32 : i32, i32
  }
  func.func @transform_1(%arg0: i32) -> (i32, i32) {
    %c0_i32 = arith.constant 0 : i32
    %c0_i32_0 = arith.constant 0 : i32
    %c0_i32_1 = arith.constant 0 : i32
    return %c0_i32, %c0_i32_0 : i32, i32
  }
  func.func @transform_2(%arg0: i32) -> (i32, i32) {
    %c0_i32 = arith.constant 0 : i32
    %c0_i32_0 = arith.constant 0 : i32
    %c0_i32_1 = arith.constant 0 : i32
    return %c0_i32, %c0_i32_0 : i32, i32
  }
  func.func @transform_3(%arg0: i32) -> (i32, i32) {
    %c0_i32 = arith.constant 0 : i32
    %c0_i32_0 = arith.constant 0 : i32
    %c0_i32_1 = arith.constant 0 : i32
    return %c0_i32, %c0_i32_0 : i32, i32
  }
  func.func @transform_4(%arg0: i32) -> (i32, i32) {
    %c0_i32 = arith.constant 0 : i32
    %c0_i32_0 = arith.constant 0 : i32
    %c0_i32_1 = arith.constant 0 : i32
    return %c0_i32, %c0_i32_0 : i32, i32
  }
  func.func @transform_5(%arg0: i32) -> (i32, i32) {
    %c0_i32 = arith.constant 0 : i32
    %c0_i32_0 = arith.constant 0 : i32
    %c0_i32_1 = arith.constant 0 : i32
    return %c0_i32, %c0_i32_0 : i32, i32
  }
  func.func @transform_6(%arg0: i32) -> (i32, i32) {
    %c0_i32 = arith.constant 0 : i32
    %c0_i32_0 = arith.constant 0 : i32
    %c0_i32_1 = arith.constant 0 : i32
    return %c0_i32, %c0_i32_0 : i32, i32
  }
  func.func @transform_7(%arg0: i32) -> (i32, i32) {
    %c0_i32 = arith.constant 0 : i32
    %c0_i32_0 = arith.constant 0 : i32
    %c0_i32_1 = arith.constant 0 : i32
    return %c0_i32, %c0_i32_0 : i32, i32
  }
  func.func @transform_8(%arg0: i32) -> (i32, i32) {
    %c0_i32 = arith.constant 0 : i32
    %c0_i32_0 = arith.constant 0 : i32
    %c0_i32_1 = arith.constant 0 : i32
    return %c0_i32, %c0_i32_0 : i32, i32
  }
  func.func @transform_9(%arg0: i32) -> (i32, i32) {
    %c0_i32 = arith.constant 0 : i32
    %c0_i32_0 = arith.constant 0 : i32
    %c0_i32_1 = arith.constant 0 : i32
    return %c0_i32, %c0_i32_0 : i32, i32
  }
  func.func @transform_10(%arg0: i32) -> (i32, i32) {
    %c0_i32 = arith.constant 0 : i32
    %c0_i32_0 = arith.constant 0 : i32
    %c0_i32_1 = arith.constant 0 : i32
    return %c0_i32, %c0_i32_0 : i32, i32
  }
  func.func @transform_11(%arg0: i32) -> (i32, i32) {
    %c0_i32 = arith.constant 0 : i32
    %c0_i32_0 = arith.constant 0 : i32
    %c0_i32_1 = arith.constant 0 : i32
    return %c0_i32, %c0_i32_0 : i32, i32
  }
  func.func @transform_12(%arg0: i32) -> (i32, i32) {
    %c0_i32 = arith.constant 0 : i32
    %c0_i32_0 = arith.constant 0 : i32
    %c0_i32_1 = arith.constant 0 : i32
    return %c0_i32, %c0_i32_0 : i32, i32
  }
  func.func @transform_13(%arg0: i32) -> (i32, i32) {
    %c0_i32 = arith.constant 0 : i32
    %c0_i32_0 = arith.constant 0 : i32
    return %arg0, %c0_i32 : i32, i32
  }
}

</mosaic_0001>

<llo_original>
// kernel: tpu_custom_call.1
$region0: #{tpu_custom_call.1}
  #allocation0 [shape = 'u32[]', space=smem, size = 0x4, offset = 0x4, fixed_abs, tag = 'smem constant byte address 0x4 - core index']
  #allocation1 [shape = 'u32[144,128]{1,0:T(1,128)}', space=vmem, size = 0x12000, scoped, tag = 'internal scratch']
  %s0 = inlined_call_operand.hbm [shape: f32[8,768], index: 0, kind: input, shape index: {}]
  %s1 = inlined_call_operand.hbm [shape: f32[768,768], index: 1, kind: input, shape index: {}]
  %s2 = inlined_call_operand.hbm [shape: f32[1,768], index: 2, kind: input, shape index: {}]
  %s3 = inlined_call_operand.hbm [shape: f32[768,768], index: 3, kind: input, shape index: {}]
  %s4 = inlined_call_operand.hbm [shape: f32[1,768], index: 4, kind: input, shape index: {}]
  %s5 = inlined_call_operand.hbm [shape: f32[768,768], index: 5, kind: input, shape index: {}]
  %s6 = inlined_call_operand.hbm [shape: f32[1,768], index: 6, kind: input, shape index: {}]
  %s7 = inlined_call_operand.hbm [shape: f32[768,768], index: 7, kind: input, shape index: {}]
  %s8 = inlined_call_operand.hbm [shape: f32[1,768], index: 8, kind: input, shape index: {}]
  %s9 = inlined_call_operand.hbm [shape: f32[768,512], index: 9, kind: input, shape index: {}]
  %s10 = inlined_call_operand.hbm [shape: f32[1,512], index: 10, kind: input, shape index: {}]
  %s11 = inlined_call_operand.hbm [shape: f32[512,256], index: 11, kind: input, shape index: {}]
  %s12 = inlined_call_operand.hbm [shape: f32[1,256], index: 12, kind: input, shape index: {}]
  %s13 = inlined_call_operand.hbm [shape: f32[8,256], index: 13, kind: output, shape index: {}]
  %s14 = sld [smem:[#allocation0]]
  $region114: #{tpu_custom_call.1} parent=0
    _
  %s16 = ssub.s32 1, %s14
  %s17 = scalar_select 0, %s16, %s14
  $region1: #{tpu_custom_call.1} parent=0
    #allocation2 [shape = 'u8[24576]{0}', space=vmem, size = 0x6000, scoped, tag = 'input window, operand 0, single buffered']
    #allocation3 [shape = 's32[1]{0}', space=sflag, size = 0x4, scoped, tag = 'scoped memory for tpu_custom_call.1']
    #allocation4 [shape = 's32[1]{0}', space=sflag, size = 0x4, scoped, tag = 'scoped memory for tpu_custom_call.1']
    #allocation5 [shape = 'u8[2359296]{0}', space=vmem, size = 0x240000, scoped, tag = 'input window, operand 1, single buffered']
    #allocation6 [shape = 's32[1]{0}', space=sflag, size = 0x4, scoped, tag = 'scoped memory for tpu_custom_call.1']
    #allocation7 [shape = 'u8[3072]{0}', space=vmem, size = 0xc00, scoped, tag = 'input window, operand 2, single buffered']
    #allocation8 [shape = 'u8[2359296]{0}', space=vmem, size = 0x240000, scoped, tag = 'input window, operand 3, single buffered']
    #allocation9 [shape = 's32[1]{0}', space=sflag, size = 0x4, scoped, tag = 'scoped memory for tpu_custom_call.1']
    #allocation10 [shape = 'u8[3072]{0}', space=vmem, size = 0xc00, scoped, tag = 'input window, operand 4, single buffered']
    #allocation11 [shape = 'u8[2359296]{0}', space=vmem, size = 0x240000, scoped, tag = 'input window, operand 5, single buffered']
    #allocation12 [shape = 's32[1]{0}', space=sflag, size = 0x4, scoped, tag = 'scoped memory for tpu_custom_call.1']
    #allocation13 [shape = 'u8[3072]{0}', space=vmem, size = 0xc00, scoped, tag = 'input window, operand 6, single buffered']
    #allocation14 [shape = 'u8[2359296]{0}', space=vmem, size = 0x240000, scoped, tag = 'input window, operand 7, single buffered']
    #allocation15 [shape = 's32[1]{0}', space=sflag, size = 0x4, scoped, tag = 'scoped memory for tpu_custom_call.1']
    #allocation16 [shape = 'u8[3072]{0}', space=vmem, size = 0xc00, scoped, tag = 'input window, operand 8, single buffered']
    #allocation17 [shape = 'u8[1572864]{0}', space=vmem, size = 0x180000, scoped, tag = 'input window, operand 9, single buffered']
    #allocation18 [shape = 's32[1]{0}', space=sflag, size = 0x4, scoped, tag = 'scoped memory for tpu_custom_call.1']
    #allocation19 [shape = 'u8[2048]{0}', space=vmem, size = 0x800, scoped, tag = 'input window, operand 10, single buffered']
    #allocation20 [shape = 'u8[524288]{0}', space=vmem, size = 0x80000, scoped, tag = 'input window, operand 11, single buffered']
    #allocation21 [shape = 's32[1]{0}', space=sflag, size = 0x4, scoped, tag = 'scoped memory for tpu_custom_call.1']
    #allocation22 [shape = 'u8[1024]{0}', space=vmem, size = 0x400, scoped, tag = 'input window, operand 12, single buffered']
    #allocation23 [shape = 'u8[8192]{0}', space=vmem, size = 0x2000, scoped, tag = 'output window, operand 0, single buffered']
    %18 = vsyncpa [#allocation3], 0
    %19 = vsyncpa [#allocation6], 0
    %20 = vsyncpa [#allocation9], 0
    %21 = vsyncpa [#allocation12], 0
    %22 = vsyncpa [#allocation15], 0
    %23 = vsyncpa [#allocation18], 0
    %24 = vsyncpa [#allocation21], 0
    %25 = vsyncpa [#allocation4], 0
    // Predicated region
    $region2: #{tpu_custom_call.1} parent=1 // pred_check
      _
    $region3: #{tpu_custom_call.1} parent=1 // pred_check_branch
      %27 = sbr.rel (0) target = $region5
    $region4: #{tpu_custom_call.1} parent=1 // pred_region
      %s29 = ssub.s32 768, 768
      %30 = vsyncadd [#allocation3], %s29
      %s32 = sshll.u32 [#allocation2], 4
      %s33 = int_to_ptr.vmem [resolvable:$true] %s32
      %35 = dma.hbm_to_vmem [thread:$0]  %s0, 768, %s33, [#allocation3]
    $region5: #{tpu_custom_call.1} parent=1 // pred_fallthru
      _
    // Predicated region
    $region6: #{tpu_custom_call.1} parent=1 // pred_check
      _
    $region7: #{tpu_custom_call.1} parent=1 // pred_check_branch
      %37 = sbr.rel (0) target = $region9
    $region8: #{tpu_custom_call.1} parent=1 // pred_region
      %s39 = ssub.s32 73728, 73728
      %40 = vsyncadd [#allocation6], %s39
      %s41 = sshll.u32 [#allocation5], 4
      %s42 = int_to_ptr.vmem [resolvable:$true] %s41
      %47 = dma.hbm_to_vmem [thread:$0]  %s1, 73728, %s42, [#allocation6], 768, 768, 48
    $region9: #{tpu_custom_call.1} parent=1 // pred_fallthru
      _
    // Predicated region
    $region10: #{tpu_custom_call.1} parent=1 // pred_check
      _
    $region11: #{tpu_custom_call.1} parent=1 // pred_check_branch
      %49 = sbr.rel (0) target = $region13
    $region12: #{tpu_custom_call.1} parent=1 // pred_region
      %s51 = ssub.s32 96, 96
      %52 = vsyncadd [#allocation6], %s51
      %s54 = sshll.u32 [#allocation7], 4
      %s55 = int_to_ptr.vmem [resolvable:$true] %s54
      %57 = dma.hbm_to_vmem [thread:$0]  %s2, 96, %s55, [#allocation6]
    $region13: #{tpu_custom_call.1} parent=1 // pred_fallthru
      _
    // Predicated region
    $region14: #{tpu_custom_call.1} parent=1 // pred_check
      _
    $region15: #{tpu_custom_call.1} parent=1 // pred_check_branch
      %59 = sbr.rel (0) target = $region17
    $region16: #{tpu_custom_call.1} parent=1 // pred_region
      %s61 = ssub.s32 73728, 73728
      %62 = vsyncadd [#allocation9], %s61
      %s63 = sshll.u32 [#allocation8], 4
      %s64 = int_to_ptr.vmem [resolvable:$true] %s63
      %69 = dma.hbm_to_vmem [thread:$0]  %s3, 73728, %s64, [#allocation9], 768, 768, 48
    $region17: #{tpu_custom_call.1} parent=1 // pred_fallthru
      _
    // Predicated region
    $region18: #{tpu_custom_call.1} parent=1 // pred_check
      _
    $region19: #{tpu_custom_call.1} parent=1 // pred_check_branch
      %71 = sbr.rel (0) target = $region21
    $region20: #{tpu_custom_call.1} parent=1 // pred_region
      %s73 = ssub.s32 96, 96
      %74 = vsyncadd [#allocation9], %s73
      %s76 = sshll.u32 [#allocation10], 4
      %s77 = int_to_ptr.vmem [resolvable:$true] %s76
      %79 = dma.hbm_to_vmem [thread:$0]  %s4, 96, %s77, [#allocation9]
    $region21: #{tpu_custom_call.1} parent=1 // pred_fallthru
      _
    // Predicated region
    $region22: #{tpu_custom_call.1} parent=1 // pred_check
      _
    $region23: #{tpu_custom_call.1} parent=1 // pred_check_branch
      %81 = sbr.rel (0) target = $region25
    $region24: #{tpu_custom_call.1} parent=1 // pred_region
      %s83 = ssub.s32 73728, 73728
      %84 = vsyncadd [#allocation12], %s83
      %s85 = sshll.u32 [#allocation11], 4
      %s86 = int_to_ptr.vmem [resolvable:$true] %s85
      %91 = dma.hbm_to_vmem [thread:$0]  %s5, 73728, %s86, [#allocation12], 768, 768, 48
    $region25: #{tpu_custom_call.1} parent=1 // pred_fallthru
      _
    // Predicated region
    $region26: #{tpu_custom_call.1} parent=1 // pred_check
      _
    $region27: #{tpu_custom_call.1} parent=1 // pred_check_branch
      %93 = sbr.rel (0) target = $region29
    $region28: #{tpu_custom_call.1} parent=1 // pred_region
      %s95 = ssub.s32 96, 96
      %96 = vsyncadd [#allocation12], %s95
      %s98 = sshll.u32 [#allocation13], 4
      %s99 = int_to_ptr.vmem [resolvable:$true] %s98
      %101 = dma.hbm_to_vmem [thread:$0]  %s6, 96, %s99, [#allocation12]
    $region29: #{tpu_custom_call.1} parent=1 // pred_fallthru
      _
    // Predicated region
    $region30: #{tpu_custom_call.1} parent=1 // pred_check
      _
    $region31: #{tpu_custom_call.1} parent=1 // pred_check_branch
      %103 = sbr.rel (0) target = $region33
    $region32: #{tpu_custom_call.1} parent=1 // pred_region
      %s105 = ssub.s32 73728, 73728
      %106 = vsyncadd [#allocation15], %s105
      %s107 = sshll.u32 [#allocation14], 4
      %s108 = int_to_ptr.vmem [resolvable:$true] %s107
      %113 = dma.hbm_to_vmem [thread:$0]  %s7, 73728, %s108, [#allocation15], 768, 768, 48
    $region33: #{tpu_custom_call.1} parent=1 // pred_fallthru
      _
    // Predicated region
    $region34: #{tpu_custom_call.1} parent=1 // pred_check
      _
    $region35: #{tpu_custom_call.1} parent=1 // pred_check_branch
      %115 = sbr.rel (0) target = $region37
    $region36: #{tpu_custom_call.1} parent=1 // pred_region
      %s117 = ssub.s32 96, 96
      %118 = vsyncadd [#allocation15], %s117
      %s120 = sshll.u32 [#allocation16], 4
      %s121 = int_to_ptr.vmem [resolvable:$true] %s120
      %123 = dma.hbm_to_vmem [thread:$0]  %s8, 96, %s121, [#allocation15]
    $region37: #{tpu_custom_call.1} parent=1 // pred_fallthru
      _
    // Predicated region
    $region38: #{tpu_custom_call.1} parent=1 // pred_check
      _
    $region39: #{tpu_custom_call.1} parent=1 // pred_check_branch
      %125 = sbr.rel (0) target = $region41
    $region40: #{tpu_custom_call.1} parent=1 // pred_region
      %s127 = ssub.s32 49152, 49152
      %128 = vsyncadd [#allocation18], %s127
      %s129 = sshll.u32 [#allocation17], 4
      %s130 = int_to_ptr.vmem [resolvable:$true] %s129
      %135 = dma.hbm_to_vmem [thread:$0]  %s9, 49152, %s130, [#allocation18], 512, 512, 32
    $region41: #{tpu_custom_call.1} parent=1 // pred_fallthru
      _
    // Predicated region
    $region42: #{tpu_custom_call.1} parent=1 // pred_check
      _
    $region43: #{tpu_custom_call.1} parent=1 // pred_check_branch
      %137 = sbr.rel (0) target = $region45
    $region44: #{tpu_custom_call.1} parent=1 // pred_region
      %s139 = ssub.s32 64, 64
      %140 = vsyncadd [#allocation18], %s139
      %s142 = sshll.u32 [#allocation19], 4
      %s143 = int_to_ptr.vmem [resolvable:$true] %s142
      %145 = dma.hbm_to_vmem [thread:$0]  %s10, 64, %s143, [#allocation18]
    $region45: #{tpu_custom_call.1} parent=1 // pred_fallthru
      _
    // Predicated region
    $region46: #{tpu_custom_call.1} parent=1 // pred_check
      _
    $region47: #{tpu_custom_call.1} parent=1 // pred_check_branch
      %147 = sbr.rel (0) target = $region49
    $region48: #{tpu_custom_call.1} parent=1 // pred_region
      %s149 = ssub.s32 16384, 16384
      %150 = vsyncadd [#allocation21], %s149
      %s151 = sshll.u32 [#allocation20], 4
      %s152 = int_to_ptr.vmem [resolvable:$true] %s151
      %157 = dma.hbm_to_vmem [thread:$0]  %s11, 16384, %s152, [#allocation21], 256, 256, 16
    $region49: #{tpu_custom_call.1} parent=1 // pred_fallthru
      _
    // Predicated region
    $region50: #{tpu_custom_call.1} parent=1 // pred_check
      _
    $region51: #{tpu_custom_call.1} parent=1 // pred_check_branch
      %159 = sbr.rel (0) target = $region53
    $region52: #{tpu_custom_call.1} parent=1 // pred_region
      %s161 = ssub.s32 32, 32
      %162 = vsyncadd [#allocation21], %s161
      %s164 = sshll.u32 [#allocation22], 4
      %s165 = int_to_ptr.vmem [resolvable:$true] %s164
      %167 = dma.hbm_to_vmem [thread:$0]  %s12, 32, %s165, [#allocation21]
    $region53: #{tpu_custom_call.1} parent=1 // pred_fallthru
      _
    // Predicated region
    $region54: #{tpu_custom_call.1} parent=1 // pred_check
      _
    $region55: #{tpu_custom_call.1} parent=1 // pred_check_branch
      %169 = sbr.rel (0) target = $region57
    $region56: #{tpu_custom_call.1} parent=1 // pred_region
      %170 = dma.done [#allocation3], 768
    $region57: #{tpu_custom_call.1} parent=1 // pred_fallthru
      _
    // Predicated region
    $region58: #{tpu_custom_call.1} parent=1 // pred_check
      _
    $region59: #{tpu_custom_call.1} parent=1 // pred_check_branch
      %172 = sbr.rel (0) target = $region61
    $region60: #{tpu_custom_call.1} parent=1 // pred_region
      %173 = dma.done [#allocation6], 73728
    $region61: #{tpu_custom_call.1} parent=1 // pred_fallthru
      _
    // Predicated region
    $region62: #{tpu_custom_call.1} parent=1 // pred_check
      _
    $region63: #{tpu_custom_call.1} parent=1 // pred_check_branch
      %175 = sbr.rel (0) target = $region65
    $region64: #{tpu_custom_call.1} parent=1 // pred_region
      %176 = dma.done [#allocation6], 96
    $region65: #{tpu_custom_call.1} parent=1 // pred_fallthru
      _
    // Predicated region
    $region66: #{tpu_custom_call.1} parent=1 // pred_check
      _
    $region67: #{tpu_custom_call.1} parent=1 // pred_check_branch
      %178 = sbr.rel (0) target = $region69
    $region68: #{tpu_custom_call.1} parent=1 // pred_region
      %179 = dma.done [#allocation9], 73728
    $region69: #{tpu_custom_call.1} parent=1 // pred_fallthru
      _
    // Predicated region
    $region70: #{tpu_custom_call.1} parent=1 // pred_check
      _
    $region71: #{tpu_custom_call.1} parent=1 // pred_check_branch
      %181 = sbr.rel (0) target = $region73
    $region72: #{tpu_custom_call.1} parent=1 // pred_region
      %182 = dma.done [#allocation9], 96
    $region73: #{tpu_custom_call.1} parent=1 // pred_fallthru
      _
    // Predicated region
    $region74: #{tpu_custom_call.1} parent=1 // pred_check
      _
    $region75: #{tpu_custom_call.1} parent=1 // pred_check_branch
      %184 = sbr.rel (0) target = $region77
    $region76: #{tpu_custom_call.1} parent=1 // pred_region
      %185 = dma.done [#allocation12], 73728
    $region77: #{tpu_custom_call.1} parent=1 // pred_fallthru
      _
    // Predicated region
    $region78: #{tpu_custom_call.1} parent=1 // pred_check
      _
    $region79: #{tpu_custom_call.1} parent=1 // pred_check_branch
      %187 = sbr.rel (0) target = $region81
    $region80: #{tpu_custom_call.1} parent=1 // pred_region
      %188 = dma.done [#allocation12], 96
    $region81: #{tpu_custom_call.1} parent=1 // pred_fallthru
      _
    // Predicated region
    $region82: #{tpu_custom_call.1} parent=1 // pred_check
      _
    $region83: #{tpu_custom_call.1} parent=1 // pred_check_branch
      %190 = sbr.rel (0) target = $region85
    $region84: #{tpu_custom_call.1} parent=1 // pred_region
      %191 = dma.done [#allocation15], 73728
    $region85: #{tpu_custom_call.1} parent=1 // pred_fallthru
      _
    // Predicated region
    $region86: #{tpu_custom_call.1} parent=1 // pred_check
      _
    $region87: #{tpu_custom_call.1} parent=1 // pred_check_branch
      %193 = sbr.rel (0) target = $region89
    $region88: #{tpu_custom_call.1} parent=1 // pred_region
      %194 = dma.done [#allocation15], 96
    $region89: #{tpu_custom_call.1} parent=1 // pred_fallthru
      _
    // Predicated region
    $region90: #{tpu_custom_call.1} parent=1 // pred_check
      _
    $region91: #{tpu_custom_call.1} parent=1 // pred_check_branch
      %196 = sbr.rel (0) target = $region93
    $region92: #{tpu_custom_call.1} parent=1 // pred_region
      %197 = dma.done [#allocation18], 49152
    $region93: #{tpu_custom_call.1} parent=1 // pred_fallthru
      _
    // Predicated region
    $region94: #{tpu_custom_call.1} parent=1 // pred_check
      _
    $region95: #{tpu_custom_call.1} parent=1 // pred_check_branch
      %199 = sbr.rel (0) target = $region97
    $region96: #{tpu_custom_call.1} parent=1 // pred_region
      %200 = dma.done [#allocation18], 64
    $region97: #{tpu_custom_call.1} parent=1 // pred_fallthru
      _
    // Predicated region
    $region98: #{tpu_custom_call.1} parent=1 // pred_check
      _
    $region99: #{tpu_custom_call.1} parent=1 // pred_check_branch
      %202 = sbr.rel (0) target = $region101
    $region100: #{tpu_custom_call.1} parent=1 // pred_region
      %203 = dma.done [#allocation21], 16384
    $region101: #{tpu_custom_call.1} parent=1 // pred_fallthru
      _
    // Predicated region
    $region102: #{tpu_custom_call.1} parent=1 // pred_check
      _
    $region103: #{tpu_custom_call.1} parent=1 // pred_check_branch
      %205 = sbr.rel (0) target = $region105
    $region104: #{tpu_custom_call.1} parent=1 // pred_region
      %206 = dma.done [#allocation21], 32
    $region105: #{tpu_custom_call.1} parent=1 // pred_fallthru
      _
    %v207 = vld [vmem:[#allocation2] sm:$0xff]
    %v208 = vld [vmem:[#allocation2 + $0x8] sm:$0xff]
    %v209 = vld [vmem:[#allocation2 + $0x10] sm:$0xff]
    %v210 = vld [vmem:[#allocation2 + $0x18] sm:$0xff]
    %v211 = vld [vmem:[#allocation2 + $0x20] sm:$0xff]
    %v212 = vld [vmem:[#allocation2 + $0x28] sm:$0xff]
    %v213 = vmul.f32 %v207, 2.0
    %v214 = vmul.f32 %v208, 2.0
    %v215 = vmul.f32 %v209, 2.0
    %v216 = vmul.f32 %v210, 2.0
    %v217 = vmul.f32 %v211, 2.0
    %v218 = vmul.f32 %v212, 2.0
    %v219 = vsub.f32 %v213, 1.0
    %v220 = vsub.f32 %v214, 1.0
    %v221 = vsub.f32 %v215, 1.0
    %v222 = vsub.f32 %v216, 1.0
    %v223 = vsub.f32 %v217, 1.0
    %v224 = vsub.f32 %v218, 1.0
    %v225 = vld [vmem:[#allocation5] sm:$0xff]
    %v226 = vld [vmem:[#allocation5 + $0x8] sm:$0xff]
    %v227 = vld [vmem:[#allocation5 + $0x10] sm:$0xff]
    %v228 = vld [vmem:[#allocation5 + $0x18] sm:$0xff]
    %v229 = vld [vmem:[#allocation5 + $0x20] sm:$0xff]
    %v230 = vld [vmem:[#allocation5 + $0x28] sm:$0xff]
    %v231 = vld [vmem:[#allocation5 + $0x30] sm:$0xff]
    %v232 = vld [vmem:[#allocation5 + $0x38] sm:$0xff]
    %v233 = vld [vmem:[#allocation5 + $0x40] sm:$0xff]
    %v234 = vld [vmem:[#allocation5 + $0x48] sm:$0xff]
    %v235 = vld [vmem:[#allocation5 + $0x50] sm:$0xff]
    %v236 = vld [vmem:[#allocation5 + $0x58] sm:$0xff]
    %v237 = vld [vmem:[#allocation5 + $0x60] sm:$0xff]
    %v238 = vld [vmem:[#allocation5 + $0x68] sm:$0xff]
    %v239 = vld [vmem:[#allocation5 + $0x70] sm:$0xff]
    %v240 = vld [vmem:[#allocation5 + $0x78] sm:$0xff]
    %v241 = vld [vmem:[#allocation5 + $0x80] sm:$0xff]
    %v242 = vld [vmem:[#allocation5 + $0x88] sm:$0xff]
    %v243 = vld [vmem:[#allocation5 + $0x90] sm:$0xff]
    %v244 = vld [vmem:[#allocation5 + $0x98] sm:$0xff]
    %v245 = vld [vmem:[#allocation5 + $0xa0] sm:$0xff]
    %v246 = vld [vmem:[#allocation5 + $0xa8] sm:$0xff]
    %v247 = vld [vmem:[#allocation5 + $0xb0] sm:$0xff]
    %v248 = vld [vmem:[#allocation5 + $0xb8] sm:$0xff]
    %v249 = vld [vmem:[#allocation5 + $0xc0] sm:$0xff]
    %v250 = vld [vmem:[#allocation5 + $0xc8] sm:$0xff]
    %v251 = vld [vmem:[#allocation5 + $0xd0] sm:$0xff]
    %v252 = vld [vmem:[#allocation5 + $0xd8] sm:$0xff]
    %v253 = vld [vmem:[#allocation5 + $0xe0] sm:$0xff]
    %v254 = vld [vmem:[#allocation5 + $0xe8] sm:$0xff]
    %v255 = vld [vmem:[#allocation5 + $0xf0] sm:$0xff]
    %v256 = vld [vmem:[#allocation5 + $0xf8] sm:$0xff]
    %v257 = vld [vmem:[#allocation5 + $0x100] sm:$0xff]
    %v258 = vld [vmem:[#allocation5 + $0x108] sm:$0xff]
    %v259 = vld [vmem:[#allocation5 + $0x110] sm:$0xff]
    %v260 = vld [vmem:[#allocation5 + $0x118] sm:$0xff]
    %v261 = vld [vmem:[#allocation5 + $0x120] sm:$0xff]
    %v262 = vld [vmem:[#allocation5 + $0x128] sm:$0xff]
    %v263 = vld [vmem:[#allocation5 + $0x130] sm:$0xff]
    %v264 = vld [vmem:[#allocation5 + $0x138] sm:$0xff]
    %v265 = vld [vmem:[#allocation5 + $0x140] sm:$0xff]
    %v266 = vld [vmem:[#allocation5 + $0x148] sm:$0xff]
    %v267 = vld [vmem:[#allocation5 + $0x150] sm:$0xff]
    %v268 = vld [vmem:[#allocation5 + $0x158] sm:$0xff]
    %v269 = vld [vmem:[#allocation5 + $0x160] sm:$0xff]
    %v270 = vld [vmem:[#allocation5 + $0x168] sm:$0xff]
    %v271 = vld [vmem:[#allocation5 + $0x170] sm:$0xff]
    %v272 = vld [vmem:[#allocation5 + $0x178] sm:$0xff]
    %v273 = vld [vmem:[#allocation5 + $0x180] sm:$0xff]
    %v274 = vld [vmem:[#allocation5 + $0x188] sm:$0xff]
    %v275 = vld [vmem:[#allocation5 + $0x190] sm:$0xff]
    %v276 = vld [vmem:[#allocation5 + $0x198] sm:$0xff]
    %v277 = vld [vmem:[#allocation5 + $0x1a0] sm:$0xff]
    %v278 = vld [vmem:[#allocation5 + $0x1a8] sm:$0xff]
    %v279 = vld [vmem:[#allocation5 + $0x1b0] sm:$0xff]
    %v280 = vld [vmem:[#allocation5 + $0x1b8] sm:$0xff]
    %v281 = vld [vmem:[#allocation5 + $0x1c0] sm:$0xff]
    %v282 = vld [vmem:[#allocation5 + $0x1c8] sm:$0xff]
    %v283 = vld [vmem:[#allocation5 + $0x1d0] sm:$0xff]
    %v284 = vld [vmem:[#allocation5 + $0x1d8] sm:$0xff]
    %v285 = vld [vmem:[#allocation5 + $0x1e0] sm:$0xff]
    %v286 = vld [vmem:[#allocation5 + $0x1e8] sm:$0xff]
    %v287 = vld [vmem:[#allocation5 + $0x1f0] sm:$0xff]
    %v288 = vld [vmem:[#allocation5 + $0x1f8] sm:$0xff]
    %v289 = vld [vmem:[#allocation5 + $0x200] sm:$0xff]
    %v290 = vld [vmem:[#allocation5 + $0x208] sm:$0xff]
    %v291 = vld [vmem:[#allocation5 + $0x210] sm:$0xff]
    %v292 = vld [vmem:[#allocation5 + $0x218] sm:$0xff]
    %v293 = vld [vmem:[#allocation5 + $0x220] sm:$0xff]
    %v294 = vld [vmem:[#allocation5 + $0x228] sm:$0xff]
    %v295 = vld [vmem:[#allocation5 + $0x230] sm:$0xff]
    %v296 = vld [vmem:[#allocation5 + $0x238] sm:$0xff]
    %v297 = vld [vmem:[#allocation5 + $0x240] sm:$0xff]
    %v298 = vld [vmem:[#allocation5 + $0x248] sm:$0xff]
    %v299 = vld [vmem:[#allocation5 + $0x250] sm:$0xff]
    %v300 = vld [vmem:[#allocation5 + $0x258] sm:$0xff]
    %v301 = vld [vmem:[#allocation5 + $0x260] sm:$0xff]
    %v302 = vld [vmem:[#allocation5 + $0x268] sm:$0xff]
    %v303 = vld [vmem:[#allocation5 + $0x270] sm:$0xff]
    %v304 = vld [vmem:[#allocation5 + $0x278] sm:$0xff]
    %v305 = vld [vmem:[#allocation5 + $0x280] sm:$0xff]
    %v306 = vld [vmem:[#allocation5 + $0x288] sm:$0xff]
    %v307 = vld [vmem:[#allocation5 + $0x290] sm:$0xff]
    %v308 = vld [vmem:[#allocation5 + $0x298] sm:$0xff]
    %v309 = vld [vmem:[#allocation5 + $0x2a0] sm:$0xff]
    %v310 = vld [vmem:[#allocation5 + $0x2a8] sm:$0xff]
    %v311 = vld [vmem:[#allocation5 + $0x2b0] sm:$0xff]
    %v312 = vld [vmem:[#allocation5 + $0x2b8] sm:$0xff]
    %v313 = vld [vmem:[#allocation5 + $0x2c0] sm:$0xff]
    %v314 = vld [vmem:[#allocation5 + $0x2c8] sm:$0xff]
    %v315 = vld [vmem:[#allocation5 + $0x2d0] sm:$0xff]
    %v316 = vld [vmem:[#allocation5 + $0x2d8] sm:$0xff]
    %v317 = vld [vmem:[#allocation5 + $0x2e0] sm:$0xff]
    %v318 = vld [vmem:[#allocation5 + $0x2e8] sm:$0xff]
    %v319 = vld [vmem:[#allocation5 + $0x2f0] sm:$0xff]
    %v320 = vld [vmem:[#allocation5 + $0x2f8] sm:$0xff]
    %v321 = vld [vmem:[#allocation5 + $0x300] sm:$0xff]
    %v322 = vld [vmem:[#allocation5 + $0x308] sm:$0xff]
    %v323 = vld [vmem:[#allocation5 + $0x310] sm:$0xff]
    %v324 = vld [vmem:[#allocation5 + $0x318] sm:$0xff]
    %v325 = vld [vmem:[#allocation5 + $0x320] sm:$0xff]
    %v326 = vld [vmem:[#allocation5 + $0x328] sm:$0xff]
    %v327 = vld [vmem:[#allocation5 + $0x330] sm:$0xff]
    %v328 = vld [vmem:[#allocation5 + $0x338] sm:$0xff]
    %v329 = vld [vmem:[#allocation5 + $0x340] sm:$0xff]
    %v330 = vld [vmem:[#allocation5 + $0x348] sm:$0xff]
    %v331 = vld [vmem:[#allocation5 + $0x350] sm:$0xff]
    %v332 = vld [vmem:[#allocation5 + $0x358] sm:$0xff]
    %v333 = vld [vmem:[#allocation5 + $0x360] sm:$0xff]
    %v334 = vld [vmem:[#allocation5 + $0x368] sm:$0xff]
    %v335 = vld [vmem:[#allocation5 + $0x370] sm:$0xff]
    %v336 = vld [vmem:[#allocation5 + $0x378] sm:$0xff]
    %v337 = vld [vmem:[#allocation5 + $0x380] sm:$0xff]
    %v338 = vld [vmem:[#allocation5 + $0x388] sm:$0xff]
    %v339 = vld [vmem:[#allocation5 + $0x390] sm:$0xff]
    %v340 = vld [vmem:[#allocation5 + $0x398] sm:$0xff]
    %v341 = vld [vmem:[#allocation5 + $0x3a0] sm:$0xff]
    %v342 = vld [vmem:[#allocation5 + $0x3a8] sm:$0xff]
    %v343 = vld [vmem:[#allocation5 + $0x3b0] sm:$0xff]
    %v344 = vld [vmem:[#allocation5 + $0x3b8] sm:$0xff]
    %v345 = vld [vmem:[#allocation5 + $0x3c0] sm:$0xff]
    %v346 = vld [vmem:[#allocation5 + $0x3c8] sm:$0xff]
    %v347 = vld [vmem:[#allocation5 + $0x3d0] sm:$0xff]
    %v348 = vld [vmem:[#allocation5 + $0x3d8] sm:$0xff]
    %v349 = vld [vmem:[#allocation5 + $0x3e0] sm:$0xff]
    %v350 = vld [vmem:[#allocation5 + $0x3e8] sm:$0xff]
    %v351 = vld [vmem:[#allocation5 + $0x3f0] sm:$0xff]
    %v352 = vld [vmem:[#allocation5 + $0x3f8] sm:$0xff]
    %v353 = vld [vmem:[#allocation5 + $0x400] sm:$0xff]
    %v354 = vld [vmem:[#allocation5 + $0x408] sm:$0xff]
    %v355 = vld [vmem:[#allocation5 + $0x410] sm:$0xff]
    %v356 = vld [vmem:[#allocation5 + $0x418] sm:$0xff]
    %v357 = vld [vmem:[#allocation5 + $0x420] sm:$0xff]
    %v358 = vld [vmem:[#allocation5 + $0x428] sm:$0xff]
    %v359 = vld [vmem:[#allocation5 + $0x430] sm:$0xff]
    %v360 = vld [vmem:[#allocation5 + $0x438] sm:$0xff]
    %v361 = vld [vmem:[#allocation5 + $0x440] sm:$0xff]
    %v362 = vld [vmem:[#allocation5 + $0x448] sm:$0xff]
    %v363 = vld [vmem:[#allocation5 + $0x450] sm:$0xff]
    %v364 = vld [vmem:[#allocation5 + $0x458] sm:$0xff]
    %v365 = vld [vmem:[#allocation5 + $0x460] sm:$0xff]
    %v366 = vld [vmem:[#allocation5 + $0x468] sm:$0xff]
    %v367 = vld [vmem:[#allocation5 + $0x470] sm:$0xff]
    %v368 = vld [vmem:[#allocation5 + $0x478] sm:$0xff]
    %v369 = vld [vmem:[#allocation5 + $0x480] sm:$0xff]
    %v370 = vld [vmem:[#allocation5 + $0x488] sm:$0xff]
    %v371 = vld [vmem:[#allocation5 + $0x490] sm:$0xff]
    %v372 = vld [vmem:[#allocation5 + $0x498] sm:$0xff]
    %v373 = vld [vmem:[#allocation5 + $0x4a0] sm:$0xff]
    %v374 = vld [vmem:[#allocation5 + $0x4a8] sm:$0xff]
    %v375 = vld [vmem:[#allocation5 + $0x4b0] sm:$0xff]
    %v376 = vld [vmem:[#allocation5 + $0x4b8] sm:$0xff]
    %v377 = vld [vmem:[#allocation5 + $0x4c0] sm:$0xff]
    %v378 = vld [vmem:[#allocation5 + $0x4c8] sm:$0xff]
    %v379 = vld [vmem:[#allocation5 + $0x4d0] sm:$0xff]
    %v380 = vld [vmem:[#allocation5 + $0x4d8] sm:$0xff]
    %v381 = vld [vmem:[#allocation5 + $0x4e0] sm:$0xff]
    %v382 = vld [vmem:[#allocation5 + $0x4e8] sm:$0xff]
    %v383 = vld [vmem:[#allocation5 + $0x4f0] sm:$0xff]
    %v384 = vld [vmem:[#allocation5 + $0x4f8] sm:$0xff]
    %v385 = vld [vmem:[#allocation5 + $0x500] sm:$0xff]
    %v386 = vld [vmem:[#allocation5 + $0x508] sm:$0xff]
    %v387 = vld [vmem:[#allocation5 + $0x510] sm:$0xff]
    %v388 = vld [vmem:[#allocation5 + $0x518] sm:$0xff]
    %v389 = vld [vmem:[#allocation5 + $0x520] sm:$0xff]
    %v390 = vld [vmem:[#allocation5 + $0x528] sm:$0xff]
    %v391 = vld [vmem:[#allocation5 + $0x530] sm:$0xff]
    %v392 = vld [vmem:[#allocation5 + $0x538] sm:$0xff]
    %v393 = vld [vmem:[#allocation5 + $0x540] sm:$0xff]
    %v394 = vld [vmem:[#allocation5 + $0x548] sm:$0xff]
    %v395 = vld [vmem:[#allocation5 + $0x550] sm:$0xff]
    %v396 = vld [vmem:[#allocation5 + $0x558] sm:$0xff]
    %v397 = vld [vmem:[#allocation5 + $0x560] sm:$0xff]
    %v398 = vld [vmem:[#allocation5 + $0x568] sm:$0xff]
    %v399 = vld [vmem:[#allocation5 + $0x570] sm:$0xff]
    %v400 = vld [vmem:[#allocation5 + $0x578] sm:$0xff]
    %v401 = vld [vmem:[#allocation5 + $0x580] sm:$0xff]
    %v402 = vld [vmem:[#allocation5 + $0x588] sm:$0xff]
    %v403 = vld [vmem:[#allocation5 + $0x590] sm:$0xff]
    %v404 = vld [vmem:[#allocation5 + $0x598] sm:$0xff]
    %v405 = vld [vmem:[#allocation5 + $0x5a0] sm:$0xff]
    %v406 = vld [vmem:[#allocation5 + $0x5a8] sm:$0xff]
    %v407 = vld [vmem:[#allocation5 + $0x5b0] sm:$0xff]
    %v408 = vld [vmem:[#allocation5 + $0x5b8] sm:$0xff]
    %v409 = vld [vmem:[#allocation5 + $0x5c0] sm:$0xff]
    %v410 = vld [vmem:[#allocation5 + $0x5c8] sm:$0xff]
    %v411 = vld [vmem:[#allocation5 + $0x5d0] sm:$0xff]
    %v412 = vld [vmem:[#allocation5 + $0x5d8] sm:$0xff]
    %v413 = vld [vmem:[#allocation5 + $0x5e0] sm:$0xff]
    %v414 = vld [vmem:[#allocation5 + $0x5e8] sm:$0xff]
    %v415 = vld [vmem:[#allocation5 + $0x5f0] sm:$0xff]
    %v416 = vld [vmem:[#allocation5 + $0x5f8] sm:$0xff]
    %v417 = vld [vmem:[#allocation5 + $0x600] sm:$0xff]
    %v418 = vld [vmem:[#allocation5 + $0x608] sm:$0xff]
    %v419 = vld [vmem:[#allocation5 + $0x610] sm:$0xff]
    %v420 = vld [vmem:[#allocation5 + $0x618] sm:$0xff]
    %v421 = vld [vmem:[#allocation5 + $0x620] sm:$0xff]
    %v422 = vld [vmem:[#allocation5 + $0x628] sm:$0xff]
    %v423 = vld [vmem:[#allocation5 + $0x630] sm:$0xff]
    %v424 = vld [vmem:[#allocation5 + $0x638] sm:$0xff]
    %v425 = vld [vmem:[#allocation5 + $0x640] sm:$0xff]
    %v426 = vld [vmem:[#allocation5 + $0x648] sm:$0xff]
    %v427 = vld [vmem:[#allocation5 + $0x650] sm:$0xff]
    %v428 = vld [vmem:[#allocation5 + $0x658] sm:$0xff]
    %v429 = vld [vmem:[#allocation5 + $0x660] sm:$0xff]
    %v430 = vld [vmem:[#allocation5 + $0x668] sm:$0xff]
    %v431 = vld [vmem:[#allocation5 + $0x670] sm:$0xff]
    %v432 = vld [vmem:[#allocation5 + $0x678] sm:$0xff]
    %v433 = vld [vmem:[#allocation5 + $0x680] sm:$0xff]
    %v434 = vld [vmem:[#allocation5 + $0x688] sm:$0xff]
    %v435 = vld [vmem:[#allocation5 + $0x690] sm:$0xff]
    %v436 = vld [vmem:[#allocation5 + $0x698] sm:$0xff]
    %v437 = vld [vmem:[#allocation5 + $0x6a0] sm:$0xff]
    %v438 = vld [vmem:[#allocation5 + $0x6a8] sm:$0xff]
    %v439 = vld [vmem:[#allocation5 + $0x6b0] sm:$0xff]
    %v440 = vld [vmem:[#allocation5 + $0x6b8] sm:$0xff]
    %v441 = vld [vmem:[#allocation5 + $0x6c0] sm:$0xff]
    %v442 = vld [vmem:[#allocation5 + $0x6c8] sm:$0xff]
    %v443 = vld [vmem:[#allocation5 + $0x6d0] sm:$0xff]
    %v444 = vld [vmem:[#allocation5 + $0x6d8] sm:$0xff]
    %v445 = vld [vmem:[#allocation5 + $0x6e0] sm:$0xff]
    %v446 = vld [vmem:[#allocation5 + $0x6e8] sm:$0xff]
    %v447 = vld [vmem:[#allocation5 + $0x6f0] sm:$0xff]
    %v448 = vld [vmem:[#allocation5 + $0x6f8] sm:$0xff]
    %v449 = vld [vmem:[#allocation5 + $0x700] sm:$0xff]
    %v450 = vld [vmem:[#allocation5 + $0x708] sm:$0xff]
    %v451 = vld [vmem:[#allocation5 + $0x710] sm:$0xff]
    %v452 = vld [vmem:[#allocation5 + $0x718] sm:$0xff]
    %v453 = vld [vmem:[#allocation5 + $0x720] sm:$0xff]
    %v454 = vld [vmem:[#allocation5 + $0x728] sm:$0xff]
    %v455 = vld [vmem:[#allocation5 + $0x730] sm:$0xff]
    %v456 = vld [vmem:[#allocation5 + $0x738] sm:$0xff]
    %v457 = vld [vmem:[#allocation5 + $0x740] sm:$0xff]
    %v458 = vld [vmem:[#allocation5 + $0x748] sm:$0xff]
    %v459 = vld [vmem:[#allocation5 + $0x750] sm:$0xff]
    %v460 = vld [vmem:[#allocation5 + $0x758] sm:$0xff]
    %v461 = vld [vmem:[#allocation5 + $0x760] sm:$0xff]
    %v462 = vld [vmem:[#allocation5 + $0x768] sm:$0xff]
    %v463 = vld [vmem:[#allocation5 + $0x770] sm:$0xff]
    %v464 = vld [vmem:[#allocation5 + $0x778] sm:$0xff]
    %v465 = vld [vmem:[#allocation5 + $0x780] sm:$0xff]
    %v466 = vld [vmem:[#allocation5 + $0x788] sm:$0xff]
    %v467 = vld [vmem:[#allocation5 + $0x790] sm:$0xff]
    %v468 = vld [vmem:[#allocation5 + $0x798] sm:$0xff]
    %v469 = vld [vmem:[#allocation5 + $0x7a0] sm:$0xff]
    %v470 = vld [vmem:[#allocation5 + $0x7a8] sm:$0xff]
    %v471 = vld [vmem:[#allocation5 + $0x7b0] sm:$0xff]
    %v472 = vld [vmem:[#allocation5 + $0x7b8] sm:$0xff]
    %v473 = vld [vmem:[#allocation5 + $0x7c0] sm:$0xff]
    %v474 = vld [vmem:[#allocation5 + $0x7c8] sm:$0xff]
    %v475 = vld [vmem:[#allocation5 + $0x7d0] sm:$0xff]
    %v476 = vld [vmem:[#allocation5 + $0x7d8] sm:$0xff]
    %v477 = vld [vmem:[#allocation5 + $0x7e0] sm:$0xff]
    %v478 = vld [vmem:[#allocation5 + $0x7e8] sm:$0xff]
    %v479 = vld [vmem:[#allocation5 + $0x7f0] sm:$0xff]
    %v480 = vld [vmem:[#allocation5 + $0x7f8] sm:$0xff]
    %v481 = vld [vmem:[#allocation5 + $0x800] sm:$0xff]
    %v482 = vld [vmem:[#allocation5 + $0x808] sm:$0xff]
    %v483 = vld [vmem:[#allocation5 + $0x810] sm:$0xff]
    %v484 = vld [vmem:[#allocation5 + $0x818] sm:$0xff]
    %v485 = vld [vmem:[#allocation5 + $0x820] sm:$0xff]
    %v486 = vld [vmem:[#allocation5 + $0x828] sm:$0xff]
    %v487 = vld [vmem:[#allocation5 + $0x830] sm:$0xff]
    %v488 = vld [vmem:[#allocation5 + $0x838] sm:$0xff]
    %v489 = vld [vmem:[#allocation5 + $0x840] sm:$0xff]
    %v490 = vld [vmem:[#allocation5 + $0x848] sm:$0xff]
    %v491 = vld [vmem:[#allocation5 + $0x850] sm:$0xff]
    %v492 = vld [vmem:[#allocation5 + $0x858] sm:$0xff]
    %v493 = vld [vmem:[#allocation5 + $0x860] sm:$0xff]
    %v494 = vld [vmem:[#allocation5 + $0x868] sm:$0xff]
    %v495 = vld [vmem:[#allocation5 + $0x870] sm:$0xff]
    %v496 = vld [vmem:[#allocation5 + $0x878] sm:$0xff]
    %v497 = vld [vmem:[#allocation5 + $0x880] sm:$0xff]
    %v498 = vld [vmem:[#allocation5 + $0x888] sm:$0xff]
    %v499 = vld [vmem:[#allocation5 + $0x890] sm:$0xff]
    %v500 = vld [vmem:[#allocation5 + $0x898] sm:$0xff]
    %v501 = vld [vmem:[#allocation5 + $0x8a0] sm:$0xff]
    %v502 = vld [vmem:[#allocation5 + $0x8a8] sm:$0xff]
    %v503 = vld [vmem:[#allocation5 + $0x8b0] sm:$0xff]
    %v504 = vld [vmem:[#allocation5 + $0x8b8] sm:$0xff]
    %v505 = vld [vmem:[#allocation5 + $0x8c0] sm:$0xff]
    %v506 = vld [vmem:[#allocation5 + $0x8c8] sm:$0xff]
    %v507 = vld [vmem:[#allocation5 + $0x8d0] sm:$0xff]
    %v508 = vld [vmem:[#allocation5 + $0x8d8] sm:$0xff]
    %v509 = vld [vmem:[#allocation5 + $0x8e0] sm:$0xff]
    %v510 = vld [vmem:[#allocation5 + $0x8e8] sm:$0xff]
    %v511 = vld [vmem:[#allocation5 + $0x8f0] sm:$0xff]
    %v512 = vld [vmem:[#allocation5 + $0x8f8] sm:$0xff]
    %v513 = vld [vmem:[#allocation5 + $0x900] sm:$0xff]
    %v514 = vld [vmem:[#allocation5 + $0x908] sm:$0xff]
    %v515 = vld [vmem:[#allocation5 + $0x910] sm:$0xff]
    %v516 = vld [vmem:[#allocation5 + $0x918] sm:$0xff]
    %v517 = vld [vmem:[#allocation5 + $0x920] sm:$0xff]
    %v518 = vld [vmem:[#allocation5 + $0x928] sm:$0xff]
    %v519 = vld [vmem:[#allocation5 + $0x930] sm:$0xff]
    %v520 = vld [vmem:[#allocation5 + $0x938] sm:$0xff]
    %v521 = vld [vmem:[#allocation5 + $0x940] sm:$0xff]
    %v522 = vld [vmem:[#allocation5 + $0x948] sm:$0xff]
    %v523 = vld [vmem:[#allocation5 + $0x950] sm:$0xff]
    %v524 = vld [vmem:[#allocation5 + $0x958] sm:$0xff]
    %v525 = vld [vmem:[#allocation5 + $0x960] sm:$0xff]
    %v526 = vld [vmem:[#allocation5 + $0x968] sm:$0xff]
    %v527 = vld [vmem:[#allocation5 + $0x970] sm:$0xff]
    %v528 = vld [vmem:[#allocation5 + $0x978] sm:$0xff]
    %v529 = vld [vmem:[#allocation5 + $0x980] sm:$0xff]
    %v530 = vld [vmem:[#allocation5 + $0x988] sm:$0xff]
    %v531 = vld [vmem:[#allocation5 + $0x990] sm:$0xff]
    %v532 = vld [vmem:[#allocation5 + $0x998] sm:$0xff]
    %v533 = vld [vmem:[#allocation5 + $0x9a0] sm:$0xff]
    %v534 = vld [vmem:[#allocation5 + $0x9a8] sm:$0xff]
    %v535 = vld [vmem:[#allocation5 + $0x9b0] sm:$0xff]
    %v536 = vld [vmem:[#allocation5 + $0x9b8] sm:$0xff]
    %v537 = vld [vmem:[#allocation5 + $0x9c0] sm:$0xff]
    %v538 = vld [vmem:[#allocation5 + $0x9c8] sm:$0xff]
    %v539 = vld [vmem:[#allocation5 + $0x9d0] sm:$0xff]
    %v540 = vld [vmem:[#allocation5 + $0x9d8] sm:$0xff]
    %v541 = vld [vmem:[#allocation5 + $0x9e0] sm:$0xff]
    %v542 = vld [vmem:[#allocation5 + $0x9e8] sm:$0xff]
    %v543 = vld [vmem:[#allocation5 + $0x9f0] sm:$0xff]
    %v544 = vld [vmem:[#allocation5 + $0x9f8] sm:$0xff]
    %v545 = vld [vmem:[#allocation5 + $0xa00] sm:$0xff]
    %v546 = vld [vmem:[#allocation5 + $0xa08] sm:$0xff]
    %v547 = vld [vmem:[#allocation5 + $0xa10] sm:$0xff]
    %v548 = vld [vmem:[#allocation5 + $0xa18] sm:$0xff]
    %v549 = vld [vmem:[#allocation5 + $0xa20] sm:$0xff]
    %v550 = vld [vmem:[#allocation5 + $0xa28] sm:$0xff]
    %v551 = vld [vmem:[#allocation5 + $0xa30] sm:$0xff]
    %v552 = vld [vmem:[#allocation5 + $0xa38] sm:$0xff]
    %v553 = vld [vmem:[#allocation5 + $0xa40] sm:$0xff]
    %v554 = vld [vmem:[#allocation5 + $0xa48] sm:$0xff]
    %v555 = vld [vmem:[#allocation5 + $0xa50] sm:$0xff]
    %v556 = vld [vmem:[#allocation5 + $0xa58] sm:$0xff]
    %v557 = vld [vmem:[#allocation5 + $0xa60] sm:$0xff]
    %v558 = vld [vmem:[#allocation5 + $0xa68] sm:$0xff]
    %v559 = vld [vmem:[#allocation5 + $0xa70] sm:$0xff]
    %v560 = vld [vmem:[#allocation5 + $0xa78] sm:$0xff]
    %v561 = vld [vmem:[#allocation5 + $0xa80] sm:$0xff]
    %v562 = vld [vmem:[#allocation5 + $0xa88] sm:$0xff]
    %v563 = vld [vmem:[#allocation5 + $0xa90] sm:$0xff]
    %v564 = vld [vmem:[#allocation5 + $0xa98] sm:$0xff]
    %v565 = vld [vmem:[#allocation5 + $0xaa0] sm:$0xff]
    %v566 = vld [vmem:[#allocation5 + $0xaa8] sm:$0xff]
    %v567 = vld [vmem:[#allocation5 + $0xab0] sm:$0xff]
    %v568 = vld [vmem:[#allocation5 + $0xab8] sm:$0xff]
    %v569 = vld [vmem:[#allocation5 + $0xac0] sm:$0xff]
    %v570 = vld [vmem:[#allocation5 + $0xac8] sm:$0xff]
    %v571 = vld [vmem:[#allocation5 + $0xad0] sm:$0xff]
    %v572 = vld [vmem:[#allocation5 + $0xad8] sm:$0xff]
    %v573 = vld [vmem:[#allocation5 + $0xae0] sm:$0xff]
    %v574 = vld [vmem:[#allocation5 + $0xae8] sm:$0xff]
    %v575 = vld [vmem:[#allocation5 + $0xaf0] sm:$0xff]
    %v576 = vld [vmem:[#allocation5 + $0xaf8] sm:$0xff]
    %v577 = vld [vmem:[#allocation5 + $0xb00] sm:$0xff]
    %v578 = vld [vmem:[#allocation5 + $0xb08] sm:$0xff]
    %v579 = vld [vmem:[#allocation5 + $0xb10] sm:$0xff]
    %v580 = vld [vmem:[#allocation5 + $0xb18] sm:$0xff]
    %v581 = vld [vmem:[#allocation5 + $0xb20] sm:$0xff]
    %v582 = vld [vmem:[#allocation5 + $0xb28] sm:$0xff]
    %v583 = vld [vmem:[#allocation5 + $0xb30] sm:$0xff]
    %v584 = vld [vmem:[#allocation5 + $0xb38] sm:$0xff]
    %v585 = vld [vmem:[#allocation5 + $0xb40] sm:$0xff]
    %v586 = vld [vmem:[#allocation5 + $0xb48] sm:$0xff]
    %v587 = vld [vmem:[#allocation5 + $0xb50] sm:$0xff]
    %v588 = vld [vmem:[#allocation5 + $0xb58] sm:$0xff]
    %v589 = vld [vmem:[#allocation5 + $0xb60] sm:$0xff]
    %v590 = vld [vmem:[#allocation5 + $0xb68] sm:$0xff]
    %v591 = vld [vmem:[#allocation5 + $0xb70] sm:$0xff]
    %v592 = vld [vmem:[#allocation5 + $0xb78] sm:$0xff]
    %v593 = vld [vmem:[#allocation5 + $0xb80] sm:$0xff]
    %v594 = vld [vmem:[#allocation5 + $0xb88] sm:$0xff]
    %v595 = vld [vmem:[#allocation5 + $0xb90] sm:$0xff]
    %v596 = vld [vmem:[#allocation5 + $0xb98] sm:$0xff]
    %v597 = vld [vmem:[#allocation5 + $0xba0] sm:$0xff]
    %v598 = vld [vmem:[#allocation5 + $0xba8] sm:$0xff]
    %v599 = vld [vmem:[#allocation5 + $0xbb0] sm:$0xff]
    %v600 = vld [vmem:[#allocation5 + $0xbb8] sm:$0xff]
    %v601 = vld [vmem:[#allocation5 + $0xbc0] sm:$0xff]
    %v602 = vld [vmem:[#allocation5 + $0xbc8] sm:$0xff]
    %v603 = vld [vmem:[#allocation5 + $0xbd0] sm:$0xff]
    %v604 = vld [vmem:[#allocation5 + $0xbd8] sm:$0xff]
    %v605 = vld [vmem:[#allocation5 + $0xbe0] sm:$0xff]
    %v606 = vld [vmem:[#allocation5 + $0xbe8] sm:$0xff]
    %v607 = vld [vmem:[#allocation5 + $0xbf0] sm:$0xff]
    %v608 = vld [vmem:[#allocation5 + $0xbf8] sm:$0xff]
    %v609 = vld [vmem:[#allocation5 + $0xc00] sm:$0xff]
    %v610 = vld [vmem:[#allocation5 + $0xc08] sm:$0xff]
    %v611 = vld [vmem:[#allocation5 + $0xc10] sm:$0xff]
    %v612 = vld [vmem:[#allocation5 + $0xc18] sm:$0xff]
    %v613 = vld [vmem:[#allocation5 + $0xc20] sm:$0xff]
    %v614 = vld [vmem:[#allocation5 + $0xc28] sm:$0xff]
    %v615 = vld [vmem:[#allocation5 + $0xc30] sm:$0xff]
    %v616 = vld [vmem:[#allocation5 + $0xc38] sm:$0xff]
    %v617 = vld [vmem:[#allocation5 + $0xc40] sm:$0xff]
    %v618 = vld [vmem:[#allocation5 + $0xc48] sm:$0xff]
    %v619 = vld [vmem:[#allocation5 + $0xc50] sm:$0xff]
    %v620 = vld [vmem:[#allocation5 + $0xc58] sm:$0xff]
    %v621 = vld [vmem:[#allocation5 + $0xc60] sm:$0xff]
    %v622 = vld [vmem:[#allocation5 + $0xc68] sm:$0xff]
    %v623 = vld [vmem:[#allocation5 + $0xc70] sm:$0xff]
    %v624 = vld [vmem:[#allocation5 + $0xc78] sm:$0xff]
    %v625 = vld [vmem:[#allocation5 + $0xc80] sm:$0xff]
    %v626 = vld [vmem:[#allocation5 + $0xc88] sm:$0xff]
    %v627 = vld [vmem:[#allocation5 + $0xc90] sm:$0xff]
    %v628 = vld [vmem:[#allocation5 + $0xc98] sm:$0xff]
    %v629 = vld [vmem:[#allocation5 + $0xca0] sm:$0xff]
    %v630 = vld [vmem:[#allocation5 + $0xca8] sm:$0xff]
    %v631 = vld [vmem:[#allocation5 + $0xcb0] sm:$0xff]
    %v632 = vld [vmem:[#allocation5 + $0xcb8] sm:$0xff]
    %v633 = vld [vmem:[#allocation5 + $0xcc0] sm:$0xff]
    %v634 = vld [vmem:[#allocation5 + $0xcc8] sm:$0xff]
    %v635 = vld [vmem:[#allocation5 + $0xcd0] sm:$0xff]
    %v636 = vld [vmem:[#allocation5 + $0xcd8] sm:$0xff]
    %v637 = vld [vmem:[#allocation5 + $0xce0] sm:$0xff]
    %v638 = vld [vmem:[#allocation5 + $0xce8] sm:$0xff]
    %v639 = vld [vmem:[#allocation5 + $0xcf0] sm:$0xff]
    %v640 = vld [vmem:[#allocation5 + $0xcf8] sm:$0xff]
    %v641 = vld [vmem:[#allocation5 + $0xd00] sm:$0xff]
    %v642 = vld [vmem:[#allocation5 + $0xd08] sm:$0xff]
    %v643 = vld [vmem:[#allocation5 + $0xd10] sm:$0xff]
    %v644 = vld [vmem:[#allocation5 + $0xd18] sm:$0xff]
    %v645 = vld [vmem:[#allocation5 + $0xd20] sm:$0xff]
    %v646 = vld [vmem:[#allocation5 + $0xd28] sm:$0xff]
    %v647 = vld [vmem:[#allocation5 + $0xd30] sm:$0xff]
    %v648 = vld [vmem:[#allocation5 + $0xd38] sm:$0xff]
    %v649 = vld [vmem:[#allocation5 + $0xd40] sm:$0xff]
    %v650 = vld [vmem:[#allocation5 + $0xd48] sm:$0xff]
    %v651 = vld [vmem:[#allocation5 + $0xd50] sm:$0xff]
    %v652 = vld [vmem:[#allocation5 + $0xd58] sm:$0xff]
    %v653 = vld [vmem:[#allocation5 + $0xd60] sm:$0xff]
    %v654 = vld [vmem:[#allocation5 + $0xd68] sm:$0xff]
    %v655 = vld [vmem:[#allocation5 + $0xd70] sm:$0xff]
    %v656 = vld [vmem:[#allocation5 + $0xd78] sm:$0xff]
    %v657 = vld [vmem:[#allocation5 + $0xd80] sm:$0xff]
    %v658 = vld [vmem:[#allocation5 + $0xd88] sm:$0xff]
    %v659 = vld [vmem:[#allocation5 + $0xd90] sm:$0xff]
    %v660 = vld [vmem:[#allocation5 + $0xd98] sm:$0xff]
    %v661 = vld [vmem:[#allocation5 + $0xda0] sm:$0xff]
    %v662 = vld [vmem:[#allocation5 + $0xda8] sm:$0xff]
    %v663 = vld [vmem:[#allocation5 + $0xdb0] sm:$0xff]
    %v664 = vld [vmem:[#allocation5 + $0xdb8] sm:$0xff]
    %v665 = vld [vmem:[#allocation5 + $0xdc0] sm:$0xff]
    %v666 = vld [vmem:[#allocation5 + $0xdc8] sm:$0xff]
    %v667 = vld [vmem:[#allocation5 + $0xdd0] sm:$0xff]
    %v668 = vld [vmem:[#allocation5 + $0xdd8] sm:$0xff]
    %v669 = vld [vmem:[#allocation5 + $0xde0] sm:$0xff]
    %v670 = vld [vmem:[#allocation5 + $0xde8] sm:$0xff]
    %v671 = vld [vmem:[#allocation5 + $0xdf0] sm:$0xff]
    %v672 = vld [vmem:[#allocation5 + $0xdf8] sm:$0xff]
    %v673 = vld [vmem:[#allocation5 + $0xe00] sm:$0xff]
    %v674 = vld [vmem:[#allocation5 + $0xe08] sm:$0xff]
    %v675 = vld [vmem:[#allocation5 + $0xe10] sm:$0xff]
    %v676 = vld [vmem:[#allocation5 + $0xe18] sm:$0xff]
    %v677 = vld [vmem:[#allocation5 + $0xe20] sm:$0xff]
    %v678 = vld [vmem:[#allocation5 + $0xe28] sm:$0xff]
    %v679 = vld [vmem:[#allocation5 + $0xe30] sm:$0xff]
    %v680 = vld [vmem:[#allocation5 + $0xe38] sm:$0xff]
    %v681 = vld [vmem:[#allocation5 + $0xe40] sm:$0xff]
    %v682 = vld [vmem:[#allocation5 + $0xe48] sm:$0xff]
    %v683 = vld [vmem:[#allocation5 + $0xe50] sm:$0xff]
    %v684 = vld [vmem:[#allocation5 + $0xe58] sm:$0xff]
    %v685 = vld [vmem:[#allocation5 + $0xe60] sm:$0xff]
    %v686 = vld [vmem:[#allocation5 + $0xe68] sm:$0xff]
    %v687 = vld [vmem:[#allocation5 + $0xe70] sm:$0xff]
    %v688 = vld [vmem:[#allocation5 + $0xe78] sm:$0xff]
    %v689 = vld [vmem:[#allocation5 + $0xe80] sm:$0xff]
    %v690 = vld [vmem:[#allocation5 + $0xe88] sm:$0xff]
    %v691 = vld [vmem:[#allocation5 + $0xe90] sm:$0xff]
    %v692 = vld [vmem:[#allocation5 + $0xe98] sm:$0xff]
    %v693 = vld [vmem:[#allocation5 + $0xea0] sm:$0xff]
    %v694 = vld [vmem:[#allocation5 + $0xea8] sm:$0xff]
    %v695 = vld [vmem:[#allocation5 + $0xeb0] sm:$0xff]
    %v696 = vld [vmem:[#allocation5 + $0xeb8] sm:$0xff]
    %v697 = vld [vmem:[#allocation5 + $0xec0] sm:$0xff]
    %v698 = vld [vmem:[#allocation5 + $0xec8] sm:$0xff]
    %v699 = vld [vmem:[#allocation5 + $0xed0] sm:$0xff]
    %v700 = vld [vmem:[#allocation5 + $0xed8] sm:$0xff]
    %v701 = vld [vmem:[#allocation5 + $0xee0] sm:$0xff]
    %v702 = vld [vmem:[#allocation5 + $0xee8] sm:$0xff]
    %v703 = vld [vmem:[#allocation5 + $0xef0] sm:$0xff]
    %v704 = vld [vmem:[#allocation5 + $0xef8] sm:$0xff]
    %v705 = vld [vmem:[#allocation5 + $0xf00] sm:$0xff]
    %v706 = vld [vmem:[#allocation5 + $0xf08] sm:$0xff]
    %v707 = vld [vmem:[#allocation5 + $0xf10] sm:$0xff]
    %v708 = vld [vmem:[#allocation5 + $0xf18] sm:$0xff]
    %v709 = vld [vmem:[#allocation5 + $0xf20] sm:$0xff]
    %v710 = vld [vmem:[#allocation5 + $0xf28] sm:$0xff]
    %v711 = vld [vmem:[#allocation5 + $0xf30] sm:$0xff]
    %v712 = vld [vmem:[#allocation5 + $0xf38] sm:$0xff]
    %v713 = vld [vmem:[#allocation5 + $0xf40] sm:$0xff]
    %v714 = vld [vmem:[#allocation5 + $0xf48] sm:$0xff]
    %v715 = vld [vmem:[#allocation5 + $0xf50] sm:$0xff]
    %v716 = vld [vmem:[#allocation5 + $0xf58] sm:$0xff]
    %v717 = vld [vmem:[#allocation5 + $0xf60] sm:$0xff]
    %v718 = vld [vmem:[#allocation5 + $0xf68] sm:$0xff]
    %v719 = vld [vmem:[#allocation5 + $0xf70] sm:$0xff]
    %v720 = vld [vmem:[#allocation5 + $0xf78] sm:$0xff]
    %v721 = vld [vmem:[#allocation5 + $0xf80] sm:$0xff]
    %v722 = vld [vmem:[#allocation5 + $0xf88] sm:$0xff]
    %v723 = vld [vmem:[#allocation5 + $0xf90] sm:$0xff]
    %v724 = vld [vmem:[#allocation5 + $0xf98] sm:$0xff]
    %v725 = vld [vmem:[#allocation5 + $0xfa0] sm:$0xff]
    %v726 = vld [vmem:[#allocation5 + $0xfa8] sm:$0xff]
    %v727 = vld [vmem:[#allocation5 + $0xfb0] sm:$0xff]
    %v728 = vld [vmem:[#allocation5 + $0xfb8] sm:$0xff]
    %v729 = vld [vmem:[#allocation5 + $0xfc0] sm:$0xff]
    %v730 = vld [vmem:[#allocation5 + $0xfc8] sm:$0xff]
    %v731 = vld [vmem:[#allocation5 + $0xfd0] sm:$0xff]
    %v732 = vld [vmem:[#allocation5 + $0xfd8] sm:$0xff]
    %v733 = vld [vmem:[#allocation5 + $0xfe0] sm:$0xff]
    %v734 = vld [vmem:[#allocation5 + $0xfe8] sm:$0xff]
    %v735 = vld [vmem:[#allocation5 + $0xff0] sm:$0xff]
    %v736 = vld [vmem:[#allocation5 + $0xff8] sm:$0xff]
    %v737 = vld [vmem:[#allocation5 + $0x1000] sm:$0xff]
    %v738 = vld [vmem:[#allocation5 + $0x1008] sm:$0xff]
    %v739 = vld [vmem:[#allocation5 + $0x1010] sm:$0xff]
    %v740 = vld [vmem:[#allocation5 + $0x1018] sm:$0xff]
    %v741 = vld [vmem:[#allocation5 + $0x1020] sm:$0xff]
    %v742 = vld [vmem:[#allocation5 + $0x1028] sm:$0xff]
    %v743 = vld [vmem:[#allocation5 + $0x1030] sm:$0xff]
    %v744 = vld [vmem:[#allocation5 + $0x1038] sm:$0xff]
    %v745 = vld [vmem:[#allocation5 + $0x1040] sm:$0xff]
    %v746 = vld [vmem:[#allocation5 + $0x1048] sm:$0xff]
    %v747 = vld [vmem:[#allocation5 + $0x1050] sm:$0xff]
    %v748 = vld [vmem:[#allocation5 + $0x1058] sm:$0xff]
    %v749 = vld [vmem:[#allocation5 + $0x1060] sm:$0xff]
    %v750 = vld [vmem:[#allocation5 + $0x1068] sm:$0xff]
    %v751 = vld [vmem:[#allocation5 + $0x1070] sm:$0xff]
    %v752 = vld [vmem:[#allocation5 + $0x1078] sm:$0xff]
    %v753 = vld [vmem:[#allocation5 + $0x1080] sm:$0xff]
    %v754 = vld [vmem:[#allocation5 + $0x1088] sm:$0xff]
    %v755 = vld [vmem:[#allocation5 + $0x1090] sm:$0xff]
    %v756 = vld [vmem:[#allocation5 + $0x1098] sm:$0xff]
    %v757 = vld [vmem:[#allocation5 + $0x10a0] sm:$0xff]
    %v758 = vld [vmem:[#allocation5 + $0x10a8] sm:$0xff]
    %v759 = vld [vmem:[#allocation5 + $0x10b0] sm:$0xff]
    %v760 = vld [vmem:[#allocation5 + $0x10b8] sm:$0xff]
    %v761 = vld [vmem:[#allocation5 + $0x10c0] sm:$0xff]
    %v762 = vld [vmem:[#allocation5 + $0x10c8] sm:$0xff]
    %v763 = vld [vmem:[#allocation5 + $0x10d0] sm:$0xff]
    %v764 = vld [vmem:[#allocation5 + $0x10d8] sm:$0xff]
    %v765 = vld [vmem:[#allocation5 + $0x10e0] sm:$0xff]
    %v766 = vld [vmem:[#allocation5 + $0x10e8] sm:$0xff]
    %v767 = vld [vmem:[#allocation5 + $0x10f0] sm:$0xff]
    %v768 = vld [vmem:[#allocation5 + $0x10f8] sm:$0xff]
    %v769 = vld [vmem:[#allocation5 + $0x1100] sm:$0xff]
    %v770 = vld [vmem:[#allocation5 + $0x1108] sm:$0xff]
    %v771 = vld [vmem:[#allocation5 + $0x1110] sm:$0xff]
    %v772 = vld [vmem:[#allocation5 + $0x1118] sm:$0xff]
    %v773 = vld [vmem:[#allocation5 + $0x1120] sm:$0xff]
    %v774 = vld [vmem:[#allocation5 + $0x1128] sm:$0xff]
    %v775 = vld [vmem:[#allocation5 + $0x1130] sm:$0xff]
    %v776 = vld [vmem:[#allocation5 + $0x1138] sm:$0xff]
    %v777 = vld [vmem:[#allocation5 + $0x1140] sm:$0xff]
    %v778 = vld [vmem:[#allocation5 + $0x1148] sm:$0xff]
    %v779 = vld [vmem:[#allocation5 + $0x1150] sm:$0xff]
    %v780 = vld [vmem:[#allocation5 + $0x1158] sm:$0xff]
    %v781 = vld [vmem:[#allocation5 + $0x1160] sm:$0xff]
    %v782 = vld [vmem:[#allocation5 + $0x1168] sm:$0xff]
    %v783 = vld [vmem:[#allocation5 + $0x1170] sm:$0xff]
    %v784 = vld [vmem:[#allocation5 + $0x1178] sm:$0xff]
    %v785 = vld [vmem:[#allocation5 + $0x1180] sm:$0xff]
    %v786 = vld [vmem:[#allocation5 + $0x1188] sm:$0xff]
    %v787 = vld [vmem:[#allocation5 + $0x1190] sm:$0xff]
    %v788 = vld [vmem:[#allocation5 + $0x1198] sm:$0xff]
    %v789 = vld [vmem:[#allocation5 + $0x11a0] sm:$0xff]
    %v790 = vld [vmem:[#allocation5 + $0x11a8] sm:$0xff]
    %v791 = vld [vmem:[#allocation5 + $0x11b0] sm:$0xff]
    %v792 = vld [vmem:[#allocation5 + $0x11b8] sm:$0xff]
    %v793 = vld [vmem:[#allocation5 + $0x11c0] sm:$0xff]
    %v794 = vld [vmem:[#allocation5 + $0x11c8] sm:$0xff]
    %v795 = vld [vmem:[#allocation5 + $0x11d0] sm:$0xff]
    %v796 = vld [vmem:[#allocation5 + $0x11d8] sm:$0xff]
    %v797 = vld [vmem:[#allocation5 + $0x11e0] sm:$0xff]
    %v798 = vld [vmem:[#allocation5 + $0x11e8] sm:$0xff]
    %v799 = vld [vmem:[#allocation5 + $0x11f0] sm:$0xff]
    %v800 = vld [vmem:[#allocation5 + $0x11f8] sm:$0xff]
    %v801 = vld [vmem:[#allocation7] sm:$0x3f]
    %v803 = vlaneseq
    %v804 = vshrl.u32 %v803, 7
    %v805 = vsub.s32 0, %v804
    %v806 = vrot.slane %v801, %v805
    %v807 = vlaneseq
    %v808 = vshrl.u32 %v807, 7
    %v809 = vsub.s32 1, %v808
    %v810 = vrot.slane %v801, %v809
    %v811 = vlaneseq
    %v812 = vshrl.u32 %v811, 7
    %v813 = vsub.s32 2, %v812
    %v814 = vrot.slane %v801, %v813
    %v815 = vlaneseq
    %v816 = vshrl.u32 %v815, 7
    %v817 = vsub.s32 3, %v816
    %v818 = vrot.slane %v801, %v817
    %v819 = vlaneseq
    %v820 = vshrl.u32 %v819, 7
    %v821 = vsub.s32 4, %v820
    %v822 = vrot.slane %v801, %v821
    %v823 = vlaneseq
    %v824 = vshrl.u32 %v823, 7
    %v825 = vsub.s32 5, %v824
    %v826 = vrot.slane %v801, %v825
    %833 = vmatprep.subr.mxu0 %v226
    %834 = vmatpush1.msra.mxu0 %v225
    %835 = vmatprep.subr.mxu0 %v232
    %836 = vmatpush1.msra.mxu0 %v231
    %837 = vmatprep.subr.mxu0 %v238
    %838 = vmatpush1.msra.mxu0 %v237
    %839 = vmatprep.subr.mxu0 %v244
    %840 = vmatpush1.msra.mxu0 %v243
    %841 = vmatprep.subr.mxu0 %v250
    %842 = vmatpush1.msra.mxu0 %v249
    %843 = vmatprep.subr.mxu0 %v256
    %844 = vmatpush1.msra.mxu0 %v255
    %845 = vmatprep.subr.mxu0 %v262
    %846 = vmatpush1.msra.mxu0 %v261
    %847 = vmatprep.subr.mxu0 %v268
    %848 = vmatpush1.msra.mxu0 %v267
    %849 = vmatprep.subr.mxu0 %v274
    %850 = vmatpush1.msra.mxu0 %v273
    %851 = vmatprep.subr.mxu0 %v280
    %852 = vmatpush1.msra.mxu0 %v279
    %853 = vmatprep.subr.mxu0 %v286
    %854 = vmatpush1.msra.mxu0 %v285
    %855 = vmatprep.subr.mxu0 %v292
    %856 = vmatpush1.msra.mxu0 %v291
    %857 = vmatprep.subr.mxu0 %v298
    %858 = vmatpush1.msra.mxu0 %v297
    %859 = vmatprep.subr.mxu0 %v304
    %860 = vmatpush1.msra.mxu0 %v303
    %861 = vmatprep.subr.mxu0 %v310
    %862 = vmatpush1.msra.mxu0 %v309
    %863 = vmatprep.subr.mxu0 %v316
    %864 = vmatpush1.msra.mxu0 %v315
    %865 = vmatprep.subr.mxu0 %v322
    %866 = vmatpush1.msra.mxu0 %v321
    %867 = vmatprep.subr.mxu0 %v328
    %868 = vmatpush1.msra.mxu0 %v327
    %869 = vmatprep.subr.mxu0 %v334
    %870 = vmatpush1.msra.mxu0 %v333
    %871 = vmatprep.subr.mxu0 %v340
    %872 = vmatpush1.msra.mxu0 %v339
    %873 = vmatprep.subr.mxu0 %v346
    %874 = vmatpush1.msra.mxu0 %v345
    %875 = vmatprep.subr.mxu0 %v352
    %876 = vmatpush1.msra.mxu0 %v351
    %877 = vmatprep.subr.mxu0 %v358
    %878 = vmatpush1.msra.mxu0 %v357
    %879 = vmatprep.subr.mxu0 %v364
    %880 = vmatpush1.msra.mxu0 %v363
    %881 = vmatprep.subr.mxu0 %v370
    %882 = vmatpush1.msra.mxu0 %v369
    %883 = vmatprep.subr.mxu0 %v376
    %884 = vmatpush1.msra.mxu0 %v375
    %885 = vmatprep.subr.mxu0 %v382
    %886 = vmatpush1.msra.mxu0 %v381
    %887 = vmatprep.subr.mxu0 %v388
    %888 = vmatpush1.msra.mxu0 %v387
    %889 = vmatprep.subr.mxu0 %v394
    %890 = vmatpush1.msra.mxu0 %v393
    %891 = vmatprep.subr.mxu0 %v400
    %892 = vmatpush1.msra.mxu0 %v399
    %893 = vmatprep.subr.mxu0 %v406
    %894 = vmatpush1.msra.mxu0 %v405
    %895 = vmatprep.subr.mxu0 %v412
    %896 = vmatpush1.msra.mxu0 %v411
    %897 = vmatprep.mubr.f32.mxu0 %v220
    %898 = vmatmul.mubr.f32.gmra.mrb[0].mxu0 %v219
    %v899 = vpop.f32.mrb[0].mxu0
    %v900 = vadd.f32 %v806, %v899
    %v901 = vpop.f32.mrb[0].mxu0
    %v902 = vadd.f32 %v810, %v901
    %903 = vdwg.mxu0
    %904 = vmatprep.subr.mxu0 %v418
    %905 = vmatpush1.msra.mxu0 %v417
    %906 = vmatprep.subr.mxu0 %v424
    %907 = vmatpush1.msra.mxu0 %v423
    %908 = vmatprep.subr.mxu0 %v430
    %909 = vmatpush1.msra.mxu0 %v429
    %910 = vmatprep.subr.mxu0 %v436
    %911 = vmatpush1.msra.mxu0 %v435
    %912 = vmatprep.subr.mxu0 %v442
    %913 = vmatpush1.msra.mxu0 %v441
    %914 = vmatprep.subr.mxu0 %v448
    %915 = vmatpush1.msra.mxu0 %v447
    %916 = vmatprep.subr.mxu0 %v454
    %917 = vmatpush1.msra.mxu0 %v453
    %918 = vmatprep.subr.mxu0 %v460
    %919 = vmatpush1.msra.mxu0 %v459
    %920 = vmatprep.subr.mxu0 %v466
    %921 = vmatpush1.msra.mxu0 %v465
    %922 = vmatprep.subr.mxu0 %v472
    %923 = vmatpush1.msra.mxu0 %v471
    %924 = vmatprep.subr.mxu0 %v478
    %925 = vmatpush1.msra.mxu0 %v477
    %926 = vmatprep.subr.mxu0 %v484
    %927 = vmatpush1.msra.mxu0 %v483
    %928 = vmatprep.subr.mxu0 %v490
    %929 = vmatpush1.msra.mxu0 %v489
    %930 = vmatprep.subr.mxu0 %v496
    %931 = vmatpush1.msra.mxu0 %v495
    %932 = vmatprep.subr.mxu0 %v502
    %933 = vmatpush1.msra.mxu0 %v501
    %934 = vmatprep.subr.mxu0 %v508
    %935 = vmatpush1.msra.mxu0 %v507
    %936 = vmatprep.subr.mxu0 %v514
    %937 = vmatpush1.msra.mxu0 %v513
    %938 = vmatprep.subr.mxu0 %v520
    %939 = vmatpush1.msra.mxu0 %v519
    %940 = vmatprep.subr.mxu0 %v526
    %941 = vmatpush1.msra.mxu0 %v525
    %942 = vmatprep.subr.mxu0 %v532
    %943 = vmatpush1.msra.mxu0 %v531
    %944 = vmatprep.subr.mxu0 %v538
    %945 = vmatpush1.msra.mxu0 %v537
    %946 = vmatprep.subr.mxu0 %v544
    %947 = vmatpush1.msra.mxu0 %v543
    %948 = vmatprep.subr.mxu0 %v550
    %949 = vmatpush1.msra.mxu0 %v549
    %950 = vmatprep.subr.mxu0 %v556
    %951 = vmatpush1.msra.mxu0 %v555
    %952 = vmatprep.subr.mxu0 %v562
    %953 = vmatpush1.msra.mxu0 %v561
    %954 = vmatprep.subr.mxu0 %v568
    %955 = vmatpush1.msra.mxu0 %v567
    %956 = vmatprep.subr.mxu0 %v574
    %957 = vmatpush1.msra.mxu0 %v573
    %958 = vmatprep.subr.mxu0 %v580
    %959 = vmatpush1.msra.mxu0 %v579
    %960 = vmatprep.subr.mxu0 %v586
    %961 = vmatpush1.msra.mxu0 %v585
    %962 = vmatprep.subr.mxu0 %v592
    %963 = vmatpush1.msra.mxu0 %v591
    %964 = vmatprep.subr.mxu0 %v598
    %965 = vmatpush1.msra.mxu0 %v597
    %966 = vmatprep.subr.mxu0 %v604
    %967 = vmatpush1.msra.mxu0 %v603
    %968 = vmatprep.mubr.f32.mxu0 %v222
    %969 = vmatmul.mubr.f32.gmra.mrb[0].mxu0 %v221
    %v970 = vpop.f32.mrb[0].mxu0
    %v971 = vadd.f32 %v900, %v970
    %v972 = vpop.f32.mrb[0].mxu0
    %v973 = vadd.f32 %v902, %v972
    %974 = vdwg.mxu0
    %975 = vmatprep.subr.mxu0 %v610
    %976 = vmatpush1.msra.mxu0 %v609
    %977 = vmatprep.subr.mxu0 %v616
    %978 = vmatpush1.msra.mxu0 %v615
    %979 = vmatprep.subr.mxu0 %v622
    %980 = vmatpush1.msra.mxu0 %v621
    %981 = vmatprep.subr.mxu0 %v628
    %982 = vmatpush1.msra.mxu0 %v627
    %983 = vmatprep.subr.mxu0 %v634
    %984 = vmatpush1.msra.mxu0 %v633
    %985 = vmatprep.subr.mxu0 %v640
    %986 = vmatpush1.msra.mxu0 %v639
    %987 = vmatprep.subr.mxu0 %v646
    %988 = vmatpush1.msra.mxu0 %v645
    %989 = vmatprep.subr.mxu0 %v652
    %990 = vmatpush1.msra.mxu0 %v651
    %991 = vmatprep.subr.mxu0 %v658
    %992 = vmatpush1.msra.mxu0 %v657
    %993 = vmatprep.subr.mxu0 %v664
    %994 = vmatpush1.msra.mxu0 %v663
    %995 = vmatprep.subr.mxu0 %v670
    %996 = vmatpush1.msra.mxu0 %v669
    %997 = vmatprep.subr.mxu0 %v676
    %998 = vmatpush1.msra.mxu0 %v675
    %999 = vmatprep.subr.mxu0 %v682
    %1000 = vmatpush1.msra.mxu0 %v681
    %1001 = vmatprep.subr.mxu0 %v688
    %1002 = vmatpush1.msra.mxu0 %v687
    %1003 = vmatprep.subr.mxu0 %v694
    %1004 = vmatpush1.msra.mxu0 %v693
    %1005 = vmatprep.subr.mxu0 %v700
    %1006 = vmatpush1.msra.mxu0 %v699
    %1007 = vmatprep.subr.mxu0 %v706
    %1008 = vmatpush1.msra.mxu0 %v705
    %1009 = vmatprep.subr.mxu0 %v712
    %1010 = vmatpush1.msra.mxu0 %v711
    %1011 = vmatprep.subr.mxu0 %v718
    %1012 = vmatpush1.msra.mxu0 %v717
    %1013 = vmatprep.subr.mxu0 %v724
    %1014 = vmatpush1.msra.mxu0 %v723
    %1015 = vmatprep.subr.mxu0 %v730
    %1016 = vmatpush1.msra.mxu0 %v729
    %1017 = vmatprep.subr.mxu0 %v736
    %1018 = vmatpush1.msra.mxu0 %v735
    %1019 = vmatprep.subr.mxu0 %v742
    %1020 = vmatpush1.msra.mxu0 %v741
    %1021 = vmatprep.subr.mxu0 %v748
    %1022 = vmatpush1.msra.mxu0 %v747
    %1023 = vmatprep.subr.mxu0 %v754
    %1024 = vmatpush1.msra.mxu0 %v753
    %1025 = vmatprep.subr.mxu0 %v760
    %1026 = vmatpush1.msra.mxu0 %v759
    %1027 = vmatprep.subr.mxu0 %v766
    %1028 = vmatpush1.msra.mxu0 %v765
    %1029 = vmatprep.subr.mxu0 %v772
    %1030 = vmatpush1.msra.mxu0 %v771
    %1031 = vmatprep.subr.mxu0 %v778
    %1032 = vmatpush1.msra.mxu0 %v777
    %1033 = vmatprep.subr.mxu0 %v784
    %1034 = vmatpush1.msra.mxu0 %v783
    %1035 = vmatprep.subr.mxu0 %v790
    %1036 = vmatpush1.msra.mxu0 %v789
    %1037 = vmatprep.subr.mxu0 %v796
    %1038 = vmatpush1.msra.mxu0 %v795
    %1039 = vmatprep.mubr.f32.mxu0 %v224
    %1040 = vmatmul.mubr.f32.gmra.mrb[0].mxu0 %v223
    %v1041 = vpop.f32.mrb[0].mxu0
    %v1042 = vadd.f32 %v971, %v1041
    %v1043 = vpop.f32.mrb[0].mxu0
    %v1044 = vadd.f32 %v973, %v1043
    %1045 = vdwg.mxu0
    %1046 = vmatprep.subr.mxu0 %v228
    %1047 = vmatpush1.msra.mxu0 %v227
    %1048 = vmatprep.subr.mxu0 %v234
    %1049 = vmatpush1.msra.mxu0 %v233
    %1050 = vmatprep.subr.mxu0 %v240
    %1051 = vmatpush1.msra.mxu0 %v239
    %1052 = vmatprep.subr.mxu0 %v246
    %1053 = vmatpush1.msra.mxu0 %v245
    %1054 = vmatprep.subr.mxu0 %v252
    %1055 = vmatpush1.msra.mxu0 %v251
    %1056 = vmatprep.subr.mxu0 %v258
    %1057 = vmatpush1.msra.mxu0 %v257
    %1058 = vmatprep.subr.mxu0 %v264
    %1059 = vmatpush1.msra.mxu0 %v263
    %1060 = vmatprep.subr.mxu0 %v270
    %1061 = vmatpush1.msra.mxu0 %v269
    %1062 = vmatprep.subr.mxu0 %v276
    %1063 = vmatpush1.msra.mxu0 %v275
    %1064 = vmatprep.subr.mxu0 %v282
    %1065 = vmatpush1.msra.mxu0 %v281
    %1066 = vmatprep.subr.mxu0 %v288
    %1067 = vmatpush1.msra.mxu0 %v287
    %1068 = vmatprep.subr.mxu0 %v294
    %1069 = vmatpush1.msra.mxu0 %v293
    %1070 = vmatprep.subr.mxu0 %v300
    %1071 = vmatpush1.msra.mxu0 %v299
    %1072 = vmatprep.subr.mxu0 %v306
    %1073 = vmatpush1.msra.mxu0 %v305
    %1074 = vmatprep.subr.mxu0 %v312
    %1075 = vmatpush1.msra.mxu0 %v311
    %1076 = vmatprep.subr.mxu0 %v318
    %1077 = vmatpush1.msra.mxu0 %v317
    %1078 = vmatprep.subr.mxu0 %v324
    %1079 = vmatpush1.msra.mxu0 %v323
    %1080 = vmatprep.subr.mxu0 %v330
    %1081 = vmatpush1.msra.mxu0 %v329
    %1082 = vmatprep.subr.mxu0 %v336
    %1083 = vmatpush1.msra.mxu0 %v335
    %1084 = vmatprep.subr.mxu0 %v342
    %1085 = vmatpush1.msra.mxu0 %v341
    %1086 = vmatprep.subr.mxu0 %v348
    %1087 = vmatpush1.msra.mxu0 %v347
    %1088 = vmatprep.subr.mxu0 %v354
    %1089 = vmatpush1.msra.mxu0 %v353
    %1090 = vmatprep.subr.mxu0 %v360
    %1091 = vmatpush1.msra.mxu0 %v359
    %1092 = vmatprep.subr.mxu0 %v366
    %1093 = vmatpush1.msra.mxu0 %v365
    %1094 = vmatprep.subr.mxu0 %v372
    %1095 = vmatpush1.msra.mxu0 %v371
    %1096 = vmatprep.subr.mxu0 %v378
    %1097 = vmatpush1.msra.mxu0 %v377
    %1098 = vmatprep.subr.mxu0 %v384
    %1099 = vmatpush1.msra.mxu0 %v383
    %1100 = vmatprep.subr.mxu0 %v390
    %1101 = vmatpush1.msra.mxu0 %v389
    %1102 = vmatprep.subr.mxu0 %v396
    %1103 = vmatpush1.msra.mxu0 %v395
    %1104 = vmatprep.subr.mxu0 %v402
    %1105 = vmatpush1.msra.mxu0 %v401
    %1106 = vmatprep.subr.mxu0 %v408
    %1107 = vmatpush1.msra.mxu0 %v407
    %1108 = vmatprep.subr.mxu0 %v414
    %1109 = vmatpush1.msra.mxu0 %v413
    %1110 = vmatprep.mubr.f32.mxu0 %v220
    %1111 = vmatmul.mubr.f32.gmra.mrb[0].mxu0 %v219
    %v1112 = vpop.f32.mrb[0].mxu0
    %v1113 = vadd.f32 %v814, %v1112
    %v1114 = vpop.f32.mrb[0].mxu0
    %v1115 = vadd.f32 %v818, %v1114
    %1116 = vdwg.mxu0
    %1117 = vmatprep.subr.mxu0 %v420
    %1118 = vmatpush1.msra.mxu0 %v419
    %1119 = vmatprep.subr.mxu0 %v426
    %1120 = vmatpush1.msra.mxu0 %v425
    %1121 = vmatprep.subr.mxu0 %v432
    %1122 = vmatpush1.msra.mxu0 %v431
    %1123 = vmatprep.subr.mxu0 %v438
    %1124 = vmatpush1.msra.mxu0 %v437
    %1125 = vmatprep.subr.mxu0 %v444
    %1126 = vmatpush1.msra.mxu0 %v443
    %1127 = vmatprep.subr.mxu0 %v450
    %1128 = vmatpush1.msra.mxu0 %v449
    %1129 = vmatprep.subr.mxu0 %v456
    %1130 = vmatpush1.msra.mxu0 %v455
    %1131 = vmatprep.subr.mxu0 %v462
    %1132 = vmatpush1.msra.mxu0 %v461
    %1133 = vmatprep.subr.mxu0 %v468
    %1134 = vmatpush1.msra.mxu0 %v467
    %1135 = vmatprep.subr.mxu0 %v474
    %1136 = vmatpush1.msra.mxu0 %v473
    %1137 = vmatprep.subr.mxu0 %v480
    %1138 = vmatpush1.msra.mxu0 %v479
    %1139 = vmatprep.subr.mxu0 %v486
    %1140 = vmatpush1.msra.mxu0 %v485
    %1141 = vmatprep.subr.mxu0 %v492
    %1142 = vmatpush1.msra.mxu0 %v491
    %1143 = vmatprep.subr.mxu0 %v498
    %1144 = vmatpush1.msra.mxu0 %v497
    %1145 = vmatprep.subr.mxu0 %v504
    %1146 = vmatpush1.msra.mxu0 %v503
    %1147 = vmatprep.subr.mxu0 %v510
    %1148 = vmatpush1.msra.mxu0 %v509
    %1149 = vmatprep.subr.mxu0 %v516
    %1150 = vmatpush1.msra.mxu0 %v515
    %1151 = vmatprep.subr.mxu0 %v522
    %1152 = vmatpush1.msra.mxu0 %v521
    %1153 = vmatprep.subr.mxu0 %v528
    %1154 = vmatpush1.msra.mxu0 %v527
    %1155 = vmatprep.subr.mxu0 %v534
    %1156 = vmatpush1.msra.mxu0 %v533
    %1157 = vmatprep.subr.mxu0 %v540
    %1158 = vmatpush1.msra.mxu0 %v539
    %1159 = vmatprep.subr.mxu0 %v546
    %1160 = vmatpush1.msra.mxu0 %v545
    %1161 = vmatprep.subr.mxu0 %v552
    %1162 = vmatpush1.msra.mxu0 %v551
    %1163 = vmatprep.subr.mxu0 %v558
    %1164 = vmatpush1.msra.mxu0 %v557
    %1165 = vmatprep.subr.mxu0 %v564
    %1166 = vmatpush1.msra.mxu0 %v563
    %1167 = vmatprep.subr.mxu0 %v570
    %1168 = vmatpush1.msra.mxu0 %v569
    %1169 = vmatprep.subr.mxu0 %v576
    %1170 = vmatpush1.msra.mxu0 %v575
    %1171 = vmatprep.subr.mxu0 %v582
    %1172 = vmatpush1.msra.mxu0 %v581
    %1173 = vmatprep.subr.mxu0 %v588
    %1174 = vmatpush1.msra.mxu0 %v587
    %1175 = vmatprep.subr.mxu0 %v594
    %1176 = vmatpush1.msra.mxu0 %v593
    %1177 = vmatprep.subr.mxu0 %v600
    %1178 = vmatpush1.msra.mxu0 %v599
    %1179 = vmatprep.subr.mxu0 %v606
    %1180 = vmatpush1.msra.mxu0 %v605
    %1181 = vmatprep.mubr.f32.mxu0 %v222
    %1182 = vmatmul.mubr.f32.gmra.mrb[0].mxu0 %v221
    %v1183 = vpop.f32.mrb[0].mxu0
    %v1184 = vadd.f32 %v1113, %v1183
    %v1185 = vpop.f32.mrb[0].mxu0
    %v1186 = vadd.f32 %v1115, %v1185
    %1187 = vdwg.mxu0
    %1188 = vmatprep.subr.mxu0 %v612
    %1189 = vmatpush1.msra.mxu0 %v611
    %1190 = vmatprep.subr.mxu0 %v618
    %1191 = vmatpush1.msra.mxu0 %v617
    %1192 = vmatprep.subr.mxu0 %v624
    %1193 = vmatpush1.msra.mxu0 %v623
    %1194 = vmatprep.subr.mxu0 %v630
    %1195 = vmatpush1.msra.mxu0 %v629
    %1196 = vmatprep.subr.mxu0 %v636
    %1197 = vmatpush1.msra.mxu0 %v635
    %1198 = vmatprep.subr.mxu0 %v642
    %1199 = vmatpush1.msra.mxu0 %v641
    %1200 = vmatprep.subr.mxu0 %v648
    %1201 = vmatpush1.msra.mxu0 %v647
    %1202 = vmatprep.subr.mxu0 %v654
    %1203 = vmatpush1.msra.mxu0 %v653
    %1204 = vmatprep.subr.mxu0 %v660
    %1205 = vmatpush1.msra.mxu0 %v659
    %1206 = vmatprep.subr.mxu0 %v666
    %1207 = vmatpush1.msra.mxu0 %v665
    %1208 = vmatprep.subr.mxu0 %v672
    %1209 = vmatpush1.msra.mxu0 %v671
    %1210 = vmatprep.subr.mxu0 %v678
    %1211 = vmatpush1.msra.mxu0 %v677
    %1212 = vmatprep.subr.mxu0 %v684
    %1213 = vmatpush1.msra.mxu0 %v683
    %1214 = vmatprep.subr.mxu0 %v690
    %1215 = vmatpush1.msra.mxu0 %v689
    %1216 = vmatprep.subr.mxu0 %v696
    %1217 = vmatpush1.msra.mxu0 %v695
    %1218 = vmatprep.subr.mxu0 %v702
    %1219 = vmatpush1.msra.mxu0 %v701
    %1220 = vmatprep.subr.mxu0 %v708
    %1221 = vmatpush1.msra.mxu0 %v707
    %1222 = vmatprep.subr.mxu0 %v714
    %1223 = vmatpush1.msra.mxu0 %v713
    %1224 = vmatprep.subr.mxu0 %v720
    %1225 = vmatpush1.msra.mxu0 %v719
    %1226 = vmatprep.subr.mxu0 %v726
    %1227 = vmatpush1.msra.mxu0 %v725
    %1228 = vmatprep.subr.mxu0 %v732
    %1229 = vmatpush1.msra.mxu0 %v731
    %1230 = vmatprep.subr.mxu0 %v738
    %1231 = vmatpush1.msra.mxu0 %v737
    %1232 = vmatprep.subr.mxu0 %v744
    %1233 = vmatpush1.msra.mxu0 %v743
    %1234 = vmatprep.subr.mxu0 %v750
    %1235 = vmatpush1.msra.mxu0 %v749
    %1236 = vmatprep.subr.mxu0 %v756
    %1237 = vmatpush1.msra.mxu0 %v755
    %1238 = vmatprep.subr.mxu0 %v762
    %1239 = vmatpush1.msra.mxu0 %v761
    %1240 = vmatprep.subr.mxu0 %v768
    %1241 = vmatpush1.msra.mxu0 %v767
    %1242 = vmatprep.subr.mxu0 %v774
    %1243 = vmatpush1.msra.mxu0 %v773
    %1244 = vmatprep.subr.mxu0 %v780
    %1245 = vmatpush1.msra.mxu0 %v779
    %1246 = vmatprep.subr.mxu0 %v786
    %1247 = vmatpush1.msra.mxu0 %v785
    %1248 = vmatprep.subr.mxu0 %v792
    %1249 = vmatpush1.msra.mxu0 %v791
    %1250 = vmatprep.subr.mxu0 %v798
    %1251 = vmatpush1.msra.mxu0 %v797
    %1252 = vmatprep.mubr.f32.mxu0 %v224
    %1253 = vmatmul.mubr.f32.gmra.mrb[0].mxu0 %v223
    %v1254 = vpop.f32.mrb[0].mxu0
    %v1255 = vadd.f32 %v1184, %v1254
    %v1256 = vpop.f32.mrb[0].mxu0
    %v1257 = vadd.f32 %v1186, %v1256
    %1258 = vdwg.mxu0
    %1259 = vmatprep.subr.mxu0 %v230
    %1260 = vmatpush1.msra.mxu0 %v229
    %1261 = vmatprep.subr.mxu0 %v236
    %1262 = vmatpush1.msra.mxu0 %v235
    %1263 = vmatprep.subr.mxu0 %v242
    %1264 = vmatpush1.msra.mxu0 %v241
    %1265 = vmatprep.subr.mxu0 %v248
    %1266 = vmatpush1.msra.mxu0 %v247
    %1267 = vmatprep.subr.mxu0 %v254
    %1268 = vmatpush1.msra.mxu0 %v253
    %1269 = vmatprep.subr.mxu0 %v260
    %1270 = vmatpush1.msra.mxu0 %v259
    %1271 = vmatprep.subr.mxu0 %v266
    %1272 = vmatpush1.msra.mxu0 %v265
    %1273 = vmatprep.subr.mxu0 %v272
    %1274 = vmatpush1.msra.mxu0 %v271
    %1275 = vmatprep.subr.mxu0 %v278
    %1276 = vmatpush1.msra.mxu0 %v277
    %1277 = vmatprep.subr.mxu0 %v284
    %1278 = vmatpush1.msra.mxu0 %v283
    %1279 = vmatprep.subr.mxu0 %v290
    %1280 = vmatpush1.msra.mxu0 %v289
    %1281 = vmatprep.subr.mxu0 %v296
    %1282 = vmatpush1.msra.mxu0 %v295
    %1283 = vmatprep.subr.mxu0 %v302
    %1284 = vmatpush1.msra.mxu0 %v301
    %1285 = vmatprep.subr.mxu0 %v308
    %1286 = vmatpush1.msra.mxu0 %v307
    %1287 = vmatprep.subr.mxu0 %v314
    %1288 = vmatpush1.msra.mxu0 %v313
    %1289 = vmatprep.subr.mxu0 %v320
    %1290 = vmatpush1.msra.mxu0 %v319
    %1291 = vmatprep.subr.mxu0 %v326
    %1292 = vmatpush1.msra.mxu0 %v325
    %1293 = vmatprep.subr.mxu0 %v332
    %1294 = vmatpush1.msra.mxu0 %v331
    %1295 = vmatprep.subr.mxu0 %v338
    %1296 = vmatpush1.msra.mxu0 %v337
    %1297 = vmatprep.subr.mxu0 %v344
    %1298 = vmatpush1.msra.mxu0 %v343
    %1299 = vmatprep.subr.mxu0 %v350
    %1300 = vmatpush1.msra.mxu0 %v349
    %1301 = vmatprep.subr.mxu0 %v356
    %1302 = vmatpush1.msra.mxu0 %v355
    %1303 = vmatprep.subr.mxu0 %v362
    %1304 = vmatpush1.msra.mxu0 %v361
    %1305 = vmatprep.subr.mxu0 %v368
    %1306 = vmatpush1.msra.mxu0 %v367
    %1307 = vmatprep.subr.mxu0 %v374
    %1308 = vmatpush1.msra.mxu0 %v373
    %1309 = vmatprep.subr.mxu0 %v380
    %1310 = vmatpush1.msra.mxu0 %v379
    %1311 = vmatprep.subr.mxu0 %v386
    %1312 = vmatpush1.msra.mxu0 %v385
    %1313 = vmatprep.subr.mxu0 %v392
    %1314 = vmatpush1.msra.mxu0 %v391
    %1315 = vmatprep.subr.mxu0 %v398
    %1316 = vmatpush1.msra.mxu0 %v397
    %1317 = vmatprep.subr.mxu0 %v404
    %1318 = vmatpush1.msra.mxu0 %v403
    %1319 = vmatprep.subr.mxu0 %v410
    %1320 = vmatpush1.msra.mxu0 %v409
    %1321 = vmatprep.subr.mxu0 %v416
    %1322 = vmatpush1.msra.mxu0 %v415
    %1323 = vmatprep.mubr.f32.mxu0 %v220
    %1324 = vmatmul.mubr.f32.gmra.mrb[0].mxu0 %v219
    %v1325 = vpop.f32.mrb[0].mxu0
    %v1326 = vadd.f32 %v822, %v1325
    %v1327 = vpop.f32.mrb[0].mxu0
    %v1328 = vadd.f32 %v826, %v1327
    %1329 = vdwg.mxu0
    %1330 = vmatprep.subr.mxu0 %v422
    %1331 = vmatpush1.msra.mxu0 %v421
    %1332 = vmatprep.subr.mxu0 %v428
    %1333 = vmatpush1.msra.mxu0 %v427
    %1334 = vmatprep.subr.mxu0 %v434
    %1335 = vmatpush1.msra.mxu0 %v433
    %1336 = vmatprep.subr.mxu0 %v440
    %1337 = vmatpush1.msra.mxu0 %v439
    %1338 = vmatprep.subr.mxu0 %v446
    %1339 = vmatpush1.msra.mxu0 %v445
    %1340 = vmatprep.subr.mxu0 %v452
    %1341 = vmatpush1.msra.mxu0 %v451
    %1342 = vmatprep.subr.mxu0 %v458
    %1343 = vmatpush1.msra.mxu0 %v457
    %1344 = vmatprep.subr.mxu0 %v464
    %1345 = vmatpush1.msra.mxu0 %v463
    %1346 = vmatprep.subr.mxu0 %v470
    %1347 = vmatpush1.msra.mxu0 %v469
    %1348 = vmatprep.subr.mxu0 %v476
    %1349 = vmatpush1.msra.mxu0 %v475
    %1350 = vmatprep.subr.mxu0 %v482
    %1351 = vmatpush1.msra.mxu0 %v481
    %1352 = vmatprep.subr.mxu0 %v488
    %1353 = vmatpush1.msra.mxu0 %v487
    %1354 = vmatprep.subr.mxu0 %v494
    %1355 = vmatpush1.msra.mxu0 %v493
    %1356 = vmatprep.subr.mxu0 %v500
    %1357 = vmatpush1.msra.mxu0 %v499
    %1358 = vmatprep.subr.mxu0 %v506
    %1359 = vmatpush1.msra.mxu0 %v505
    %1360 = vmatprep.subr.mxu0 %v512
    %1361 = vmatpush1.msra.mxu0 %v511
    %1362 = vmatprep.subr.mxu0 %v518
    %1363 = vmatpush1.msra.mxu0 %v517
    %1364 = vmatprep.subr.mxu0 %v524
    %1365 = vmatpush1.msra.mxu0 %v523
    %1366 = vmatprep.subr.mxu0 %v530
    %1367 = vmatpush1.msra.mxu0 %v529
    %1368 = vmatprep.subr.mxu0 %v536
    %1369 = vmatpush1.msra.mxu0 %v535
    %1370 = vmatprep.subr.mxu0 %v542
    %1371 = vmatpush1.msra.mxu0 %v541
    %1372 = vmatprep.subr.mxu0 %v548
    %1373 = vmatpush1.msra.mxu0 %v547
    %1374 = vmatprep.subr.mxu0 %v554
    %1375 = vmatpush1.msra.mxu0 %v553
    %1376 = vmatprep.subr.mxu0 %v560
    %1377 = vmatpush1.msra.mxu0 %v559
    %1378 = vmatprep.subr.mxu0 %v566
    %1379 = vmatpush1.msra.mxu0 %v565
    %1380 = vmatprep.subr.mxu0 %v572
    %1381 = vmatpush1.msra.mxu0 %v571
    %1382 = vmatprep.subr.mxu0 %v578
    %1383 = vmatpush1.msra.mxu0 %v577
    %1384 = vmatprep.subr.mxu0 %v584
    %1385 = vmatpush1.msra.mxu0 %v583
    %1386 = vmatprep.subr.mxu0 %v590
    %1387 = vmatpush1.msra.mxu0 %v589
    %1388 = vmatprep.subr.mxu0 %v596
    %1389 = vmatpush1.msra.mxu0 %v595
    %1390 = vmatprep.subr.mxu0 %v602
    %1391 = vmatpush1.msra.mxu0 %v601
    %1392 = vmatprep.subr.mxu0 %v608
    %1393 = vmatpush1.msra.mxu0 %v607
    %1394 = vmatprep.mubr.f32.mxu0 %v222
    %1395 = vmatmul.mubr.f32.gmra.mrb[0].mxu0 %v221
    %v1396 = vpop.f32.mrb[0].mxu0
    %v1397 = vadd.f32 %v1326, %v1396
    %v1398 = vpop.f32.mrb[0].mxu0
    %v1399 = vadd.f32 %v1328, %v1398
    %1400 = vdwg.mxu0
    %1401 = vmatprep.subr.mxu0 %v614
    %1402 = vmatpush1.msra.mxu0 %v613
    %1403 = vmatprep.subr.mxu0 %v620
    %1404 = vmatpush1.msra.mxu0 %v619
    %1405 = vmatprep.subr.mxu0 %v626
    %1406 = vmatpush1.msra.mxu0 %v625
    %1407 = vmatprep.subr.mxu0 %v632
    %1408 = vmatpush1.msra.mxu0 %v631
    %1409 = vmatprep.subr.mxu0 %v638
    %1410 = vmatpush1.msra.mxu0 %v637
    %1411 = vmatprep.subr.mxu0 %v644
    %1412 = vmatpush1.msra.mxu0 %v643
    %1413 = vmatprep.subr.mxu0 %v650
    %1414 = vmatpush1.msra.mxu0 %v649
    %1415 = vmatprep.subr.mxu0 %v656
    %1416 = vmatpush1.msra.mxu0 %v655
    %1417 = vmatprep.subr.mxu0 %v662
    %1418 = vmatpush1.msra.mxu0 %v661
    %1419 = vmatprep.subr.mxu0 %v668
    %1420 = vmatpush1.msra.mxu0 %v667
    %1421 = vmatprep.subr.mxu0 %v674
    %1422 = vmatpush1.msra.mxu0 %v673
    %1423 = vmatprep.subr.mxu0 %v680
    %1424 = vmatpush1.msra.mxu0 %v679
    %1425 = vmatprep.subr.mxu0 %v686
    %1426 = vmatpush1.msra.mxu0 %v685
    %1427 = vmatprep.subr.mxu0 %v692
    %1428 = vmatpush1.msra.mxu0 %v691
    %1429 = vmatprep.subr.mxu0 %v698
    %1430 = vmatpush1.msra.mxu0 %v697
    %1431 = vmatprep.subr.mxu0 %v704
    %1432 = vmatpush1.msra.mxu0 %v703
    %1433 = vmatprep.subr.mxu0 %v710
    %1434 = vmatpush1.msra.mxu0 %v709
    %1435 = vmatprep.subr.mxu0 %v716
    %1436 = vmatpush1.msra.mxu0 %v715
    %1437 = vmatprep.subr.mxu0 %v722
    %1438 = vmatpush1.msra.mxu0 %v721
    %1439 = vmatprep.subr.mxu0 %v728
    %1440 = vmatpush1.msra.mxu0 %v727
    %1441 = vmatprep.subr.mxu0 %v734
    %1442 = vmatpush1.msra.mxu0 %v733
    %1443 = vmatprep.subr.mxu0 %v740
    %1444 = vmatpush1.msra.mxu0 %v739
    %1445 = vmatprep.subr.mxu0 %v746
    %1446 = vmatpush1.msra.mxu0 %v745
    %1447 = vmatprep.subr.mxu0 %v752
    %1448 = vmatpush1.msra.mxu0 %v751
    %1449 = vmatprep.subr.mxu0 %v758
    %1450 = vmatpush1.msra.mxu0 %v757
    %1451 = vmatprep.subr.mxu0 %v764
    %1452 = vmatpush1.msra.mxu0 %v763
    %1453 = vmatprep.subr.mxu0 %v770
    %1454 = vmatpush1.msra.mxu0 %v769
    %1455 = vmatprep.subr.mxu0 %v776
    %1456 = vmatpush1.msra.mxu0 %v775
    %1457 = vmatprep.subr.mxu0 %v782
    %1458 = vmatpush1.msra.mxu0 %v781
    %1459 = vmatprep.subr.mxu0 %v788
    %1460 = vmatpush1.msra.mxu0 %v787
    %1461 = vmatprep.subr.mxu0 %v794
    %1462 = vmatpush1.msra.mxu0 %v793
    %1463 = vmatprep.subr.mxu0 %v800
    %1464 = vmatpush1.msra.mxu0 %v799
    %1465 = vmatprep.mubr.f32.mxu0 %v224
    %1466 = vmatmul.mubr.f32.gmra.mrb[0].mxu0 %v223
    %v1467 = vpop.f32.mrb[0].mxu0
    %v1468 = vadd.f32 %v1397, %v1467
    %v1469 = vpop.f32.mrb[0].mxu0
    %v1470 = vadd.f32 %v1399, %v1469
    %1471 = vdwg.mxu0
    %vm1472 = vcmp.gt.f32.partialorder %v1042, 0.0
    %vm1473 = vcmp.gt.f32.partialorder %v1044, 0.0
    %vm1474 = vcmp.gt.f32.partialorder %v1255, 0.0
    %vm1475 = vcmp.gt.f32.partialorder %v1257, 0.0
    %vm1476 = vcmp.gt.f32.partialorder %v1468, 0.0
    %vm1477 = vcmp.gt.f32.partialorder %v1470, 0.0
    %v1478 = vsel %vm1472, 1.0, -1.0
    %v1479 = vsel %vm1473, 1.0, -1.0
    %v1480 = vsel %vm1474, 1.0, -1.0
    %v1481 = vsel %vm1475, 1.0, -1.0
    %v1482 = vsel %vm1476, 1.0, -1.0
    %v1483 = vsel %vm1477, 1.0, -1.0
    %v1484 = vld [vmem:[#allocation8] sm:$0xff]
    %v1485 = vld [vmem:[#allocation8 + $0x8] sm:$0xff]
    %v1486 = vld [vmem:[#allocation8 + $0x10] sm:$0xff]
    %v1487 = vld [vmem:[#allocation8 + $0x18] sm:$0xff]
    %v1488 = vld [vmem:[#allocation8 + $0x20] sm:$0xff]
    %v1489 = vld [vmem:[#allocation8 + $0x28] sm:$0xff]
    %v1490 = vld [vmem:[#allocation8 + $0x30] sm:$0xff]
    %v1491 = vld [vmem:[#allocation8 + $0x38] sm:$0xff]
    %v1492 = vld [vmem:[#allocation8 + $0x40] sm:$0xff]
    %v1493 = vld [vmem:[#allocation8 + $0x48] sm:$0xff]
    %v1494 = vld [vmem:[#allocation8 + $0x50] sm:$0xff]
    %v1495 = vld [vmem:[#allocation8 + $0x58] sm:$0xff]
    %v1496 = vld [vmem:[#allocation8 + $0x60] sm:$0xff]
    %v1497 = vld [vmem:[#allocation8 + $0x68] sm:$0xff]
    %v1498 = vld [vmem:[#allocation8 + $0x70] sm:$0xff]
    %v1499 = vld [vmem:[#allocation8 + $0x78] sm:$0xff]
    %v1500 = vld [vmem:[#allocation8 + $0x80] sm:$0xff]
    %v1501 = vld [vmem:[#allocation8 + $0x88] sm:$0xff]
    %v1502 = vld [vmem:[#allocation8 + $0x90] sm:$0xff]
    %v1503 = vld [vmem:[#allocation8 + $0x98] sm:$0xff]
    %v1504 = vld [vmem:[#allocation8 + $0xa0] sm:$0xff]
    %v1505 = vld [vmem:[#allocation8 + $0xa8] sm:$0xff]
    %v1506 = vld [vmem:[#allocation8 + $0xb0] sm:$0xff]
    %v1507 = vld [vmem:[#allocation8 + $0xb8] sm:$0xff]
    %v1508 = vld [vmem:[#allocation8 + $0xc0] sm:$0xff]
    %v1509 = vld [vmem:[#allocation8 + $0xc8] sm:$0xff]
    %v1510 = vld [vmem:[#allocation8 + $0xd0] sm:$0xff]
    %v1511 = vld [vmem:[#allocation8 + $0xd8] sm:$0xff]
    %v1512 = vld [vmem:[#allocation8 + $0xe0] sm:$0xff]
    %v1513 = vld [vmem:[#allocation8 + $0xe8] sm:$0xff]
    %v1514 = vld [vmem:[#allocation8 + $0xf0] sm:$0xff]
    %v1515 = vld [vmem:[#allocation8 + $0xf8] sm:$0xff]
    %v1516 = vld [vmem:[#allocation8 + $0x100] sm:$0xff]
    %v1517 = vld [vmem:[#allocation8 + $0x108] sm:$0xff]
    %v1518 = vld [vmem:[#allocation8 + $0x110] sm:$0xff]
    %v1519 = vld [vmem:[#allocation8 + $0x118] sm:$0xff]
    %v1520 = vld [vmem:[#allocation8 + $0x120] sm:$0xff]
    %v1521 = vld [vmem:[#allocation8 + $0x128] sm:$0xff]
    %v1522 = vld [vmem:[#allocation8 + $0x130] sm:$0xff]
    %v1523 = vld [vmem:[#allocation8 + $0x138] sm:$0xff]
    %v1524 = vld [vmem:[#allocation8 + $0x140] sm:$0xff]
    %v1525 = vld [vmem:[#allocation8 + $0x148] sm:$0xff]
    %v1526 = vld [vmem:[#allocation8 + $0x150] sm:$0xff]
    %v1527 = vld [vmem:[#allocation8 + $0x158] sm:$0xff]
    %v1528 = vld [vmem:[#allocation8 + $0x160] sm:$0xff]
    %v1529 = vld [vmem:[#allocation8 + $0x168] sm:$0xff]
    %v1530 = vld [vmem:[#allocation8 + $0x170] sm:$0xff]
    %v1531 = vld [vmem:[#allocation8 + $0x178] sm:$0xff]
    %v1532 = vld [vmem:[#allocation8 + $0x180] sm:$0xff]
    %v1533 = vld [vmem:[#allocation8 + $0x188] sm:$0xff]
    %v1534 = vld [vmem:[#allocation8 + $0x190] sm:$0xff]
    %v1535 = vld [vmem:[#allocation8 + $0x198] sm:$0xff]
    %v1536 = vld [vmem:[#allocation8 + $0x1a0] sm:$0xff]
    %v1537 = vld [vmem:[#allocation8 + $0x1a8] sm:$0xff]
    %v1538 = vld [vmem:[#allocation8 + $0x1b0] sm:$0xff]
    %v1539 = vld [vmem:[#allocation8 + $0x1b8] sm:$0xff]
    %v1540 = vld [vmem:[#allocation8 + $0x1c0] sm:$0xff]
    %v1541 = vld [vmem:[#allocation8 + $0x1c8] sm:$0xff]
    %v1542 = vld [vmem:[#allocation8 + $0x1d0] sm:$0xff]
    %v1543 = vld [vmem:[#allocation8 + $0x1d8] sm:$0xff]
    %v1544 = vld [vmem:[#allocation8 + $0x1e0] sm:$0xff]
    %v1545 = vld [vmem:[#allocation8 + $0x1e8] sm:$0xff]
    %v1546 = vld [vmem:[#allocation8 + $0x1f0] sm:$0xff]
    %v1547 = vld [vmem:[#allocation8 + $0x1f8] sm:$0xff]
    %v1548 = vld [vmem:[#allocation8 + $0x200] sm:$0xff]
    %v1549 = vld [vmem:[#allocation8 + $0x208] sm:$0xff]
    %v1550 = vld [vmem:[#allocation8 + $0x210] sm:$0xff]
    %v1551 = vld [vmem:[#allocation8 + $0x218] sm:$0xff]
    %v1552 = vld [vmem:[#allocation8 + $0x220] sm:$0xff]
    %v1553 = vld [vmem:[#allocation8 + $0x228] sm:$0xff]
    %v1554 = vld [vmem:[#allocation8 + $0x230] sm:$0xff]
    %v1555 = vld [vmem:[#allocation8 + $0x238] sm:$0xff]
    %v1556 = vld [vmem:[#allocation8 + $0x240] sm:$0xff]
    %v1557 = vld [vmem:[#allocation8 + $0x248] sm:$0xff]
    %v1558 = vld [vmem:[#allocation8 + $0x250] sm:$0xff]
    %v1559 = vld [vmem:[#allocation8 + $0x258] sm:$0xff]
    %v1560 = vld [vmem:[#allocation8 + $0x260] sm:$0xff]
    %v1561 = vld [vmem:[#allocation8 + $0x268] sm:$0xff]
    %v1562 = vld [vmem:[#allocation8 + $0x270] sm:$0xff]
    %v1563 = vld [vmem:[#allocation8 + $0x278] sm:$0xff]
    %v1564 = vld [vmem:[#allocation8 + $0x280] sm:$0xff]
    %v1565 = vld [vmem:[#allocation8 + $0x288] sm:$0xff]
    %v1566 = vld [vmem:[#allocation8 + $0x290] sm:$0xff]
    %v1567 = vld [vmem:[#allocation8 + $0x298] sm:$0xff]
    %v1568 = vld [vmem:[#allocation8 + $0x2a0] sm:$0xff]
    %v1569 = vld [vmem:[#allocation8 + $0x2a8] sm:$0xff]
    %v1570 = vld [vmem:[#allocation8 + $0x2b0] sm:$0xff]
    %v1571 = vld [vmem:[#allocation8 + $0x2b8] sm:$0xff]
    %v1572 = vld [vmem:[#allocation8 + $0x2c0] sm:$0xff]
    %v1573 = vld [vmem:[#allocation8 + $0x2c8] sm:$0xff]
    %v1574 = vld [vmem:[#allocation8 + $0x2d0] sm:$0xff]
    %v1575 = vld [vmem:[#allocation8 + $0x2d8] sm:$0xff]
    %v1576 = vld [vmem:[#allocation8 + $0x2e0] sm:$0xff]
    %v1577 = vld [vmem:[#allocation8 + $0x2e8] sm:$0xff]
    %v1578 = vld [vmem:[#allocation8 + $0x2f0] sm:$0xff]
    %v1579 = vld [vmem:[#allocation8 + $0x2f8] sm:$0xff]
    %v1580 = vld [vmem:[#allocation8 + $0x300] sm:$0xff]
    %v1581 = vld [vmem:[#allocation8 + $0x308] sm:$0xff]
    %v1582 = vld [vmem:[#allocation8 + $0x310] sm:$0xff]
    %v1583 = vld [vmem:[#allocation8 + $0x318] sm:$0xff]
    %v1584 = vld [vmem:[#allocation8 + $0x320] sm:$0xff]
    %v1585 = vld [vmem:[#allocation8 + $0x328] sm:$0xff]
    %v1586 = vld [vmem:[#allocation8 + $0x330] sm:$0xff]
    %v1587 = vld [vmem:[#allocation8 + $0x338] sm:$0xff]
    %v1588 = vld [vmem:[#allocation8 + $0x340] sm:$0xff]
    %v1589 = vld [vmem:[#allocation8 + $0x348] sm:$0xff]
    %v1590 = vld [vmem:[#allocation8 + $0x350] sm:$0xff]
    %v1591 = vld [vmem:[#allocation8 + $0x358] sm:$0xff]
    %v1592 = vld [vmem:[#allocation8 + $0x360] sm:$0xff]
    %v1593 = vld [vmem:[#allocation8 + $0x368] sm:$0xff]
    %v1594 = vld [vmem:[#allocation8 + $0x370] sm:$0xff]
    %v1595 = vld [vmem:[#allocation8 + $0x378] sm:$0xff]
    %v1596 = vld [vmem:[#allocation8 + $0x380] sm:$0xff]
    %v1597 = vld [vmem:[#allocation8 + $0x388] sm:$0xff]
    %v1598 = vld [vmem:[#allocation8 + $0x390] sm:$0xff]
    %v1599 = vld [vmem:[#allocation8 + $0x398] sm:$0xff]
    %v1600 = vld [vmem:[#allocation8 + $0x3a0] sm:$0xff]
    %v1601 = vld [vmem:[#allocation8 + $0x3a8] sm:$0xff]
    %v1602 = vld [vmem:[#allocation8 + $0x3b0] sm:$0xff]
    %v1603 = vld [vmem:[#allocation8 + $0x3b8] sm:$0xff]
    %v1604 = vld [vmem:[#allocation8 + $0x3c0] sm:$0xff]
    %v1605 = vld [vmem:[#allocation8 + $0x3c8] sm:$0xff]
    %v1606 = vld [vmem:[#allocation8 + $0x3d0] sm:$0xff]
    %v1607 = vld [vmem:[#allocation8 + $0x3d8] sm:$0xff]
    %v1608 = vld [vmem:[#allocation8 + $0x3e0] sm:$0xff]
    %v1609 = vld [vmem:[#allocation8 + $0x3e8] sm:$0xff]
    %v1610 = vld [vmem:[#allocation8 + $0x3f0] sm:$0xff]
    %v1611 = vld [vmem:[#allocation8 + $0x3f8] sm:$0xff]
    %v1612 = vld [vmem:[#allocation8 + $0x400] sm:$0xff]
    %v1613 = vld [vmem:[#allocation8 + $0x408] sm:$0xff]
    %v1614 = vld [vmem:[#allocation8 + $0x410] sm:$0xff]
    %v1615 = vld [vmem:[#allocation8 + $0x418] sm:$0xff]
    %v1616 = vld [vmem:[#allocation8 + $0x420] sm:$0xff]
    %v1617 = vld [vmem:[#allocation8 + $0x428] sm:$0xff]
    %v1618 = vld [vmem:[#allocation8 + $0x430] sm:$0xff]
    %v1619 = vld [vmem:[#allocation8 + $0x438] sm:$0xff]
    %v1620 = vld [vmem:[#allocation8 + $0x440] sm:$0xff]
    %v1621 = vld [vmem:[#allocation8 + $0x448] sm:$0xff]
    %v1622 = vld [vmem:[#allocation8 + $0x450] sm:$0xff]
    %v1623 = vld [vmem:[#allocation8 + $0x458] sm:$0xff]
    %v1624 = vld [vmem:[#allocation8 + $0x460] sm:$0xff]
    %v1625 = vld [vmem:[#allocation8 + $0x468] sm:$0xff]
    %v1626 = vld [vmem:[#allocation8 + $0x470] sm:$0xff]
    %v1627 = vld [vmem:[#allocation8 + $0x478] sm:$0xff]
    %v1628 = vld [vmem:[#allocation8 + $0x480] sm:$0xff]
    %v1629 = vld [vmem:[#allocation8 + $0x488] sm:$0xff]
    %v1630 = vld [vmem:[#allocation8 + $0x490] sm:$0xff]
    %v1631 = vld [vmem:[#allocation8 + $0x498] sm:$0xff]
    %v1632 = vld [vmem:[#allocation8 + $0x4a0] sm:$0xff]
    %v1633 = vld [vmem:[#allocation8 + $0x4a8] sm:$0xff]
    %v1634 = vld [vmem:[#allocation8 + $0x4b0] sm:$0xff]
    %v1635 = vld [vmem:[#allocation8 + $0x4b8] sm:$0xff]
    %v1636 = vld [vmem:[#allocation8 + $0x4c0] sm:$0xff]
    %v1637 = vld [vmem:[#allocation8 + $0x4c8] sm:$0xff]
    %v1638 = vld [vmem:[#allocation8 + $0x4d0] sm:$0xff]
    %v1639 = vld [vmem:[#allocation8 + $0x4d8] sm:$0xff]
    %v1640 = vld [vmem:[#allocation8 + $0x4e0] sm:$0xff]
    %v1641 = vld [vmem:[#allocation8 + $0x4e8] sm:$0xff]
    %v1642 = vld [vmem:[#allocation8 + $0x4f0] sm:$0xff]
    %v1643 = vld [vmem:[#allocation8 + $0x4f8] sm:$0xff]
    %v1644 = vld [vmem:[#allocation8 + $0x500] sm:$0xff]
    %v1645 = vld [vmem:[#allocation8 + $0x508] sm:$0xff]
    %v1646 = vld [vmem:[#allocation8 + $0x510] sm:$0xff]
    %v1647 = vld [vmem:[#allocation8 + $0x518] sm:$0xff]
    %v1648 = vld [vmem:[#allocation8 + $0x520] sm:$0xff]
    %v1649 = vld [vmem:[#allocation8 + $0x528] sm:$0xff]
    %v1650 = vld [vmem:[#allocation8 + $0x530] sm:$0xff]
    %v1651 = vld [vmem:[#allocation8 + $0x538] sm:$0xff]
    %v1652 = vld [vmem:[#allocation8 + $0x540] sm:$0xff]
    %v1653 = vld [vmem:[#allocation8 + $0x548] sm:$0xff]
    %v1654 = vld [vmem:[#allocation8 + $0x550] sm:$0xff]
    %v1655 = vld [vmem:[#allocation8 + $0x558] sm:$0xff]
    %v1656 = vld [vmem:[#allocation8 + $0x560] sm:$0xff]
    %v1657 = vld [vmem:[#allocation8 + $0x568] sm:$0xff]
    %v1658 = vld [vmem:[#allocation8 + $0x570] sm:$0xff]
    %v1659 = vld [vmem:[#allocation8 + $0x578] sm:$0xff]
    %v1660 = vld [vmem:[#allocation8 + $0x580] sm:$0xff]
    %v1661 = vld [vmem:[#allocation8 + $0x588] sm:$0xff]
    %v1662 = vld [vmem:[#allocation8 + $0x590] sm:$0xff]
    %v1663 = vld [vmem:[#allocation8 + $0x598] sm:$0xff]
    %v1664 = vld [vmem:[#allocation8 + $0x5a0] sm:$0xff]
    %v1665 = vld [vmem:[#allocation8 + $0x5a8] sm:$0xff]
    %v1666 = vld [vmem:[#allocation8 + $0x5b0] sm:$0xff]
    %v1667 = vld [vmem:[#allocation8 + $0x5b8] sm:$0xff]
    %v1668 = vld [vmem:[#allocation8 + $0x5c0] sm:$0xff]
    %v1669 = vld [vmem:[#allocation8 + $0x5c8] sm:$0xff]
    %v1670 = vld [vmem:[#allocation8 + $0x5d0] sm:$0xff]
    %v1671 = vld [vmem:[#allocation8 + $0x5d8] sm:$0xff]
    %v1672 = vld [vmem:[#allocation8 + $0x5e0] sm:$0xff]
    %v1673 = vld [vmem:[#allocation8 + $0x5e8] sm:$0xff]
    %v1674 = vld [vmem:[#allocation8 + $0x5f0] sm:$0xff]
    %v1675 = vld [vmem:[#allocation8 + $0x5f8] sm:$0xff]
    %v1676 = vld [vmem:[#allocation8 + $0x600] sm:$0xff]
    %v1677 = vld [vmem:[#allocation8 + $0x608] sm:$0xff]
    %v1678 = vld [vmem:[#allocation8 + $0x610] sm:$0xff]
    %v1679 = vld [vmem:[#allocation8 + $0x618] sm:$0xff]
    %v1680 = vld [vmem:[#allocation8 + $0x620] sm:$0xff]
    %v1681 = vld [vmem:[#allocation8 + $0x628] sm:$0xff]
    %v1682 = vld [vmem:[#allocation8 + $0x630] sm:$0xff]
    %v1683 = vld [vmem:[#allocation8 + $0x638] sm:$0xff]
    %v1684 = vld [vmem:[#allocation8 + $0x640] sm:$0xff]
    %v1685 = vld [vmem:[#allocation8 + $0x648] sm:$0xff]
    %v1686 = vld [vmem:[#allocation8 + $0x650] sm:$0xff]
    %v1687 = vld [vmem:[#allocation8 + $0x658] sm:$0xff]
    %v1688 = vld [vmem:[#allocation8 + $0x660] sm:$0xff]
    %v1689 = vld [vmem:[#allocation8 + $0x668] sm:$0xff]
    %v1690 = vld [vmem:[#allocation8 + $0x670] sm:$0xff]
    %v1691 = vld [vmem:[#allocation8 + $0x678] sm:$0xff]
    %v1692 = vld [vmem:[#allocation8 + $0x680] sm:$0xff]
    %v1693 = vld [vmem:[#allocation8 + $0x688] sm:$0xff]
    %v1694 = vld [vmem:[#allocation8 + $0x690] sm:$0xff]
    %v1695 = vld [vmem:[#allocation8 + $0x698] sm:$0xff]
    %v1696 = vld [vmem:[#allocation8 + $0x6a0] sm:$0xff]
    %v1697 = vld [vmem:[#allocation8 + $0x6a8] sm:$0xff]
    %v1698 = vld [vmem:[#allocation8 + $0x6b0] sm:$0xff]
    %v1699 = vld [vmem:[#allocation8 + $0x6b8] sm:$0xff]
    %v1700 = vld [vmem:[#allocation8 + $0x6c0] sm:$0xff]
    %v1701 = vld [vmem:[#allocation8 + $0x6c8] sm:$0xff]
    %v1702 = vld [vmem:[#allocation8 + $0x6d0] sm:$0xff]
    %v1703 = vld [vmem:[#allocation8 + $0x6d8] sm:$0xff]
    %v1704 = vld [vmem:[#allocation8 + $0x6e0] sm:$0xff]
    %v1705 = vld [vmem:[#allocation8 + $0x6e8] sm:$0xff]
    %v1706 = vld [vmem:[#allocation8 + $0x6f0] sm:$0xff]
    %v1707 = vld [vmem:[#allocation8 + $0x6f8] sm:$0xff]
    %v1708 = vld [vmem:[#allocation8 + $0x700] sm:$0xff]
    %v1709 = vld [vmem:[#allocation8 + $0x708] sm:$0xff]
    %v1710 = vld [vmem:[#allocation8 + $0x710] sm:$0xff]
    %v1711 = vld [vmem:[#allocation8 + $0x718] sm:$0xff]
    %v1712 = vld [vmem:[#allocation8 + $0x720] sm:$0xff]
    %v1713 = vld [vmem:[#allocation8 + $0x728] sm:$0xff]
    %v1714 = vld [vmem:[#allocation8 + $0x730] sm:$0xff]
    %v1715 = vld [vmem:[#allocation8 + $0x738] sm:$0xff]
    %v1716 = vld [vmem:[#allocation8 + $0x740] sm:$0xff]
    %v1717 = vld [vmem:[#allocation8 + $0x748] sm:$0xff]
    %v1718 = vld [vmem:[#allocation8 + $0x750] sm:$0xff]
    %v1719 = vld [vmem:[#allocation8 + $0x758] sm:$0xff]
    %v1720 = vld [vmem:[#allocation8 + $0x760] sm:$0xff]
    %v1721 = vld [vmem:[#allocation8 + $0x768] sm:$0xff]
    %v1722 = vld [vmem:[#allocation8 + $0x770] sm:$0xff]
    %v1723 = vld [vmem:[#allocation8 + $0x778] sm:$0xff]
    %v1724 = vld [vmem:[#allocation8 + $0x780] sm:$0xff]
    %v1725 = vld [vmem:[#allocation8 + $0x788] sm:$0xff]
    %v1726 = vld [vmem:[#allocation8 + $0x790] sm:$0xff]
    %v1727 = vld [vmem:[#allocation8 + $0x798] sm:$0xff]
    %v1728 = vld [vmem:[#allocation8 + $0x7a0] sm:$0xff]
    %v1729 = vld [vmem:[#allocation8 + $0x7a8] sm:$0xff]
    %v1730 = vld [vmem:[#allocation8 + $0x7b0] sm:$0xff]
    %v1731 = vld [vmem:[#allocation8 + $0x7b8] sm:$0xff]
    %v1732 = vld [vmem:[#allocation8 + $0x7c0] sm:$0xff]
    %v1733 = vld [vmem:[#allocation8 + $0x7c8] sm:$0xff]
    %v1734 = vld [vmem:[#allocation8 + $0x7d0] sm:$0xff]
    %v1735 = vld [vmem:[#allocation8 + $0x7d8] sm:$0xff]
    %v1736 = vld [vmem:[#allocation8 + $0x7e0] sm:$0xff]
    %v1737 = vld [vmem:[#allocation8 + $0x7e8] sm:$0xff]
    %v1738 = vld [vmem:[#allocation8 + $0x7f0] sm:$0xff]
    %v1739 = vld [vmem:[#allocation8 + $0x7f8] sm:$0xff]
    %v1740 = vld [vmem:[#allocation8 + $0x800] sm:$0xff]
    %v1741 = vld [vmem:[#allocation8 + $0x808] sm:$0xff]
    %v1742 = vld [vmem:[#allocation8 + $0x810] sm:$0xff]
    %v1743 = vld [vmem:[#allocation8 + $0x818] sm:$0xff]
    %v1744 = vld [vmem:[#allocation8 + $0x820] sm:$0xff]
    %v1745 = vld [vmem:[#allocation8 + $0x828] sm:$0xff]
    %v1746 = vld [vmem:[#allocation8 + $0x830] sm:$0xff]
    %v1747 = vld [vmem:[#allocation8 + $0x838] sm:$0xff]
    %v1748 = vld [vmem:[#allocation8 + $0x840] sm:$0xff]
    %v1749 = vld [vmem:[#allocation8 + $0x848] sm:$0xff]
    %v1750 = vld [vmem:[#allocation8 + $0x850] sm:$0xff]
    %v1751 = vld [vmem:[#allocation8 + $0x858] sm:$0xff]
    %v1752 = vld [vmem:[#allocation8 + $0x860] sm:$0xff]
    %v1753 = vld [vmem:[#allocation8 + $0x868] sm:$0xff]
    %v1754 = vld [vmem:[#allocation8 + $0x870] sm:$0xff]
    %v1755 = vld [vmem:[#allocation8 + $0x878] sm:$0xff]
    %v1756 = vld [vmem:[#allocation8 + $0x880] sm:$0xff]
    %v1757 = vld [vmem:[#allocation8 + $0x888] sm:$0xff]
    %v1758 = vld [vmem:[#allocation8 + $0x890] sm:$0xff]
    %v1759 = vld [vmem:[#allocation8 + $0x898] sm:$0xff]
    %v1760 = vld [vmem:[#allocation8 + $0x8a0] sm:$0xff]
    %v1761 = vld [vmem:[#allocation8 + $0x8a8] sm:$0xff]
    %v1762 = vld [vmem:[#allocation8 + $0x8b0] sm:$0xff]
    %v1763 = vld [vmem:[#allocation8 + $0x8b8] sm:$0xff]
    %v1764 = vld [vmem:[#allocation8 + $0x8c0] sm:$0xff]
    %v1765 = vld [vmem:[#allocation8 + $0x8c8] sm:$0xff]
    %v1766 = vld [vmem:[#allocation8 + $0x8d0] sm:$0xff]
    %v1767 = vld [vmem:[#allocation8 + $0x8d8] sm:$0xff]
    %v1768 = vld [vmem:[#allocation8 + $0x8e0] sm:$0xff]
    %v1769 = vld [vmem:[#allocation8 + $0x8e8] sm:$0xff]
    %v1770 = vld [vmem:[#allocation8 + $0x8f0] sm:$0xff]
    %v1771 = vld [vmem:[#allocation8 + $0x8f8] sm:$0xff]
    %v1772 = vld [vmem:[#allocation8 + $0x900] sm:$0xff]
    %v1773 = vld [vmem:[#allocation8 + $0x908] sm:$0xff]
    %v1774 = vld [vmem:[#allocation8 + $0x910] sm:$0xff]
    %v1775 = vld [vmem:[#allocation8 + $0x918] sm:$0xff]
    %v1776 = vld [vmem:[#allocation8 + $0x920] sm:$0xff]
    %v1777 = vld [vmem:[#allocation8 + $0x928] sm:$0xff]
    %v1778 = vld [vmem:[#allocation8 + $0x930] sm:$0xff]
    %v1779 = vld [vmem:[#allocation8 + $0x938] sm:$0xff]
    %v1780 = vld [vmem:[#allocation8 + $0x940] sm:$0xff]
    %v1781 = vld [vmem:[#allocation8 + $0x948] sm:$0xff]
    %v1782 = vld [vmem:[#allocation8 + $0x950] sm:$0xff]
    %v1783 = vld [vmem:[#allocation8 + $0x958] sm:$0xff]
    %v1784 = vld [vmem:[#allocation8 + $0x960] sm:$0xff]
    %v1785 = vld [vmem:[#allocation8 + $0x968] sm:$0xff]
    %v1786 = vld [vmem:[#allocation8 + $0x970] sm:$0xff]
    %v1787 = vld [vmem:[#allocation8 + $0x978] sm:$0xff]
    %v1788 = vld [vmem:[#allocation8 + $0x980] sm:$0xff]
    %v1789 = vld [vmem:[#allocation8 + $0x988] sm:$0xff]
    %v1790 = vld [vmem:[#allocation8 + $0x990] sm:$0xff]
    %v1791 = vld [vmem:[#allocation8 + $0x998] sm:$0xff]
    %v1792 = vld [vmem:[#allocation8 + $0x9a0] sm:$0xff]
    %v1793 = vld [vmem:[#allocation8 + $0x9a8] sm:$0xff]
    %v1794 = vld [vmem:[#allocation8 + $0x9b0] sm:$0xff]
    %v1795 = vld [vmem:[#allocation8 + $0x9b8] sm:$0xff]
    %v1796 = vld [vmem:[#allocation8 + $0x9c0] sm:$0xff]
    %v1797 = vld [vmem:[#allocation8 + $0x9c8] sm:$0xff]
    %v1798 = vld [vmem:[#allocation8 + $0x9d0] sm:$0xff]
    %v1799 = vld [vmem:[#allocation8 + $0x9d8] sm:$0xff]
    %v1800 = vld [vmem:[#allocation8 + $0x9e0] sm:$0xff]
    %v1801 = vld [vmem:[#allocation8 + $0x9e8] sm:$0xff]
    %v1802 = vld [vmem:[#allocation8 + $0x9f0] sm:$0xff]
    %v1803 = vld [vmem:[#allocation8 + $0x9f8] sm:$0xff]
    %v1804 = vld [vmem:[#allocation8 + $0xa00] sm:$0xff]
    %v1805 = vld [vmem:[#allocation8 + $0xa08] sm:$0xff]
    %v1806 = vld [vmem:[#allocation8 + $0xa10] sm:$0xff]
    %v1807 = vld [vmem:[#allocation8 + $0xa18] sm:$0xff]
    %v1808 = vld [vmem:[#allocation8 + $0xa20] sm:$0xff]
    %v1809 = vld [vmem:[#allocation8 + $0xa28] sm:$0xff]
    %v1810 = vld [vmem:[#allocation8 + $0xa30] sm:$0xff]
    %v1811 = vld [vmem:[#allocation8 + $0xa38] sm:$0xff]
    %v1812 = vld [vmem:[#allocation8 + $0xa40] sm:$0xff]
    %v1813 = vld [vmem:[#allocation8 + $0xa48] sm:$0xff]
    %v1814 = vld [vmem:[#allocation8 + $0xa50] sm:$0xff]
    %v1815 = vld [vmem:[#allocation8 + $0xa58] sm:$0xff]
    %v1816 = vld [vmem:[#allocation8 + $0xa60] sm:$0xff]
    %v1817 = vld [vmem:[#allocation8 + $0xa68] sm:$0xff]
    %v1818 = vld [vmem:[#allocation8 + $0xa70] sm:$0xff]
    %v1819 = vld [vmem:[#allocation8 + $0xa78] sm:$0xff]
    %v1820 = vld [vmem:[#allocation8 + $0xa80] sm:$0xff]
    %v1821 = vld [vmem:[#allocation8 + $0xa88] sm:$0xff]
    %v1822 = vld [vmem:[#allocation8 + $0xa90] sm:$0xff]
    %v1823 = vld [vmem:[#allocation8 + $0xa98] sm:$0xff]
    %v1824 = vld [vmem:[#allocation8 + $0xaa0] sm:$0xff]
    %v1825 = vld [vmem:[#allocation8 + $0xaa8] sm:$0xff]
    %v1826 = vld [vmem:[#allocation8 + $0xab0] sm:$0xff]
    %v1827 = vld [vmem:[#allocation8 + $0xab8] sm:$0xff]
    %v1828 = vld [vmem:[#allocation8 + $0xac0] sm:$0xff]
    %v1829 = vld [vmem:[#allocation8 + $0xac8] sm:$0xff]
    %v1830 = vld [vmem:[#allocation8 + $0xad0] sm:$0xff]
    %v1831 = vld [vmem:[#allocation8 + $0xad8] sm:$0xff]
    %v1832 = vld [vmem:[#allocation8 + $0xae0] sm:$0xff]
    %v1833 = vld [vmem:[#allocation8 + $0xae8] sm:$0xff]
    %v1834 = vld [vmem:[#allocation8 + $0xaf0] sm:$0xff]
    %v1835 = vld [vmem:[#allocation8 + $0xaf8] sm:$0xff]
    %v1836 = vld [vmem:[#allocation8 + $0xb00] sm:$0xff]
    %v1837 = vld [vmem:[#allocation8 + $0xb08] sm:$0xff]
    %v1838 = vld [vmem:[#allocation8 + $0xb10] sm:$0xff]
    %v1839 = vld [vmem:[#allocation8 + $0xb18] sm:$0xff]
    %v1840 = vld [vmem:[#allocation8 + $0xb20] sm:$0xff]
    %v1841 = vld [vmem:[#allocation8 + $0xb28] sm:$0xff]
    %v1842 = vld [vmem:[#allocation8 + $0xb30] sm:$0xff]
    %v1843 = vld [vmem:[#allocation8 + $0xb38] sm:$0xff]
    %v1844 = vld [vmem:[#allocation8 + $0xb40] sm:$0xff]
    %v1845 = vld [vmem:[#allocation8 + $0xb48] sm:$0xff]
    %v1846 = vld [vmem:[#allocation8 + $0xb50] sm:$0xff]
    %v1847 = vld [vmem:[#allocation8 + $0xb58] sm:$0xff]
    %v1848 = vld [vmem:[#allocation8 + $0xb60] sm:$0xff]
    %v1849 = vld [vmem:[#allocation8 + $0xb68] sm:$0xff]
    %v1850 = vld [vmem:[#allocation8 + $0xb70] sm:$0xff]
    %v1851 = vld [vmem:[#allocation8 + $0xb78] sm:$0xff]
    %v1852 = vld [vmem:[#allocation8 + $0xb80] sm:$0xff]
    %v1853 = vld [vmem:[#allocation8 + $0xb88] sm:$0xff]
    %v1854 = vld [vmem:[#allocation8 + $0xb90] sm:$0xff]
    %v1855 = vld [vmem:[#allocation8 + $0xb98] sm:$0xff]
    %v1856 = vld [vmem:[#allocation8 + $0xba0] sm:$0xff]
    %v1857 = vld [vmem:[#allocation8 + $0xba8] sm:$0xff]
    %v1858 = vld [vmem:[#allocation8 + $0xbb0] sm:$0xff]
    %v1859 = vld [vmem:[#allocation8 + $0xbb8] sm:$0xff]
    %v1860 = vld [vmem:[#allocation8 + $0xbc0] sm:$0xff]
    %v1861 = vld [vmem:[#allocation8 + $0xbc8] sm:$0xff]
    %v1862 = vld [vmem:[#allocation8 + $0xbd0] sm:$0xff]
    %v1863 = vld [vmem:[#allocation8 + $0xbd8] sm:$0xff]
    %v1864 = vld [vmem:[#allocation8 + $0xbe0] sm:$0xff]
    %v1865 = vld [vmem:[#allocation8 + $0xbe8] sm:$0xff]
    %v1866 = vld [vmem:[#allocation8 + $0xbf0] sm:$0xff]
    %v1867 = vld [vmem:[#allocation8 + $0xbf8] sm:$0xff]
    %v1868 = vld [vmem:[#allocation8 + $0xc00] sm:$0xff]
    %v1869 = vld [vmem:[#allocation8 + $0xc08] sm:$0xff]
    %v1870 = vld [vmem:[#allocation8 + $0xc10] sm:$0xff]
    %v1871 = vld [vmem:[#allocation8 + $0xc18] sm:$0xff]
    %v1872 = vld [vmem:[#allocation8 + $0xc20] sm:$0xff]
    %v1873 = vld [vmem:[#allocation8 + $0xc28] sm:$0xff]
    %v1874 = vld [vmem:[#allocation8 + $0xc30] sm:$0xff]
    %v1875 = vld [vmem:[#allocation8 + $0xc38] sm:$0xff]
    %v1876 = vld [vmem:[#allocation8 + $0xc40] sm:$0xff]
    %v1877 = vld [vmem:[#allocation8 + $0xc48] sm:$0xff]
    %v1878 = vld [vmem:[#allocation8 + $0xc50] sm:$0xff]
    %v1879 = vld [vmem:[#allocation8 + $0xc58] sm:$0xff]
    %v1880 = vld [vmem:[#allocation8 + $0xc60] sm:$0xff]
    %v1881 = vld [vmem:[#allocation8 + $0xc68] sm:$0xff]
    %v1882 = vld [vmem:[#allocation8 + $0xc70] sm:$0xff]
    %v1883 = vld [vmem:[#allocation8 + $0xc78] sm:$0xff]
    %v1884 = vld [vmem:[#allocation8 + $0xc80] sm:$0xff]
    %v1885 = vld [vmem:[#allocation8 + $0xc88] sm:$0xff]
    %v1886 = vld [vmem:[#allocation8 + $0xc90] sm:$0xff]
    %v1887 = vld [vmem:[#allocation8 + $0xc98] sm:$0xff]
    %v1888 = vld [vmem:[#allocation8 + $0xca0] sm:$0xff]
    %v1889 = vld [vmem:[#allocation8 + $0xca8] sm:$0xff]
    %v1890 = vld [vmem:[#allocation8 + $0xcb0] sm:$0xff]
    %v1891 = vld [vmem:[#allocation8 + $0xcb8] sm:$0xff]
    %v1892 = vld [vmem:[#allocation8 + $0xcc0] sm:$0xff]
    %v1893 = vld [vmem:[#allocation8 + $0xcc8] sm:$0xff]
    %v1894 = vld [vmem:[#allocation8 + $0xcd0] sm:$0xff]
    %v1895 = vld [vmem:[#allocation8 + $0xcd8] sm:$0xff]
    %v1896 = vld [vmem:[#allocation8 + $0xce0] sm:$0xff]
    %v1897 = vld [vmem:[#allocation8 + $0xce8] sm:$0xff]
    %v1898 = vld [vmem:[#allocation8 + $0xcf0] sm:$0xff]
    %v1899 = vld [vmem:[#allocation8 + $0xcf8] sm:$0xff]
    %v1900 = vld [vmem:[#allocation8 + $0xd00] sm:$0xff]
    %v1901 = vld [vmem:[#allocation8 + $0xd08] sm:$0xff]
    %v1902 = vld [vmem:[#allocation8 + $0xd10] sm:$0xff]
    %v1903 = vld [vmem:[#allocation8 + $0xd18] sm:$0xff]
    %v1904 = vld [vmem:[#allocation8 + $0xd20] sm:$0xff]
    %v1905 = vld [vmem:[#allocation8 + $0xd28] sm:$0xff]
    %v1906 = vld [vmem:[#allocation8 + $0xd30] sm:$0xff]
    %v1907 = vld [vmem:[#allocation8 + $0xd38] sm:$0xff]
    %v1908 = vld [vmem:[#allocation8 + $0xd40] sm:$0xff]
    %v1909 = vld [vmem:[#allocation8 + $0xd48] sm:$0xff]
    %v1910 = vld [vmem:[#allocation8 + $0xd50] sm:$0xff]
    %v1911 = vld [vmem:[#allocation8 + $0xd58] sm:$0xff]
    %v1912 = vld [vmem:[#allocation8 + $0xd60] sm:$0xff]
    %v1913 = vld [vmem:[#allocation8 + $0xd68] sm:$0xff]
    %v1914 = vld [vmem:[#allocation8 + $0xd70] sm:$0xff]
    %v1915 = vld [vmem:[#allocation8 + $0xd78] sm:$0xff]
    %v1916 = vld [vmem:[#allocation8 + $0xd80] sm:$0xff]
    %v1917 = vld [vmem:[#allocation8 + $0xd88] sm:$0xff]
    %v1918 = vld [vmem:[#allocation8 + $0xd90] sm:$0xff]
    %v1919 = vld [vmem:[#allocation8 + $0xd98] sm:$0xff]
    %v1920 = vld [vmem:[#allocation8 + $0xda0] sm:$0xff]
    %v1921 = vld [vmem:[#allocation8 + $0xda8] sm:$0xff]
    %v1922 = vld [vmem:[#allocation8 + $0xdb0] sm:$0xff]
    %v1923 = vld [vmem:[#allocation8 + $0xdb8] sm:$0xff]
    %v1924 = vld [vmem:[#allocation8 + $0xdc0] sm:$0xff]
    %v1925 = vld [vmem:[#allocation8 + $0xdc8] sm:$0xff]
    %v1926 = vld [vmem:[#allocation8 + $0xdd0] sm:$0xff]
    %v1927 = vld [vmem:[#allocation8 + $0xdd8] sm:$0xff]
    %v1928 = vld [vmem:[#allocation8 + $0xde0] sm:$0xff]
    %v1929 = vld [vmem:[#allocation8 + $0xde8] sm:$0xff]
    %v1930 = vld [vmem:[#allocation8 + $0xdf0] sm:$0xff]
    %v1931 = vld [vmem:[#allocation8 + $0xdf8] sm:$0xff]
    %v1932 = vld [vmem:[#allocation8 + $0xe00] sm:$0xff]
    %v1933 = vld [vmem:[#allocation8 + $0xe08] sm:$0xff]
    %v1934 = vld [vmem:[#allocation8 + $0xe10] sm:$0xff]
    %v1935 = vld [vmem:[#allocation8 + $0xe18] sm:$0xff]
    %v1936 = vld [vmem:[#allocation8 + $0xe20] sm:$0xff]
    %v1937 = vld [vmem:[#allocation8 + $0xe28] sm:$0xff]
    %v1938 = vld [vmem:[#allocation8 + $0xe30] sm:$0xff]
    %v1939 = vld [vmem:[#allocation8 + $0xe38] sm:$0xff]
    %v1940 = vld [vmem:[#allocation8 + $0xe40] sm:$0xff]
    %v1941 = vld [vmem:[#allocation8 + $0xe48] sm:$0xff]
    %v1942 = vld [vmem:[#allocation8 + $0xe50] sm:$0xff]
    %v1943 = vld [vmem:[#allocation8 + $0xe58] sm:$0xff]
    %v1944 = vld [vmem:[#allocation8 + $0xe60] sm:$0xff]
    %v1945 = vld [vmem:[#allocation8 + $0xe68] sm:$0xff]
    %v1946 = vld [vmem:[#allocation8 + $0xe70] sm:$0xff]
    %v1947 = vld [vmem:[#allocation8 + $0xe78] sm:$0xff]
    %v1948 = vld [vmem:[#allocation8 + $0xe80] sm:$0xff]
    %v1949 = vld [vmem:[#allocation8 + $0xe88] sm:$0xff]
    %v1950 = vld [vmem:[#allocation8 + $0xe90] sm:$0xff]
    %v1951 = vld [vmem:[#allocation8 + $0xe98] sm:$0xff]
    %v1952 = vld [vmem:[#allocation8 + $0xea0] sm:$0xff]
    %v1953 = vld [vmem:[#allocation8 + $0xea8] sm:$0xff]
    %v1954 = vld [vmem:[#allocation8 + $0xeb0] sm:$0xff]
    %v1955 = vld [vmem:[#allocation8 + $0xeb8] sm:$0xff]
    %v1956 = vld [vmem:[#allocation8 + $0xec0] sm:$0xff]
    %v1957 = vld [vmem:[#allocation8 + $0xec8] sm:$0xff]
    %v1958 = vld [vmem:[#allocation8 + $0xed0] sm:$0xff]
    %v1959 = vld [vmem:[#allocation8 + $0xed8] sm:$0xff]
    %v1960 = vld [vmem:[#allocation8 + $0xee0] sm:$0xff]
    %v1961 = vld [vmem:[#allocation8 + $0xee8] sm:$0xff]
    %v1962 = vld [vmem:[#allocation8 + $0xef0] sm:$0xff]
    %v1963 = vld [vmem:[#allocation8 + $0xef8] sm:$0xff]
    %v1964 = vld [vmem:[#allocation8 + $0xf00] sm:$0xff]
    %v1965 = vld [vmem:[#allocation8 + $0xf08] sm:$0xff]
    %v1966 = vld [vmem:[#allocation8 + $0xf10] sm:$0xff]
    %v1967 = vld [vmem:[#allocation8 + $0xf18] sm:$0xff]
    %v1968 = vld [vmem:[#allocation8 + $0xf20] sm:$0xff]
    %v1969 = vld [vmem:[#allocation8 + $0xf28] sm:$0xff]
    %v1970 = vld [vmem:[#allocation8 + $0xf30] sm:$0xff]
    %v1971 = vld [vmem:[#allocation8 + $0xf38] sm:$0xff]
    %v1972 = vld [vmem:[#allocation8 + $0xf40] sm:$0xff]
    %v1973 = vld [vmem:[#allocation8 + $0xf48] sm:$0xff]
    %v1974 = vld [vmem:[#allocation8 + $0xf50] sm:$0xff]
    %v1975 = vld [vmem:[#allocation8 + $0xf58] sm:$0xff]
    %v1976 = vld [vmem:[#allocation8 + $0xf60] sm:$0xff]
    %v1977 = vld [vmem:[#allocation8 + $0xf68] sm:$0xff]
    %v1978 = vld [vmem:[#allocation8 + $0xf70] sm:$0xff]
    %v1979 = vld [vmem:[#allocation8 + $0xf78] sm:$0xff]
    %v1980 = vld [vmem:[#allocation8 + $0xf80] sm:$0xff]
    %v1981 = vld [vmem:[#allocation8 + $0xf88] sm:$0xff]
    %v1982 = vld [vmem:[#allocation8 + $0xf90] sm:$0xff]
    %v1983 = vld [vmem:[#allocation8 + $0xf98] sm:$0xff]
    %v1984 = vld [vmem:[#allocation8 + $0xfa0] sm:$0xff]
    %v1985 = vld [vmem:[#allocation8 + $0xfa8] sm:$0xff]
    %v1986 = vld [vmem:[#allocation8 + $0xfb0] sm:$0xff]
    %v1987 = vld [vmem:[#allocation8 + $0xfb8] sm:$0xff]
    %v1988 = vld [vmem:[#allocation8 + $0xfc0] sm:$0xff]
    %v1989 = vld [vmem:[#allocation8 + $0xfc8] sm:$0xff]
    %v1990 = vld [vmem:[#allocation8 + $0xfd0] sm:$0xff]
    %v1991 = vld [vmem:[#allocation8 + $0xfd8] sm:$0xff]
    %v1992 = vld [vmem:[#allocation8 + $0xfe0] sm:$0xff]
    %v1993 = vld [vmem:[#allocation8 + $0xfe8] sm:$0xff]
    %v1994 = vld [vmem:[#allocation8 + $0xff0] sm:$0xff]
    %v1995 = vld [vmem:[#allocation8 + $0xff8] sm:$0xff]
    %v1996 = vld [vmem:[#allocation8 + $0x1000] sm:$0xff]
    %v1997 = vld [vmem:[#allocation8 + $0x1008] sm:$0xff]
    %v1998 = vld [vmem:[#allocation8 + $0x1010] sm:$0xff]
    %v1999 = vld [vmem:[#allocation8 + $0x1018] sm:$0xff]
    %v2000 = vld [vmem:[#allocation8 + $0x1020] sm:$0xff]
    %v2001 = vld [vmem:[#allocation8 + $0x1028] sm:$0xff]
    %v2002 = vld [vmem:[#allocation8 + $0x1030] sm:$0xff]
    %v2003 = vld [vmem:[#allocation8 + $0x1038] sm:$0xff]
    %v2004 = vld [vmem:[#allocation8 + $0x1040] sm:$0xff]
    %v2005 = vld [vmem:[#allocation8 + $0x1048] sm:$0xff]
    %v2006 = vld [vmem:[#allocation8 + $0x1050] sm:$0xff]
    %v2007 = vld [vmem:[#allocation8 + $0x1058] sm:$0xff]
    %v2008 = vld [vmem:[#allocation8 + $0x1060] sm:$0xff]
    %v2009 = vld [vmem:[#allocation8 + $0x1068] sm:$0xff]
    %v2010 = vld [vmem:[#allocation8 + $0x1070] sm:$0xff]
    %v2011 = vld [vmem:[#allocation8 + $0x1078] sm:$0xff]
    %v2012 = vld [vmem:[#allocation8 + $0x1080] sm:$0xff]
    %v2013 = vld [vmem:[#allocation8 + $0x1088] sm:$0xff]
    %v2014 = vld [vmem:[#allocation8 + $0x1090] sm:$0xff]
    %v2015 = vld [vmem:[#allocation8 + $0x1098] sm:$0xff]
    %v2016 = vld [vmem:[#allocation8 + $0x10a0] sm:$0xff]
    %v2017 = vld [vmem:[#allocation8 + $0x10a8] sm:$0xff]
    %v2018 = vld [vmem:[#allocation8 + $0x10b0] sm:$0xff]
    %v2019 = vld [vmem:[#allocation8 + $0x10b8] sm:$0xff]
    %v2020 = vld [vmem:[#allocation8 + $0x10c0] sm:$0xff]
    %v2021 = vld [vmem:[#allocation8 + $0x10c8] sm:$0xff]
    %v2022 = vld [vmem:[#allocation8 + $0x10d0] sm:$0xff]
    %v2023 = vld [vmem:[#allocation8 + $0x10d8] sm:$0xff]
    %v2024 = vld [vmem:[#allocation8 + $0x10e0] sm:$0xff]
    %v2025 = vld [vmem:[#allocation8 + $0x10e8] sm:$0xff]
    %v2026 = vld [vmem:[#allocation8 + $0x10f0] sm:$0xff]
    %v2027 = vld [vmem:[#allocation8 + $0x10f8] sm:$0xff]
    %v2028 = vld [vmem:[#allocation8 + $0x1100] sm:$0xff]
    %v2029 = vld [vmem:[#allocation8 + $0x1108] sm:$0xff]
    %v2030 = vld [vmem:[#allocation8 + $0x1110] sm:$0xff]
    %v2031 = vld [vmem:[#allocation8 + $0x1118] sm:$0xff]
    %v2032 = vld [vmem:[#allocation8 + $0x1120] sm:$0xff]
    %v2033 = vld [vmem:[#allocation8 + $0x1128] sm:$0xff]
    %v2034 = vld [vmem:[#allocation8 + $0x1130] sm:$0xff]
    %v2035 = vld [vmem:[#allocation8 + $0x1138] sm:$0xff]
    %v2036 = vld [vmem:[#allocation8 + $0x1140] sm:$0xff]
    %v2037 = vld [vmem:[#allocation8 + $0x1148] sm:$0xff]
    %v2038 = vld [vmem:[#allocation8 + $0x1150] sm:$0xff]
    %v2039 = vld [vmem:[#allocation8 + $0x1158] sm:$0xff]
    %v2040 = vld [vmem:[#allocation8 + $0x1160] sm:$0xff]
    %v2041 = vld [vmem:[#allocation8 + $0x1168] sm:$0xff]
    %v2042 = vld [vmem:[#allocation8 + $0x1170] sm:$0xff]
    %v2043 = vld [vmem:[#allocation8 + $0x1178] sm:$0xff]
    %v2044 = vld [vmem:[#allocation8 + $0x1180] sm:$0xff]
    %v2045 = vld [vmem:[#allocation8 + $0x1188] sm:$0xff]
    %v2046 = vld [vmem:[#allocation8 + $0x1190] sm:$0xff]
    %v2047 = vld [vmem:[#allocation8 + $0x1198] sm:$0xff]
    %v2048 = vld [vmem:[#allocation8 + $0x11a0] sm:$0xff]
    %v2049 = vld [vmem:[#allocation8 + $0x11a8] sm:$0xff]
    %v2050 = vld [vmem:[#allocation8 + $0x11b0] sm:$0xff]
    %v2051 = vld [vmem:[#allocation8 + $0x11b8] sm:$0xff]
    %v2052 = vld [vmem:[#allocation8 + $0x11c0] sm:$0xff]
    %v2053 = vld [vmem:[#allocation8 + $0x11c8] sm:$0xff]
    %v2054 = vld [vmem:[#allocation8 + $0x11d0] sm:$0xff]
    %v2055 = vld [vmem:[#allocation8 + $0x11d8] sm:$0xff]
    %v2056 = vld [vmem:[#allocation8 + $0x11e0] sm:$0xff]
    %v2057 = vld [vmem:[#allocation8 + $0x11e8] sm:$0xff]
    %v2058 = vld [vmem:[#allocation8 + $0x11f0] sm:$0xff]
    %v2059 = vld [vmem:[#allocation8 + $0x11f8] sm:$0xff]
    %v2060 = vld [vmem:[#allocation10] sm:$0x3f]
    %v2062 = vlaneseq
    %v2063 = vshrl.u32 %v2062, 7
    %v2064 = vsub.s32 0, %v2063
    %v2065 = vrot.slane %v2060, %v2064
    %v2066 = vlaneseq
    %v2067 = vshrl.u32 %v2066, 7
    %v2068 = vsub.s32 1, %v2067
    %v2069 = vrot.slane %v2060, %v2068
    %v2070 = vlaneseq
    %v2071 = vshrl.u32 %v2070, 7
    %v2072 = vsub.s32 2, %v2071
    %v2073 = vrot.slane %v2060, %v2072
    %v2074 = vlaneseq
    %v2075 = vshrl.u32 %v2074, 7
    %v2076 = vsub.s32 3, %v2075
    %v2077 = vrot.slane %v2060, %v2076
    %v2078 = vlaneseq
    %v2079 = vshrl.u32 %v2078, 7
    %v2080 = vsub.s32 4, %v2079
    %v2081 = vrot.slane %v2060, %v2080
    %v2082 = vlaneseq
    %v2083 = vshrl.u32 %v2082, 7
    %v2084 = vsub.s32 5, %v2083
    %v2085 = vrot.slane %v2060, %v2084
    %2092 = vmatprep.subr.mxu0 %v1485
    %2093 = vmatpush1.msra.mxu0 %v1484
    %2094 = vmatprep.subr.mxu0 %v1491
    %2095 = vmatpush1.msra.mxu0 %v1490
    %2096 = vmatprep.subr.mxu0 %v1497
    %2097 = vmatpush1.msra.mxu0 %v1496
    %2098 = vmatprep.subr.mxu0 %v1503
    %2099 = vmatpush1.msra.mxu0 %v1502
    %2100 = vmatprep.subr.mxu0 %v1509
    %2101 = vmatpush1.msra.mxu0 %v1508
    %2102 = vmatprep.subr.mxu0 %v1515
    %2103 = vmatpush1.msra.mxu0 %v1514
    %2104 = vmatprep.subr.mxu0 %v1521
    %2105 = vmatpush1.msra.mxu0 %v1520
    %2106 = vmatprep.subr.mxu0 %v1527
    %2107 = vmatpush1.msra.mxu0 %v1526
    %2108 = vmatprep.subr.mxu0 %v1533
    %2109 = vmatpush1.msra.mxu0 %v1532
    %2110 = vmatprep.subr.mxu0 %v1539
    %2111 = vmatpush1.msra.mxu0 %v1538
    %2112 = vmatprep.subr.mxu0 %v1545
    %2113 = vmatpush1.msra.mxu0 %v1544
    %2114 = vmatprep.subr.mxu0 %v1551
    %2115 = vmatpush1.msra.mxu0 %v1550
    %2116 = vmatprep.subr.mxu0 %v1557
    %2117 = vmatpush1.msra.mxu0 %v1556
    %2118 = vmatprep.subr.mxu0 %v1563
    %2119 = vmatpush1.msra.mxu0 %v1562
    %2120 = vmatprep.subr.mxu0 %v1569
    %2121 = vmatpush1.msra.mxu0 %v1568
    %2122 = vmatprep.subr.mxu0 %v1575
    %2123 = vmatpush1.msra.mxu0 %v1574
    %2124 = vmatprep.subr.mxu0 %v1581
    %2125 = vmatpush1.msra.mxu0 %v1580
    %2126 = vmatprep.subr.mxu0 %v1587
    %2127 = vmatpush1.msra.mxu0 %v1586
    %2128 = vmatprep.subr.mxu0 %v1593
    %2129 = vmatpush1.msra.mxu0 %v1592
    %2130 = vmatprep.subr.mxu0 %v1599
    %2131 = vmatpush1.msra.mxu0 %v1598
    %2132 = vmatprep.subr.mxu0 %v1605
    %2133 = vmatpush1.msra.mxu0 %v1604
    %2134 = vmatprep.subr.mxu0 %v1611
    %2135 = vmatpush1.msra.mxu0 %v1610
    %2136 = vmatprep.subr.mxu0 %v1617
    %2137 = vmatpush1.msra.mxu0 %v1616
    %2138 = vmatprep.subr.mxu0 %v1623
    %2139 = vmatpush1.msra.mxu0 %v1622
    %2140 = vmatprep.subr.mxu0 %v1629
    %2141 = vmatpush1.msra.mxu0 %v1628
    %2142 = vmatprep.subr.mxu0 %v1635
    %2143 = vmatpush1.msra.mxu0 %v1634
    %2144 = vmatprep.subr.mxu0 %v1641
    %2145 = vmatpush1.msra.mxu0 %v1640
    %2146 = vmatprep.subr.mxu0 %v1647
    %2147 = vmatpush1.msra.mxu0 %v1646
    %2148 = vmatprep.subr.mxu0 %v1653
    %2149 = vmatpush1.msra.mxu0 %v1652
    %2150 = vmatprep.subr.mxu0 %v1659
    %2151 = vmatpush1.msra.mxu0 %v1658
    %2152 = vmatprep.subr.mxu0 %v1665
    %2153 = vmatpush1.msra.mxu0 %v1664
    %2154 = vmatprep.subr.mxu0 %v1671
    %2155 = vmatpush1.msra.mxu0 %v1670
    %2156 = vmatprep.mubr.f32.mxu0 %v1479
    %2157 = vmatmul.mubr.f32.gmra.mrb[0].mxu0 %v1478
    %v2158 = vpop.f32.mrb[0].mxu0
    %v2159 = vadd.f32 %v2065, %v2158
    %v2160 = vpop.f32.mrb[0].mxu0
    %v2161 = vadd.f32 %v2069, %v2160
    %2162 = vdwg.mxu0
    %2163 = vmatprep.subr.mxu0 %v1677
    %2164 = vmatpush1.msra.mxu0 %v1676
    %2165 = vmatprep.subr.mxu0 %v1683
    %2166 = vmatpush1.msra.mxu0 %v1682
    %2167 = vmatprep.subr.mxu0 %v1689
    %2168 = vmatpush1.msra.mxu0 %v1688
    %2169 = vmatprep.subr.mxu0 %v1695
    %2170 = vmatpush1.msra.mxu0 %v1694
    %2171 = vmatprep.subr.mxu0 %v1701
    %2172 = vmatpush1.msra.mxu0 %v1700
    %2173 = vmatprep.subr.mxu0 %v1707
    %2174 = vmatpush1.msra.mxu0 %v1706
    %2175 = vmatprep.subr.mxu0 %v1713
    %2176 = vmatpush1.msra.mxu0 %v1712
    %2177 = vmatprep.subr.mxu0 %v1719
    %2178 = vmatpush1.msra.mxu0 %v1718
    %2179 = vmatprep.subr.mxu0 %v1725
    %2180 = vmatpush1.msra.mxu0 %v1724
    %2181 = vmatprep.subr.mxu0 %v1731
    %2182 = vmatpush1.msra.mxu0 %v1730
    %2183 = vmatprep.subr.mxu0 %v1737
    %2184 = vmatpush1.msra.mxu0 %v1736
    %2185 = vmatprep.subr.mxu0 %v1743
    %2186 = vmatpush1.msra.mxu0 %v1742
    %2187 = vmatprep.subr.mxu0 %v1749
    %2188 = vmatpush1.msra.mxu0 %v1748
    %2189 = vmatprep.subr.mxu0 %v1755
    %2190 = vmatpush1.msra.mxu0 %v1754
    %2191 = vmatprep.subr.mxu0 %v1761
    %2192 = vmatpush1.msra.mxu0 %v1760
    %2193 = vmatprep.subr.mxu0 %v1767
    %2194 = vmatpush1.msra.mxu0 %v1766
    %2195 = vmatprep.subr.mxu0 %v1773
    %2196 = vmatpush1.msra.mxu0 %v1772
    %2197 = vmatprep.subr.mxu0 %v1779
    %2198 = vmatpush1.msra.mxu0 %v1778
    %2199 = vmatprep.subr.mxu0 %v1785
    %2200 = vmatpush1.msra.mxu0 %v1784
    %2201 = vmatprep.subr.mxu0 %v1791
    %2202 = vmatpush1.msra.mxu0 %v1790
    %2203 = vmatprep.subr.mxu0 %v1797
    %2204 = vmatpush1.msra.mxu0 %v1796
    %2205 = vmatprep.subr.mxu0 %v1803
    %2206 = vmatpush1.msra.mxu0 %v1802
    %2207 = vmatprep.subr.mxu0 %v1809
    %2208 = vmatpush1.msra.mxu0 %v1808
    %2209 = vmatprep.subr.mxu0 %v1815
    %2210 = vmatpush1.msra.mxu0 %v1814
    %2211 = vmatprep.subr.mxu0 %v1821
    %2212 = vmatpush1.msra.mxu0 %v1820
    %2213 = vmatprep.subr.mxu0 %v1827
    %2214 = vmatpush1.msra.mxu0 %v1826
    %2215 = vmatprep.subr.mxu0 %v1833
    %2216 = vmatpush1.msra.mxu0 %v1832
    %2217 = vmatprep.subr.mxu0 %v1839
    %2218 = vmatpush1.msra.mxu0 %v1838
    %2219 = vmatprep.subr.mxu0 %v1845
    %2220 = vmatpush1.msra.mxu0 %v1844
    %2221 = vmatprep.subr.mxu0 %v1851
    %2222 = vmatpush1.msra.mxu0 %v1850
    %2223 = vmatprep.subr.mxu0 %v1857
    %2224 = vmatpush1.msra.mxu0 %v1856
    %2225 = vmatprep.subr.mxu0 %v1863
    %2226 = vmatpush1.msra.mxu0 %v1862
    %2227 = vmatprep.mubr.f32.mxu0 %v1481
    %2228 = vmatmul.mubr.f32.gmra.mrb[0].mxu0 %v1480
    %v2229 = vpop.f32.mrb[0].mxu0
    %v2230 = vadd.f32 %v2159, %v2229
    %v2231 = vpop.f32.mrb[0].mxu0
    %v2232 = vadd.f32 %v2161, %v2231
    %2233 = vdwg.mxu0
    %2234 = vmatprep.subr.mxu0 %v1869
    %2235 = vmatpush1.msra.mxu0 %v1868
    %2236 = vmatprep.subr.mxu0 %v1875
    %2237 = vmatpush1.msra.mxu0 %v1874
    %2238 = vmatprep.subr.mxu0 %v1881
    %2239 = vmatpush1.msra.mxu0 %v1880
    %2240 = vmatprep.subr.mxu0 %v1887
    %2241 = vmatpush1.msra.mxu0 %v1886
    %2242 = vmatprep.subr.mxu0 %v1893
    %2243 = vmatpush1.msra.mxu0 %v1892
    %2244 = vmatprep.subr.mxu0 %v1899
    %2245 = vmatpush1.msra.mxu0 %v1898
    %2246 = vmatprep.subr.mxu0 %v1905
    %2247 = vmatpush1.msra.mxu0 %v1904
    %2248 = vmatprep.subr.mxu0 %v1911
    %2249 = vmatpush1.msra.mxu0 %v1910
    %2250 = vmatprep.subr.mxu0 %v1917
    %2251 = vmatpush1.msra.mxu0 %v1916
    %2252 = vmatprep.subr.mxu0 %v1923
    %2253 = vmatpush1.msra.mxu0 %v1922
    %2254 = vmatprep.subr.mxu0 %v1929
    %2255 = vmatpush1.msra.mxu0 %v1928
    %2256 = vmatprep.subr.mxu0 %v1935
    %2257 = vmatpush1.msra.mxu0 %v1934
    %2258 = vmatprep.subr.mxu0 %v1941
    %2259 = vmatpush1.msra.mxu0 %v1940
    %2260 = vmatprep.subr.mxu0 %v1947
    %2261 = vmatpush1.msra.mxu0 %v1946
    %2262 = vmatprep.subr.mxu0 %v1953
    %2263 = vmatpush1.msra.mxu0 %v1952
    %2264 = vmatprep.subr.mxu0 %v1959
    %2265 = vmatpush1.msra.mxu0 %v1958
    %2266 = vmatprep.subr.mxu0 %v1965
    %2267 = vmatpush1.msra.mxu0 %v1964
    %2268 = vmatprep.subr.mxu0 %v1971
    %2269 = vmatpush1.msra.mxu0 %v1970
    %2270 = vmatprep.subr.mxu0 %v1977
    %2271 = vmatpush1.msra.mxu0 %v1976
    %2272 = vmatprep.subr.mxu0 %v1983
    %2273 = vmatpush1.msra.mxu0 %v1982
    %2274 = vmatprep.subr.mxu0 %v1989
    %2275 = vmatpush1.msra.mxu0 %v1988
    %2276 = vmatprep.subr.mxu0 %v1995
    %2277 = vmatpush1.msra.mxu0 %v1994
    %2278 = vmatprep.subr.mxu0 %v2001
    %2279 = vmatpush1.msra.mxu0 %v2000
    %2280 = vmatprep.subr.mxu0 %v2007
    %2281 = vmatpush1.msra.mxu0 %v2006
    %2282 = vmatprep.subr.mxu0 %v2013
    %2283 = vmatpush1.msra.mxu0 %v2012
    %2284 = vmatprep.subr.mxu0 %v2019
    %2285 = vmatpush1.msra.mxu0 %v2018
    %2286 = vmatprep.subr.mxu0 %v2025
    %2287 = vmatpush1.msra.mxu0 %v2024
    %2288 = vmatprep.subr.mxu0 %v2031
    %2289 = vmatpush1.msra.mxu0 %v2030
    %2290 = vmatprep.subr.mxu0 %v2037
    %2291 = vmatpush1.msra.mxu0 %v2036
    %2292 = vmatprep.subr.mxu0 %v2043
    %2293 = vmatpush1.msra.mxu0 %v2042
    %2294 = vmatprep.subr.mxu0 %v2049
    %2295 = vmatpush1.msra.mxu0 %v2048
    %2296 = vmatprep.subr.mxu0 %v2055
    %2297 = vmatpush1.msra.mxu0 %v2054
    %2298 = vmatprep.mubr.f32.mxu0 %v1483
    %2299 = vmatmul.mubr.f32.gmra.mrb[0].mxu0 %v1482
    %v2300 = vpop.f32.mrb[0].mxu0
    %v2301 = vadd.f32 %v2230, %v2300
    %v2302 = vpop.f32.mrb[0].mxu0
    %v2303 = vadd.f32 %v2232, %v2302
    %2304 = vdwg.mxu0
    %2305 = vmatprep.subr.mxu0 %v1487
    %2306 = vmatpush1.msra.mxu0 %v1486
    %2307 = vmatprep.subr.mxu0 %v1493
    %2308 = vmatpush1.msra.mxu0 %v1492
    %2309 = vmatprep.subr.mxu0 %v1499
    %2310 = vmatpush1.msra.mxu0 %v1498
    %2311 = vmatprep.subr.mxu0 %v1505
    %2312 = vmatpush1.msra.mxu0 %v1504
    %2313 = vmatprep.subr.mxu0 %v1511
    %2314 = vmatpush1.msra.mxu0 %v1510
    %2315 = vmatprep.subr.mxu0 %v1517
    %2316 = vmatpush1.msra.mxu0 %v1516
    %2317 = vmatprep.subr.mxu0 %v1523
    %2318 = vmatpush1.msra.mxu0 %v1522
    %2319 = vmatprep.subr.mxu0 %v1529
    %2320 = vmatpush1.msra.mxu0 %v1528
    %2321 = vmatprep.subr.mxu0 %v1535
    %2322 = vmatpush1.msra.mxu0 %v1534
    %2323 = vmatprep.subr.mxu0 %v1541
    %2324 = vmatpush1.msra.mxu0 %v1540
    %2325 = vmatprep.subr.mxu0 %v1547
    %2326 = vmatpush1.msra.mxu0 %v1546
    %2327 = vmatprep.subr.mxu0 %v1553
    %2328 = vmatpush1.msra.mxu0 %v1552
    %2329 = vmatprep.subr.mxu0 %v1559
    %2330 = vmatpush1.msra.mxu0 %v1558
    %2331 = vmatprep.subr.mxu0 %v1565
    %2332 = vmatpush1.msra.mxu0 %v1564
    %2333 = vmatprep.subr.mxu0 %v1571
    %2334 = vmatpush1.msra.mxu0 %v1570
    %2335 = vmatprep.subr.mxu0 %v1577
    %2336 = vmatpush1.msra.mxu0 %v1576
    %2337 = vmatprep.subr.mxu0 %v1583
    %2338 = vmatpush1.msra.mxu0 %v1582
    %2339 = vmatprep.subr.mxu0 %v1589
    %2340 = vmatpush1.msra.mxu0 %v1588
    %2341 = vmatprep.subr.mxu0 %v1595
    %2342 = vmatpush1.msra.mxu0 %v1594
    %2343 = vmatprep.subr.mxu0 %v1601
    %2344 = vmatpush1.msra.mxu0 %v1600
    %2345 = vmatprep.subr.mxu0 %v1607
    %2346 = vmatpush1.msra.mxu0 %v1606
    %2347 = vmatprep.subr.mxu0 %v1613
    %2348 = vmatpush1.msra.mxu0 %v1612
    %2349 = vmatprep.subr.mxu0 %v1619
    %2350 = vmatpush1.msra.mxu0 %v1618
    %2351 = vmatprep.subr.mxu0 %v1625
    %2352 = vmatpush1.msra.mxu0 %v1624
    %2353 = vmatprep.subr.mxu0 %v1631
    %2354 = vmatpush1.msra.mxu0 %v1630
    %2355 = vmatprep.subr.mxu0 %v1637
    %2356 = vmatpush1.msra.mxu0 %v1636
    %2357 = vmatprep.subr.mxu0 %v1643
    %2358 = vmatpush1.msra.mxu0 %v1642
    %2359 = vmatprep.subr.mxu0 %v1649
    %2360 = vmatpush1.msra.mxu0 %v1648
    %2361 = vmatprep.subr.mxu0 %v1655
    %2362 = vmatpush1.msra.mxu0 %v1654
    %2363 = vmatprep.subr.mxu0 %v1661
    %2364 = vmatpush1.msra.mxu0 %v1660
    %2365 = vmatprep.subr.mxu0 %v1667
    %2366 = vmatpush1.msra.mxu0 %v1666
    %2367 = vmatprep.subr.mxu0 %v1673
    %2368 = vmatpush1.msra.mxu0 %v1672
    %2369 = vmatprep.mubr.f32.mxu0 %v1479
    %2370 = vmatmul.mubr.f32.gmra.mrb[0].mxu0 %v1478
    %v2371 = vpop.f32.mrb[0].mxu0
    %v2372 = vadd.f32 %v2073, %v2371
    %v2373 = vpop.f32.mrb[0].mxu0
    %v2374 = vadd.f32 %v2077, %v2373
    %2375 = vdwg.mxu0
    %2376 = vmatprep.subr.mxu0 %v1679
    %2377 = vmatpush1.msra.mxu0 %v1678
    %2378 = vmatprep.subr.mxu0 %v1685
    %2379 = vmatpush1.msra.mxu0 %v1684
    %2380 = vmatprep.subr.mxu0 %v1691
    %2381 = vmatpush1.msra.mxu0 %v1690
    %2382 = vmatprep.subr.mxu0 %v1697
    %2383 = vmatpush1.msra.mxu0 %v1696
    %2384 = vmatprep.subr.mxu0 %v1703
    %2385 = vmatpush1.msra.mxu0 %v1702
    %2386 = vmatprep.subr.mxu0 %v1709
    %2387 = vmatpush1.msra.mxu0 %v1708
    %2388 = vmatprep.subr.mxu0 %v1715
    %2389 = vmatpush1.msra.mxu0 %v1714
    %2390 = vmatprep.subr.mxu0 %v1721
    %2391 = vmatpush1.msra.mxu0 %v1720
    %2392 = vmatprep.subr.mxu0 %v1727
    %2393 = vmatpush1.msra.mxu0 %v1726
    %2394 = vmatprep.subr.mxu0 %v1733
    %2395 = vmatpush1.msra.mxu0 %v1732
    %2396 = vmatprep.subr.mxu0 %v1739
    %2397 = vmatpush1.msra.mxu0 %v1738
    %2398 = vmatprep.subr.mxu0 %v1745
    %2399 = vmatpush1.msra.mxu0 %v1744
    %2400 = vmatprep.subr.mxu0 %v1751
    %2401 = vmatpush1.msra.mxu0 %v1750
    %2402 = vmatprep.subr.mxu0 %v1757
    %2403 = vmatpush1.msra.mxu0 %v1756
    %2404 = vmatprep.subr.mxu0 %v1763
    %2405 = vmatpush1.msra.mxu0 %v1762
    %2406 = vmatprep.subr.mxu0 %v1769
    %2407 = vmatpush1.msra.mxu0 %v1768
    %2408 = vmatprep.subr.mxu0 %v1775
    %2409 = vmatpush1.msra.mxu0 %v1774
    %2410 = vmatprep.subr.mxu0 %v1781
    %2411 = vmatpush1.msra.mxu0 %v1780
    %2412 = vmatprep.subr.mxu0 %v1787
    %2413 = vmatpush1.msra.mxu0 %v1786
    %2414 = vmatprep.subr.mxu0 %v1793
    %2415 = vmatpush1.msra.mxu0 %v1792
    %2416 = vmatprep.subr.mxu0 %v1799
    %2417 = vmatpush1.msra.mxu0 %v1798
    %2418 = vmatprep.subr.mxu0 %v1805
    %2419 = vmatpush1.msra.mxu0 %v1804
    %2420 = vmatprep.subr.mxu0 %v1811
    %2421 = vmatpush1.msra.mxu0 %v1810
    %2422 = vmatprep.subr.mxu0 %v1817
    %2423 = vmatpush1.msra.mxu0 %v1816
    %2424 = vmatprep.subr.mxu0 %v1823
    %2425 = vmatpush1.msra.mxu0 %v1822
    %2426 = vmatprep.subr.mxu0 %v1829
    %2427 = vmatpush1.msra.mxu0 %v1828
    %2428 = vmatprep.subr.mxu0 %v1835
    %2429 = vmatpush1.msra.mxu0 %v1834
    %2430 = vmatprep.subr.mxu0 %v1841
    %2431 = vmatpush1.msra.mxu0 %v1840
    %2432 = vmatprep.subr.mxu0 %v1847
    %2433 = vmatpush1.msra.mxu0 %v1846
    %2434 = vmatprep.subr.mxu0 %v1853
    %2435 = vmatpush1.msra.mxu0 %v1852
    %2436 = vmatprep.subr.mxu0 %v1859
    %2437 = vmatpush1.msra.mxu0 %v1858
    %2438 = vmatprep.subr.mxu0 %v1865
    %2439 = vmatpush1.msra.mxu0 %v1864
    %2440 = vmatprep.mubr.f32.mxu0 %v1481
    %2441 = vmatmul.mubr.f32.gmra.mrb[0].mxu0 %v1480
    %v2442 = vpop.f32.mrb[0].mxu0
    %v2443 = vadd.f32 %v2372, %v2442
    %v2444 = vpop.f32.mrb[0].mxu0
    %v2445 = vadd.f32 %v2374, %v2444
    %2446 = vdwg.mxu0
    %2447 = vmatprep.subr.mxu0 %v1871
    %2448 = vmatpush1.msra.mxu0 %v1870
    %2449 = vmatprep.subr.mxu0 %v1877
    %2450 = vmatpush1.msra.mxu0 %v1876
    %2451 = vmatprep.subr.mxu0 %v1883
    %2452 = vmatpush1.msra.mxu0 %v1882
    %2453 = vmatprep.subr.mxu0 %v1889
    %2454 = vmatpush1.msra.mxu0 %v1888
    %2455 = vmatprep.subr.mxu0 %v1895
    %2456 = vmatpush1.msra.mxu0 %v1894
    %2457 = vmatprep.subr.mxu0 %v1901
    %2458 = vmatpush1.msra.mxu0 %v1900
    %2459 = vmatprep.subr.mxu0 %v1907
    %2460 = vmatpush1.msra.mxu0 %v1906
    %2461 = vmatprep.subr.mxu0 %v1913
    %2462 = vmatpush1.msra.mxu0 %v1912
    %2463 = vmatprep.subr.mxu0 %v1919
    %2464 = vmatpush1.msra.mxu0 %v1918
    %2465 = vmatprep.subr.mxu0 %v1925
    %2466 = vmatpush1.msra.mxu0 %v1924
    %2467 = vmatprep.subr.mxu0 %v1931
    %2468 = vmatpush1.msra.mxu0 %v1930
    %2469 = vmatprep.subr.mxu0 %v1937
    %2470 = vmatpush1.msra.mxu0 %v1936
    %2471 = vmatprep.subr.mxu0 %v1943
    %2472 = vmatpush1.msra.mxu0 %v1942
    %2473 = vmatprep.subr.mxu0 %v1949
    %2474 = vmatpush1.msra.mxu0 %v1948
    %2475 = vmatprep.subr.mxu0 %v1955
    %2476 = vmatpush1.msra.mxu0 %v1954
    %2477 = vmatprep.subr.mxu0 %v1961
    %2478 = vmatpush1.msra.mxu0 %v1960
    %2479 = vmatprep.subr.mxu0 %v1967
    %2480 = vmatpush1.msra.mxu0 %v1966
    %2481 = vmatprep.subr.mxu0 %v1973
    %2482 = vmatpush1.msra.mxu0 %v1972
    %2483 = vmatprep.subr.mxu0 %v1979
    %2484 = vmatpush1.msra.mxu0 %v1978
    %2485 = vmatprep.subr.mxu0 %v1985
    %2486 = vmatpush1.msra.mxu0 %v1984
    %2487 = vmatprep.subr.mxu0 %v1991
    %2488 = vmatpush1.msra.mxu0 %v1990
    %2489 = vmatprep.subr.mxu0 %v1997
    %2490 = vmatpush1.msra.mxu0 %v1996
    %2491 = vmatprep.subr.mxu0 %v2003
    %2492 = vmatpush1.msra.mxu0 %v2002
    %2493 = vmatprep.subr.mxu0 %v2009
    %2494 = vmatpush1.msra.mxu0 %v2008
    %2495 = vmatprep.subr.mxu0 %v2015
    %2496 = vmatpush1.msra.mxu0 %v2014
    %2497 = vmatprep.subr.mxu0 %v2021
    %2498 = vmatpush1.msra.mxu0 %v2020
    %2499 = vmatprep.subr.mxu0 %v2027
    %2500 = vmatpush1.msra.mxu0 %v2026
    %2501 = vmatprep.subr.mxu0 %v2033
    %2502 = vmatpush1.msra.mxu0 %v2032
    %2503 = vmatprep.subr.mxu0 %v2039
    %2504 = vmatpush1.msra.mxu0 %v2038
    %2505 = vmatprep.subr.mxu0 %v2045
    %2506 = vmatpush1.msra.mxu0 %v2044
    %2507 = vmatprep.subr.mxu0 %v2051
    %2508 = vmatpush1.msra.mxu0 %v2050
    %2509 = vmatprep.subr.mxu0 %v2057
    %2510 = vmatpush1.msra.mxu0 %v2056
    %2511 = vmatprep.mubr.f32.mxu0 %v1483
    %2512 = vmatmul.mubr.f32.gmra.mrb[0].mxu0 %v1482
    %v2513 = vpop.f32.mrb[0].mxu0
    %v2514 = vadd.f32 %v2443, %v2513
    %v2515 = vpop.f32.mrb[0].mxu0
    %v2516 = vadd.f32 %v2445, %v2515
    %2517 = vdwg.mxu0
    %2518 = vmatprep.subr.mxu0 %v1489
    %2519 = vmatpush1.msra.mxu0 %v1488
    %2520 = vmatprep.subr.mxu0 %v1495
    %2521 = vmatpush1.msra.mxu0 %v1494
    %2522 = vmatprep.subr.mxu0 %v1501
    %2523 = vmatpush1.msra.mxu0 %v1500
    %2524 = vmatprep.subr.mxu0 %v1507
    %2525 = vmatpush1.msra.mxu0 %v1506
    %2526 = vmatprep.subr.mxu0 %v1513
    %2527 = vmatpush1.msra.mxu0 %v1512
    %2528 = vmatprep.subr.mxu0 %v1519
    %2529 = vmatpush1.msra.mxu0 %v1518
    %2530 = vmatprep.subr.mxu0 %v1525
    %2531 = vmatpush1.msra.mxu0 %v1524
    %2532 = vmatprep.subr.mxu0 %v1531
    %2533 = vmatpush1.msra.mxu0 %v1530
    %2534 = vmatprep.subr.mxu0 %v1537
    %2535 = vmatpush1.msra.mxu0 %v1536
    %2536 = vmatprep.subr.mxu0 %v1543
    %2537 = vmatpush1.msra.mxu0 %v1542
    %2538 = vmatprep.subr.mxu0 %v1549
    %2539 = vmatpush1.msra.mxu0 %v1548
    %2540 = vmatprep.subr.mxu0 %v1555
    %2541 = vmatpush1.msra.mxu0 %v1554
    %2542 = vmatprep.subr.mxu0 %v1561
    %2543 = vmatpush1.msra.mxu0 %v1560
    %2544 = vmatprep.subr.mxu0 %v1567
    %2545 = vmatpush1.msra.mxu0 %v1566
    %2546 = vmatprep.subr.mxu0 %v1573
    %2547 = vmatpush1.msra.mxu0 %v1572
    %2548 = vmatprep.subr.mxu0 %v1579
    %2549 = vmatpush1.msra.mxu0 %v1578
    %2550 = vmatprep.subr.mxu0 %v1585
    %2551 = vmatpush1.msra.mxu0 %v1584
    %2552 = vmatprep.subr.mxu0 %v1591
    %2553 = vmatpush1.msra.mxu0 %v1590
    %2554 = vmatprep.subr.mxu0 %v1597
    %2555 = vmatpush1.msra.mxu0 %v1596
    %2556 = vmatprep.subr.mxu0 %v1603
    %2557 = vmatpush1.msra.mxu0 %v1602
    %2558 = vmatprep.subr.mxu0 %v1609
    %2559 = vmatpush1.msra.mxu0 %v1608
    %2560 = vmatprep.subr.mxu0 %v1615
    %2561 = vmatpush1.msra.mxu0 %v1614
    %2562 = vmatprep.subr.mxu0 %v1621
    %2563 = vmatpush1.msra.mxu0 %v1620
    %2564 = vmatprep.subr.mxu0 %v1627
    %2565 = vmatpush1.msra.mxu0 %v1626
    %2566 = vmatprep.subr.mxu0 %v1633
    %2567 = vmatpush1.msra.mxu0 %v1632
    %2568 = vmatprep.subr.mxu0 %v1639
    %2569 = vmatpush1.msra.mxu0 %v1638
    %2570 = vmatprep.subr.mxu0 %v1645
    %2571 = vmatpush1.msra.mxu0 %v1644
    %2572 = vmatprep.subr.mxu0 %v1651
    %2573 = vmatpush1.msra.mxu0 %v1650
    %2574 = vmatprep.subr.mxu0 %v1657
    %2575 = vmatpush1.msra.mxu0 %v1656
    %2576 = vmatprep.subr.mxu0 %v1663
    %2577 = vmatpush1.msra.mxu0 %v1662
    %2578 = vmatprep.subr.mxu0 %v1669
    %2579 = vmatpush1.msra.mxu0 %v1668
    %2580 = vmatprep.subr.mxu0 %v1675
    %2581 = vmatpush1.msra.mxu0 %v1674
    %2582 = vmatprep.mubr.f32.mxu0 %v1479
    %2583 = vmatmul.mubr.f32.gmra.mrb[0].mxu0 %v1478
    %v2584 = vpop.f32.mrb[0].mxu0
    %v2585 = vadd.f32 %v2081, %v2584
    %v2586 = vpop.f32.mrb[0].mxu0
    %v2587 = vadd.f32 %v2085, %v2586
    %2588 = vdwg.mxu0
    %2589 = vmatprep.subr.mxu0 %v1681
    %2590 = vmatpush1.msra.mxu0 %v1680
    %2591 = vmatprep.subr.mxu0 %v1687
    %2592 = vmatpush1.msra.mxu0 %v1686
    %2593 = vmatprep.subr.mxu0 %v1693
    %2594 = vmatpush1.msra.mxu0 %v1692
    %2595 = vmatprep.subr.mxu0 %v1699
    %2596 = vmatpush1.msra.mxu0 %v1698
    %2597 = vmatprep.subr.mxu0 %v1705
    %2598 = vmatpush1.msra.mxu0 %v1704
    %2599 = vmatprep.subr.mxu0 %v1711
    %2600 = vmatpush1.msra.mxu0 %v1710
    %2601 = vmatprep.subr.mxu0 %v1717
    %2602 = vmatpush1.msra.mxu0 %v1716
    %2603 = vmatprep.subr.mxu0 %v1723
    %2604 = vmatpush1.msra.mxu0 %v1722
    %2605 = vmatprep.subr.mxu0 %v1729
    %2606 = vmatpush1.msra.mxu0 %v1728
    %2607 = vmatprep.subr.mxu0 %v1735
    %2608 = vmatpush1.msra.mxu0 %v1734
    %2609 = vmatprep.subr.mxu0 %v1741
    %2610 = vmatpush1.msra.mxu0 %v1740
    %2611 = vmatprep.subr.mxu0 %v1747
    %2612 = vmatpush1.msra.mxu0 %v1746
    %2613 = vmatprep.subr.mxu0 %v1753
    %2614 = vmatpush1.msra.mxu0 %v1752
    %2615 = vmatprep.subr.mxu0 %v1759
    %2616 = vmatpush1.msra.mxu0 %v1758
    %2617 = vmatprep.subr.mxu0 %v1765
    %2618 = vmatpush1.msra.mxu0 %v1764
    %2619 = vmatprep.subr.mxu0 %v1771
    %2620 = vmatpush1.msra.mxu0 %v1770
    %2621 = vmatprep.subr.mxu0 %v1777
    %2622 = vmatpush1.msra.mxu0 %v1776
    %2623 = vmatprep.subr.mxu0 %v1783
    %2624 = vmatpush1.msra.mxu0 %v1782
    %2625 = vmatprep.subr.mxu0 %v1789
    %2626 = vmatpush1.msra.mxu0 %v1788
    %2627 = vmatprep.subr.mxu0 %v1795
    %2628 = vmatpush1.msra.mxu0 %v1794
    %2629 = vmatprep.subr.mxu0 %v1801
    %2630 = vmatpush1.msra.mxu0 %v1800
    %2631 = vmatprep.subr.mxu0 %v1807
    %2632 = vmatpush1.msra.mxu0 %v1806
    %2633 = vmatprep.subr.mxu0 %v1813
    %2634 = vmatpush1.msra.mxu0 %v1812
    %2635 = vmatprep.subr.mxu0 %v1819
    %2636 = vmatpush1.msra.mxu0 %v1818
    %2637 = vmatprep.subr.mxu0 %v1825
    %2638 = vmatpush1.msra.mxu0 %v1824
    %2639 = vmatprep.subr.mxu0 %v1831
    %2640 = vmatpush1.msra.mxu0 %v1830
    %2641 = vmatprep.subr.mxu0 %v1837
    %2642 = vmatpush1.msra.mxu0 %v1836
    %2643 = vmatprep.subr.mxu0 %v1843
    %2644 = vmatpush1.msra.mxu0 %v1842
    %2645 = vmatprep.subr.mxu0 %v1849
    %2646 = vmatpush1.msra.mxu0 %v1848
    %2647 = vmatprep.subr.mxu0 %v1855
    %2648 = vmatpush1.msra.mxu0 %v1854
    %2649 = vmatprep.subr.mxu0 %v1861
    %2650 = vmatpush1.msra.mxu0 %v1860
    %2651 = vmatprep.subr.mxu0 %v1867
    %2652 = vmatpush1.msra.mxu0 %v1866
    %2653 = vmatprep.mubr.f32.mxu0 %v1481
    %2654 = vmatmul.mubr.f32.gmra.mrb[0].mxu0 %v1480
    %v2655 = vpop.f32.mrb[0].mxu0
    %v2656 = vadd.f32 %v2585, %v2655
    %v2657 = vpop.f32.mrb[0].mxu0
    %v2658 = vadd.f32 %v2587, %v2657
    %2659 = vdwg.mxu0
    %2660 = vmatprep.subr.mxu0 %v1873
    %2661 = vmatpush1.msra.mxu0 %v1872
    %2662 = vmatprep.subr.mxu0 %v1879
    %2663 = vmatpush1.msra.mxu0 %v1878
    %2664 = vmatprep.subr.mxu0 %v1885
    %2665 = vmatpush1.msra.mxu0 %v1884
    %2666 = vmatprep.subr.mxu0 %v1891
    %2667 = vmatpush1.msra.mxu0 %v1890
    %2668 = vmatprep.subr.mxu0 %v1897
    %2669 = vmatpush1.msra.mxu0 %v1896
    %2670 = vmatprep.subr.mxu0 %v1903
    %2671 = vmatpush1.msra.mxu0 %v1902
    %2672 = vmatprep.subr.mxu0 %v1909
    %2673 = vmatpush1.msra.mxu0 %v1908
    %2674 = vmatprep.subr.mxu0 %v1915
    %2675 = vmatpush1.msra.mxu0 %v1914
    %2676 = vmatprep.subr.mxu0 %v1921
    %2677 = vmatpush1.msra.mxu0 %v1920
    %2678 = vmatprep.subr.mxu0 %v1927
    %2679 = vmatpush1.msra.mxu0 %v1926
    %2680 = vmatprep.subr.mxu0 %v1933
    %2681 = vmatpush1.msra.mxu0 %v1932
    %2682 = vmatprep.subr.mxu0 %v1939
    %2683 = vmatpush1.msra.mxu0 %v1938
    %2684 = vmatprep.subr.mxu0 %v1945
    %2685 = vmatpush1.msra.mxu0 %v1944
    %2686 = vmatprep.subr.mxu0 %v1951
    %2687 = vmatpush1.msra.mxu0 %v1950
    %2688 = vmatprep.subr.mxu0 %v1957
    %2689 = vmatpush1.msra.mxu0 %v1956
    %2690 = vmatprep.subr.mxu0 %v1963
    %2691 = vmatpush1.msra.mxu0 %v1962
    %2692 = vmatprep.subr.mxu0 %v1969
    %2693 = vmatpush1.msra.mxu0 %v1968
    %2694 = vmatprep.subr.mxu0 %v1975
    %2695 = vmatpush1.msra.mxu0 %v1974
    %2696 = vmatprep.subr.mxu0 %v1981
    %2697 = vmatpush1.msra.mxu0 %v1980
    %2698 = vmatprep.subr.mxu0 %v1987
    %2699 = vmatpush1.msra.mxu0 %v1986
    %2700 = vmatprep.subr.mxu0 %v1993
    %2701 = vmatpush1.msra.mxu0 %v1992
    %2702 = vmatprep.subr.mxu0 %v1999
    %2703 = vmatpush1.msra.mxu0 %v1998
    %2704 = vmatprep.subr.mxu0 %v2005
    %2705 = vmatpush1.msra.mxu0 %v2004
    %2706 = vmatprep.subr.mxu0 %v2011
    %2707 = vmatpush1.msra.mxu0 %v2010
    %2708 = vmatprep.subr.mxu0 %v2017
    %2709 = vmatpush1.msra.mxu0 %v2016
    %2710 = vmatprep.subr.mxu0 %v2023
    %2711 = vmatpush1.msra.mxu0 %v2022
    %2712 = vmatprep.subr.mxu0 %v2029
    %2713 = vmatpush1.msra.mxu0 %v2028
    %2714 = vmatprep.subr.mxu0 %v2035
    %2715 = vmatpush1.msra.mxu0 %v2034
    %2716 = vmatprep.subr.mxu0 %v2041
    %2717 = vmatpush1.msra.mxu0 %v2040
    %2718 = vmatprep.subr.mxu0 %v2047
    %2719 = vmatpush1.msra.mxu0 %v2046
    %2720 = vmatprep.subr.mxu0 %v2053
    %2721 = vmatpush1.msra.mxu0 %v2052
    %2722 = vmatprep.subr.mxu0 %v2059
    %2723 = vmatpush1.msra.mxu0 %v2058
    %2724 = vmatprep.mubr.f32.mxu0 %v1483
    %2725 = vmatmul.mubr.f32.gmra.mrb[0].mxu0 %v1482
    %v2726 = vpop.f32.mrb[0].mxu0
    %v2727 = vadd.f32 %v2656, %v2726
    %v2728 = vpop.f32.mrb[0].mxu0
    %v2729 = vadd.f32 %v2658, %v2728
    %2730 = vdwg.mxu0
    %vm2731 = vcmp.gt.f32.partialorder %v2301, 0.0
    %vm2732 = vcmp.gt.f32.partialorder %v2303, 0.0
    %vm2733 = vcmp.gt.f32.partialorder %v2514, 0.0
    %vm2734 = vcmp.gt.f32.partialorder %v2516, 0.0
    %vm2735 = vcmp.gt.f32.partialorder %v2727, 0.0
    %vm2736 = vcmp.gt.f32.partialorder %v2729, 0.0
    %v2737 = vsel %vm2731, 1.0, -1.0
    %v2738 = vsel %vm2732, 1.0, -1.0
    %v2739 = vsel %vm2733, 1.0, -1.0
    %v2740 = vsel %vm2734, 1.0, -1.0
    %v2741 = vsel %vm2735, 1.0, -1.0
    %v2742 = vsel %vm2736, 1.0, -1.0
    %v2743 = vld [vmem:[#allocation11] sm:$0xff]
    %v2744 = vld [vmem:[#allocation11 + $0x8] sm:$0xff]
    %v2745 = vld [vmem:[#allocation11 + $0x10] sm:$0xff]
    %v2746 = vld [vmem:[#allocation11 + $0x18] sm:$0xff]
    %v2747 = vld [vmem:[#allocation11 + $0x20] sm:$0xff]
    %v2748 = vld [vmem:[#allocation11 + $0x28] sm:$0xff]
    %v2749 = vld [vmem:[#allocation11 + $0x30] sm:$0xff]
    %v2750 = vld [vmem:[#allocation11 + $0x38] sm:$0xff]
    %v2751 = vld [vmem:[#allocation11 + $0x40] sm:$0xff]
    %v2752 = vld [vmem:[#allocation11 + $0x48] sm:$0xff]
    %v2753 = vld [vmem:[#allocation11 + $0x50] sm:$0xff]
    %v2754 = vld [vmem:[#allocation11 + $0x58] sm:$0xff]
    %v2755 = vld [vmem:[#allocation11 + $0x60] sm:$0xff]
    %v2756 = vld [vmem:[#allocation11 + $0x68] sm:$0xff]
    %v2757 = vld [vmem:[#allocation11 + $0x70] sm:$0xff]
    %v2758 = vld [vmem:[#allocation11 + $0x78] sm:$0xff]
    %v2759 = vld [vmem:[#allocation11 + $0x80] sm:$0xff]
    %v2760 = vld [vmem:[#allocation11 + $0x88] sm:$0xff]
    %v2761 = vld [vmem:[#allocation11 + $0x90] sm:$0xff]
    %v2762 = vld [vmem:[#allocation11 + $0x98] sm:$0xff]
    %v2763 = vld [vmem:[#allocation11 + $0xa0] sm:$0xff]
    %v2764 = vld [vmem:[#allocation11 + $0xa8] sm:$0xff]
    %v2765 = vld [vmem:[#allocation11 + $0xb0] sm:$0xff]
    %v2766 = vld [vmem:[#allocation11 + $0xb8] sm:$0xff]
    %v2767 = vld [vmem:[#allocation11 + $0xc0] sm:$0xff]
    %v2768 = vld [vmem:[#allocation11 + $0xc8] sm:$0xff]
    %v2769 = vld [vmem:[#allocation11 + $0xd0] sm:$0xff]
    %v2770 = vld [vmem:[#allocation11 + $0xd8] sm:$0xff]
    %v2771 = vld [vmem:[#allocation11 + $0xe0] sm:$0xff]
    %v2772 = vld [vmem:[#allocation11 + $0xe8] sm:$0xff]
    %v2773 = vld [vmem:[#allocation11 + $0xf0] sm:$0xff]
    %v2774 = vld [vmem:[#allocation11 + $0xf8] sm:$0xff]
    %v2775 = vld [vmem:[#allocation11 + $0x100] sm:$0xff]
    %v2776 = vld [vmem:[#allocation11 + $0x108] sm:$0xff]
    %v2777 = vld [vmem:[#allocation11 + $0x110] sm:$0xff]
    %v2778 = vld [vmem:[#allocation11 + $0x118] sm:$0xff]
    %v2779 = vld [vmem:[#allocation11 + $0x120] sm:$0xff]
    %v2780 = vld [vmem:[#allocation11 + $0x128] sm:$0xff]
    %v2781 = vld [vmem:[#allocation11 + $0x130] sm:$0xff]
    %v2782 = vld [vmem:[#allocation11 + $0x138] sm:$0xff]
    %v2783 = vld [vmem:[#allocation11 + $0x140] sm:$0xff]
    %v2784 = vld [vmem:[#allocation11 + $0x148] sm:$0xff]
    %v2785 = vld [vmem:[#allocation11 + $0x150] sm:$0xff]
    %v2786 = vld [vmem:[#allocation11 + $0x158] sm:$0xff]
    %v2787 = vld [vmem:[#allocation11 + $0x160] sm:$0xff]
    %v2788 = vld [vmem:[#allocation11 + $0x168] sm:$0xff]
    %v2789 = vld [vmem:[#allocation11 + $0x170] sm:$0xff]
    %v2790 = vld [vmem:[#allocation11 + $0x178] sm:$0xff]
    %v2791 = vld [vmem:[#allocation11 + $0x180] sm:$0xff]
    %v2792 = vld [vmem:[#allocation11 + $0x188] sm:$0xff]
    %v2793 = vld [vmem:[#allocation11 + $0x190] sm:$0xff]
    %v2794 = vld [vmem:[#allocation11 + $0x198] sm:$0xff]
    %v2795 = vld [vmem:[#allocation11 + $0x1a0] sm:$0xff]
    %v2796 = vld [vmem:[#allocation11 + $0x1a8] sm:$0xff]
    %v2797 = vld [vmem:[#allocation11 + $0x1b0] sm:$0xff]
    %v2798 = vld [vmem:[#allocation11 + $0x1b8] sm:$0xff]
    %v2799 = vld [vmem:[#allocation11 + $0x1c0] sm:$0xff]
    %v2800 = vld [vmem:[#allocation11 + $0x1c8] sm:$0xff]
    %v2801 = vld [vmem:[#allocation11 + $0x1d0] sm:$0xff]
    %v2802 = vld [vmem:[#allocation11 + $0x1d8] sm:$0xff]
    %v2803 = vld [vmem:[#allocation11 + $0x1e0] sm:$0xff]
    %v2804 = vld [vmem:[#allocation11 + $0x1e8] sm:$0xff]
    %v2805 = vld [vmem:[#allocation11 + $0x1f0] sm:$0xff]
    %v2806 = vld [vmem:[#allocation11 + $0x1f8] sm:$0xff]
    %v2807 = vld [vmem:[#allocation11 + $0x200] sm:$0xff]
    %v2808 = vld [vmem:[#allocation11 + $0x208] sm:$0xff]
    %v2809 = vld [vmem:[#allocation11 + $0x210] sm:$0xff]
    %v2810 = vld [vmem:[#allocation11 + $0x218] sm:$0xff]
    %v2811 = vld [vmem:[#allocation11 + $0x220] sm:$0xff]
    %v2812 = vld [vmem:[#allocation11 + $0x228] sm:$0xff]
    %v2813 = vld [vmem:[#allocation11 + $0x230] sm:$0xff]
    %v2814 = vld [vmem:[#allocation11 + $0x238] sm:$0xff]
    %v2815 = vld [vmem:[#allocation11 + $0x240] sm:$0xff]
    %v2816 = vld [vmem:[#allocation11 + $0x248] sm:$0xff]
    %v2817 = vld [vmem:[#allocation11 + $0x250] sm:$0xff]
    %v2818 = vld [vmem:[#allocation11 + $0x258] sm:$0xff]
    %v2819 = vld [vmem:[#allocation11 + $0x260] sm:$0xff]
    %v2820 = vld [vmem:[#allocation11 + $0x268] sm:$0xff]
    %v2821 = vld [vmem:[#allocation11 + $0x270] sm:$0xff]
    %v2822 = vld [vmem:[#allocation11 + $0x278] sm:$0xff]
    %v2823 = vld [vmem:[#allocation11 + $0x280] sm:$0xff]
    %v2824 = vld [vmem:[#allocation11 + $0x288] sm:$0xff]
    %v2825 = vld [vmem:[#allocation11 + $0x290] sm:$0xff]
    %v2826 = vld [vmem:[#allocation11 + $0x298] sm:$0xff]
    %v2827 = vld [vmem:[#allocation11 + $0x2a0] sm:$0xff]
    %v2828 = vld [vmem:[#allocation11 + $0x2a8] sm:$0xff]
    %v2829 = vld [vmem:[#allocation11 + $0x2b0] sm:$0xff]
    %v2830 = vld [vmem:[#allocation11 + $0x2b8] sm:$0xff]
    %v2831 = vld [vmem:[#allocation11 + $0x2c0] sm:$0xff]
    %v2832 = vld [vmem:[#allocation11 + $0x2c8] sm:$0xff]
    %v2833 = vld [vmem:[#allocation11 + $0x2d0] sm:$0xff]
    %v2834 = vld [vmem:[#allocation11 + $0x2d8] sm:$0xff]
    %v2835 = vld [vmem:[#allocation11 + $0x2e0] sm:$0xff]
    %v2836 = vld [vmem:[#allocation11 + $0x2e8] sm:$0xff]
    %v2837 = vld [vmem:[#allocation11 + $0x2f0] sm:$0xff]
    %v2838 = vld [vmem:[#allocation11 + $0x2f8] sm:$0xff]
    %v2839 = vld [vmem:[#allocation11 + $0x300] sm:$0xff]
    %v2840 = vld [vmem:[#allocation11 + $0x308] sm:$0xff]
    %v2841 = vld [vmem:[#allocation11 + $0x310] sm:$0xff]
    %v2842 = vld [vmem:[#allocation11 + $0x318] sm:$0xff]
    %v2843 = vld [vmem:[#allocation11 + $0x320] sm:$0xff]
    %v2844 = vld [vmem:[#allocation11 + $0x328] sm:$0xff]
    %v2845 = vld [vmem:[#allocation11 + $0x330] sm:$0xff]
    %v2846 = vld [vmem:[#allocation11 + $0x338] sm:$0xff]
    %v2847 = vld [vmem:[#allocation11 + $0x340] sm:$0xff]
    %v2848 = vld [vmem:[#allocation11 + $0x348] sm:$0xff]
    %v2849 = vld [vmem:[#allocation11 + $0x350] sm:$0xff]
    %v2850 = vld [vmem:[#allocation11 + $0x358] sm:$0xff]
    %v2851 = vld [vmem:[#allocation11 + $0x360] sm:$0xff]
    %v2852 = vld [vmem:[#allocation11 + $0x368] sm:$0xff]
    %v2853 = vld [vmem:[#allocation11 + $0x370] sm:$0xff]
    %v2854 = vld [vmem:[#allocation11 + $0x378] sm:$0xff]
    %v2855 = vld [vmem:[#allocation11 + $0x380] sm:$0xff]
    %v2856 = vld [vmem:[#allocation11 + $0x388] sm:$0xff]
    %v2857 = vld [vmem:[#allocation11 + $0x390] sm:$0xff]
    %v2858 = vld [vmem:[#allocation11 + $0x398] sm:$0xff]
    %v2859 = vld [vmem:[#allocation11 + $0x3a0] sm:$0xff]
    %v2860 = vld [vmem:[#allocation11 + $0x3a8] sm:$0xff]
    %v2861 = vld [vmem:[#allocation11 + $0x3b0] sm:$0xff]
    %v2862 = vld [vmem:[#allocation11 + $0x3b8] sm:$0xff]
    %v2863 = vld [vmem:[#allocation11 + $0x3c0] sm:$0xff]
    %v2864 = vld [vmem:[#allocation11 + $0x3c8] sm:$0xff]
    %v2865 = vld [vmem:[#allocation11 + $0x3d0] sm:$0xff]
    %v2866 = vld [vmem:[#allocation11 + $0x3d8] sm:$0xff]
    %v2867 = vld [vmem:[#allocation11 + $0x3e0] sm:$0xff]
    %v2868 = vld [vmem:[#allocation11 + $0x3e8] sm:$0xff]
    %v2869 = vld [vmem:[#allocation11 + $0x3f0] sm:$0xff]
    %v2870 = vld [vmem:[#allocation11 + $0x3f8] sm:$0xff]
    %v2871 = vld [vmem:[#allocation11 + $0x400] sm:$0xff]
    %v2872 = vld [vmem:[#allocation11 + $0x408] sm:$0xff]
    %v2873 = vld [vmem:[#allocation11 + $0x410] sm:$0xff]
    %v2874 = vld [vmem:[#allocation11 + $0x418] sm:$0xff]
    %v2875 = vld [vmem:[#allocation11 + $0x420] sm:$0xff]
    %v2876 = vld [vmem:[#allocation11 + $0x428] sm:$0xff]
    %v2877 = vld [vmem:[#allocation11 + $0x430] sm:$0xff]
    %v2878 = vld [vmem:[#allocation11 + $0x438] sm:$0xff]
    %v2879 = vld [vmem:[#allocation11 + $0x440] sm:$0xff]
    %v2880 = vld [vmem:[#allocation11 + $0x448] sm:$0xff]
    %v2881 = vld [vmem:[#allocation11 + $0x450] sm:$0xff]
    %v2882 = vld [vmem:[#allocation11 + $0x458] sm:$0xff]
    %v2883 = vld [vmem:[#allocation11 + $0x460] sm:$0xff]
    %v2884 = vld [vmem:[#allocation11 + $0x468] sm:$0xff]
    %v2885 = vld [vmem:[#allocation11 + $0x470] sm:$0xff]
    %v2886 = vld [vmem:[#allocation11 + $0x478] sm:$0xff]
    %v2887 = vld [vmem:[#allocation11 + $0x480] sm:$0xff]
    %v2888 = vld [vmem:[#allocation11 + $0x488] sm:$0xff]
    %v2889 = vld [vmem:[#allocation11 + $0x490] sm:$0xff]
    %v2890 = vld [vmem:[#allocation11 + $0x498] sm:$0xff]
    %v2891 = vld [vmem:[#allocation11 + $0x4a0] sm:$0xff]
    %v2892 = vld [vmem:[#allocation11 + $0x4a8] sm:$0xff]
    %v2893 = vld [vmem:[#allocation11 + $0x4b0] sm:$0xff]
    %v2894 = vld [vmem:[#allocation11 + $0x4b8] sm:$0xff]
    %v2895 = vld [vmem:[#allocation11 + $0x4c0] sm:$0xff]
    %v2896 = vld [vmem:[#allocation11 + $0x4c8] sm:$0xff]
    %v2897 = vld [vmem:[#allocation11 + $0x4d0] sm:$0xff]
    %v2898 = vld [vmem:[#allocation11 + $0x4d8] sm:$0xff]
    %v2899 = vld [vmem:[#allocation11 + $0x4e0] sm:$0xff]
    %v2900 = vld [vmem:[#allocation11 + $0x4e8] sm:$0xff]
    %v2901 = vld [vmem:[#allocation11 + $0x4f0] sm:$0xff]
    %v2902 = vld [vmem:[#allocation11 + $0x4f8] sm:$0xff]
    %v2903 = vld [vmem:[#allocation11 + $0x500] sm:$0xff]
    %v2904 = vld [vmem:[#allocation11 + $0x508] sm:$0xff]
    %v2905 = vld [vmem:[#allocation11 + $0x510] sm:$0xff]
    %v2906 = vld [vmem:[#allocation11 + $0x518] sm:$0xff]
    %v2907 = vld [vmem:[#allocation11 + $0x520] sm:$0xff]
    %v2908 = vld [vmem:[#allocation11 + $0x528] sm:$0xff]
    %v2909 = vld [vmem:[#allocation11 + $0x530] sm:$0xff]
    %v2910 = vld [vmem:[#allocation11 + $0x538] sm:$0xff]
    %v2911 = vld [vmem:[#allocation11 + $0x540] sm:$0xff]
    %v2912 = vld [vmem:[#allocation11 + $0x548] sm:$0xff]
    %v2913 = vld [vmem:[#allocation11 + $0x550] sm:$0xff]
    %v2914 = vld [vmem:[#allocation11 + $0x558] sm:$0xff]
    %v2915 = vld [vmem:[#allocation11 + $0x560] sm:$0xff]
    %v2916 = vld [vmem:[#allocation11 + $0x568] sm:$0xff]
    %v2917 = vld [vmem:[#allocation11 + $0x570] sm:$0xff]
    %v2918 = vld [vmem:[#allocation11 + $0x578] sm:$0xff]
    %v2919 = vld [vmem:[#allocation11 + $0x580] sm:$0xff]
    %v2920 = vld [vmem:[#allocation11 + $0x588] sm:$0xff]
    %v2921 = vld [vmem:[#allocation11 + $0x590] sm:$0xff]
    %v2922 = vld [vmem:[#allocation11 + $0x598] sm:$0xff]
    %v2923 = vld [vmem:[#allocation11 + $0x5a0] sm:$0xff]
    %v2924 = vld [vmem:[#allocation11 + $0x5a8] sm:$0xff]
    %v2925 = vld [vmem:[#allocation11 + $0x5b0] sm:$0xff]
    %v2926 = vld [vmem:[#allocation11 + $0x5b8] sm:$0xff]
    %v2927 = vld [vmem:[#allocation11 + $0x5c0] sm:$0xff]
    %v2928 = vld [vmem:[#allocation11 + $0x5c8] sm:$0xff]
    %v2929 = vld [vmem:[#allocation11 + $0x5d0] sm:$0xff]
    %v2930 = vld [vmem:[#allocation11 + $0x5d8] sm:$0xff]
    %v2931 = vld [vmem:[#allocation11 + $0x5e0] sm:$0xff]
    %v2932 = vld [vmem:[#allocation11 + $0x5e8] sm:$0xff]
    %v2933 = vld [vmem:[#allocation11 + $0x5f0] sm:$0xff]
    %v2934 = vld [vmem:[#allocation11 + $0x5f8] sm:$0xff]
    %v2935 = vld [vmem:[#allocation11 + $0x600] sm:$0xff]
    %v2936 = vld [vmem:[#allocation11 + $0x608] sm:$0xff]
    %v2937 = vld [vmem:[#allocation11 + $0x610] sm:$0xff]
    %v2938 = vld [vmem:[#allocation11 + $0x618] sm:$0xff]
    %v2939 = vld [vmem:[#allocation11 + $0x620] sm:$0xff]
    %v2940 = vld [vmem:[#allocation11 + $0x628] sm:$0xff]
    %v2941 = vld [vmem:[#allocation11 + $0x630] sm:$0xff]
    %v2942 = vld [vmem:[#allocation11 + $0x638] sm:$0xff]
    %v2943 = vld [vmem:[#allocation11 + $0x640] sm:$0xff]
    %v2944 = vld [vmem:[#allocation11 + $0x648] sm:$0xff]
    %v2945 = vld [vmem:[#allocation11 + $0x650] sm:$0xff]
    %v2946 = vld [vmem:[#allocation11 + $0x658] sm:$0xff]
    %v2947 = vld [vmem:[#allocation11 + $0x660] sm:$0xff]
    %v2948 = vld [vmem:[#allocation11 + $0x668] sm:$0xff]
    %v2949 = vld [vmem:[#allocation11 + $0x670] sm:$0xff]
    %v2950 = vld [vmem:[#allocation11 + $0x678] sm:$0xff]
    %v2951 = vld [vmem:[#allocation11 + $0x680] sm:$0xff]
    %v2952 = vld [vmem:[#allocation11 + $0x688] sm:$0xff]
    %v2953 = vld [vmem:[#allocation11 + $0x690] sm:$0xff]
    %v2954 = vld [vmem:[#allocation11 + $0x698] sm:$0xff]
    %v2955 = vld [vmem:[#allocation11 + $0x6a0] sm:$0xff]
    %v2956 = vld [vmem:[#allocation11 + $0x6a8] sm:$0xff]
    %v2957 = vld [vmem:[#allocation11 + $0x6b0] sm:$0xff]
    %v2958 = vld [vmem:[#allocation11 + $0x6b8] sm:$0xff]
    %v2959 = vld [vmem:[#allocation11 + $0x6c0] sm:$0xff]
    %v2960 = vld [vmem:[#allocation11 + $0x6c8] sm:$0xff]
    %v2961 = vld [vmem:[#allocation11 + $0x6d0] sm:$0xff]
    %v2962 = vld [vmem:[#allocation11 + $0x6d8] sm:$0xff]
    %v2963 = vld [vmem:[#allocation11 + $0x6e0] sm:$0xff]
    %v2964 = vld [vmem:[#allocation11 + $0x6e8] sm:$0xff]
    %v2965 = vld [vmem:[#allocation11 + $0x6f0] sm:$0xff]
    %v2966 = vld [vmem:[#allocation11 + $0x6f8] sm:$0xff]
    %v2967 = vld [vmem:[#allocation11 + $0x700] sm:$0xff]
    %v2968 = vld [vmem:[#allocation11 + $0x708] sm:$0xff]
    %v2969 = vld [vmem:[#allocation11 + $0x710] sm:$0xff]
    %v2970 = vld [vmem:[#allocation11 + $0x718] sm:$0xff]
    %v2971 = vld [vmem:[#allocation11 + $0x720] sm:$0xff]
    %v2972 = vld [vmem:[#allocation11 + $0x728] sm:$0xff]
    %v2973 = vld [vmem:[#allocation11 + $0x730] sm:$0xff]
    %v2974 = vld [vmem:[#allocation11 + $0x738] sm:$0xff]
    %v2975 = vld [vmem:[#allocation11 + $0x740] sm:$0xff]
    %v2976 = vld [vmem:[#allocation11 + $0x748] sm:$0xff]
    %v2977 = vld [vmem:[#allocation11 + $0x750] sm:$0xff]
    %v2978 = vld [vmem:[#allocation11 + $0x758] sm:$0xff]
    %v2979 = vld [vmem:[#allocation11 + $0x760] sm:$0xff]
    %v2980 = vld [vmem:[#allocation11 + $0x768] sm:$0xff]
    %v2981 = vld [vmem:[#allocation11 + $0x770] sm:$0xff]
    %v2982 = vld [vmem:[#allocation11 + $0x778] sm:$0xff]
    %v2983 = vld [vmem:[#allocation11 + $0x780] sm:$0xff]
    %v2984 = vld [vmem:[#allocation11 + $0x788] sm:$0xff]
    %v2985 = vld [vmem:[#allocation11 + $0x790] sm:$0xff]
    %v2986 = vld [vmem:[#allocation11 + $0x798] sm:$0xff]
    %v2987 = vld [vmem:[#allocation11 + $0x7a0] sm:$0xff]
    %v2988 = vld [vmem:[#allocation11 + $0x7a8] sm:$0xff]
    %v2989 = vld [vmem:[#allocation11 + $0x7b0] sm:$0xff]
    %v2990 = vld [vmem:[#allocation11 + $0x7b8] sm:$0xff]
    %v2991 = vld [vmem:[#allocation11 + $0x7c0] sm:$0xff]
    %v2992 = vld [vmem:[#allocation11 + $0x7c8] sm:$0xff]
    %v2993 = vld [vmem:[#allocation11 + $0x7d0] sm:$0xff]
    %v2994 = vld [vmem:[#allocation11 + $0x7d8] sm:$0xff]
    %v2995 = vld [vmem:[#allocation11 + $0x7e0] sm:$0xff]
    %v2996 = vld [vmem:[#allocation11 + $0x7e8] sm:$0xff]
    %v2997 = vld [vmem:[#allocation11 + $0x7f0] sm:$0xff]
    %v2998 = vld [vmem:[#allocation11 + $0x7f8] sm:$0xff]
    %v2999 = vld [vmem:[#allocation11 + $0x800] sm:$0xff]
    %v3000 = vld [vmem:[#allocation11 + $0x808] sm:$0xff]
    %v3001 = vld [vmem:[#allocation11 + $0x810] sm:$0xff]
    %v3002 = vld [vmem:[#allocation11 + $0x818] sm:$0xff]
    %v3003 = vld [vmem:[#allocation11 + $0x820] sm:$0xff]
    %v3004 = vld [vmem:[#allocation11 + $0x828] sm:$0xff]
    %v3005 = vld [vmem:[#allocation11 + $0x830] sm:$0xff]
    %v3006 = vld [vmem:[#allocation11 + $0x838] sm:$0xff]
    %v3007 = vld [vmem:[#allocation11 + $0x840] sm:$0xff]
    %v3008 = vld [vmem:[#allocation11 + $0x848] sm:$0xff]
    %v3009 = vld [vmem:[#allocation11 + $0x850] sm:$0xff]
    %v3010 = vld [vmem:[#allocation11 + $0x858] sm:$0xff]
    %v3011 = vld [vmem:[#allocation11 + $0x860] sm:$0xff]
    %v3012 = vld [vmem:[#allocation11 + $0x868] sm:$0xff]
    %v3013 = vld [vmem:[#allocation11 + $0x870] sm:$0xff]
    %v3014 = vld [vmem:[#allocation11 + $0x878] sm:$0xff]
    %v3015 = vld [vmem:[#allocation11 + $0x880] sm:$0xff]
    %v3016 = vld [vmem:[#allocation11 + $0x888] sm:$0xff]
    %v3017 = vld [vmem:[#allocation11 + $0x890] sm:$0xff]
    %v3018 = vld [vmem:[#allocation11 + $0x898] sm:$0xff]
    %v3019 = vld [vmem:[#allocation11 + $0x8a0] sm:$0xff]
    %v3020 = vld [vmem:[#allocation11 + $0x8a8] sm:$0xff]
    %v3021 = vld [vmem:[#allocation11 + $0x8b0] sm:$0xff]
    %v3022 = vld [vmem:[#allocation11 + $0x8b8] sm:$0xff]
    %v3023 = vld [vmem:[#allocation11 + $0x8c0] sm:$0xff]
    %v3024 = vld [vmem:[#allocation11 + $0x8c8] sm:$0xff]
    %v3025 = vld [vmem:[#allocation11 + $0x8d0] sm:$0xff]
    %v3026 = vld [vmem:[#allocation11 + $0x8d8] sm:$0xff]
    %v3027 = vld [vmem:[#allocation11 + $0x8e0] sm:$0xff]
    %v3028 = vld [vmem:[#allocation11 + $0x8e8] sm:$0xff]
    %v3029 = vld [vmem:[#allocation11 + $0x8f0] sm:$0xff]
    %v3030 = vld [vmem:[#allocation11 + $0x8f8] sm:$0xff]
    %v3031 = vld [vmem:[#allocation11 + $0x900] sm:$0xff]
    %v3032 = vld [vmem:[#allocation11 + $0x908] sm:$0xff]
    %v3033 = vld [vmem:[#allocation11 + $0x910] sm:$0xff]
    %v3034 = vld [vmem:[#allocation11 + $0x918] sm:$0xff]
    %v3035 = vld [vmem:[#allocation11 + $0x920] sm:$0xff]
    %v3036 = vld [vmem:[#allocation11 + $0x928] sm:$0xff]
    %v3037 = vld [vmem:[#allocation11 + $0x930] sm:$0xff]
    %v3038 = vld [vmem:[#allocation11 + $0x938] sm:$0xff]
    %v3039 = vld [vmem:[#allocation11 + $0x940] sm:$0xff]
    %v3040 = vld [vmem:[#allocation11 + $0x948] sm:$0xff]
    %v3041 = vld [vmem:[#allocation11 + $0x950] sm:$0xff]
    %v3042 = vld [vmem:[#allocation11 + $0x958] sm:$0xff]
    %v3043 = vld [vmem:[#allocation11 + $0x960] sm:$0xff]
    %v3044 = vld [vmem:[#allocation11 + $0x968] sm:$0xff]
    %v3045 = vld [vmem:[#allocation11 + $0x970] sm:$0xff]
    %v3046 = vld [vmem:[#allocation11 + $0x978] sm:$0xff]
    %v3047 = vld [vmem:[#allocation11 + $0x980] sm:$0xff]
    %v3048 = vld [vmem:[#allocation11 + $0x988] sm:$0xff]
    %v3049 = vld [vmem:[#allocation11 + $0x990] sm:$0xff]
    %v3050 = vld [vmem:[#allocation11 + $0x998] sm:$0xff]
    %v3051 = vld [vmem:[#allocation11 + $0x9a0] sm:$0xff]
    %v3052 = vld [vmem:[#allocation11 + $0x9a8] sm:$0xff]
    %v3053 = vld [vmem:[#allocation11 + $0x9b0] sm:$0xff]
    %v3054 = vld [vmem:[#allocation11 + $0x9b8] sm:$0xff]
    %v3055 = vld [vmem:[#allocation11 + $0x9c0] sm:$0xff]
    %v3056 = vld [vmem:[#allocation11 + $0x9c8] sm:$0xff]
    %v3057 = vld [vmem:[#allocation11 + $0x9d0] sm:$0xff]
    %v3058 = vld [vmem:[#allocation11 + $0x9d8] sm:$0xff]
    %v3059 = vld [vmem:[#allocation11 + $0x9e0] sm:$0xff]
    %v3060 = vld [vmem:[#allocation11 + $0x9e8] sm:$0xff]
    %v3061 = vld [vmem:[#allocation11 + $0x9f0] sm:$0xff]
    %v3062 = vld [vmem:[#allocation11 + $0x9f8] sm:$0xff]
    %v3063 = vld [vmem:[#allocation11 + $0xa00] sm:$0xff]
    %v3064 = vld [vmem:[#allocation11 + $0xa08] sm:$0xff]
    %v3065 = vld [vmem:[#allocation11 + $0xa10] sm:$0xff]
    %v3066 = vld [vmem:[#allocation11 + $0xa18] sm:$0xff]
    %v3067 = vld [vmem:[#allocation11 + $0xa20] sm:$0xff]
    %v3068 = vld [vmem:[#allocation11 + $0xa28] sm:$0xff]
    %v3069 = vld [vmem:[#allocation11 + $0xa30] sm:$0xff]
    %v3070 = vld [vmem:[#allocation11 + $0xa38] sm:$0xff]
    %v3071 = vld [vmem:[#allocation11 + $0xa40] sm:$0xff]
    %v3072 = vld [vmem:[#allocation11 + $0xa48] sm:$0xff]
    %v3073 = vld [vmem:[#allocation11 + $0xa50] sm:$0xff]
    %v3074 = vld [vmem:[#allocation11 + $0xa58] sm:$0xff]
    %v3075 = vld [vmem:[#allocation11 + $0xa60] sm:$0xff]
    %v3076 = vld [vmem:[#allocation11 + $0xa68] sm:$0xff]
    %v3077 = vld [vmem:[#allocation11 + $0xa70] sm:$0xff]
    %v3078 = vld [vmem:[#allocation11 + $0xa78] sm:$0xff]
    %v3079 = vld [vmem:[#allocation11 + $0xa80] sm:$0xff]
    %v3080 = vld [vmem:[#allocation11 + $0xa88] sm:$0xff]
    %v3081 = vld [vmem:[#allocation11 + $0xa90] sm:$0xff]
    %v3082 = vld [vmem:[#allocation11 + $0xa98] sm:$0xff]
    %v3083 = vld [vmem:[#allocation11 + $0xaa0] sm:$0xff]
    %v3084 = vld [vmem:[#allocation11 + $0xaa8] sm:$0xff]
    %v3085 = vld [vmem:[#allocation11 + $0xab0] sm:$0xff]
    %v3086 = vld [vmem:[#allocation11 + $0xab8] sm:$0xff]
    %v3087 = vld [vmem:[#allocation11 + $0xac0] sm:$0xff]
    %v3088 = vld [vmem:[#allocation11 + $0xac8] sm:$0xff]
    %v3089 = vld [vmem:[#allocation11 + $0xad0] sm:$0xff]
    %v3090 = vld [vmem:[#allocation11 + $0xad8] sm:$0xff]
    %v3091 = vld [vmem:[#allocation11 + $0xae0] sm:$0xff]
    %v3092 = vld [vmem:[#allocation11 + $0xae8] sm:$0xff]
    %v3093 = vld [vmem:[#allocation11 + $0xaf0] sm:$0xff]
    %v3094 = vld [vmem:[#allocation11 + $0xaf8] sm:$0xff]
    %v3095 = vld [vmem:[#allocation11 + $0xb00] sm:$0xff]
    %v3096 = vld [vmem:[#allocation11 + $0xb08] sm:$0xff]
    %v3097 = vld [vmem:[#allocation11 + $0xb10] sm:$0xff]
    %v3098 = vld [vmem:[#allocation11 + $0xb18] sm:$0xff]
    %v3099 = vld [vmem:[#allocation11 + $0xb20] sm:$0xff]
    %v3100 = vld [vmem:[#allocation11 + $0xb28] sm:$0xff]
    %v3101 = vld [vmem:[#allocation11 + $0xb30] sm:$0xff]
    %v3102 = vld [vmem:[#allocation11 + $0xb38] sm:$0xff]
    %v3103 = vld [vmem:[#allocation11 + $0xb40] sm:$0xff]
    %v3104 = vld [vmem:[#allocation11 + $0xb48] sm:$0xff]
    %v3105 = vld [vmem:[#allocation11 + $0xb50] sm:$0xff]
    %v3106 = vld [vmem:[#allocation11 + $0xb58] sm:$0xff]
    %v3107 = vld [vmem:[#allocation11 + $0xb60] sm:$0xff]
    %v3108 = vld [vmem:[#allocation11 + $0xb68] sm:$0xff]
    %v3109 = vld [vmem:[#allocation11 + $0xb70] sm:$0xff]
    %v3110 = vld [vmem:[#allocation11 + $0xb78] sm:$0xff]
    %v3111 = vld [vmem:[#allocation11 + $0xb80] sm:$0xff]
    %v3112 = vld [vmem:[#allocation11 + $0xb88] sm:$0xff]
    %v3113 = vld [vmem:[#allocation11 + $0xb90] sm:$0xff]
    %v3114 = vld [vmem:[#allocation11 + $0xb98] sm:$0xff]
    %v3115 = vld [vmem:[#allocation11 + $0xba0] sm:$0xff]
    %v3116 = vld [vmem:[#allocation11 + $0xba8] sm:$0xff]
    %v3117 = vld [vmem:[#allocation11 + $0xbb0] sm:$0xff]
    %v3118 = vld [vmem:[#allocation11 + $0xbb8] sm:$0xff]
    %v3119 = vld [vmem:[#allocation11 + $0xbc0] sm:$0xff]
    %v3120 = vld [vmem:[#allocation11 + $0xbc8] sm:$0xff]
    %v3121 = vld [vmem:[#allocation11 + $0xbd0] sm:$0xff]
    %v3122 = vld [vmem:[#allocation11 + $0xbd8] sm:$0xff]
    %v3123 = vld [vmem:[#allocation11 + $0xbe0] sm:$0xff]
    %v3124 = vld [vmem:[#allocation11 + $0xbe8] sm:$0xff]
    %v3125 = vld [vmem:[#allocation11 + $0xbf0] sm:$0xff]
    %v3126 = vld [vmem:[#allocation11 + $0xbf8] sm:$0xff]
    %v3127 = vld [vmem:[#allocation11 + $0xc00] sm:$0xff]
    %v3128 = vld [vmem:[#allocation11 + $0xc08] sm:$0xff]
    %v3129 = vld [vmem:[#allocation11 + $0xc10] sm:$0xff]
    %v3130 = vld [vmem:[#allocation11 + $0xc18] sm:$0xff]
    %v3131 = vld [vmem:[#allocation11 + $0xc20] sm:$0xff]
    %v3132 = vld [vmem:[#allocation11 + $0xc28] sm:$0xff]
    %v3133 = vld [vmem:[#allocation11 + $0xc30] sm:$0xff]
    %v3134 = vld [vmem:[#allocation11 + $0xc38] sm:$0xff]
    %v3135 = vld [vmem:[#allocation11 + $0xc40] sm:$0xff]
    %v3136 = vld [vmem:[#allocation11 + $0xc48] sm:$0xff]
    %v3137 = vld [vmem:[#allocation11 + $0xc50] sm:$0xff]
    %v3138 = vld [vmem:[#allocation11 + $0xc58] sm:$0xff]
    %v3139 = vld [vmem:[#allocation11 + $0xc60] sm:$0xff]
    %v3140 = vld [vmem:[#allocation11 + $0xc68] sm:$0xff]
    %v3141 = vld [vmem:[#allocation11 + $0xc70] sm:$0xff]
    %v3142 = vld [vmem:[#allocation11 + $0xc78] sm:$0xff]
    %v3143 = vld [vmem:[#allocation11 + $0xc80] sm:$0xff]
    %v3144 = vld [vmem:[#allocation11 + $0xc88] sm:$0xff]
    %v3145 = vld [vmem:[#allocation11 + $0xc90] sm:$0xff]
    %v3146 = vld [vmem:[#allocation11 + $0xc98] sm:$0xff]
    %v3147 = vld [vmem:[#allocation11 + $0xca0] sm:$0xff]
    %v3148 = vld [vmem:[#allocation11 + $0xca8] sm:$0xff]
    %v3149 = vld [vmem:[#allocation11 + $0xcb0] sm:$0xff]
    %v3150 = vld [vmem:[#allocation11 + $0xcb8] sm:$0xff]
    %v3151 = vld [vmem:[#allocation11 + $0xcc0] sm:$0xff]
    %v3152 = vld [vmem:[#allocation11 + $0xcc8] sm:$0xff]
    %v3153 = vld [vmem:[#allocation11 + $0xcd0] sm:$0xff]
    %v3154 = vld [vmem:[#allocation11 + $0xcd8] sm:$0xff]
    %v3155 = vld [vmem:[#allocation11 + $0xce0] sm:$0xff]
    %v3156 = vld [vmem:[#allocation11 + $0xce8] sm:$0xff]
    %v3157 = vld [vmem:[#allocation11 + $0xcf0] sm:$0xff]
    %v3158 = vld [vmem:[#allocation11 + $0xcf8] sm:$0xff]
    %v3159 = vld [vmem:[#allocation11 + $0xd00] sm:$0xff]
    %v3160 = vld [vmem:[#allocation11 + $0xd08] sm:$0xff]
    %v3161 = vld [vmem:[#allocation11 + $0xd10] sm:$0xff]
    %v3162 = vld [vmem:[#allocation11 + $0xd18] sm:$0xff]
    %v3163 = vld [vmem:[#allocation11 + $0xd20] sm:$0xff]
    %v3164 = vld [vmem:[#allocation11 + $0xd28] sm:$0xff]
    %v3165 = vld [vmem:[#allocation11 + $0xd30] sm:$0xff]
    %v3166 = vld [vmem:[#allocation11 + $0xd38] sm:$0xff]
    %v3167 = vld [vmem:[#allocation11 + $0xd40] sm:$0xff]
    %v3168 = vld [vmem:[#allocation11 + $0xd48] sm:$0xff]
    %v3169 = vld [vmem:[#allocation11 + $0xd50] sm:$0xff]
    %v3170 = vld [vmem:[#allocation11 + $0xd58] sm:$0xff]
    %v3171 = vld [vmem:[#allocation11 + $0xd60] sm:$0xff]
    %v3172 = vld [vmem:[#allocation11 + $0xd68] sm:$0xff]
    %v3173 = vld [vmem:[#allocation11 + $0xd70] sm:$0xff]
    %v3174 = vld [vmem:[#allocation11 + $0xd78] sm:$0xff]
    %v3175 = vld [vmem:[#allocation11 + $0xd80] sm:$0xff]
    %v3176 = vld [vmem:[#allocation11 + $0xd88] sm:$0xff]
    %v3177 = vld [vmem:[#allocation11 + $0xd90] sm:$0xff]
    %v3178 = vld [vmem:[#allocation11 + $0xd98] sm:$0xff]
    %v3179 = vld [vmem:[#allocation11 + $0xda0] sm:$0xff]
    %v3180 = vld [vmem:[#allocation11 + $0xda8] sm:$0xff]
    %v3181 = vld [vmem:[#allocation11 + $0xdb0] sm:$0xff]
    %v3182 = vld [vmem:[#allocation11 + $0xdb8] sm:$0xff]
    %v3183 = vld [vmem:[#allocation11 + $0xdc0] sm:$0xff]
    %v3184 = vld [vmem:[#allocation11 + $0xdc8] sm:$0xff]
    %v3185 = vld [vmem:[#allocation11 + $0xdd0] sm:$0xff]
    %v3186 = vld [vmem:[#allocation11 + $0xdd8] sm:$0xff]
    %v3187 = vld [vmem:[#allocation11 + $0xde0] sm:$0xff]
    %v3188 = vld [vmem:[#allocation11 + $0xde8] sm:$0xff]
    %v3189 = vld [vmem:[#allocation11 + $0xdf0] sm:$0xff]
    %v3190 = vld [vmem:[#allocation11 + $0xdf8] sm:$0xff]
    %v3191 = vld [vmem:[#allocation11 + $0xe00] sm:$0xff]
    %v3192 = vld [vmem:[#allocation11 + $0xe08] sm:$0xff]
    %v3193 = vld [vmem:[#allocation11 + $0xe10] sm:$0xff]
    %v3194 = vld [vmem:[#allocation11 + $0xe18] sm:$0xff]
    %v3195 = vld [vmem:[#allocation11 + $0xe20] sm:$0xff]
    %v3196 = vld [vmem:[#allocation11 + $0xe28] sm:$0xff]
    %v3197 = vld [vmem:[#allocation11 + $0xe30] sm:$0xff]
    %v3198 = vld [vmem:[#allocation11 + $0xe38] sm:$0xff]
    %v3199 = vld [vmem:[#allocation11 + $0xe40] sm:$0xff]
    %v3200 = vld [vmem:[#allocation11 + $0xe48] sm:$0xff]
    %v3201 = vld [vmem:[#allocation11 + $0xe50] sm:$0xff]
    %v3202 = vld [vmem:[#allocation11 + $0xe58] sm:$0xff]
    %v3203 = vld [vmem:[#allocation11 + $0xe60] sm:$0xff]
    %v3204 = vld [vmem:[#allocation11 + $0xe68] sm:$0xff]
    %v3205 = vld [vmem:[#allocation11 + $0xe70] sm:$0xff]
    %v3206 = vld [vmem:[#allocation11 + $0xe78] sm:$0xff]
    %v3207 = vld [vmem:[#allocation11 + $0xe80] sm:$0xff]
    %v3208 = vld [vmem:[#allocation11 + $0xe88] sm:$0xff]
    %v3209 = vld [vmem:[#allocation11 + $0xe90] sm:$0xff]
    %v3210 = vld [vmem:[#allocation11 + $0xe98] sm:$0xff]
    %v3211 = vld [vmem:[#allocation11 + $0xea0] sm:$0xff]
    %v3212 = vld [vmem:[#allocation11 + $0xea8] sm:$0xff]
    %v3213 = vld [vmem:[#allocation11 + $0xeb0] sm:$0xff]
    %v3214 = vld [vmem:[#allocation11 + $0xeb8] sm:$0xff]
    %v3215 = vld [vmem:[#allocation11 + $0xec0] sm:$0xff]
    %v3216 = vld [vmem:[#allocation11 + $0xec8] sm:$0xff]
    %v3217 = vld [vmem:[#allocation11 + $0xed0] sm:$0xff]
    %v3218 = vld [vmem:[#allocation11 + $0xed8] sm:$0xff]
    %v3219 = vld [vmem:[#allocation11 + $0xee0] sm:$0xff]
    %v3220 = vld [vmem:[#allocation11 + $0xee8] sm:$0xff]
    %v3221 = vld [vmem:[#allocation11 + $0xef0] sm:$0xff]
    %v3222 = vld [vmem:[#allocation11 + $0xef8] sm:$0xff]
    %v3223 = vld [vmem:[#allocation11 + $0xf00] sm:$0xff]
    %v3224 = vld [vmem:[#allocation11 + $0xf08] sm:$0xff]
    %v3225 = vld [vmem:[#allocation11 + $0xf10] sm:$0xff]
    %v3226 = vld [vmem:[#allocation11 + $0xf18] sm:$0xff]
    %v3227 = vld [vmem:[#allocation11 + $0xf20] sm:$0xff]
    %v3228 = vld [vmem:[#allocation11 + $0xf28] sm:$0xff]
    %v3229 = vld [vmem:[#allocation11 + $0xf30] sm:$0xff]
    %v3230 = vld [vmem:[#allocation11 + $0xf38] sm:$0xff]
    %v3231 = vld [vmem:[#allocation11 + $0xf40] sm:$0xff]
    %v3232 = vld [vmem:[#allocation11 + $0xf48] sm:$0xff]
    %v3233 = vld [vmem:[#allocation11 + $0xf50] sm:$0xff]
    %v3234 = vld [vmem:[#allocation11 + $0xf58] sm:$0xff]
    %v3235 = vld [vmem:[#allocation11 + $0xf60] sm:$0xff]
    %v3236 = vld [vmem:[#allocation11 + $0xf68] sm:$0xff]
    %v3237 = vld [vmem:[#allocation11 + $0xf70] sm:$0xff]
    %v3238 = vld [vmem:[#allocation11 + $0xf78] sm:$0xff]
    %v3239 = vld [vmem:[#allocation11 + $0xf80] sm:$0xff]
    %v3240 = vld [vmem:[#allocation11 + $0xf88] sm:$0xff]
    %v3241 = vld [vmem:[#allocation11 + $0xf90] sm:$0xff]
    %v3242 = vld [vmem:[#allocation11 + $0xf98] sm:$0xff]
    %v3243 = vld [vmem:[#allocation11 + $0xfa0] sm:$0xff]
    %v3244 = vld [vmem:[#allocation11 + $0xfa8] sm:$0xff]
    %v3245 = vld [vmem:[#allocation11 + $0xfb0] sm:$0xff]
    %v3246 = vld [vmem:[#allocation11 + $0xfb8] sm:$0xff]
    %v3247 = vld [vmem:[#allocation11 + $0xfc0] sm:$0xff]
    %v3248 = vld [vmem:[#allocation11 + $0xfc8] sm:$0xff]
    %v3249 = vld [vmem:[#allocation11 + $0xfd0] sm:$0xff]
    %v3250 = vld [vmem:[#allocation11 + $0xfd8] sm:$0xff]
    %v3251 = vld [vmem:[#allocation11 + $0xfe0] sm:$0xff]
    %v3252 = vld [vmem:[#allocation11 + $0xfe8] sm:$0xff]
    %v3253 = vld [vmem:[#allocation11 + $0xff0] sm:$0xff]
    %v3254 = vld [vmem:[#allocation11 + $0xff8] sm:$0xff]
    %v3255 = vld [vmem:[#allocation11 + $0x1000] sm:$0xff]
    %v3256 = vld [vmem:[#allocation11 + $0x1008] sm:$0xff]
    %v3257 = vld [vmem:[#allocation11 + $0x1010] sm:$0xff]
    %v3258 = vld [vmem:[#allocation11 + $0x1018] sm:$0xff]
    %v3259 = vld [vmem:[#allocation11 + $0x1020] sm:$0xff]
    %v3260 = vld [vmem:[#allocation11 + $0x1028] sm:$0xff]
    %v3261 = vld [vmem:[#allocation11 + $0x1030] sm:$0xff]
    %v3262 = vld [vmem:[#allocation11 + $0x1038] sm:$0xff]
    %v3263 = vld [vmem:[#allocation11 + $0x1040] sm:$0xff]
    %v3264 = vld [vmem:[#allocation11 + $0x1048] sm:$0xff]
    %v3265 = vld [vmem:[#allocation11 + $0x1050] sm:$0xff]
    %v3266 = vld [vmem:[#allocation11 + $0x1058] sm:$0xff]
    %v3267 = vld [vmem:[#allocation11 + $0x1060] sm:$0xff]
    %v3268 = vld [vmem:[#allocation11 + $0x1068] sm:$0xff]
    %v3269 = vld [vmem:[#allocation11 + $0x1070] sm:$0xff]
    %v3270 = vld [vmem:[#allocation11 + $0x1078] sm:$0xff]
    %v3271 = vld [vmem:[#allocation11 + $0x1080] sm:$0xff]
    %v3272 = vld [vmem:[#allocation11 + $0x1088] sm:$0xff]
    %v3273 = vld [vmem:[#allocation11 + $0x1090] sm:$0xff]
    %v3274 = vld [vmem:[#allocation11 + $0x1098] sm:$0xff]
    %v3275 = vld [vmem:[#allocation11 + $0x10a0] sm:$0xff]
    %v3276 = vld [vmem:[#allocation11 + $0x10a8] sm:$0xff]
    %v3277 = vld [vmem:[#allocation11 + $0x10b0] sm:$0xff]
    %v3278 = vld [vmem:[#allocation11 + $0x10b8] sm:$0xff]
    %v3279 = vld [vmem:[#allocation11 + $0x10c0] sm:$0xff]
    %v3280 = vld [vmem:[#allocation11 + $0x10c8] sm:$0xff]
    %v3281 = vld [vmem:[#allocation11 + $0x10d0] sm:$0xff]
    %v3282 = vld [vmem:[#allocation11 + $0x10d8] sm:$0xff]
    %v3283 = vld [vmem:[#allocation11 + $0x10e0] sm:$0xff]
    %v3284 = vld [vmem:[#allocation11 + $0x10e8] sm:$0xff]
    %v3285 = vld [vmem:[#allocation11 + $0x10f0] sm:$0xff]
    %v3286 = vld [vmem:[#allocation11 + $0x10f8] sm:$0xff]
    %v3287 = vld [vmem:[#allocation11 + $0x1100] sm:$0xff]
    %v3288 = vld [vmem:[#allocation11 + $0x1108] sm:$0xff]
    %v3289 = vld [vmem:[#allocation11 + $0x1110] sm:$0xff]
    %v3290 = vld [vmem:[#allocation11 + $0x1118] sm:$0xff]
    %v3291 = vld [vmem:[#allocation11 + $0x1120] sm:$0xff]
    %v3292 = vld [vmem:[#allocation11 + $0x1128] sm:$0xff]
    %v3293 = vld [vmem:[#allocation11 + $0x1130] sm:$0xff]
    %v3294 = vld [vmem:[#allocation11 + $0x1138] sm:$0xff]
    %v3295 = vld [vmem:[#allocation11 + $0x1140] sm:$0xff]
    %v3296 = vld [vmem:[#allocation11 + $0x1148] sm:$0xff]
    %v3297 = vld [vmem:[#allocation11 + $0x1150] sm:$0xff]
    %v3298 = vld [vmem:[#allocation11 + $0x1158] sm:$0xff]
    %v3299 = vld [vmem:[#allocation11 + $0x1160] sm:$0xff]
    %v3300 = vld [vmem:[#allocation11 + $0x1168] sm:$0xff]
    %v3301 = vld [vmem:[#allocation11 + $0x1170] sm:$0xff]
    %v3302 = vld [vmem:[#allocation11 + $0x1178] sm:$0xff]
    %v3303 = vld [vmem:[#allocation11 + $0x1180] sm:$0xff]
    %v3304 = vld [vmem:[#allocation11 + $0x1188] sm:$0xff]
    %v3305 = vld [vmem:[#allocation11 + $0x1190] sm:$0xff]
    %v3306 = vld [vmem:[#allocation11 + $0x1198] sm:$0xff]
    %v3307 = vld [vmem:[#allocation11 + $0x11a0] sm:$0xff]
    %v3308 = vld [vmem:[#allocation11 + $0x11a8] sm:$0xff]
    %v3309 = vld [vmem:[#allocation11 + $0x11b0] sm:$0xff]
    %v3310 = vld [vmem:[#allocation11 + $0x11b8] sm:$0xff]
    %v3311 = vld [vmem:[#allocation11 + $0x11c0] sm:$0xff]
    %v3312 = vld [vmem:[#allocation11 + $0x11c8] sm:$0xff]
    %v3313 = vld [vmem:[#allocation11 + $0x11d0] sm:$0xff]
    %v3314 = vld [vmem:[#allocation11 + $0x11d8] sm:$0xff]
    %v3315 = vld [vmem:[#allocation11 + $0x11e0] sm:$0xff]
    %v3316 = vld [vmem:[#allocation11 + $0x11e8] sm:$0xff]
    %v3317 = vld [vmem:[#allocation11 + $0x11f0] sm:$0xff]
    %v3318 = vld [vmem:[#allocation11 + $0x11f8] sm:$0xff]
    %v3319 = vld [vmem:[#allocation13] sm:$0x3f]
    %v3321 = vlaneseq
    %v3322 = vshrl.u32 %v3321, 7
    %v3323 = vsub.s32 0, %v3322
    %v3324 = vrot.slane %v3319, %v3323
    %v3325 = vlaneseq
    %v3326 = vshrl.u32 %v3325, 7
    %v3327 = vsub.s32 1, %v3326
    %v3328 = vrot.slane %v3319, %v3327
    %v3329 = vlaneseq
    %v3330 = vshrl.u32 %v3329, 7
    %v3331 = vsub.s32 2, %v3330
    %v3332 = vrot.slane %v3319, %v3331
    %v3333 = vlaneseq
    %v3334 = vshrl.u32 %v3333, 7
    %v3335 = vsub.s32 3, %v3334
    %v3336 = vrot.slane %v3319, %v3335
    %v3337 = vlaneseq
    %v3338 = vshrl.u32 %v3337, 7
    %v3339 = vsub.s32 4, %v3338
    %v3340 = vrot.slane %v3319, %v3339
    %v3341 = vlaneseq
    %v3342 = vshrl.u32 %v3341, 7
    %v3343 = vsub.s32 5, %v3342
    %v3344 = vrot.slane %v3319, %v3343
    %3351 = vmatprep.subr.mxu0 %v2744
    %3352 = vmatpush1.msra.mxu0 %v2743
    %3353 = vmatprep.subr.mxu0 %v2750
    %3354 = vmatpush1.msra.mxu0 %v2749
    %3355 = vmatprep.subr.mxu0 %v2756
    %3356 = vmatpush1.msra.mxu0 %v2755
    %3357 = vmatprep.subr.mxu0 %v2762
    %3358 = vmatpush1.msra.mxu0 %v2761
    %3359 = vmatprep.subr.mxu0 %v2768
    %3360 = vmatpush1.msra.mxu0 %v2767
    %3361 = vmatprep.subr.mxu0 %v2774
    %3362 = vmatpush1.msra.mxu0 %v2773
    %3363 = vmatprep.subr.mxu0 %v2780
    %3364 = vmatpush1.msra.mxu0 %v2779
    %3365 = vmatprep.subr.mxu0 %v2786
    %3366 = vmatpush1.msra.mxu0 %v2785
    %3367 = vmatprep.subr.mxu0 %v2792
    %3368 = vmatpush1.msra.mxu0 %v2791
    %3369 = vmatprep.subr.mxu0 %v2798
    %3370 = vmatpush1.msra.mxu0 %v2797
    %3371 = vmatprep.subr.mxu0 %v2804
    %3372 = vmatpush1.msra.mxu0 %v2803
    %3373 = vmatprep.subr.mxu0 %v2810
    %3374 = vmatpush1.msra.mxu0 %v2809
    %3375 = vmatprep.subr.mxu0 %v2816
    %3376 = vmatpush1.msra.mxu0 %v2815
    %3377 = vmatprep.subr.mxu0 %v2822
    %3378 = vmatpush1.msra.mxu0 %v2821
    %3379 = vmatprep.subr.mxu0 %v2828
    %3380 = vmatpush1.msra.mxu0 %v2827
    %3381 = vmatprep.subr.mxu0 %v2834
    %3382 = vmatpush1.msra.mxu0 %v2833
    %3383 = vmatprep.subr.mxu0 %v2840
    %3384 = vmatpush1.msra.mxu0 %v2839
    %3385 = vmatprep.subr.mxu0 %v2846
    %3386 = vmatpush1.msra.mxu0 %v2845
    %3387 = vmatprep.subr.mxu0 %v2852
    %3388 = vmatpush1.msra.mxu0 %v2851
    %3389 = vmatprep.subr.mxu0 %v2858
    %3390 = vmatpush1.msra.mxu0 %v2857
    %3391 = vmatprep.subr.mxu0 %v2864
    %3392 = vmatpush1.msra.mxu0 %v2863
    %3393 = vmatprep.subr.mxu0 %v2870
    %3394 = vmatpush1.msra.mxu0 %v2869
    %3395 = vmatprep.subr.mxu0 %v2876
    %3396 = vmatpush1.msra.mxu0 %v2875
    %3397 = vmatprep.subr.mxu0 %v2882
    %3398 = vmatpush1.msra.mxu0 %v2881
    %3399 = vmatprep.subr.mxu0 %v2888
    %3400 = vmatpush1.msra.mxu0 %v2887
    %3401 = vmatprep.subr.mxu0 %v2894
    %3402 = vmatpush1.msra.mxu0 %v2893
    %3403 = vmatprep.subr.mxu0 %v2900
    %3404 = vmatpush1.msra.mxu0 %v2899
    %3405 = vmatprep.subr.mxu0 %v2906
    %3406 = vmatpush1.msra.mxu0 %v2905
    %3407 = vmatprep.subr.mxu0 %v2912
    %3408 = vmatpush1.msra.mxu0 %v2911
    %3409 = vmatprep.subr.mxu0 %v2918
    %3410 = vmatpush1.msra.mxu0 %v2917
    %3411 = vmatprep.subr.mxu0 %v2924
    %3412 = vmatpush1.msra.mxu0 %v2923
    %3413 = vmatprep.subr.mxu0 %v2930
    %3414 = vmatpush1.msra.mxu0 %v2929
    %3415 = vmatprep.mubr.f32.mxu0 %v2738
    %3416 = vmatmul.mubr.f32.gmra.mrb[0].mxu0 %v2737
    %v3417 = vpop.f32.mrb[0].mxu0
    %v3418 = vadd.f32 %v3324, %v3417
    %v3419 = vpop.f32.mrb[0].mxu0
    %v3420 = vadd.f32 %v3328, %v3419
    %3421 = vdwg.mxu0
    %3422 = vmatprep.subr.mxu0 %v2936
    %3423 = vmatpush1.msra.mxu0 %v2935
    %3424 = vmatprep.subr.mxu0 %v2942
    %3425 = vmatpush1.msra.mxu0 %v2941
    %3426 = vmatprep.subr.mxu0 %v2948
    %3427 = vmatpush1.msra.mxu0 %v2947
    %3428 = vmatprep.subr.mxu0 %v2954
    %3429 = vmatpush1.msra.mxu0 %v2953
    %3430 = vmatprep.subr.mxu0 %v2960
    %3431 = vmatpush1.msra.mxu0 %v2959
    %3432 = vmatprep.subr.mxu0 %v2966
    %3433 = vmatpush1.msra.mxu0 %v2965
    %3434 = vmatprep.subr.mxu0 %v2972
    %3435 = vmatpush1.msra.mxu0 %v2971
    %3436 = vmatprep.subr.mxu0 %v2978
    %3437 = vmatpush1.msra.mxu0 %v2977
    %3438 = vmatprep.subr.mxu0 %v2984
    %3439 = vmatpush1.msra.mxu0 %v2983
    %3440 = vmatprep.subr.mxu0 %v2990
    %3441 = vmatpush1.msra.mxu0 %v2989
    %3442 = vmatprep.subr.mxu0 %v2996
    %3443 = vmatpush1.msra.mxu0 %v2995
    %3444 = vmatprep.subr.mxu0 %v3002
    %3445 = vmatpush1.msra.mxu0 %v3001
    %3446 = vmatprep.subr.mxu0 %v3008
    %3447 = vmatpush1.msra.mxu0 %v3007
    %3448 = vmatprep.subr.mxu0 %v3014
    %3449 = vmatpush1.msra.mxu0 %v3013
    %3450 = vmatprep.subr.mxu0 %v3020
    %3451 = vmatpush1.msra.mxu0 %v3019
    %3452 = vmatprep.subr.mxu0 %v3026
    %3453 = vmatpush1.msra.mxu0 %v3025
    %3454 = vmatprep.subr.mxu0 %v3032
    %3455 = vmatpush1.msra.mxu0 %v3031
    %3456 = vmatprep.subr.mxu0 %v3038
    %3457 = vmatpush1.msra.mxu0 %v3037
    %3458 = vmatprep.subr.mxu0 %v3044
    %3459 = vmatpush1.msra.mxu0 %v3043
    %3460 = vmatprep.subr.mxu0 %v3050
    %3461 = vmatpush1.msra.mxu0 %v3049
    %3462 = vmatprep.subr.mxu0 %v3056
    %3463 = vmatpush1.msra.mxu0 %v3055
    %3464 = vmatprep.subr.mxu0 %v3062
    %3465 = vmatpush1.msra.mxu0 %v3061
    %3466 = vmatprep.subr.mxu0 %v3068
    %3467 = vmatpush1.msra.mxu0 %v3067
    %3468 = vmatprep.subr.mxu0 %v3074
    %3469 = vmatpush1.msra.mxu0 %v3073
    %3470 = vmatprep.subr.mxu0 %v3080
    %3471 = vmatpush1.msra.mxu0 %v3079
    %3472 = vmatprep.subr.mxu0 %v3086
    %3473 = vmatpush1.msra.mxu0 %v3085
    %3474 = vmatprep.subr.mxu0 %v3092
    %3475 = vmatpush1.msra.mxu0 %v3091
    %3476 = vmatprep.subr.mxu0 %v3098
    %3477 = vmatpush1.msra.mxu0 %v3097
    %3478 = vmatprep.subr.mxu0 %v3104
    %3479 = vmatpush1.msra.mxu0 %v3103
    %3480 = vmatprep.subr.mxu0 %v3110
    %3481 = vmatpush1.msra.mxu0 %v3109
    %3482 = vmatprep.subr.mxu0 %v3116
    %3483 = vmatpush1.msra.mxu0 %v3115
    %3484 = vmatprep.subr.mxu0 %v3122
    %3485 = vmatpush1.msra.mxu0 %v3121
    %3486 = vmatprep.mubr.f32.mxu0 %v2740
    %3487 = vmatmul.mubr.f32.gmra.mrb[0].mxu0 %v2739
    %v3488 = vpop.f32.mrb[0].mxu0
    %v3489 = vadd.f32 %v3418, %v3488
    %v3490 = vpop.f32.mrb[0].mxu0
    %v3491 = vadd.f32 %v3420, %v3490
    %3492 = vdwg.mxu0
    %3493 = vmatprep.subr.mxu0 %v3128
    %3494 = vmatpush1.msra.mxu0 %v3127
    %3495 = vmatprep.subr.mxu0 %v3134
    %3496 = vmatpush1.msra.mxu0 %v3133
    %3497 = vmatprep.subr.mxu0 %v3140
    %3498 = vmatpush1.msra.mxu0 %v3139
    %3499 = vmatprep.subr.mxu0 %v3146
    %3500 = vmatpush1.msra.mxu0 %v3145
    %3501 = vmatprep.subr.mxu0 %v3152
    %3502 = vmatpush1.msra.mxu0 %v3151
    %3503 = vmatprep.subr.mxu0 %v3158
    %3504 = vmatpush1.msra.mxu0 %v3157
    %3505 = vmatprep.subr.mxu0 %v3164
    %3506 = vmatpush1.msra.mxu0 %v3163
    %3507 = vmatprep.subr.mxu0 %v3170
    %3508 = vmatpush1.msra.mxu0 %v3169
    %3509 = vmatprep.subr.mxu0 %v3176
    %3510 = vmatpush1.msra.mxu0 %v3175
    %3511 = vmatprep.subr.mxu0 %v3182
    %3512 = vmatpush1.msra.mxu0 %v3181
    %3513 = vmatprep.subr.mxu0 %v3188
    %3514 = vmatpush1.msra.mxu0 %v3187
    %3515 = vmatprep.subr.mxu0 %v3194
    %3516 = vmatpush1.msra.mxu0 %v3193
    %3517 = vmatprep.subr.mxu0 %v3200
    %3518 = vmatpush1.msra.mxu0 %v3199
    %3519 = vmatprep.subr.mxu0 %v3206
    %3520 = vmatpush1.msra.mxu0 %v3205
    %3521 = vmatprep.subr.mxu0 %v3212
    %3522 = vmatpush1.msra.mxu0 %v3211
    %3523 = vmatprep.subr.mxu0 %v3218
    %3524 = vmatpush1.msra.mxu0 %v3217
    %3525 = vmatprep.subr.mxu0 %v3224
    %3526 = vmatpush1.msra.mxu0 %v3223
    %3527 = vmatprep.subr.mxu0 %v3230
    %3528 = vmatpush1.msra.mxu0 %v3229
    %3529 = vmatprep.subr.mxu0 %v3236
    %3530 = vmatpush1.msra.mxu0 %v3235
    %3531 = vmatprep.subr.mxu0 %v3242
    %3532 = vmatpush1.msra.mxu0 %v3241
    %3533 = vmatprep.subr.mxu0 %v3248
    %3534 = vmatpush1.msra.mxu0 %v3247
    %3535 = vmatprep.subr.mxu0 %v3254
    %3536 = vmatpush1.msra.mxu0 %v3253
    %3537 = vmatprep.subr.mxu0 %v3260
    %3538 = vmatpush1.msra.mxu0 %v3259
    %3539 = vmatprep.subr.mxu0 %v3266
    %3540 = vmatpush1.msra.mxu0 %v3265
    %3541 = vmatprep.subr.mxu0 %v3272
    %3542 = vmatpush1.msra.mxu0 %v3271
    %3543 = vmatprep.subr.mxu0 %v3278
    %3544 = vmatpush1.msra.mxu0 %v3277
    %3545 = vmatprep.subr.mxu0 %v3284
    %3546 = vmatpush1.msra.mxu0 %v3283
    %3547 = vmatprep.subr.mxu0 %v3290
    %3548 = vmatpush1.msra.mxu0 %v3289
    %3549 = vmatprep.subr.mxu0 %v3296
    %3550 = vmatpush1.msra.mxu0 %v3295
    %3551 = vmatprep.subr.mxu0 %v3302
    %3552 = vmatpush1.msra.mxu0 %v3301
    %3553 = vmatprep.subr.mxu0 %v3308
    %3554 = vmatpush1.msra.mxu0 %v3307
    %3555 = vmatprep.subr.mxu0 %v3314
    %3556 = vmatpush1.msra.mxu0 %v3313
    %3557 = vmatprep.mubr.f32.mxu0 %v2742
    %3558 = vmatmul.mubr.f32.gmra.mrb[0].mxu0 %v2741
    %v3559 = vpop.f32.mrb[0].mxu0
    %v3560 = vadd.f32 %v3489, %v3559
    %v3561 = vpop.f32.mrb[0].mxu0
    %v3562 = vadd.f32 %v3491, %v3561
    %3563 = vdwg.mxu0
    %3564 = vmatprep.subr.mxu0 %v2746
    %3565 = vmatpush1.msra.mxu0 %v2745
    %3566 = vmatprep.subr.mxu0 %v2752
    %3567 = vmatpush1.msra.mxu0 %v2751
    %3568 = vmatprep.subr.mxu0 %v2758
    %3569 = vmatpush1.msra.mxu0 %v2757
    %3570 = vmatprep.subr.mxu0 %v2764
    %3571 = vmatpush1.msra.mxu0 %v2763
    %3572 = vmatprep.subr.mxu0 %v2770
    %3573 = vmatpush1.msra.mxu0 %v2769
    %3574 = vmatprep.subr.mxu0 %v2776
    %3575 = vmatpush1.msra.mxu0 %v2775
    %3576 = vmatprep.subr.mxu0 %v2782
    %3577 = vmatpush1.msra.mxu0 %v2781
    %3578 = vmatprep.subr.mxu0 %v2788
    %3579 = vmatpush1.msra.mxu0 %v2787
    %3580 = vmatprep.subr.mxu0 %v2794
    %3581 = vmatpush1.msra.mxu0 %v2793
    %3582 = vmatprep.subr.mxu0 %v2800
    %3583 = vmatpush1.msra.mxu0 %v2799
    %3584 = vmatprep.subr.mxu0 %v2806
    %3585 = vmatpush1.msra.mxu0 %v2805
    %3586 = vmatprep.subr.mxu0 %v2812
    %3587 = vmatpush1.msra.mxu0 %v2811
    %3588 = vmatprep.subr.mxu0 %v2818
    %3589 = vmatpush1.msra.mxu0 %v2817
    %3590 = vmatprep.subr.mxu0 %v2824
    %3591 = vmatpush1.msra.mxu0 %v2823
    %3592 = vmatprep.subr.mxu0 %v2830
    %3593 = vmatpush1.msra.mxu0 %v2829
    %3594 = vmatprep.subr.mxu0 %v2836
    %3595 = vmatpush1.msra.mxu0 %v2835
    %3596 = vmatprep.subr.mxu0 %v2842
    %3597 = vmatpush1.msra.mxu0 %v2841
    %3598 = vmatprep.subr.mxu0 %v2848
    %3599 = vmatpush1.msra.mxu0 %v2847
    %3600 = vmatprep.subr.mxu0 %v2854
    %3601 = vmatpush1.msra.mxu0 %v2853
    %3602 = vmatprep.subr.mxu0 %v2860
    %3603 = vmatpush1.msra.mxu0 %v2859
    %3604 = vmatprep.subr.mxu0 %v2866
    %3605 = vmatpush1.msra.mxu0 %v2865
    %3606 = vmatprep.subr.mxu0 %v2872
    %3607 = vmatpush1.msra.mxu0 %v2871
    %3608 = vmatprep.subr.mxu0 %v2878
    %3609 = vmatpush1.msra.mxu0 %v2877
    %3610 = vmatprep.subr.mxu0 %v2884
    %3611 = vmatpush1.msra.mxu0 %v2883
    %3612 = vmatprep.subr.mxu0 %v2890
    %3613 = vmatpush1.msra.mxu0 %v2889
    %3614 = vmatprep.subr.mxu0 %v2896
    %3615 = vmatpush1.msra.mxu0 %v2895
    %3616 = vmatprep.subr.mxu0 %v2902
    %3617 = vmatpush1.msra.mxu0 %v2901
    %3618 = vmatprep.subr.mxu0 %v2908
    %3619 = vmatpush1.msra.mxu0 %v2907
    %3620 = vmatprep.subr.mxu0 %v2914
    %3621 = vmatpush1.msra.mxu0 %v2913
    %3622 = vmatprep.subr.mxu0 %v2920
    %3623 = vmatpush1.msra.mxu0 %v2919
    %3624 = vmatprep.subr.mxu0 %v2926
    %3625 = vmatpush1.msra.mxu0 %v2925
    %3626 = vmatprep.subr.mxu0 %v2932
    %3627 = vmatpush1.msra.mxu0 %v2931
    %3628 = vmatprep.mubr.f32.mxu0 %v2738
    %3629 = vmatmul.mubr.f32.gmra.mrb[0].mxu0 %v2737
    %v3630 = vpop.f32.mrb[0].mxu0
    %v3631 = vadd.f32 %v3332, %v3630
    %v3632 = vpop.f32.mrb[0].mxu0
    %v3633 = vadd.f32 %v3336, %v3632
    %3634 = vdwg.mxu0
    %3635 = vmatprep.subr.mxu0 %v2938
    %3636 = vmatpush1.msra.mxu0 %v2937
    %3637 = vmatprep.subr.mxu0 %v2944
    %3638 = vmatpush1.msra.mxu0 %v2943
    %3639 = vmatprep.subr.mxu0 %v2950
    %3640 = vmatpush1.msra.mxu0 %v2949
    %3641 = vmatprep.subr.mxu0 %v2956
    %3642 = vmatpush1.msra.mxu0 %v2955
    %3643 = vmatprep.subr.mxu0 %v2962
    %3644 = vmatpush1.msra.mxu0 %v2961
    %3645 = vmatprep.subr.mxu0 %v2968
    %3646 = vmatpush1.msra.mxu0 %v2967
    %3647 = vmatprep.subr.mxu0 %v2974
    %3648 = vmatpush1.msra.mxu0 %v2973
    %3649 = vmatprep.subr.mxu0 %v2980
    %3650 = vmatpush1.msra.mxu0 %v2979
    %3651 = vmatprep.subr.mxu0 %v2986
    %3652 = vmatpush1.msra.mxu0 %v2985
    %3653 = vmatprep.subr.mxu0 %v2992
    %3654 = vmatpush1.msra.mxu0 %v2991
    %3655 = vmatprep.subr.mxu0 %v2998
    %3656 = vmatpush1.msra.mxu0 %v2997
    %3657 = vmatprep.subr.mxu0 %v3004
    %3658 = vmatpush1.msra.mxu0 %v3003
    %3659 = vmatprep.subr.mxu0 %v3010
    %3660 = vmatpush1.msra.mxu0 %v3009
    %3661 = vmatprep.subr.mxu0 %v3016
    %3662 = vmatpush1.msra.mxu0 %v3015
    %3663 = vmatprep.subr.mxu0 %v3022
    %3664 = vmatpush1.msra.mxu0 %v3021
    %3665 = vmatprep.subr.mxu0 %v3028
    %3666 = vmatpush1.msra.mxu0 %v3027
    %3667 = vmatprep.subr.mxu0 %v3034
    %3668 = vmatpush1.msra.mxu0 %v3033
    %3669 = vmatprep.subr.mxu0 %v3040
    %3670 = vmatpush1.msra.mxu0 %v3039
    %3671 = vmatprep.subr.mxu0 %v3046
    %3672 = vmatpush1.msra.mxu0 %v3045
    %3673 = vmatprep.subr.mxu0 %v3052
    %3674 = vmatpush1.msra.mxu0 %v3051
    %3675 = vmatprep.subr.mxu0 %v3058
    %3676 = vmatpush1.msra.mxu0 %v3057
    %3677 = vmatprep.subr.mxu0 %v3064
    %3678 = vmatpush1.msra.mxu0 %v3063
    %3679 = vmatprep.subr.mxu0 %v3070
    %3680 = vmatpush1.msra.mxu0 %v3069
    %3681 = vmatprep.subr.mxu0 %v3076
    %3682 = vmatpush1.msra.mxu0 %v3075
    %3683 = vmatprep.subr.mxu0 %v3082
    %3684 = vmatpush1.msra.mxu0 %v3081
    %3685 = vmatprep.subr.mxu0 %v3088
    %3686 = vmatpush1.msra.mxu0 %v3087
    %3687 = vmatprep.subr.mxu0 %v3094
    %3688 = vmatpush1.msra.mxu0 %v3093
    %3689 = vmatprep.subr.mxu0 %v3100
    %3690 = vmatpush1.msra.mxu0 %v3099
    %3691 = vmatprep.subr.mxu0 %v3106
    %3692 = vmatpush1.msra.mxu0 %v3105
    %3693 = vmatprep.subr.mxu0 %v3112
    %3694 = vmatpush1.msra.mxu0 %v3111
    %3695 = vmatprep.subr.mxu0 %v3118
    %3696 = vmatpush1.msra.mxu0 %v3117
    %3697 = vmatprep.subr.mxu0 %v3124
    %3698 = vmatpush1.msra.mxu0 %v3123
    %3699 = vmatprep.mubr.f32.mxu0 %v2740
    %3700 = vmatmul.mubr.f32.gmra.mrb[0].mxu0 %v2739
    %v3701 = vpop.f32.mrb[0].mxu0
    %v3702 = vadd.f32 %v3631, %v3701
    %v3703 = vpop.f32.mrb[0].mxu0
    %v3704 = vadd.f32 %v3633, %v3703
    %3705 = vdwg.mxu0
    %3706 = vmatprep.subr.mxu0 %v3130
    %3707 = vmatpush1.msra.mxu0 %v3129
    %3708 = vmatprep.subr.mxu0 %v3136
    %3709 = vmatpush1.msra.mxu0 %v3135
    %3710 = vmatprep.subr.mxu0 %v3142
    %3711 = vmatpush1.msra.mxu0 %v3141
    %3712 = vmatprep.subr.mxu0 %v3148
    %3713 = vmatpush1.msra.mxu0 %v3147
    %3714 = vmatprep.subr.mxu0 %v3154
    %3715 = vmatpush1.msra.mxu0 %v3153
    %3716 = vmatprep.subr.mxu0 %v3160
    %3717 = vmatpush1.msra.mxu0 %v3159
    %3718 = vmatprep.subr.mxu0 %v3166
    %3719 = vmatpush1.msra.mxu0 %v3165
    %3720 = vmatprep.subr.mxu0 %v3172
    %3721 = vmatpush1.msra.mxu0 %v3171
    %3722 = vmatprep.subr.mxu0 %v3178
    %3723 = vmatpush1.msra.mxu0 %v3177
    %3724 = vmatprep.subr.mxu0 %v3184
    %3725 = vmatpush1.msra.mxu0 %v3183
    %3726 = vmatprep.subr.mxu0 %v3190
    %3727 = vmatpush1.msra.mxu0 %v3189
    %3728 = vmatprep.subr.mxu0 %v3196
    %3729 = vmatpush1.msra.mxu0 %v3195
    %3730 = vmatprep.subr.mxu0 %v3202
    %3731 = vmatpush1.msra.mxu0 %v3201
    %3732 = vmatprep.subr.mxu0 %v3208
    %3733 = vmatpush1.msra.mxu0 %v3207
    %3734 = vmatprep.subr.mxu0 %v3214
    %3735 = vmatpush1.msra.mxu0 %v3213
    %3736 = vmatprep.subr.mxu0 %v3220
    %3737 = vmatpush1.msra.mxu0 %v3219
    %3738 = vmatprep.subr.mxu0 %v3226
    %3739 = vmatpush1.msra.mxu0 %v3225
    %3740 = vmatprep.subr.mxu0 %v3232
    %3741 = vmatpush1.msra.mxu0 %v3231
    %3742 = vmatprep.subr.mxu0 %v3238
    %3743 = vmatpush1.msra.mxu0 %v3237
    %3744 = vmatprep.subr.mxu0 %v3244
    %3745 = vmatpush1.msra.mxu0 %v3243
    %3746 = vmatprep.subr.mxu0 %v3250
    %3747 = vmatpush1.msra.mxu0 %v3249
    %3748 = vmatprep.subr.mxu0 %v3256
    %3749 = vmatpush1.msra.mxu0 %v3255
    %3750 = vmatprep.subr.mxu0 %v3262
    %3751 = vmatpush1.msra.mxu0 %v3261
    %3752 = vmatprep.subr.mxu0 %v3268
    %3753 = vmatpush1.msra.mxu0 %v3267
    %3754 = vmatprep.subr.mxu0 %v3274
    %3755 = vmatpush1.msra.mxu0 %v3273
    %3756 = vmatprep.subr.mxu0 %v3280
    %3757 = vmatpush1.msra.mxu0 %v3279
    %3758 = vmatprep.subr.mxu0 %v3286
    %3759 = vmatpush1.msra.mxu0 %v3285
    %3760 = vmatprep.subr.mxu0 %v3292
    %3761 = vmatpush1.msra.mxu0 %v3291
    %3762 = vmatprep.subr.mxu0 %v3298
    %3763 = vmatpush1.msra.mxu0 %v3297
    %3764 = vmatprep.subr.mxu0 %v3304
    %3765 = vmatpush1.msra.mxu0 %v3303
    %3766 = vmatprep.subr.mxu0 %v3310
    %3767 = vmatpush1.msra.mxu0 %v3309
    %3768 = vmatprep.subr.mxu0 %v3316
    %3769 = vmatpush1.msra.mxu0 %v3315
    %3770 = vmatprep.mubr.f32.mxu0 %v2742
    %3771 = vmatmul.mubr.f32.gmra.mrb[0].mxu0 %v2741
    %v3772 = vpop.f32.mrb[0].mxu0
    %v3773 = vadd.f32 %v3702, %v3772
    %v3774 = vpop.f32.mrb[0].mxu0
    %v3775 = vadd.f32 %v3704, %v3774
    %3776 = vdwg.mxu0
    %3777 = vmatprep.subr.mxu0 %v2748
    %3778 = vmatpush1.msra.mxu0 %v2747
    %3779 = vmatprep.subr.mxu0 %v2754
    %3780 = vmatpush1.msra.mxu0 %v2753
    %3781 = vmatprep.subr.mxu0 %v2760
    %3782 = vmatpush1.msra.mxu0 %v2759
    %3783 = vmatprep.subr.mxu0 %v2766
    %3784 = vmatpush1.msra.mxu0 %v2765
    %3785 = vmatprep.subr.mxu0 %v2772
    %3786 = vmatpush1.msra.mxu0 %v2771
    %3787 = vmatprep.subr.mxu0 %v2778
    %3788 = vmatpush1.msra.mxu0 %v2777
    %3789 = vmatprep.subr.mxu0 %v2784
    %3790 = vmatpush1.msra.mxu0 %v2783
    %3791 = vmatprep.subr.mxu0 %v2790
    %3792 = vmatpush1.msra.mxu0 %v2789
    %3793 = vmatprep.subr.mxu0 %v2796
    %3794 = vmatpush1.msra.mxu0 %v2795
    %3795 = vmatprep.subr.mxu0 %v2802
    %3796 = vmatpush1.msra.mxu0 %v2801
    %3797 = vmatprep.subr.mxu0 %v2808
    %3798 = vmatpush1.msra.mxu0 %v2807
    %3799 = vmatprep.subr.mxu0 %v2814
    %3800 = vmatpush1.msra.mxu0 %v2813
    %3801 = vmatprep.subr.mxu0 %v2820
    %3802 = vmatpush1.msra.mxu0 %v2819
    %3803 = vmatprep.subr.mxu0 %v2826
    %3804 = vmatpush1.msra.mxu0 %v2825
    %3805 = vmatprep.subr.mxu0 %v2832
    %3806 = vmatpush1.msra.mxu0 %v2831
    %3807 = vmatprep.subr.mxu0 %v2838
    %3808 = vmatpush1.msra.mxu0 %v2837
    %3809 = vmatprep.subr.mxu0 %v2844
    %3810 = vmatpush1.msra.mxu0 %v2843
    %3811 = vmatprep.subr.mxu0 %v2850
    %3812 = vmatpush1.msra.mxu0 %v2849
    %3813 = vmatprep.subr.mxu0 %v2856
    %3814 = vmatpush1.msra.mxu0 %v2855
    %3815 = vmatprep.subr.mxu0 %v2862
    %3816 = vmatpush1.msra.mxu0 %v2861
    %3817 = vmatprep.subr.mxu0 %v2868
    %3818 = vmatpush1.msra.mxu0 %v2867
    %3819 = vmatprep.subr.mxu0 %v2874
    %3820 = vmatpush1.msra.mxu0 %v2873
    %3821 = vmatprep.subr.mxu0 %v2880
    %3822 = vmatpush1.msra.mxu0 %v2879
    %3823 = vmatprep.subr.mxu0 %v2886
    %3824 = vmatpush1.msra.mxu0 %v2885
    %3825 = vmatprep.subr.mxu0 %v2892
    %3826 = vmatpush1.msra.mxu0 %v2891
    %3827 = vmatprep.subr.mxu0 %v2898
    %3828 = vmatpush1.msra.mxu0 %v2897
    %3829 = vmatprep.subr.mxu0 %v2904
    %3830 = vmatpush1.msra.mxu0 %v2903
    %3831 = vmatprep.subr.mxu0 %v2910
    %3832 = vmatpush1.msra.mxu0 %v2909
    %3833 = vmatprep.subr.mxu0 %v2916
    %3834 = vmatpush1.msra.mxu0 %v2915
    %3835 = vmatprep.subr.mxu0 %v2922
    %3836 = vmatpush1.msra.mxu0 %v2921
    %3837 = vmatprep.subr.mxu0 %v2928
    %3838 = vmatpush1.msra.mxu0 %v2927
    %3839 = vmatprep.subr.mxu0 %v2934
    %3840 = vmatpush1.msra.mxu0 %v2933
    %3841 = vmatprep.mubr.f32.mxu0 %v2738
    %3842 = vmatmul.mubr.f32.gmra.mrb[0].mxu0 %v2737
    %v3843 = vpop.f32.mrb[0].mxu0
    %v3844 = vadd.f32 %v3340, %v3843
    %v3845 = vpop.f32.mrb[0].mxu0
    %v3846 = vadd.f32 %v3344, %v3845
    %3847 = vdwg.mxu0
    %3848 = vmatprep.subr.mxu0 %v2940
    %3849 = vmatpush1.msra.mxu0 %v2939
    %3850 = vmatprep.subr.mxu0 %v2946
    %3851 = vmatpush1.msra.mxu0 %v2945
    %3852 = vmatprep.subr.mxu0 %v2952
    %3853 = vmatpush1.msra.mxu0 %v2951
    %3854 = vmatprep.subr.mxu0 %v2958
    %3855 = vmatpush1.msra.mxu0 %v2957
    %3856 = vmatprep.subr.mxu0 %v2964
    %3857 = vmatpush1.msra.mxu0 %v2963
    %3858 = vmatprep.subr.mxu0 %v2970
    %3859 = vmatpush1.msra.mxu0 %v2969
    %3860 = vmatprep.subr.mxu0 %v2976
    %3861 = vmatpush1.msra.mxu0 %v2975
    %3862 = vmatprep.subr.mxu0 %v2982
    %3863 = vmatpush1.msra.mxu0 %v2981
    %3864 = vmatprep.subr.mxu0 %v2988
    %3865 = vmatpush1.msra.mxu0 %v2987
    %3866 = vmatprep.subr.mxu0 %v2994
    %3867 = vmatpush1.msra.mxu0 %v2993
    %3868 = vmatprep.subr.mxu0 %v3000
    %3869 = vmatpush1.msra.mxu0 %v2999
    %3870 = vmatprep.subr.mxu0 %v3006
    %3871 = vmatpush1.msra.mxu0 %v3005
    %3872 = vmatprep.subr.mxu0 %v3012
    %3873 = vmatpush1.msra.mxu0 %v3011
    %3874 = vmatprep.subr.mxu0 %v3018
    %3875 = vmatpush1.msra.mxu0 %v3017
    %3876 = vmatprep.subr.mxu0 %v3024
    %3877 = vmatpush1.msra.mxu0 %v3023
    %3878 = vmatprep.subr.mxu0 %v3030
    %3879 = vmatpush1.msra.mxu0 %v3029
    %3880 = vmatprep.subr.mxu0 %v3036
    %3881 = vmatpush1.msra.mxu0 %v3035
    %3882 = vmatprep.subr.mxu0 %v3042
    %3883 = vmatpush1.msra.mxu0 %v3041
    %3884 = vmatprep.subr.mxu0 %v3048
    %3885 = vmatpush1.msra.mxu0 %v3047
    %3886 = vmatprep.subr.mxu0 %v3054
    %3887 = vmatpush1.msra.mxu0 %v3053
    %3888 = vmatprep.subr.mxu0 %v3060
    %3889 = vmatpush1.msra.mxu0 %v3059
    %3890 = vmatprep.subr.mxu0 %v3066
    %3891 = vmatpush1.msra.mxu0 %v3065
    %3892 = vmatprep.subr.mxu0 %v3072
    %3893 = vmatpush1.msra.mxu0 %v3071
    %3894 = vmatprep.subr.mxu0 %v3078
    %3895 = vmatpush1.msra.mxu0 %v3077
    %3896 = vmatprep.subr.mxu0 %v3084
    %3897 = vmatpush1.msra.mxu0 %v3083
    %3898 = vmatprep.subr.mxu0 %v3090
    %3899 = vmatpush1.msra.mxu0 %v3089
    %3900 = vmatprep.subr.mxu0 %v3096
    %3901 = vmatpush1.msra.mxu0 %v3095
    %3902 = vmatprep.subr.mxu0 %v3102
    %3903 = vmatpush1.msra.mxu0 %v3101
    %3904 = vmatprep.subr.mxu0 %v3108
    %3905 = vmatpush1.msra.mxu0 %v3107
    %3906 = vmatprep.subr.mxu0 %v3114
    %3907 = vmatpush1.msra.mxu0 %v3113
    %3908 = vmatprep.subr.mxu0 %v3120
    %3909 = vmatpush1.msra.mxu0 %v3119
    %3910 = vmatprep.subr.mxu0 %v3126
    %3911 = vmatpush1.msra.mxu0 %v3125
    %3912 = vmatprep.mubr.f32.mxu0 %v2740
    %3913 = vmatmul.mubr.f32.gmra.mrb[0].mxu0 %v2739
    %v3914 = vpop.f32.mrb[0].mxu0
    %v3915 = vadd.f32 %v3844, %v3914
    %v3916 = vpop.f32.mrb[0].mxu0
    %v3917 = vadd.f32 %v3846, %v3916
    %3918 = vdwg.mxu0
    %3919 = vmatprep.subr.mxu0 %v3132
    %3920 = vmatpush1.msra.mxu0 %v3131
    %3921 = vmatprep.subr.mxu0 %v3138
    %3922 = vmatpush1.msra.mxu0 %v3137
    %3923 = vmatprep.subr.mxu0 %v3144
    %3924 = vmatpush1.msra.mxu0 %v3143
    %3925 = vmatprep.subr.mxu0 %v3150
    %3926 = vmatpush1.msra.mxu0 %v3149
    %3927 = vmatprep.subr.mxu0 %v3156
    %3928 = vmatpush1.msra.mxu0 %v3155
    %3929 = vmatprep.subr.mxu0 %v3162
    %3930 = vmatpush1.msra.mxu0 %v3161
    %3931 = vmatprep.subr.mxu0 %v3168
    %3932 = vmatpush1.msra.mxu0 %v3167
    %3933 = vmatprep.subr.mxu0 %v3174
    %3934 = vmatpush1.msra.mxu0 %v3173
    %3935 = vmatprep.subr.mxu0 %v3180
    %3936 = vmatpush1.msra.mxu0 %v3179
    %3937 = vmatprep.subr.mxu0 %v3186
    %3938 = vmatpush1.msra.mxu0 %v3185
    %3939 = vmatprep.subr.mxu0 %v3192
    %3940 = vmatpush1.msra.mxu0 %v3191
    %3941 = vmatprep.subr.mxu0 %v3198
    %3942 = vmatpush1.msra.mxu0 %v3197
    %3943 = vmatprep.subr.mxu0 %v3204
    %3944 = vmatpush1.msra.mxu0 %v3203
    %3945 = vmatprep.subr.mxu0 %v3210
    %3946 = vmatpush1.msra.mxu0 %v3209
    %3947 = vmatprep.subr.mxu0 %v3216
    %3948 = vmatpush1.msra.mxu0 %v3215
    %3949 = vmatprep.subr.mxu0 %v3222
    %3950 = vmatpush1.msra.mxu0 %v3221
    %3951 = vmatprep.subr.mxu0 %v3228
    %3952 = vmatpush1.msra.mxu0 %v3227
    %3953 = vmatprep.subr.mxu0 %v3234
    %3954 = vmatpush1.msra.mxu0 %v3233
    %3955 = vmatprep.subr.mxu0 %v3240
    %3956 = vmatpush1.msra.mxu0 %v3239
    %3957 = vmatprep.subr.mxu0 %v3246
    %3958 = vmatpush1.msra.mxu0 %v3245
    %3959 = vmatprep.subr.mxu0 %v3252
    %3960 = vmatpush1.msra.mxu0 %v3251
    %3961 = vmatprep.subr.mxu0 %v3258
    %3962 = vmatpush1.msra.mxu0 %v3257
    %3963 = vmatprep.subr.mxu0 %v3264
    %3964 = vmatpush1.msra.mxu0 %v3263
    %3965 = vmatprep.subr.mxu0 %v3270
    %3966 = vmatpush1.msra.mxu0 %v3269
    %3967 = vmatprep.subr.mxu0 %v3276
    %3968 = vmatpush1.msra.mxu0 %v3275
    %3969 = vmatprep.subr.mxu0 %v3282
    %3970 = vmatpush1.msra.mxu0 %v3281
    %3971 = vmatprep.subr.mxu0 %v3288
    %3972 = vmatpush1.msra.mxu0 %v3287
    %3973 = vmatprep.subr.mxu0 %v3294
    %3974 = vmatpush1.msra.mxu0 %v3293
    %3975 = vmatprep.subr.mxu0 %v3300
    %3976 = vmatpush1.msra.mxu0 %v3299
    %3977 = vmatprep.subr.mxu0 %v3306
    %3978 = vmatpush1.msra.mxu0 %v3305
    %3979 = vmatprep.subr.mxu0 %v3312
    %3980 = vmatpush1.msra.mxu0 %v3311
    %3981 = vmatprep.subr.mxu0 %v3318
    %3982 = vmatpush1.msra.mxu0 %v3317
    %3983 = vmatprep.mubr.f32.mxu0 %v2742
    %3984 = vmatmul.mubr.f32.gmra.mrb[0].mxu0 %v2741
    %v3985 = vpop.f32.mrb[0].mxu0
    %v3986 = vadd.f32 %v3915, %v3985
    %v3987 = vpop.f32.mrb[0].mxu0
    %v3988 = vadd.f32 %v3917, %v3987
    %3989 = vdwg.mxu0
    %vm3990 = vcmp.gt.f32.partialorder %v3560, 0.0
    %vm3991 = vcmp.gt.f32.partialorder %v3562, 0.0
    %vm3992 = vcmp.gt.f32.partialorder %v3773, 0.0
    %vm3993 = vcmp.gt.f32.partialorder %v3775, 0.0
    %vm3994 = vcmp.gt.f32.partialorder %v3986, 0.0
    %vm3995 = vcmp.gt.f32.partialorder %v3988, 0.0
    %v3996 = vsel %vm3990, 1.0, -1.0
    %v3997 = vsel %vm3991, 1.0, -1.0
    %v3998 = vsel %vm3992, 1.0, -1.0
    %v3999 = vsel %vm3993, 1.0, -1.0
    %v4000 = vsel %vm3994, 1.0, -1.0
    %v4001 = vsel %vm3995, 1.0, -1.0
    %v4002 = vld [vmem:[#allocation14] sm:$0xff]
    %v4003 = vld [vmem:[#allocation14 + $0x8] sm:$0xff]
    %v4004 = vld [vmem:[#allocation14 + $0x10] sm:$0xff]
    %v4005 = vld [vmem:[#allocation14 + $0x18] sm:$0xff]
    %v4006 = vld [vmem:[#allocation14 + $0x20] sm:$0xff]
    %v4007 = vld [vmem:[#allocation14 + $0x28] sm:$0xff]
    %v4008 = vld [vmem:[#allocation14 + $0x30] sm:$0xff]
    %v4009 = vld [vmem:[#allocation14 + $0x38] sm:$0xff]
    %v4010 = vld [vmem:[#allocation14 + $0x40] sm:$0xff]
    %v4011 = vld [vmem:[#allocation14 + $0x48] sm:$0xff]
    %v4012 = vld [vmem:[#allocation14 + $0x50] sm:$0xff]
    %v4013 = vld [vmem:[#allocation14 + $0x58] sm:$0xff]
    %v4014 = vld [vmem:[#allocation14 + $0x60] sm:$0xff]
    %v4015 = vld [vmem:[#allocation14 + $0x68] sm:$0xff]
    %v4016 = vld [vmem:[#allocation14 + $0x70] sm:$0xff]
    %v4017 = vld [vmem:[#allocation14 + $0x78] sm:$0xff]
    %v4018 = vld [vmem:[#allocation14 + $0x80] sm:$0xff]
    %v4019 = vld [vmem:[#allocation14 + $0x88] sm:$0xff]
    %v4020 = vld [vmem:[#allocation14 + $0x90] sm:$0xff]
    %v4021 = vld [vmem:[#allocation14 + $0x98] sm:$0xff]
    %v4022 = vld [vmem:[#allocation14 + $0xa0] sm:$0xff]
    %v4023 = vld [vmem:[#allocation14 + $0xa8] sm:$0xff]
    %v4024 = vld [vmem:[#allocation14 + $0xb0] sm:$0xff]
    %v4025 = vld [vmem:[#allocation14 + $0xb8] sm:$0xff]
    %v4026 = vld [vmem:[#allocation14 + $0xc0] sm:$0xff]
    %v4027 = vld [vmem:[#allocation14 + $0xc8] sm:$0xff]
    %v4028 = vld [vmem:[#allocation14 + $0xd0] sm:$0xff]
    %v4029 = vld [vmem:[#allocation14 + $0xd8] sm:$0xff]
    %v4030 = vld [vmem:[#allocation14 + $0xe0] sm:$0xff]
    %v4031 = vld [vmem:[#allocation14 + $0xe8] sm:$0xff]
    %v4032 = vld [vmem:[#allocation14 + $0xf0] sm:$0xff]
    %v4033 = vld [vmem:[#allocation14 + $0xf8] sm:$0xff]
    %v4034 = vld [vmem:[#allocation14 + $0x100] sm:$0xff]
    %v4035 = vld [vmem:[#allocation14 + $0x108] sm:$0xff]
    %v4036 = vld [vmem:[#allocation14 + $0x110] sm:$0xff]
    %v4037 = vld [vmem:[#allocation14 + $0x118] sm:$0xff]
    %v4038 = vld [vmem:[#allocation14 + $0x120] sm:$0xff]
    %v4039 = vld [vmem:[#allocation14 + $0x128] sm:$0xff]
    %v4040 = vld [vmem:[#allocation14 + $0x130] sm:$0xff]
    %v4041 = vld [vmem:[#allocation14 + $0x138] sm:$0xff]
    %v4042 = vld [vmem:[#allocation14 + $0x140] sm:$0xff]
    %v4043 = vld [vmem:[#allocation14 + $0x148] sm:$0xff]
    %v4044 = vld [vmem:[#allocation14 + $0x150] sm:$0xff]
    %v4045 = vld [vmem:[#allocation14 + $0x158] sm:$0xff]
    %v4046 = vld [vmem:[#allocation14 + $0x160] sm:$0xff]
    %v4047 = vld [vmem:[#allocation14 + $0x168] sm:$0xff]
    %v4048 = vld [vmem:[#allocation14 + $0x170] sm:$0xff]
    %v4049 = vld [vmem:[#allocation14 + $0x178] sm:$0xff]
    %v4050 = vld [vmem:[#allocation14 + $0x180] sm:$0xff]
    %v4051 = vld [vmem:[#allocation14 + $0x188] sm:$0xff]
    %v4052 = vld [vmem:[#allocation14 + $0x190] sm:$0xff]
    %v4053 = vld [vmem:[#allocation14 + $0x198] sm:$0xff]
    %v4054 = vld [vmem:[#allocation14 + $0x1a0] sm:$0xff]
    %v4055 = vld [vmem:[#allocation14 + $0x1a8] sm:$0xff]
    %v4056 = vld [vmem:[#allocation14 + $0x1b0] sm:$0xff]
    %v4057 = vld [vmem:[#allocation14 + $0x1b8] sm:$0xff]
    %v4058 = vld [vmem:[#allocation14 + $0x1c0] sm:$0xff]
    %v4059 = vld [vmem:[#allocation14 + $0x1c8] sm:$0xff]
    %v4060 = vld [vmem:[#allocation14 + $0x1d0] sm:$0xff]
    %v4061 = vld [vmem:[#allocation14 + $0x1d8] sm:$0xff]
    %v4062 = vld [vmem:[#allocation14 + $0x1e0] sm:$0xff]
    %v4063 = vld [vmem:[#allocation14 + $0x1e8] sm:$0xff]
    %v4064 = vld [vmem:[#allocation14 + $0x1f0] sm:$0xff]
    %v4065 = vld [vmem:[#allocation14 + $0x1f8] sm:$0xff]
    %v4066 = vld [vmem:[#allocation14 + $0x200] sm:$0xff]
    %v4067 = vld [vmem:[#allocation14 + $0x208] sm:$0xff]
    %v4068 = vld [vmem:[#allocation14 + $0x210] sm:$0xff]
    %v4069 = vld [vmem:[#allocation14 + $0x218] sm:$0xff]
    %v4070 = vld [vmem:[#allocation14 + $0x220] sm:$0xff]
    %v4071 = vld [vmem:[#allocation14 + $0x228] sm:$0xff]
    %v4072 = vld [vmem:[#allocation14 + $0x230] sm:$0xff]
    %v4073 = vld [vmem:[#allocation14 + $0x238] sm:$0xff]
    %v4074 = vld [vmem:[#allocation14 + $0x240] sm:$0xff]
    %v4075 = vld [vmem:[#allocation14 + $0x248] sm:$0xff]
    %v4076 = vld [vmem:[#allocation14 + $0x250] sm:$0xff]
    %v4077 = vld [vmem:[#allocation14 + $0x258] sm:$0xff]
    %v4078 = vld [vmem:[#allocation14 + $0x260] sm:$0xff]
    %v4079 = vld [vmem:[#allocation14 + $0x268] sm:$0xff]
    %v4080 = vld [vmem:[#allocation14 + $0x270] sm:$0xff]
    %v4081 = vld [vmem:[#allocation14 + $0x278] sm:$0xff]
    %v4082 = vld [vmem:[#allocation14 + $0x280] sm:$0xff]
    %v4083 = vld [vmem:[#allocation14 + $0x288] sm:$0xff]
    %v4084 = vld [vmem:[#allocation14 + $0x290] sm:$0xff]
    %v4085 = vld [vmem:[#allocation14 + $0x298] sm:$0xff]
    %v4086 = vld [vmem:[#allocation14 + $0x2a0] sm:$0xff]
    %v4087 = vld [vmem:[#allocation14 + $0x2a8] sm:$0xff]
    %v4088 = vld [vmem:[#allocation14 + $0x2b0] sm:$0xff]
    %v4089 = vld [vmem:[#allocation14 + $0x2b8] sm:$0xff]
    %v4090 = vld [vmem:[#allocation14 + $0x2c0] sm:$0xff]
    %v4091 = vld [vmem:[#allocation14 + $0x2c8] sm:$0xff]
    %v4092 = vld [vmem:[#allocation14 + $0x2d0] sm:$0xff]
    %v4093 = vld [vmem:[#allocation14 + $0x2d8] sm:$0xff]
    %v4094 = vld [vmem:[#allocation14 + $0x2e0] sm:$0xff]
    %v4095 = vld [vmem:[#allocation14 + $0x2e8] sm:$0xff]
    %v4096 = vld [vmem:[#allocation14 + $0x2f0] sm:$0xff]
    %v4097 = vld [vmem:[#allocation14 + $0x2f8] sm:$0xff]
    %v4098 = vld [vmem:[#allocation14 + $0x300] sm:$0xff]
    %v4099 = vld [vmem:[#allocation14 + $0x308] sm:$0xff]
    %v4100 = vld [vmem:[#allocation14 + $0x310] sm:$0xff]
    %v4101 = vld [vmem:[#allocation14 + $0x318] sm:$0xff]
    %v4102 = vld [vmem:[#allocation14 + $0x320] sm:$0xff]
    %v4103 = vld [vmem:[#allocation14 + $0x328] sm:$0xff]
    %v4104 = vld [vmem:[#allocation14 + $0x330] sm:$0xff]
    %v4105 = vld [vmem:[#allocation14 + $0x338] sm:$0xff]
    %v4106 = vld [vmem:[#allocation14 + $0x340] sm:$0xff]
    %v4107 = vld [vmem:[#allocation14 + $0x348] sm:$0xff]
    %v4108 = vld [vmem:[#allocation14 + $0x350] sm:$0xff]
    %v4109 = vld [vmem:[#allocation14 + $0x358] sm:$0xff]
    %v4110 = vld [vmem:[#allocation14 + $0x360] sm:$0xff]
    %v4111 = vld [vmem:[#allocation14 + $0x368] sm:$0xff]
    %v4112 = vld [vmem:[#allocation14 + $0x370] sm:$0xff]
    %v4113 = vld [vmem:[#allocation14 + $0x378] sm:$0xff]
    %v4114 = vld [vmem:[#allocation14 + $0x380] sm:$0xff]
    %v4115 = vld [vmem:[#allocation14 + $0x388] sm:$0xff]
    %v4116 = vld [vmem:[#allocation14 + $0x390] sm:$0xff]
    %v4117 = vld [vmem:[#allocation14 + $0x398] sm:$0xff]
    %v4118 = vld [vmem:[#allocation14 + $0x3a0] sm:$0xff]
    %v4119 = vld [vmem:[#allocation14 + $0x3a8] sm:$0xff]
    %v4120 = vld [vmem:[#allocation14 + $0x3b0] sm:$0xff]
    %v4121 = vld [vmem:[#allocation14 + $0x3b8] sm:$0xff]
    %v4122 = vld [vmem:[#allocation14 + $0x3c0] sm:$0xff]
    %v4123 = vld [vmem:[#allocation14 + $0x3c8] sm:$0xff]
    %v4124 = vld [vmem:[#allocation14 + $0x3d0] sm:$0xff]
    %v4125 = vld [vmem:[#allocation14 + $0x3d8] sm:$0xff]
    %v4126 = vld [vmem:[#allocation14 + $0x3e0] sm:$0xff]
    %v4127 = vld [vmem:[#allocation14 + $0x3e8] sm:$0xff]
    %v4128 = vld [vmem:[#allocation14 + $0x3f0] sm:$0xff]
    %v4129 = vld [vmem:[#allocation14 + $0x3f8] sm:$0xff]
    %v4130 = vld [vmem:[#allocation14 + $0x400] sm:$0xff]
    %v4131 = vld [vmem:[#allocation14 + $0x408] sm:$0xff]
    %v4132 = vld [vmem:[#allocation14 + $0x410] sm:$0xff]
    %v4133 = vld [vmem:[#allocation14 + $0x418] sm:$0xff]
    %v4134 = vld [vmem:[#allocation14 + $0x420] sm:$0xff]
    %v4135 = vld [vmem:[#allocation14 + $0x428] sm:$0xff]
    %v4136 = vld [vmem:[#allocation14 + $0x430] sm:$0xff]
    %v4137 = vld [vmem:[#allocation14 + $0x438] sm:$0xff]
    %v4138 = vld [vmem:[#allocation14 + $0x440] sm:$0xff]
    %v4139 = vld [vmem:[#allocation14 + $0x448] sm:$0xff]
    %v4140 = vld [vmem:[#allocation14 + $0x450] sm:$0xff]
    %v4141 = vld [vmem:[#allocation14 + $0x458] sm:$0xff]
    %v4142 = vld [vmem:[#allocation14 + $0x460] sm:$0xff]
    %v4143 = vld [vmem:[#allocation14 + $0x468] sm:$0xff]
    %v4144 = vld [vmem:[#allocation14 + $0x470] sm:$0xff]
    %v4145 = vld [vmem:[#allocation14 + $0x478] sm:$0xff]
    %v4146 = vld [vmem:[#allocation14 + $0x480] sm:$0xff]
    %v4147 = vld [vmem:[#allocation14 + $0x488] sm:$0xff]
    %v4148 = vld [vmem:[#allocation14 + $0x490] sm:$0xff]
    %v4149 = vld [vmem:[#allocation14 + $0x498] sm:$0xff]
    %v4150 = vld [vmem:[#allocation14 + $0x4a0] sm:$0xff]
    %v4151 = vld [vmem:[#allocation14 + $0x4a8] sm:$0xff]
    %v4152 = vld [vmem:[#allocation14 + $0x4b0] sm:$0xff]
    %v4153 = vld [vmem:[#allocation14 + $0x4b8] sm:$0xff]
    %v4154 = vld [vmem:[#allocation14 + $0x4c0] sm:$0xff]
    %v4155 = vld [vmem:[#allocation14 + $0x4c8] sm:$0xff]
    %v4156 = vld [vmem:[#allocation14 + $0x4d0] sm:$0xff]
    %v4157 = vld [vmem:[#allocation14 + $0x4d8] sm:$0xff]
    %v4158 = vld [vmem:[#allocation14 + $0x4e0] sm:$0xff]
    %v4159 = vld [vmem:[#allocation14 + $0x4e8] sm:$0xff]
    %v4160 = vld [vmem:[#allocation14 + $0x4f0] sm:$0xff]
    %v4161 = vld [vmem:[#allocation14 + $0x4f8] sm:$0xff]
    %v4162 = vld [vmem:[#allocation14 + $0x500] sm:$0xff]
    %v4163 = vld [vmem:[#allocation14 + $0x508] sm:$0xff]
    %v4164 = vld [vmem:[#allocation14 + $0x510] sm:$0xff]
    %v4165 = vld [vmem:[#allocation14 + $0x518] sm:$0xff]
    %v4166 = vld [vmem:[#allocation14 + $0x520] sm:$0xff]
    %v4167 = vld [vmem:[#allocation14 + $0x528] sm:$0xff]
    %v4168 = vld [vmem:[#allocation14 + $0x530] sm:$0xff]
    %v4169 = vld [vmem:[#allocation14 + $0x538] sm:$0xff]
    %v4170 = vld [vmem:[#allocation14 + $0x540] sm:$0xff]
    %v4171 = vld [vmem:[#allocation14 + $0x548] sm:$0xff]
    %v4172 = vld [vmem:[#allocation14 + $0x550] sm:$0xff]
    %v4173 = vld [vmem:[#allocation14 + $0x558] sm:$0xff]
    %v4174 = vld [vmem:[#allocation14 + $0x560] sm:$0xff]
    %v4175 = vld [vmem:[#allocation14 + $0x568] sm:$0xff]
    %v4176 = vld [vmem:[#allocation14 + $0x570] sm:$0xff]
    %v4177 = vld [vmem:[#allocation14 + $0x578] sm:$0xff]
    %v4178 = vld [vmem:[#allocation14 + $0x580] sm:$0xff]
    %v4179 = vld [vmem:[#allocation14 + $0x588] sm:$0xff]
    %v4180 = vld [vmem:[#allocation14 + $0x590] sm:$0xff]
    %v4181 = vld [vmem:[#allocation14 + $0x598] sm:$0xff]
    %v4182 = vld [vmem:[#allocation14 + $0x5a0] sm:$0xff]
    %v4183 = vld [vmem:[#allocation14 + $0x5a8] sm:$0xff]
    %v4184 = vld [vmem:[#allocation14 + $0x5b0] sm:$0xff]
    %v4185 = vld [vmem:[#allocation14 + $0x5b8] sm:$0xff]
    %v4186 = vld [vmem:[#allocation14 + $0x5c0] sm:$0xff]
    %v4187 = vld [vmem:[#allocation14 + $0x5c8] sm:$0xff]
    %v4188 = vld [vmem:[#allocation14 + $0x5d0] sm:$0xff]
    %v4189 = vld [vmem:[#allocation14 + $0x5d8] sm:$0xff]
    %v4190 = vld [vmem:[#allocation14 + $0x5e0] sm:$0xff]
    %v4191 = vld [vmem:[#allocation14 + $0x5e8] sm:$0xff]
    %v4192 = vld [vmem:[#allocation14 + $0x5f0] sm:$0xff]
    %v4193 = vld [vmem:[#allocation14 + $0x5f8] sm:$0xff]
    %v4194 = vld [vmem:[#allocation14 + $0x600] sm:$0xff]
    %v4195 = vld [vmem:[#allocation14 + $0x608] sm:$0xff]
    %v4196 = vld [vmem:[#allocation14 + $0x610] sm:$0xff]
    %v4197 = vld [vmem:[#allocation14 + $0x618] sm:$0xff]
    %v4198 = vld [vmem:[#allocation14 + $0x620] sm:$0xff]
    %v4199 = vld [vmem:[#allocation14 + $0x628] sm:$0xff]
    %v4200 = vld [vmem:[#allocation14 + $0x630] sm:$0xff]
    %v4201 = vld [vmem:[#allocation14 + $0x638] sm:$0xff]
    %v4202 = vld [vmem:[#allocation14 + $0x640] sm:$0xff]
    %v4203 = vld [vmem:[#allocation14 + $0x648] sm:$0xff]
    %v4204 = vld [vmem:[#allocation14 + $0x650] sm:$0xff]
    %v4205 = vld [vmem:[#allocation14 + $0x658] sm:$0xff]
    %v4206 = vld [vmem:[#allocation14 + $0x660] sm:$0xff]
    %v4207 = vld [vmem:[#allocation14 + $0x668] sm:$0xff]
    %v4208 = vld [vmem:[#allocation14 + $0x670] sm:$0xff]
    %v4209 = vld [vmem:[#allocation14 + $0x678] sm:$0xff]
    %v4210 = vld [vmem:[#allocation14 + $0x680] sm:$0xff]
    %v4211 = vld [vmem:[#allocation14 + $0x688] sm:$0xff]
    %v4212 = vld [vmem:[#allocation14 + $0x690] sm:$0xff]
    %v4213 = vld [vmem:[#allocation14 + $0x698] sm:$0xff]
    %v4214 = vld [vmem:[#allocation14 + $0x6a0] sm:$0xff]
    %v4215 = vld [vmem:[#allocation14 + $0x6a8] sm:$0xff]
    %v4216 = vld [vmem:[#allocation14 + $0x6b0] sm:$0xff]
    %v4217 = vld [vmem:[#allocation14 + $0x6b8] sm:$0xff]
    %v4218 = vld [vmem:[#allocation14 + $0x6c0] sm:$0xff]
    %v4219 = vld [vmem:[#allocation14 + $0x6c8] sm:$0xff]
    %v4220 = vld [vmem:[#allocation14 + $0x6d0] sm:$0xff]
    %v4221 = vld [vmem:[#allocation14 + $0x6d8] sm:$0xff]
    %v4222 = vld [vmem:[#allocation14 + $0x6e0] sm:$0xff]
    %v4223 = vld [vmem:[#allocation14 + $0x6e8] sm:$0xff]
    %v4224 = vld [vmem:[#allocation14 + $0x6f0] sm:$0xff]
    %v4225 = vld [vmem:[#allocation14 + $0x6f8] sm:$0xff]
    %v4226 = vld [vmem:[#allocation14 + $0x700] sm:$0xff]
    %v4227 = vld [vmem:[#allocation14 + $0x708] sm:$0xff]
    %v4228 = vld [vmem:[#allocation14 + $0x710] sm:$0xff]
    %v4229 = vld [vmem:[#allocation14 + $0x718] sm:$0xff]
    %v4230 = vld [vmem:[#allocation14 + $0x720] sm:$0xff]
    %v4231 = vld [vmem:[#allocation14 + $0x728] sm:$0xff]
    %v4232 = vld [vmem:[#allocation14 + $0x730] sm:$0xff]
    %v4233 = vld [vmem:[#allocation14 + $0x738] sm:$0xff]
    %v4234 = vld [vmem:[#allocation14 + $0x740] sm:$0xff]
    %v4235 = vld [vmem:[#allocation14 + $0x748] sm:$0xff]
    %v4236 = vld [vmem:[#allocation14 + $0x750] sm:$0xff]
    %v4237 = vld [vmem:[#allocation14 + $0x758] sm:$0xff]
    %v4238 = vld [vmem:[#allocation14 + $0x760] sm:$0xff]
    %v4239 = vld [vmem:[#allocation14 + $0x768] sm:$0xff]
    %v4240 = vld [vmem:[#allocation14 + $0x770] sm:$0xff]
    %v4241 = vld [vmem:[#allocation14 + $0x778] sm:$0xff]
    %v4242 = vld [vmem:[#allocation14 + $0x780] sm:$0xff]
    %v4243 = vld [vmem:[#allocation14 + $0x788] sm:$0xff]
    %v4244 = vld [vmem:[#allocation14 + $0x790] sm:$0xff]
    %v4245 = vld [vmem:[#allocation14 + $0x798] sm:$0xff]
    %v4246 = vld [vmem:[#allocation14 + $0x7a0] sm:$0xff]
    %v4247 = vld [vmem:[#allocation14 + $0x7a8] sm:$0xff]
    %v4248 = vld [vmem:[#allocation14 + $0x7b0] sm:$0xff]
    %v4249 = vld [vmem:[#allocation14 + $0x7b8] sm:$0xff]
    %v4250 = vld [vmem:[#allocation14 + $0x7c0] sm:$0xff]
    %v4251 = vld [vmem:[#allocation14 + $0x7c8] sm:$0xff]
    %v4252 = vld [vmem:[#allocation14 + $0x7d0] sm:$0xff]
    %v4253 = vld [vmem:[#allocation14 + $0x7d8] sm:$0xff]
    %v4254 = vld [vmem:[#allocation14 + $0x7e0] sm:$0xff]
    %v4255 = vld [vmem:[#allocation14 + $0x7e8] sm:$0xff]
    %v4256 = vld [vmem:[#allocation14 + $0x7f0] sm:$0xff]
    %v4257 = vld [vmem:[#allocation14 + $0x7f8] sm:$0xff]
    %v4258 = vld [vmem:[#allocation14 + $0x800] sm:$0xff]
    %v4259 = vld [vmem:[#allocation14 + $0x808] sm:$0xff]
    %v4260 = vld [vmem:[#allocation14 + $0x810] sm:$0xff]
    %v4261 = vld [vmem:[#allocation14 + $0x818] sm:$0xff]
    %v4262 = vld [vmem:[#allocation14 + $0x820] sm:$0xff]
    %v4263 = vld [vmem:[#allocation14 + $0x828] sm:$0xff]
    %v4264 = vld [vmem:[#allocation14 + $0x830] sm:$0xff]
    %v4265 = vld [vmem:[#allocation14 + $0x838] sm:$0xff]
    %v4266 = vld [vmem:[#allocation14 + $0x840] sm:$0xff]
    %v4267 = vld [vmem:[#allocation14 + $0x848] sm:$0xff]
    %v4268 = vld [vmem:[#allocation14 + $0x850] sm:$0xff]
    %v4269 = vld [vmem:[#allocation14 + $0x858] sm:$0xff]
    %v4270 = vld [vmem:[#allocation14 + $0x860] sm:$0xff]
    %v4271 = vld [vmem:[#allocation14 + $0x868] sm:$0xff]
    %v4272 = vld [vmem:[#allocation14 + $0x870] sm:$0xff]
    %v4273 = vld [vmem:[#allocation14 + $0x878] sm:$0xff]
    %v4274 = vld [vmem:[#allocation14 + $0x880] sm:$0xff]
    %v4275 = vld [vmem:[#allocation14 + $0x888] sm:$0xff]
    %v4276 = vld [vmem:[#allocation14 + $0x890] sm:$0xff]
    %v4277 = vld [vmem:[#allocation14 + $0x898] sm:$0xff]
    %v4278 = vld [vmem:[#allocation14 + $0x8a0] sm:$0xff]
    %v4279 = vld [vmem:[#allocation14 + $0x8a8] sm:$0xff]
    %v4280 = vld [vmem:[#allocation14 + $0x8b0] sm:$0xff]
    %v4281 = vld [vmem:[#allocation14 + $0x8b8] sm:$0xff]
    %v4282 = vld [vmem:[#allocation14 + $0x8c0] sm:$0xff]
    %v4283 = vld [vmem:[#allocation14 + $0x8c8] sm:$0xff]
    %v4284 = vld [vmem:[#allocation14 + $0x8d0] sm:$0xff]
    %v4285 = vld [vmem:[#allocation14 + $0x8d8] sm:$0xff]
    %v4286 = vld [vmem:[#allocation14 + $0x8e0] sm:$0xff]
    %v4287 = vld [vmem:[#allocation14 + $0x8e8] sm:$0xff]
    %v4288 = vld [vmem:[#allocation14 + $0x8f0] sm:$0xff]
    %v4289 = vld [vmem:[#allocation14 + $0x8f8] sm:$0xff]
    %v4290 = vld [vmem:[#allocation14 + $0x900] sm:$0xff]
    %v4291 = vld [vmem:[#allocation14 + $0x908] sm:$0xff]
    %v4292 = vld [vmem:[#allocation14 + $0x910] sm:$0xff]
    %v4293 = vld [vmem:[#allocation14 + $0x918] sm:$0xff]
    %v4294 = vld [vmem:[#allocation14 + $0x920] sm:$0xff]
    %v4295 = vld [vmem:[#allocation14 + $0x928] sm:$0xff]
    %v4296 = vld [vmem:[#allocation14 + $0x930] sm:$0xff]
    %v4297 = vld [vmem:[#allocation14 + $0x938] sm:$0xff]
    %v4298 = vld [vmem:[#allocation14 + $0x940] sm:$0xff]
    %v4299 = vld [vmem:[#allocation14 + $0x948] sm:$0xff]
    %v4300 = vld [vmem:[#allocation14 + $0x950] sm:$0xff]
    %v4301 = vld [vmem:[#allocation14 + $0x958] sm:$0xff]
    %v4302 = vld [vmem:[#allocation14 + $0x960] sm:$0xff]
    %v4303 = vld [vmem:[#allocation14 + $0x968] sm:$0xff]
    %v4304 = vld [vmem:[#allocation14 + $0x970] sm:$0xff]
    %v4305 = vld [vmem:[#allocation14 + $0x978] sm:$0xff]
    %v4306 = vld [vmem:[#allocation14 + $0x980] sm:$0xff]
    %v4307 = vld [vmem:[#allocation14 + $0x988] sm:$0xff]
    %v4308 = vld [vmem:[#allocation14 + $0x990] sm:$0xff]
    %v4309 = vld [vmem:[#allocation14 + $0x998] sm:$0xff]
    %v4310 = vld [vmem:[#allocation14 + $0x9a0] sm:$0xff]
    %v4311 = vld [vmem:[#allocation14 + $0x9a8] sm:$0xff]
    %v4312 = vld [vmem:[#allocation14 + $0x9b0] sm:$0xff]
    %v4313 = vld [vmem:[#allocation14 + $0x9b8] sm:$0xff]
    %v4314 = vld [vmem:[#allocation14 + $0x9c0] sm:$0xff]
    %v4315 = vld [vmem:[#allocation14 + $0x9c8] sm:$0xff]
    %v4316 = vld [vmem:[#allocation14 + $0x9d0] sm:$0xff]
    %v4317 = vld [vmem:[#allocation14 + $0x9d8] sm:$0xff]
    %v4318 = vld [vmem:[#allocation14 + $0x9e0] sm:$0xff]
    %v4319 = vld [vmem:[#allocation14 + $0x9e8] sm:$0xff]
    %v4320 = vld [vmem:[#allocation14 + $0x9f0] sm:$0xff]
    %v4321 = vld [vmem:[#allocation14 + $0x9f8] sm:$0xff]
    %v4322 = vld [vmem:[#allocation14 + $0xa00] sm:$0xff]
    %v4323 = vld [vmem:[#allocation14 + $0xa08] sm:$0xff]
    %v4324 = vld [vmem:[#allocation14 + $0xa10] sm:$0xff]
    %v4325 = vld [vmem:[#allocation14 + $0xa18] sm:$0xff]
    %v4326 = vld [vmem:[#allocation14 + $0xa20] sm:$0xff]
    %v4327 = vld [vmem:[#allocation14 + $0xa28] sm:$0xff]
    %v4328 = vld [vmem:[#allocation14 + $0xa30] sm:$0xff]
    %v4329 = vld [vmem:[#allocation14 + $0xa38] sm:$0xff]
    %v4330 = vld [vmem:[#allocation14 + $0xa40] sm:$0xff]
    %v4331 = vld [vmem:[#allocation14 + $0xa48] sm:$0xff]
    %v4332 = vld [vmem:[#allocation14 + $0xa50] sm:$0xff]
    %v4333 = vld [vmem:[#allocation14 + $0xa58] sm:$0xff]
    %v4334 = vld [vmem:[#allocation14 + $0xa60] sm:$0xff]
    %v4335 = vld [vmem:[#allocation14 + $0xa68] sm:$0xff]
    %v4336 = vld [vmem:[#allocation14 + $0xa70] sm:$0xff]
    %v4337 = vld [vmem:[#allocation14 + $0xa78] sm:$0xff]
    %v4338 = vld [vmem:[#allocation14 + $0xa80] sm:$0xff]
    %v4339 = vld [vmem:[#allocation14 + $0xa88] sm:$0xff]
    %v4340 = vld [vmem:[#allocation14 + $0xa90] sm:$0xff]
    %v4341 = vld [vmem:[#allocation14 + $0xa98] sm:$0xff]
    %v4342 = vld [vmem:[#allocation14 + $0xaa0] sm:$0xff]
    %v4343 = vld [vmem:[#allocation14 + $0xaa8] sm:$0xff]
    %v4344 = vld [vmem:[#allocation14 + $0xab0] sm:$0xff]
    %v4345 = vld [vmem:[#allocation14 + $0xab8] sm:$0xff]
    %v4346 = vld [vmem:[#allocation14 + $0xac0] sm:$0xff]
    %v4347 = vld [vmem:[#allocation14 + $0xac8] sm:$0xff]
    %v4348 = vld [vmem:[#allocation14 + $0xad0] sm:$0xff]
    %v4349 = vld [vmem:[#allocation14 + $0xad8] sm:$0xff]
    %v4350 = vld [vmem:[#allocation14 + $0xae0] sm:$0xff]
    %v4351 = vld [vmem:[#allocation14 + $0xae8] sm:$0xff]
    %v4352 = vld [vmem:[#allocation14 + $0xaf0] sm:$0xff]
    %v4353 = vld [vmem:[#allocation14 + $0xaf8] sm:$0xff]
    %v4354 = vld [vmem:[#allocation14 + $0xb00] sm:$0xff]
    %v4355 = vld [vmem:[#allocation14 + $0xb08] sm:$0xff]
    %v4356 = vld [vmem:[#allocation14 + $0xb10] sm:$0xff]
    %v4357 = vld [vmem:[#allocation14 + $0xb18] sm:$0xff]
    %v4358 = vld [vmem:[#allocation14 + $0xb20] sm:$0xff]
    %v4359 = vld [vmem:[#allocation14 + $0xb28] sm:$0xff]
    %v4360 = vld [vmem:[#allocation14 + $0xb30] sm:$0xff]
    %v4361 = vld [vmem:[#allocation14 + $0xb38] sm:$0xff]
    %v4362 = vld [vmem:[#allocation14 + $0xb40] sm:$0xff]
    %v4363 = vld [vmem:[#allocation14 + $0xb48] sm:$0xff]
    %v4364 = vld [vmem:[#allocation14 + $0xb50] sm:$0xff]
    %v4365 = vld [vmem:[#allocation14 + $0xb58] sm:$0xff]
    %v4366 = vld [vmem:[#allocation14 + $0xb60] sm:$0xff]
    %v4367 = vld [vmem:[#allocation14 + $0xb68] sm:$0xff]
    %v4368 = vld [vmem:[#allocation14 + $0xb70] sm:$0xff]
    %v4369 = vld [vmem:[#allocation14 + $0xb78] sm:$0xff]
    %v4370 = vld [vmem:[#allocation14 + $0xb80] sm:$0xff]
    %v4371 = vld [vmem:[#allocation14 + $0xb88] sm:$0xff]
    %v4372 = vld [vmem:[#allocation14 + $0xb90] sm:$0xff]
    %v4373 = vld [vmem:[#allocation14 + $0xb98] sm:$0xff]
    %v4374 = vld [vmem:[#allocation14 + $0xba0] sm:$0xff]
    %v4375 = vld [vmem:[#allocation14 + $0xba8] sm:$0xff]
    %v4376 = vld [vmem:[#allocation14 + $0xbb0] sm:$0xff]
    %v4377 = vld [vmem:[#allocation14 + $0xbb8] sm:$0xff]
    %v4378 = vld [vmem:[#allocation14 + $0xbc0] sm:$0xff]
    %v4379 = vld [vmem:[#allocation14 + $0xbc8] sm:$0xff]
    %v4380 = vld [vmem:[#allocation14 + $0xbd0] sm:$0xff]
    %v4381 = vld [vmem:[#allocation14 + $0xbd8] sm:$0xff]
    %v4382 = vld [vmem:[#allocation14 + $0xbe0] sm:$0xff]
    %v4383 = vld [vmem:[#allocation14 + $0xbe8] sm:$0xff]
    %v4384 = vld [vmem:[#allocation14 + $0xbf0] sm:$0xff]
    %v4385 = vld [vmem:[#allocation14 + $0xbf8] sm:$0xff]
    %v4386 = vld [vmem:[#allocation14 + $0xc00] sm:$0xff]
    %v4387 = vld [vmem:[#allocation14 + $0xc08] sm:$0xff]
    %v4388 = vld [vmem:[#allocation14 + $0xc10] sm:$0xff]
    %v4389 = vld [vmem:[#allocation14 + $0xc18] sm:$0xff]
    %v4390 = vld [vmem:[#allocation14 + $0xc20] sm:$0xff]
    %v4391 = vld [vmem:[#allocation14 + $0xc28] sm:$0xff]
    %v4392 = vld [vmem:[#allocation14 + $0xc30] sm:$0xff]
    %v4393 = vld [vmem:[#allocation14 + $0xc38] sm:$0xff]
    %v4394 = vld [vmem:[#allocation14 + $0xc40] sm:$0xff]
    %v4395 = vld [vmem:[#allocation14 + $0xc48] sm:$0xff]
    %v4396 = vld [vmem:[#allocation14 + $0xc50] sm:$0xff]
    %v4397 = vld [vmem:[#allocation14 + $0xc58] sm:$0xff]
    %v4398 = vld [vmem:[#allocation14 + $0xc60] sm:$0xff]
    %v4399 = vld [vmem:[#allocation14 + $0xc68] sm:$0xff]
    %v4400 = vld [vmem:[#allocation14 + $0xc70] sm:$0xff]
    %v4401 = vld [vmem:[#allocation14 + $0xc78] sm:$0xff]
    %v4402 = vld [vmem:[#allocation14 + $0xc80] sm:$0xff]
    %v4403 = vld [vmem:[#allocation14 + $0xc88] sm:$0xff]
    %v4404 = vld [vmem:[#allocation14 + $0xc90] sm:$0xff]
    %v4405 = vld [vmem:[#allocation14 + $0xc98] sm:$0xff]
    %v4406 = vld [vmem:[#allocation14 + $0xca0] sm:$0xff]
    %v4407 = vld [vmem:[#allocation14 + $0xca8] sm:$0xff]
    %v4408 = vld [vmem:[#allocation14 + $0xcb0] sm:$0xff]
    %v4409 = vld [vmem:[#allocation14 + $0xcb8] sm:$0xff]
    %v4410 = vld [vmem:[#allocation14 + $0xcc0] sm:$0xff]
    %v4411 = vld [vmem:[#allocation14 + $0xcc8] sm:$0xff]
    %v4412 = vld [vmem:[#allocation14 + $0xcd0] sm:$0xff]
    %v4413 = vld [vmem:[#allocation14 + $0xcd8] sm:$0xff]
    %v4414 = vld [vmem:[#allocation14 + $0xce0] sm:$0xff]
    %v4415 = vld [vmem:[#allocation14 + $0xce8] sm:$0xff]
    %v4416 = vld [vmem:[#allocation14 + $0xcf0] sm:$0xff]
    %v4417 = vld [vmem:[#allocation14 + $0xcf8] sm:$0xff]
    %v4418 = vld [vmem:[#allocation14 + $0xd00] sm:$0xff]
    %v4419 = vld [vmem:[#allocation14 + $0xd08] sm:$0xff]
    %v4420 = vld [vmem:[#allocation14 + $0xd10] sm:$0xff]
    %v4421 = vld [vmem:[#allocation14 + $0xd18] sm:$0xff]
    %v4422 = vld [vmem:[#allocation14 + $0xd20] sm:$0xff]
    %v4423 = vld [vmem:[#allocation14 + $0xd28] sm:$0xff]
    %v4424 = vld [vmem:[#allocation14 + $0xd30] sm:$0xff]
    %v4425 = vld [vmem:[#allocation14 + $0xd38] sm:$0xff]
    %v4426 = vld [vmem:[#allocation14 + $0xd40] sm:$0xff]
    %v4427 = vld [vmem:[#allocation14 + $0xd48] sm:$0xff]
    %v4428 = vld [vmem:[#allocation14 + $0xd50] sm:$0xff]
    %v4429 = vld [vmem:[#allocation14 + $0xd58] sm:$0xff]
    %v4430 = vld [vmem:[#allocation14 + $0xd60] sm:$0xff]
    %v4431 = vld [vmem:[#allocation14 + $0xd68] sm:$0xff]
    %v4432 = vld [vmem:[#allocation14 + $0xd70] sm:$0xff]
    %v4433 = vld [vmem:[#allocation14 + $0xd78] sm:$0xff]
    %v4434 = vld [vmem:[#allocation14 + $0xd80] sm:$0xff]
    %v4435 = vld [vmem:[#allocation14 + $0xd88] sm:$0xff]
    %v4436 = vld [vmem:[#allocation14 + $0xd90] sm:$0xff]
    %v4437 = vld [vmem:[#allocation14 + $0xd98] sm:$0xff]
    %v4438 = vld [vmem:[#allocation14 + $0xda0] sm:$0xff]
    %v4439 = vld [vmem:[#allocation14 + $0xda8] sm:$0xff]
    %v4440 = vld [vmem:[#allocation14 + $0xdb0] sm:$0xff]
    %v4441 = vld [vmem:[#allocation14 + $0xdb8] sm:$0xff]
    %v4442 = vld [vmem:[#allocation14 + $0xdc0] sm:$0xff]
    %v4443 = vld [vmem:[#allocation14 + $0xdc8] sm:$0xff]
    %v4444 = vld [vmem:[#allocation14 + $0xdd0] sm:$0xff]
    %v4445 = vld [vmem:[#allocation14 + $0xdd8] sm:$0xff]
    %v4446 = vld [vmem:[#allocation14 + $0xde0] sm:$0xff]
    %v4447 = vld [vmem:[#allocation14 + $0xde8] sm:$0xff]
    %v4448 = vld [vmem:[#allocation14 + $0xdf0] sm:$0xff]
    %v4449 = vld [vmem:[#allocation14 + $0xdf8] sm:$0xff]
    %v4450 = vld [vmem:[#allocation14 + $0xe00] sm:$0xff]
    %v4451 = vld [vmem:[#allocation14 + $0xe08] sm:$0xff]
    %v4452 = vld [vmem:[#allocation14 + $0xe10] sm:$0xff]
    %v4453 = vld [vmem:[#allocation14 + $0xe18] sm:$0xff]
    %v4454 = vld [vmem:[#allocation14 + $0xe20] sm:$0xff]
    %v4455 = vld [vmem:[#allocation14 + $0xe28] sm:$0xff]
    %v4456 = vld [vmem:[#allocation14 + $0xe30] sm:$0xff]
    %v4457 = vld [vmem:[#allocation14 + $0xe38] sm:$0xff]
    %v4458 = vld [vmem:[#allocation14 + $0xe40] sm:$0xff]
    %v4459 = vld [vmem:[#allocation14 + $0xe48] sm:$0xff]
    %v4460 = vld [vmem:[#allocation14 + $0xe50] sm:$0xff]
    %v4461 = vld [vmem:[#allocation14 + $0xe58] sm:$0xff]
    %v4462 = vld [vmem:[#allocation14 + $0xe60] sm:$0xff]
    %v4463 = vld [vmem:[#allocation14 + $0xe68] sm:$0xff]
    %v4464 = vld [vmem:[#allocation14 + $0xe70] sm:$0xff]
    %v4465 = vld [vmem:[#allocation14 + $0xe78] sm:$0xff]
    %v4466 = vld [vmem:[#allocation14 + $0xe80] sm:$0xff]
    %v4467 = vld [vmem:[#allocation14 + $0xe88] sm:$0xff]
    %v4468 = vld [vmem:[#allocation14 + $0xe90] sm:$0xff]
    %v4469 = vld [vmem:[#allocation14 + $0xe98] sm:$0xff]
    %v4470 = vld [vmem:[#allocation14 + $0xea0] sm:$0xff]
    %v4471 = vld [vmem:[#allocation14 + $0xea8] sm:$0xff]
    %v4472 = vld [vmem:[#allocation14 + $0xeb0] sm:$0xff]
    %v4473 = vld [vmem:[#allocation14 + $0xeb8] sm:$0xff]
    %v4474 = vld [vmem:[#allocation14 + $0xec0] sm:$0xff]
    %v4475 = vld [vmem:[#allocation14 + $0xec8] sm:$0xff]
    %v4476 = vld [vmem:[#allocation14 + $0xed0] sm:$0xff]
    %v4477 = vld [vmem:[#allocation14 + $0xed8] sm:$0xff]
    %v4478 = vld [vmem:[#allocation14 + $0xee0] sm:$0xff]
    %v4479 = vld [vmem:[#allocation14 + $0xee8] sm:$0xff]
    %v4480 = vld [vmem:[#allocation14 + $0xef0] sm:$0xff]
    %v4481 = vld [vmem:[#allocation14 + $0xef8] sm:$0xff]
    %v4482 = vld [vmem:[#allocation14 + $0xf00] sm:$0xff]
    %v4483 = vld [vmem:[#allocation14 + $0xf08] sm:$0xff]
    %v4484 = vld [vmem:[#allocation14 + $0xf10] sm:$0xff]
    %v4485 = vld [vmem:[#allocation14 + $0xf18] sm:$0xff]
    %v4486 = vld [vmem:[#allocation14 + $0xf20] sm:$0xff]
    %v4487 = vld [vmem:[#allocation14 + $0xf28] sm:$0xff]
    %v4488 = vld [vmem:[#allocation14 + $0xf30] sm:$0xff]
    %v4489 = vld [vmem:[#allocation14 + $0xf38] sm:$0xff]
    %v4490 = vld [vmem:[#allocation14 + $0xf40] sm:$0xff]
    %v4491 = vld [vmem:[#allocation14 + $0xf48] sm:$0xff]
    %v4492 = vld [vmem:[#allocation14 + $0xf50] sm:$0xff]
    %v4493 = vld [vmem:[#allocation14 + $0xf58] sm:$0xff]
    %v4494 = vld [vmem:[#allocation14 + $0xf60] sm:$0xff]
    %v4495 = vld [vmem:[#allocation14 + $0xf68] sm:$0xff]
    %v4496 = vld [vmem:[#allocation14 + $0xf70] sm:$0xff]
    %v4497 = vld [vmem:[#allocation14 + $0xf78] sm:$0xff]
    %v4498 = vld [vmem:[#allocation14 + $0xf80] sm:$0xff]
    %v4499 = vld [vmem:[#allocation14 + $0xf88] sm:$0xff]
    %v4500 = vld [vmem:[#allocation14 + $0xf90] sm:$0xff]
    %v4501 = vld [vmem:[#allocation14 + $0xf98] sm:$0xff]
    %v4502 = vld [vmem:[#allocation14 + $0xfa0] sm:$0xff]
    %v4503 = vld [vmem:[#allocation14 + $0xfa8] sm:$0xff]
    %v4504 = vld [vmem:[#allocation14 + $0xfb0] sm:$0xff]
    %v4505 = vld [vmem:[#allocation14 + $0xfb8] sm:$0xff]
    %v4506 = vld [vmem:[#allocation14 + $0xfc0] sm:$0xff]
    %v4507 = vld [vmem:[#allocation14 + $0xfc8] sm:$0xff]
    %v4508 = vld [vmem:[#allocation14 + $0xfd0] sm:$0xff]
    %v4509 = vld [vmem:[#allocation14 + $0xfd8] sm:$0xff]
    %v4510 = vld [vmem:[#allocation14 + $0xfe0] sm:$0xff]
    %v4511 = vld [vmem:[#allocation14 + $0xfe8] sm:$0xff]
    %v4512 = vld [vmem:[#allocation14 + $0xff0] sm:$0xff]
    %v4513 = vld [vmem:[#allocation14 + $0xff8] sm:$0xff]
    %v4514 = vld [vmem:[#allocation14 + $0x1000] sm:$0xff]
    %v4515 = vld [vmem:[#allocation14 + $0x1008] sm:$0xff]
    %v4516 = vld [vmem:[#allocation14 + $0x1010] sm:$0xff]
    %v4517 = vld [vmem:[#allocation14 + $0x1018] sm:$0xff]
    %v4518 = vld [vmem:[#allocation14 + $0x1020] sm:$0xff]
    %v4519 = vld [vmem:[#allocation14 + $0x1028] sm:$0xff]
    %v4520 = vld [vmem:[#allocation14 + $0x1030] sm:$0xff]
    %v4521 = vld [vmem:[#allocation14 + $0x1038] sm:$0xff]
    %v4522 = vld [vmem:[#allocation14 + $0x1040] sm:$0xff]
    %v4523 = vld [vmem:[#allocation14 + $0x1048] sm:$0xff]
    %v4524 = vld [vmem:[#allocation14 + $0x1050] sm:$0xff]
    %v4525 = vld [vmem:[#allocation14 + $0x1058] sm:$0xff]
    %v4526 = vld [vmem:[#allocation14 + $0x1060] sm:$0xff]
    %v4527 = vld [vmem:[#allocation14 + $0x1068] sm:$0xff]
    %v4528 = vld [vmem:[#allocation14 + $0x1070] sm:$0xff]
    %v4529 = vld [vmem:[#allocation14 + $0x1078] sm:$0xff]
    %v4530 = vld [vmem:[#allocation14 + $0x1080] sm:$0xff]
    %v4531 = vld [vmem:[#allocation14 + $0x1088] sm:$0xff]
    %v4532 = vld [vmem:[#allocation14 + $0x1090] sm:$0xff]
    %v4533 = vld [vmem:[#allocation14 + $0x1098] sm:$0xff]
    %v4534 = vld [vmem:[#allocation14 + $0x10a0] sm:$0xff]
    %v4535 = vld [vmem:[#allocation14 + $0x10a8] sm:$0xff]
    %v4536 = vld [vmem:[#allocation14 + $0x10b0] sm:$0xff]
    %v4537 = vld [vmem:[#allocation14 + $0x10b8] sm:$0xff]
    %v4538 = vld [vmem:[#allocation14 + $0x10c0] sm:$0xff]
    %v4539 = vld [vmem:[#allocation14 + $0x10c8] sm:$0xff]
    %v4540 = vld [vmem:[#allocation14 + $0x10d0] sm:$0xff]
    %v4541 = vld [vmem:[#allocation14 + $0x10d8] sm:$0xff]
    %v4542 = vld [vmem:[#allocation14 + $0x10e0] sm:$0xff]
    %v4543 = vld [vmem:[#allocation14 + $0x10e8] sm:$0xff]
    %v4544 = vld [vmem:[#allocation14 + $0x10f0] sm:$0xff]
    %v4545 = vld [vmem:[#allocation14 + $0x10f8] sm:$0xff]
    %v4546 = vld [vmem:[#allocation14 + $0x1100] sm:$0xff]
    %v4547 = vld [vmem:[#allocation14 + $0x1108] sm:$0xff]
    %v4548 = vld [vmem:[#allocation14 + $0x1110] sm:$0xff]
    %v4549 = vld [vmem:[#allocation14 + $0x1118] sm:$0xff]
    %v4550 = vld [vmem:[#allocation14 + $0x1120] sm:$0xff]
    %v4551 = vld [vmem:[#allocation14 + $0x1128] sm:$0xff]
    %v4552 = vld [vmem:[#allocation14 + $0x1130] sm:$0xff]
    %v4553 = vld [vmem:[#allocation14 + $0x1138] sm:$0xff]
    %v4554 = vld [vmem:[#allocation14 + $0x1140] sm:$0xff]
    %v4555 = vld [vmem:[#allocation14 + $0x1148] sm:$0xff]
    %v4556 = vld [vmem:[#allocation14 + $0x1150] sm:$0xff]
    %v4557 = vld [vmem:[#allocation14 + $0x1158] sm:$0xff]
    %v4558 = vld [vmem:[#allocation14 + $0x1160] sm:$0xff]
    %v4559 = vld [vmem:[#allocation14 + $0x1168] sm:$0xff]
    %v4560 = vld [vmem:[#allocation14 + $0x1170] sm:$0xff]
    %v4561 = vld [vmem:[#allocation14 + $0x1178] sm:$0xff]
    %v4562 = vld [vmem:[#allocation14 + $0x1180] sm:$0xff]
    %v4563 = vld [vmem:[#allocation14 + $0x1188] sm:$0xff]
    %v4564 = vld [vmem:[#allocation14 + $0x1190] sm:$0xff]
    %v4565 = vld [vmem:[#allocation14 + $0x1198] sm:$0xff]
    %v4566 = vld [vmem:[#allocation14 + $0x11a0] sm:$0xff]
    %v4567 = vld [vmem:[#allocation14 + $0x11a8] sm:$0xff]
    %v4568 = vld [vmem:[#allocation14 + $0x11b0] sm:$0xff]
    %v4569 = vld [vmem:[#allocation14 + $0x11b8] sm:$0xff]
    %v4570 = vld [vmem:[#allocation14 + $0x11c0] sm:$0xff]
    %v4571 = vld [vmem:[#allocation14 + $0x11c8] sm:$0xff]
    %v4572 = vld [vmem:[#allocation14 + $0x11d0] sm:$0xff]
    %v4573 = vld [vmem:[#allocation14 + $0x11d8] sm:$0xff]
    %v4574 = vld [vmem:[#allocation14 + $0x11e0] sm:$0xff]
    %v4575 = vld [vmem:[#allocation14 + $0x11e8] sm:$0xff]
    %v4576 = vld [vmem:[#allocation14 + $0x11f0] sm:$0xff]
    %v4577 = vld [vmem:[#allocation14 + $0x11f8] sm:$0xff]
    %v4578 = vld [vmem:[#allocation16] sm:$0x3f]
    %v4580 = vlaneseq
    %v4581 = vshrl.u32 %v4580, 7
    %v4582 = vsub.s32 0, %v4581
    %v4583 = vrot.slane %v4578, %v4582
    %v4584 = vlaneseq
    %v4585 = vshrl.u32 %v4584, 7
    %v4586 = vsub.s32 1, %v4585
    %v4587 = vrot.slane %v4578, %v4586
    %v4588 = vlaneseq
    %v4589 = vshrl.u32 %v4588, 7
    %v4590 = vsub.s32 2, %v4589
    %v4591 = vrot.slane %v4578, %v4590
    %v4592 = vlaneseq
    %v4593 = vshrl.u32 %v4592, 7
    %v4594 = vsub.s32 3, %v4593
    %v4595 = vrot.slane %v4578, %v4594
    %v4596 = vlaneseq
    %v4597 = vshrl.u32 %v4596, 7
    %v4598 = vsub.s32 4, %v4597
    %v4599 = vrot.slane %v4578, %v4598
    %v4600 = vlaneseq
    %v4601 = vshrl.u32 %v4600, 7
    %v4602 = vsub.s32 5, %v4601
    %v4603 = vrot.slane %v4578, %v4602
    %4610 = vmatprep.subr.mxu0 %v4003
    %4611 = vmatpush1.msra.mxu0 %v4002
    %4612 = vmatprep.subr.mxu0 %v4009
    %4613 = vmatpush1.msra.mxu0 %v4008
    %4614 = vmatprep.subr.mxu0 %v4015
    %4615 = vmatpush1.msra.mxu0 %v4014
    %4616 = vmatprep.subr.mxu0 %v4021
    %4617 = vmatpush1.msra.mxu0 %v4020
    %4618 = vmatprep.subr.mxu0 %v4027
    %4619 = vmatpush1.msra.mxu0 %v4026
    %4620 = vmatprep.subr.mxu0 %v4033
    %4621 = vmatpush1.msra.mxu0 %v4032
    %4622 = vmatprep.subr.mxu0 %v4039
    %4623 = vmatpush1.msra.mxu0 %v4038
    %4624 = vmatprep.subr.mxu0 %v4045
    %4625 = vmatpush1.msra.mxu0 %v4044
    %4626 = vmatprep.subr.mxu0 %v4051
    %4627 = vmatpush1.msra.mxu0 %v4050
    %4628 = vmatprep.subr.mxu0 %v4057
    %4629 = vmatpush1.msra.mxu0 %v4056
    %4630 = vmatprep.subr.mxu0 %v4063
    %4631 = vmatpush1.msra.mxu0 %v4062
    %4632 = vmatprep.subr.mxu0 %v4069
    %4633 = vmatpush1.msra.mxu0 %v4068
    %4634 = vmatprep.subr.mxu0 %v4075
    %4635 = vmatpush1.msra.mxu0 %v4074
    %4636 = vmatprep.subr.mxu0 %v4081
    %4637 = vmatpush1.msra.mxu0 %v4080
    %4638 = vmatprep.subr.mxu0 %v4087
    %4639 = vmatpush1.msra.mxu0 %v4086
    %4640 = vmatprep.subr.mxu0 %v4093
    %4641 = vmatpush1.msra.mxu0 %v4092
    %4642 = vmatprep.subr.mxu0 %v4099
    %4643 = vmatpush1.msra.mxu0 %v4098
    %4644 = vmatprep.subr.mxu0 %v4105
    %4645 = vmatpush1.msra.mxu0 %v4104
    %4646 = vmatprep.subr.mxu0 %v4111
    %4647 = vmatpush1.msra.mxu0 %v4110
    %4648 = vmatprep.subr.mxu0 %v4117
    %4649 = vmatpush1.msra.mxu0 %v4116
    %4650 = vmatprep.subr.mxu0 %v4123
    %4651 = vmatpush1.msra.mxu0 %v4122
    %4652 = vmatprep.subr.mxu0 %v4129
    %4653 = vmatpush1.msra.mxu0 %v4128
    %4654 = vmatprep.subr.mxu0 %v4135
    %4655 = vmatpush1.msra.mxu0 %v4134
    %4656 = vmatprep.subr.mxu0 %v4141
    %4657 = vmatpush1.msra.mxu0 %v4140
    %4658 = vmatprep.subr.mxu0 %v4147
    %4659 = vmatpush1.msra.mxu0 %v4146
    %4660 = vmatprep.subr.mxu0 %v4153
    %4661 = vmatpush1.msra.mxu0 %v4152
    %4662 = vmatprep.subr.mxu0 %v4159
    %4663 = vmatpush1.msra.mxu0 %v4158
    %4664 = vmatprep.subr.mxu0 %v4165
    %4665 = vmatpush1.msra.mxu0 %v4164
    %4666 = vmatprep.subr.mxu0 %v4171
    %4667 = vmatpush1.msra.mxu0 %v4170
    %4668 = vmatprep.subr.mxu0 %v4177
    %4669 = vmatpush1.msra.mxu0 %v4176
    %4670 = vmatprep.subr.mxu0 %v4183
    %4671 = vmatpush1.msra.mxu0 %v4182
    %4672 = vmatprep.subr.mxu0 %v4189
    %4673 = vmatpush1.msra.mxu0 %v4188
    %4674 = vmatprep.mubr.f32.mxu0 %v3997
    %4675 = vmatmul.mubr.f32.gmra.mrb[0].mxu0 %v3996
    %v4676 = vpop.f32.mrb[0].mxu0
    %v4677 = vadd.f32 %v4583, %v4676
    %v4678 = vpop.f32.mrb[0].mxu0
    %v4679 = vadd.f32 %v4587, %v4678
    %4680 = vdwg.mxu0
    %4681 = vmatprep.subr.mxu0 %v4195
    %4682 = vmatpush1.msra.mxu0 %v4194
    %4683 = vmatprep.subr.mxu0 %v4201
    %4684 = vmatpush1.msra.mxu0 %v4200
    %4685 = vmatprep.subr.mxu0 %v4207
    %4686 = vmatpush1.msra.mxu0 %v4206
    %4687 = vmatprep.subr.mxu0 %v4213
    %4688 = vmatpush1.msra.mxu0 %v4212
    %4689 = vmatprep.subr.mxu0 %v4219
    %4690 = vmatpush1.msra.mxu0 %v4218
    %4691 = vmatprep.subr.mxu0 %v4225
    %4692 = vmatpush1.msra.mxu0 %v4224
    %4693 = vmatprep.subr.mxu0 %v4231
    %4694 = vmatpush1.msra.mxu0 %v4230
    %4695 = vmatprep.subr.mxu0 %v4237
    %4696 = vmatpush1.msra.mxu0 %v4236
    %4697 = vmatprep.subr.mxu0 %v4243
    %4698 = vmatpush1.msra.mxu0 %v4242
    %4699 = vmatprep.subr.mxu0 %v4249
    %4700 = vmatpush1.msra.mxu0 %v4248
    %4701 = vmatprep.subr.mxu0 %v4255
    %4702 = vmatpush1.msra.mxu0 %v4254
    %4703 = vmatprep.subr.mxu0 %v4261
    %4704 = vmatpush1.msra.mxu0 %v4260
    %4705 = vmatprep.subr.mxu0 %v4267
    %4706 = vmatpush1.msra.mxu0 %v4266
    %4707 = vmatprep.subr.mxu0 %v4273
    %4708 = vmatpush1.msra.mxu0 %v4272
    %4709 = vmatprep.subr.mxu0 %v4279
    %4710 = vmatpush1.msra.mxu0 %v4278
    %4711 = vmatprep.subr.mxu0 %v4285
    %4712 = vmatpush1.msra.mxu0 %v4284
    %4713 = vmatprep.subr.mxu0 %v4291
    %4714 = vmatpush1.msra.mxu0 %v4290
    %4715 = vmatprep.subr.mxu0 %v4297
    %4716 = vmatpush1.msra.mxu0 %v4296
    %4717 = vmatprep.subr.mxu0 %v4303
    %4718 = vmatpush1.msra.mxu0 %v4302
    %4719 = vmatprep.subr.mxu0 %v4309
    %4720 = vmatpush1.msra.mxu0 %v4308
    %4721 = vmatprep.subr.mxu0 %v4315
    %4722 = vmatpush1.msra.mxu0 %v4314
    %4723 = vmatprep.subr.mxu0 %v4321
    %4724 = vmatpush1.msra.mxu0 %v4320
    %4725 = vmatprep.subr.mxu0 %v4327
    %4726 = vmatpush1.msra.mxu0 %v4326
    %4727 = vmatprep.subr.mxu0 %v4333
    %4728 = vmatpush1.msra.mxu0 %v4332
    %4729 = vmatprep.subr.mxu0 %v4339
    %4730 = vmatpush1.msra.mxu0 %v4338
    %4731 = vmatprep.subr.mxu0 %v4345
    %4732 = vmatpush1.msra.mxu0 %v4344
    %4733 = vmatprep.subr.mxu0 %v4351
    %4734 = vmatpush1.msra.mxu0 %v4350
    %4735 = vmatprep.subr.mxu0 %v4357
    %4736 = vmatpush1.msra.mxu0 %v4356
    %4737 = vmatprep.subr.mxu0 %v4363
    %4738 = vmatpush1.msra.mxu0 %v4362
    %4739 = vmatprep.subr.mxu0 %v4369
    %4740 = vmatpush1.msra.mxu0 %v4368
    %4741 = vmatprep.subr.mxu0 %v4375
    %4742 = vmatpush1.msra.mxu0 %v4374
    %4743 = vmatprep.subr.mxu0 %v4381
    %4744 = vmatpush1.msra.mxu0 %v4380
    %4745 = vmatprep.mubr.f32.mxu0 %v3999
    %4746 = vmatmul.mubr.f32.gmra.mrb[0].mxu0 %v3998
    %v4747 = vpop.f32.mrb[0].mxu0
    %v4748 = vadd.f32 %v4677, %v4747
    %v4749 = vpop.f32.mrb[0].mxu0
    %v4750 = vadd.f32 %v4679, %v4749
    %4751 = vdwg.mxu0
    %4752 = vmatprep.subr.mxu0 %v4387
    %4753 = vmatpush1.msra.mxu0 %v4386
    %4754 = vmatprep.subr.mxu0 %v4393
    %4755 = vmatpush1.msra.mxu0 %v4392
    %4756 = vmatprep.subr.mxu0 %v4399
    %4757 = vmatpush1.msra.mxu0 %v4398
    %4758 = vmatprep.subr.mxu0 %v4405
    %4759 = vmatpush1.msra.mxu0 %v4404
    %4760 = vmatprep.subr.mxu0 %v4411
    %4761 = vmatpush1.msra.mxu0 %v4410
    %4762 = vmatprep.subr.mxu0 %v4417
    %4763 = vmatpush1.msra.mxu0 %v4416
    %4764 = vmatprep.subr.mxu0 %v4423
    %4765 = vmatpush1.msra.mxu0 %v4422
    %4766 = vmatprep.subr.mxu0 %v4429
    %4767 = vmatpush1.msra.mxu0 %v4428
    %4768 = vmatprep.subr.mxu0 %v4435
    %4769 = vmatpush1.msra.mxu0 %v4434
    %4770 = vmatprep.subr.mxu0 %v4441
    %4771 = vmatpush1.msra.mxu0 %v4440
    %4772 = vmatprep.subr.mxu0 %v4447
    %4773 = vmatpush1.msra.mxu0 %v4446
    %4774 = vmatprep.subr.mxu0 %v4453
    %4775 = vmatpush1.msra.mxu0 %v4452
    %4776 = vmatprep.subr.mxu0 %v4459
    %4777 = vmatpush1.msra.mxu0 %v4458
    %4778 = vmatprep.subr.mxu0 %v4465
    %4779 = vmatpush1.msra.mxu0 %v4464
    %4780 = vmatprep.subr.mxu0 %v4471
    %4781 = vmatpush1.msra.mxu0 %v4470
    %4782 = vmatprep.subr.mxu0 %v4477
    %4783 = vmatpush1.msra.mxu0 %v4476
    %4784 = vmatprep.subr.mxu0 %v4483
    %4785 = vmatpush1.msra.mxu0 %v4482
    %4786 = vmatprep.subr.mxu0 %v4489
    %4787 = vmatpush1.msra.mxu0 %v4488
    %4788 = vmatprep.subr.mxu0 %v4495
    %4789 = vmatpush1.msra.mxu0 %v4494
    %4790 = vmatprep.subr.mxu0 %v4501
    %4791 = vmatpush1.msra.mxu0 %v4500
    %4792 = vmatprep.subr.mxu0 %v4507
    %4793 = vmatpush1.msra.mxu0 %v4506
    %4794 = vmatprep.subr.mxu0 %v4513
    %4795 = vmatpush1.msra.mxu0 %v4512
    %4796 = vmatprep.subr.mxu0 %v4519
    %4797 = vmatpush1.msra.mxu0 %v4518
    %4798 = vmatprep.subr.mxu0 %v4525
    %4799 = vmatpush1.msra.mxu0 %v4524
    %4800 = vmatprep.subr.mxu0 %v4531
    %4801 = vmatpush1.msra.mxu0 %v4530
    %4802 = vmatprep.subr.mxu0 %v4537
    %4803 = vmatpush1.msra.mxu0 %v4536
    %4804 = vmatprep.subr.mxu0 %v4543
    %4805 = vmatpush1.msra.mxu0 %v4542
    %4806 = vmatprep.subr.mxu0 %v4549
    %4807 = vmatpush1.msra.mxu0 %v4548
    %4808 = vmatprep.subr.mxu0 %v4555
    %4809 = vmatpush1.msra.mxu0 %v4554
    %4810 = vmatprep.subr.mxu0 %v4561
    %4811 = vmatpush1.msra.mxu0 %v4560
    %4812 = vmatprep.subr.mxu0 %v4567
    %4813 = vmatpush1.msra.mxu0 %v4566
    %4814 = vmatprep.subr.mxu0 %v4573
    %4815 = vmatpush1.msra.mxu0 %v4572
    %4816 = vmatprep.mubr.f32.mxu0 %v4001
    %4817 = vmatmul.mubr.f32.gmra.mrb[0].mxu0 %v4000
    %v4818 = vpop.f32.mrb[0].mxu0
    %v4819 = vadd.f32 %v4748, %v4818
    %v4820 = vpop.f32.mrb[0].mxu0
    %v4821 = vadd.f32 %v4750, %v4820
    %4822 = vdwg.mxu0
    %4823 = vmatprep.subr.mxu0 %v4005
    %4824 = vmatpush1.msra.mxu0 %v4004
    %4825 = vmatprep.subr.mxu0 %v4011
    %4826 = vmatpush1.msra.mxu0 %v4010
    %4827 = vmatprep.subr.mxu0 %v4017
    %4828 = vmatpush1.msra.mxu0 %v4016
    %4829 = vmatprep.subr.mxu0 %v4023
    %4830 = vmatpush1.msra.mxu0 %v4022
    %4831 = vmatprep.subr.mxu0 %v4029
    %4832 = vmatpush1.msra.mxu0 %v4028
    %4833 = vmatprep.subr.mxu0 %v4035
    %4834 = vmatpush1.msra.mxu0 %v4034
    %4835 = vmatprep.subr.mxu0 %v4041
    %4836 = vmatpush1.msra.mxu0 %v4040
    %4837 = vmatprep.subr.mxu0 %v4047
    %4838 = vmatpush1.msra.mxu0 %v4046
    %4839 = vmatprep.subr.mxu0 %v4053
    %4840 = vmatpush1.msra.mxu0 %v4052
    %4841 = vmatprep.subr.mxu0 %v4059
    %4842 = vmatpush1.msra.mxu0 %v4058
    %4843 = vmatprep.subr.mxu0 %v4065
    %4844 = vmatpush1.msra.mxu0 %v4064
    %4845 = vmatprep.subr.mxu0 %v4071
    %4846 = vmatpush1.msra.mxu0 %v4070
    %4847 = vmatprep.subr.mxu0 %v4077
    %4848 = vmatpush1.msra.mxu0 %v4076
    %4849 = vmatprep.subr.mxu0 %v4083
    %4850 = vmatpush1.msra.mxu0 %v4082
    %4851 = vmatprep.subr.mxu0 %v4089
    %4852 = vmatpush1.msra.mxu0 %v4088
    %4853 = vmatprep.subr.mxu0 %v4095
    %4854 = vmatpush1.msra.mxu0 %v4094
    %4855 = vmatprep.subr.mxu0 %v4101
    %4856 = vmatpush1.msra.mxu0 %v4100
    %4857 = vmatprep.subr.mxu0 %v4107
    %4858 = vmatpush1.msra.mxu0 %v4106
    %4859 = vmatprep.subr.mxu0 %v4113
    %4860 = vmatpush1.msra.mxu0 %v4112
    %4861 = vmatprep.subr.mxu0 %v4119
    %4862 = vmatpush1.msra.mxu0 %v4118
    %4863 = vmatprep.subr.mxu0 %v4125
    %4864 = vmatpush1.msra.mxu0 %v4124
    %4865 = vmatprep.subr.mxu0 %v4131
    %4866 = vmatpush1.msra.mxu0 %v4130
    %4867 = vmatprep.subr.mxu0 %v4137
    %4868 = vmatpush1.msra.mxu0 %v4136
    %4869 = vmatprep.subr.mxu0 %v4143
    %4870 = vmatpush1.msra.mxu0 %v4142
    %4871 = vmatprep.subr.mxu0 %v4149
    %4872 = vmatpush1.msra.mxu0 %v4148
    %4873 = vmatprep.subr.mxu0 %v4155
    %4874 = vmatpush1.msra.mxu0 %v4154
    %4875 = vmatprep.subr.mxu0 %v4161
    %4876 = vmatpush1.msra.mxu0 %v4160
    %4877 = vmatprep.subr.mxu0 %v4167
    %4878 = vmatpush1.msra.mxu0 %v4166
    %4879 = vmatprep.subr.mxu0 %v4173
    %4880 = vmatpush1.msra.mxu0 %v4172
    %4881 = vmatprep.subr.mxu0 %v4179
    %4882 = vmatpush1.msra.mxu0 %v4178
    %4883 = vmatprep.subr.mxu0 %v4185
    %4884 = vmatpush1.msra.mxu0 %v4184
    %4885 = vmatprep.subr.mxu0 %v4191
    %4886 = vmatpush1.msra.mxu0 %v4190
    %4887 = vmatprep.mubr.f32.mxu0 %v3997
    %4888 = vmatmul.mubr.f32.gmra.mrb[0].mxu0 %v3996
    %v4889 = vpop.f32.mrb[0].mxu0
    %v4890 = vadd.f32 %v4591, %v4889
    %v4891 = vpop.f32.mrb[0].mxu0
    %v4892 = vadd.f32 %v4595, %v4891
    %4893 = vdwg.mxu0
    %4894 = vmatprep.subr.mxu0 %v4197
    %4895 = vmatpush1.msra.mxu0 %v4196
    %4896 = vmatprep.subr.mxu0 %v4203
    %4897 = vmatpush1.msra.mxu0 %v4202
    %4898 = vmatprep.subr.mxu0 %v4209
    %4899 = vmatpush1.msra.mxu0 %v4208
    %4900 = vmatprep.subr.mxu0 %v4215
    %4901 = vmatpush1.msra.mxu0 %v4214
    %4902 = vmatprep.subr.mxu0 %v4221
    %4903 = vmatpush1.msra.mxu0 %v4220
    %4904 = vmatprep.subr.mxu0 %v4227
    %4905 = vmatpush1.msra.mxu0 %v4226
    %4906 = vmatprep.subr.mxu0 %v4233
    %4907 = vmatpush1.msra.mxu0 %v4232
    %4908 = vmatprep.subr.mxu0 %v4239
    %4909 = vmatpush1.msra.mxu0 %v4238
    %4910 = vmatprep.subr.mxu0 %v4245
    %4911 = vmatpush1.msra.mxu0 %v4244
    %4912 = vmatprep.subr.mxu0 %v4251
    %4913 = vmatpush1.msra.mxu0 %v4250
    %4914 = vmatprep.subr.mxu0 %v4257
    %4915 = vmatpush1.msra.mxu0 %v4256
    %4916 = vmatprep.subr.mxu0 %v4263
    %4917 = vmatpush1.msra.mxu0 %v4262
    %4918 = vmatprep.subr.mxu0 %v4269
    %4919 = vmatpush1.msra.mxu0 %v4268
    %4920 = vmatprep.subr.mxu0 %v4275
    %4921 = vmatpush1.msra.mxu0 %v4274
    %4922 = vmatprep.subr.mxu0 %v4281
    %4923 = vmatpush1.msra.mxu0 %v4280
    %4924 = vmatprep.subr.mxu0 %v4287
    %4925 = vmatpush1.msra.mxu0 %v4286
    %4926 = vmatprep.subr.mxu0 %v4293
    %4927 = vmatpush1.msra.mxu0 %v4292
    %4928 = vmatprep.subr.mxu0 %v4299
    %4929 = vmatpush1.msra.mxu0 %v4298
    %4930 = vmatprep.subr.mxu0 %v4305
    %4931 = vmatpush1.msra.mxu0 %v4304
    %4932 = vmatprep.subr.mxu0 %v4311
    %4933 = vmatpush1.msra.mxu0 %v4310
    %4934 = vmatprep.subr.mxu0 %v4317
    %4935 = vmatpush1.msra.mxu0 %v4316
    %4936 = vmatprep.subr.mxu0 %v4323
    %4937 = vmatpush1.msra.mxu0 %v4322
    %4938 = vmatprep.subr.mxu0 %v4329
    %4939 = vmatpush1.msra.mxu0 %v4328
    %4940 = vmatprep.subr.mxu0 %v4335
    %4941 = vmatpush1.msra.mxu0 %v4334
    %4942 = vmatprep.subr.mxu0 %v4341
    %4943 = vmatpush1.msra.mxu0 %v4340
    %4944 = vmatprep.subr.mxu0 %v4347
    %4945 = vmatpush1.msra.mxu0 %v4346
    %4946 = vmatprep.subr.mxu0 %v4353
    %4947 = vmatpush1.msra.mxu0 %v4352
    %4948 = vmatprep.subr.mxu0 %v4359
    %4949 = vmatpush1.msra.mxu0 %v4358
    %4950 = vmatprep.subr.mxu0 %v4365
    %4951 = vmatpush1.msra.mxu0 %v4364
    %4952 = vmatprep.subr.mxu0 %v4371
    %4953 = vmatpush1.msra.mxu0 %v4370
    %4954 = vmatprep.subr.mxu0 %v4377
    %4955 = vmatpush1.msra.mxu0 %v4376
    %4956 = vmatprep.subr.mxu0 %v4383
    %4957 = vmatpush1.msra.mxu0 %v4382
    %4958 = vmatprep.mubr.f32.mxu0 %v3999
    %4959 = vmatmul.mubr.f32.gmra.mrb[0].mxu0 %v3998
    %v4960 = vpop.f32.mrb[0].mxu0
    %v4961 = vadd.f32 %v4890, %v4960
    %v4962 = vpop.f32.mrb[0].mxu0
    %v4963 = vadd.f32 %v4892, %v4962
    %4964 = vdwg.mxu0
    %4965 = vmatprep.subr.mxu0 %v4389
    %4966 = vmatpush1.msra.mxu0 %v4388
    %4967 = vmatprep.subr.mxu0 %v4395
    %4968 = vmatpush1.msra.mxu0 %v4394
    %4969 = vmatprep.subr.mxu0 %v4401
    %4970 = vmatpush1.msra.mxu0 %v4400
    %4971 = vmatprep.subr.mxu0 %v4407
    %4972 = vmatpush1.msra.mxu0 %v4406
    %4973 = vmatprep.subr.mxu0 %v4413
    %4974 = vmatpush1.msra.mxu0 %v4412
    %4975 = vmatprep.subr.mxu0 %v4419
    %4976 = vmatpush1.msra.mxu0 %v4418
    %4977 = vmatprep.subr.mxu0 %v4425
    %4978 = vmatpush1.msra.mxu0 %v4424
    %4979 = vmatprep.subr.mxu0 %v4431
    %4980 = vmatpush1.msra.mxu0 %v4430
    %4981 = vmatprep.subr.mxu0 %v4437
    %4982 = vmatpush1.msra.mxu0 %v4436
    %4983 = vmatprep.subr.mxu0 %v4443
    %4984 = vmatpush1.msra.mxu0 %v4442
    %4985 = vmatprep.subr.mxu0 %v4449
    %4986 = vmatpush1.msra.mxu0 %v4448
    %4987 = vmatprep.subr.mxu0 %v4455
    %4988 = vmatpush1.msra.mxu0 %v4454
    %4989 = vmatprep.subr.mxu0 %v4461
    %4990 = vmatpush1.msra.mxu0 %v4460
    %4991 = vmatprep.subr.mxu0 %v4467
    %4992 = vmatpush1.msra.mxu0 %v4466
    %4993 = vmatprep.subr.mxu0 %v4473
    %4994 = vmatpush1.msra.mxu0 %v4472
    %4995 = vmatprep.subr.mxu0 %v4479
    %4996 = vmatpush1.msra.mxu0 %v4478
    %4997 = vmatprep.subr.mxu0 %v4485
    %4998 = vmatpush1.msra.mxu0 %v4484
    %4999 = vmatprep.subr.mxu0 %v4491
    %5000 = vmatpush1.msra.mxu0 %v4490
    %5001 = vmatprep.subr.mxu0 %v4497
    %5002 = vmatpush1.msra.mxu0 %v4496
    %5003 = vmatprep.subr.mxu0 %v4503
    %5004 = vmatpush1.msra.mxu0 %v4502
    %5005 = vmatprep.subr.mxu0 %v4509
    %5006 = vmatpush1.msra.mxu0 %v4508
    %5007 = vmatprep.subr.mxu0 %v4515
    %5008 = vmatpush1.msra.mxu0 %v4514
    %5009 = vmatprep.subr.mxu0 %v4521
    %5010 = vmatpush1.msra.mxu0 %v4520
    %5011 = vmatprep.subr.mxu0 %v4527
    %5012 = vmatpush1.msra.mxu0 %v4526
    %5013 = vmatprep.subr.mxu0 %v4533
    %5014 = vmatpush1.msra.mxu0 %v4532
    %5015 = vmatprep.subr.mxu0 %v4539
    %5016 = vmatpush1.msra.mxu0 %v4538
    %5017 = vmatprep.subr.mxu0 %v4545
    %5018 = vmatpush1.msra.mxu0 %v4544
    %5019 = vmatprep.subr.mxu0 %v4551
    %5020 = vmatpush1.msra.mxu0 %v4550
    %5021 = vmatprep.subr.mxu0 %v4557
    %5022 = vmatpush1.msra.mxu0 %v4556
    %5023 = vmatprep.subr.mxu0 %v4563
    %5024 = vmatpush1.msra.mxu0 %v4562
    %5025 = vmatprep.subr.mxu0 %v4569
    %5026 = vmatpush1.msra.mxu0 %v4568
    %5027 = vmatprep.subr.mxu0 %v4575
    %5028 = vmatpush1.msra.mxu0 %v4574
    %5029 = vmatprep.mubr.f32.mxu0 %v4001
    %5030 = vmatmul.mubr.f32.gmra.mrb[0].mxu0 %v4000
    %v5031 = vpop.f32.mrb[0].mxu0
    %v5032 = vadd.f32 %v4961, %v5031
    %v5033 = vpop.f32.mrb[0].mxu0
    %v5034 = vadd.f32 %v4963, %v5033
    %5035 = vdwg.mxu0
    %5036 = vmatprep.subr.mxu0 %v4007
    %5037 = vmatpush1.msra.mxu0 %v4006
    %5038 = vmatprep.subr.mxu0 %v4013
    %5039 = vmatpush1.msra.mxu0 %v4012
    %5040 = vmatprep.subr.mxu0 %v4019
    %5041 = vmatpush1.msra.mxu0 %v4018
    %5042 = vmatprep.subr.mxu0 %v4025
    %5043 = vmatpush1.msra.mxu0 %v4024
    %5044 = vmatprep.subr.mxu0 %v4031
    %5045 = vmatpush1.msra.mxu0 %v4030
    %5046 = vmatprep.subr.mxu0 %v4037
    %5047 = vmatpush1.msra.mxu0 %v4036
    %5048 = vmatprep.subr.mxu0 %v4043
    %5049 = vmatpush1.msra.mxu0 %v4042
    %5050 = vmatprep.subr.mxu0 %v4049
    %5051 = vmatpush1.msra.mxu0 %v4048
    %5052 = vmatprep.subr.mxu0 %v4055
    %5053 = vmatpush1.msra.mxu0 %v4054
    %5054 = vmatprep.subr.mxu0 %v4061
    %5055 = vmatpush1.msra.mxu0 %v4060
    %5056 = vmatprep.subr.mxu0 %v4067
    %5057 = vmatpush1.msra.mxu0 %v4066
    %5058 = vmatprep.subr.mxu0 %v4073
    %5059 = vmatpush1.msra.mxu0 %v4072
    %5060 = vmatprep.subr.mxu0 %v4079
    %5061 = vmatpush1.msra.mxu0 %v4078
    %5062 = vmatprep.subr.mxu0 %v4085
    %5063 = vmatpush1.msra.mxu0 %v4084
    %5064 = vmatprep.subr.mxu0 %v4091
    %5065 = vmatpush1.msra.mxu0 %v4090
    %5066 = vmatprep.subr.mxu0 %v4097
    %5067 = vmatpush1.msra.mxu0 %v4096
    %5068 = vmatprep.subr.mxu0 %v4103
    %5069 = vmatpush1.msra.mxu0 %v4102
    %5070 = vmatprep.subr.mxu0 %v4109
    %5071 = vmatpush1.msra.mxu0 %v4108
    %5072 = vmatprep.subr.mxu0 %v4115
    %5073 = vmatpush1.msra.mxu0 %v4114
    %5074 = vmatprep.subr.mxu0 %v4121
    %5075 = vmatpush1.msra.mxu0 %v4120
    %5076 = vmatprep.subr.mxu0 %v4127
    %5077 = vmatpush1.msra.mxu0 %v4126
    %5078 = vmatprep.subr.mxu0 %v4133
    %5079 = vmatpush1.msra.mxu0 %v4132
    %5080 = vmatprep.subr.mxu0 %v4139
    %5081 = vmatpush1.msra.mxu0 %v4138
    %5082 = vmatprep.subr.mxu0 %v4145
    %5083 = vmatpush1.msra.mxu0 %v4144
    %5084 = vmatprep.subr.mxu0 %v4151
    %5085 = vmatpush1.msra.mxu0 %v4150
    %5086 = vmatprep.subr.mxu0 %v4157
    %5087 = vmatpush1.msra.mxu0 %v4156
    %5088 = vmatprep.subr.mxu0 %v4163
    %5089 = vmatpush1.msra.mxu0 %v4162
    %5090 = vmatprep.subr.mxu0 %v4169
    %5091 = vmatpush1.msra.mxu0 %v4168
    %5092 = vmatprep.subr.mxu0 %v4175
    %5093 = vmatpush1.msra.mxu0 %v4174
    %5094 = vmatprep.subr.mxu0 %v4181
    %5095 = vmatpush1.msra.mxu0 %v4180
    %5096 = vmatprep.subr.mxu0 %v4187
    %5097 = vmatpush1.msra.mxu0 %v4186
    %5098 = vmatprep.subr.mxu0 %v4193
    %5099 = vmatpush1.msra.mxu0 %v4192
    %5100 = vmatprep.mubr.f32.mxu0 %v3997
    %5101 = vmatmul.mubr.f32.gmra.mrb[0].mxu0 %v3996
    %v5102 = vpop.f32.mrb[0].mxu0
    %v5103 = vadd.f32 %v4599, %v5102
    %v5104 = vpop.f32.mrb[0].mxu0
    %v5105 = vadd.f32 %v4603, %v5104
    %5106 = vdwg.mxu0
    %5107 = vmatprep.subr.mxu0 %v4199
    %5108 = vmatpush1.msra.mxu0 %v4198
    %5109 = vmatprep.subr.mxu0 %v4205
    %5110 = vmatpush1.msra.mxu0 %v4204
    %5111 = vmatprep.subr.mxu0 %v4211
    %5112 = vmatpush1.msra.mxu0 %v4210
    %5113 = vmatprep.subr.mxu0 %v4217
    %5114 = vmatpush1.msra.mxu0 %v4216
    %5115 = vmatprep.subr.mxu0 %v4223
    %5116 = vmatpush1.msra.mxu0 %v4222
    %5117 = vmatprep.subr.mxu0 %v4229
    %5118 = vmatpush1.msra.mxu0 %v4228
    %5119 = vmatprep.subr.mxu0 %v4235
    %5120 = vmatpush1.msra.mxu0 %v4234
    %5121 = vmatprep.subr.mxu0 %v4241
    %5122 = vmatpush1.msra.mxu0 %v4240
    %5123 = vmatprep.subr.mxu0 %v4247
    %5124 = vmatpush1.msra.mxu0 %v4246
    %5125 = vmatprep.subr.mxu0 %v4253
    %5126 = vmatpush1.msra.mxu0 %v4252
    %5127 = vmatprep.subr.mxu0 %v4259
    %5128 = vmatpush1.msra.mxu0 %v4258
    %5129 = vmatprep.subr.mxu0 %v4265
    %5130 = vmatpush1.msra.mxu0 %v4264
    %5131 = vmatprep.subr.mxu0 %v4271
    %5132 = vmatpush1.msra.mxu0 %v4270
    %5133 = vmatprep.subr.mxu0 %v4277
    %5134 = vmatpush1.msra.mxu0 %v4276
    %5135 = vmatprep.subr.mxu0 %v4283
    %5136 = vmatpush1.msra.mxu0 %v4282
    %5137 = vmatprep.subr.mxu0 %v4289
    %5138 = vmatpush1.msra.mxu0 %v4288
    %5139 = vmatprep.subr.mxu0 %v4295
    %5140 = vmatpush1.msra.mxu0 %v4294
    %5141 = vmatprep.subr.mxu0 %v4301
    %5142 = vmatpush1.msra.mxu0 %v4300
    %5143 = vmatprep.subr.mxu0 %v4307
    %5144 = vmatpush1.msra.mxu0 %v4306
    %5145 = vmatprep.subr.mxu0 %v4313
    %5146 = vmatpush1.msra.mxu0 %v4312
    %5147 = vmatprep.subr.mxu0 %v4319
    %5148 = vmatpush1.msra.mxu0 %v4318
    %5149 = vmatprep.subr.mxu0 %v4325
    %5150 = vmatpush1.msra.mxu0 %v4324
    %5151 = vmatprep.subr.mxu0 %v4331
    %5152 = vmatpush1.msra.mxu0 %v4330
    %5153 = vmatprep.subr.mxu0 %v4337
    %5154 = vmatpush1.msra.mxu0 %v4336
    %5155 = vmatprep.subr.mxu0 %v4343
    %5156 = vmatpush1.msra.mxu0 %v4342
    %5157 = vmatprep.subr.mxu0 %v4349
    %5158 = vmatpush1.msra.mxu0 %v4348
    %5159 = vmatprep.subr.mxu0 %v4355
    %5160 = vmatpush1.msra.mxu0 %v4354
    %5161 = vmatprep.subr.mxu0 %v4361
    %5162 = vmatpush1.msra.mxu0 %v4360
    %5163 = vmatprep.subr.mxu0 %v4367
    %5164 = vmatpush1.msra.mxu0 %v4366
    %5165 = vmatprep.subr.mxu0 %v4373
    %5166 = vmatpush1.msra.mxu0 %v4372
    %5167 = vmatprep.subr.mxu0 %v4379
    %5168 = vmatpush1.msra.mxu0 %v4378
    %5169 = vmatprep.subr.mxu0 %v4385
    %5170 = vmatpush1.msra.mxu0 %v4384
    %5171 = vmatprep.mubr.f32.mxu0 %v3999
    %5172 = vmatmul.mubr.f32.gmra.mrb[0].mxu0 %v3998
    %v5173 = vpop.f32.mrb[0].mxu0
    %v5174 = vadd.f32 %v5103, %v5173
    %v5175 = vpop.f32.mrb[0].mxu0
    %v5176 = vadd.f32 %v5105, %v5175
    %5177 = vdwg.mxu0
    %5178 = vmatprep.subr.mxu0 %v4391
    %5179 = vmatpush1.msra.mxu0 %v4390
    %5180 = vmatprep.subr.mxu0 %v4397
    %5181 = vmatpush1.msra.mxu0 %v4396
    %5182 = vmatprep.subr.mxu0 %v4403
    %5183 = vmatpush1.msra.mxu0 %v4402
    %5184 = vmatprep.subr.mxu0 %v4409
    %5185 = vmatpush1.msra.mxu0 %v4408
    %5186 = vmatprep.subr.mxu0 %v4415
    %5187 = vmatpush1.msra.mxu0 %v4414
    %5188 = vmatprep.subr.mxu0 %v4421
    %5189 = vmatpush1.msra.mxu0 %v4420
    %5190 = vmatprep.subr.mxu0 %v4427
    %5191 = vmatpush1.msra.mxu0 %v4426
    %5192 = vmatprep.subr.mxu0 %v4433
    %5193 = vmatpush1.msra.mxu0 %v4432
    %5194 = vmatprep.subr.mxu0 %v4439
    %5195 = vmatpush1.msra.mxu0 %v4438
    %5196 = vmatprep.subr.mxu0 %v4445
    %5197 = vmatpush1.msra.mxu0 %v4444
    %5198 = vmatprep.subr.mxu0 %v4451
    %5199 = vmatpush1.msra.mxu0 %v4450
    %5200 = vmatprep.subr.mxu0 %v4457
    %5201 = vmatpush1.msra.mxu0 %v4456
    %5202 = vmatprep.subr.mxu0 %v4463
    %5203 = vmatpush1.msra.mxu0 %v4462
    %5204 = vmatprep.subr.mxu0 %v4469
    %5205 = vmatpush1.msra.mxu0 %v4468
    %5206 = vmatprep.subr.mxu0 %v4475
    %5207 = vmatpush1.msra.mxu0 %v4474
    %5208 = vmatprep.subr.mxu0 %v4481
    %5209 = vmatpush1.msra.mxu0 %v4480
    %5210 = vmatprep.subr.mxu0 %v4487
    %5211 = vmatpush1.msra.mxu0 %v4486
    %5212 = vmatprep.subr.mxu0 %v4493
    %5213 = vmatpush1.msra.mxu0 %v4492
    %5214 = vmatprep.subr.mxu0 %v4499
    %5215 = vmatpush1.msra.mxu0 %v4498
    %5216 = vmatprep.subr.mxu0 %v4505
    %5217 = vmatpush1.msra.mxu0 %v4504
    %5218 = vmatprep.subr.mxu0 %v4511
    %5219 = vmatpush1.msra.mxu0 %v4510
    %5220 = vmatprep.subr.mxu0 %v4517
    %5221 = vmatpush1.msra.mxu0 %v4516
    %5222 = vmatprep.subr.mxu0 %v4523
    %5223 = vmatpush1.msra.mxu0 %v4522
    %5224 = vmatprep.subr.mxu0 %v4529
    %5225 = vmatpush1.msra.mxu0 %v4528
    %5226 = vmatprep.subr.mxu0 %v4535
    %5227 = vmatpush1.msra.mxu0 %v4534
    %5228 = vmatprep.subr.mxu0 %v4541
    %5229 = vmatpush1.msra.mxu0 %v4540
    %5230 = vmatprep.subr.mxu0 %v4547
    %5231 = vmatpush1.msra.mxu0 %v4546
    %5232 = vmatprep.subr.mxu0 %v4553
    %5233 = vmatpush1.msra.mxu0 %v4552
    %5234 = vmatprep.subr.mxu0 %v4559
    %5235 = vmatpush1.msra.mxu0 %v4558
    %5236 = vmatprep.subr.mxu0 %v4565
    %5237 = vmatpush1.msra.mxu0 %v4564
    %5238 = vmatprep.subr.mxu0 %v4571
    %5239 = vmatpush1.msra.mxu0 %v4570
    %5240 = vmatprep.subr.mxu0 %v4577
    %5241 = vmatpush1.msra.mxu0 %v4576
    %5242 = vmatprep.mubr.f32.mxu0 %v4001
    %5243 = vmatmul.mubr.f32.gmra.mrb[0].mxu0 %v4000
    %v5244 = vpop.f32.mrb[0].mxu0
    %v5245 = vadd.f32 %v5174, %v5244
    %v5246 = vpop.f32.mrb[0].mxu0
    %v5247 = vadd.f32 %v5176, %v5246
    %5248 = vdwg.mxu0
    %vm5249 = vcmp.gt.f32.partialorder %v4819, 0.0
    %vm5250 = vcmp.gt.f32.partialorder %v4821, 0.0
    %vm5251 = vcmp.gt.f32.partialorder %v5032, 0.0
    %vm5252 = vcmp.gt.f32.partialorder %v5034, 0.0
    %vm5253 = vcmp.gt.f32.partialorder %v5245, 0.0
    %vm5254 = vcmp.gt.f32.partialorder %v5247, 0.0
    %v5255 = vsel %vm5249, 1.0, -1.0
    %v5256 = vsel %vm5250, 1.0, -1.0
    %v5257 = vsel %vm5251, 1.0, -1.0
    %v5258 = vsel %vm5252, 1.0, -1.0
    %v5259 = vsel %vm5253, 1.0, -1.0
    %v5260 = vsel %vm5254, 1.0, -1.0
    %v5261 = vld [vmem:[#allocation17] sm:$0xff]
    %v5262 = vld [vmem:[#allocation17 + $0x8] sm:$0xff]
    %v5263 = vld [vmem:[#allocation17 + $0x10] sm:$0xff]
    %v5264 = vld [vmem:[#allocation17 + $0x18] sm:$0xff]
    %v5265 = vld [vmem:[#allocation17 + $0x20] sm:$0xff]
    %v5266 = vld [vmem:[#allocation17 + $0x28] sm:$0xff]
    %v5267 = vld [vmem:[#allocation17 + $0x30] sm:$0xff]
    %v5268 = vld [vmem:[#allocation17 + $0x38] sm:$0xff]
    %v5269 = vld [vmem:[#allocation17 + $0x40] sm:$0xff]
    %v5270 = vld [vmem:[#allocation17 + $0x48] sm:$0xff]
    %v5271 = vld [vmem:[#allocation17 + $0x50] sm:$0xff]
    %v5272 = vld [vmem:[#allocation17 + $0x58] sm:$0xff]
    %v5273 = vld [vmem:[#allocation17 + $0x60] sm:$0xff]
    %v5274 = vld [vmem:[#allocation17 + $0x68] sm:$0xff]
    %v5275 = vld [vmem:[#allocation17 + $0x70] sm:$0xff]
    %v5276 = vld [vmem:[#allocation17 + $0x78] sm:$0xff]
    %v5277 = vld [vmem:[#allocation17 + $0x80] sm:$0xff]
    %v5278 = vld [vmem:[#allocation17 + $0x88] sm:$0xff]
    %v5279 = vld [vmem:[#allocation17 + $0x90] sm:$0xff]
    %v5280 = vld [vmem:[#allocation17 + $0x98] sm:$0xff]
    %v5281 = vld [vmem:[#allocation17 + $0xa0] sm:$0xff]
    %v5282 = vld [vmem:[#allocation17 + $0xa8] sm:$0xff]
    %v5283 = vld [vmem:[#allocation17 + $0xb0] sm:$0xff]
    %v5284 = vld [vmem:[#allocation17 + $0xb8] sm:$0xff]
    %v5285 = vld [vmem:[#allocation17 + $0xc0] sm:$0xff]
    %v5286 = vld [vmem:[#allocation17 + $0xc8] sm:$0xff]
    %v5287 = vld [vmem:[#allocation17 + $0xd0] sm:$0xff]
    %v5288 = vld [vmem:[#allocation17 + $0xd8] sm:$0xff]
    %v5289 = vld [vmem:[#allocation17 + $0xe0] sm:$0xff]
    %v5290 = vld [vmem:[#allocation17 + $0xe8] sm:$0xff]
    %v5291 = vld [vmem:[#allocation17 + $0xf0] sm:$0xff]
    %v5292 = vld [vmem:[#allocation17 + $0xf8] sm:$0xff]
    %v5293 = vld [vmem:[#allocation17 + $0x100] sm:$0xff]
    %v5294 = vld [vmem:[#allocation17 + $0x108] sm:$0xff]
    %v5295 = vld [vmem:[#allocation17 + $0x110] sm:$0xff]
    %v5296 = vld [vmem:[#allocation17 + $0x118] sm:$0xff]
    %v5297 = vld [vmem:[#allocation17 + $0x120] sm:$0xff]
    %v5298 = vld [vmem:[#allocation17 + $0x128] sm:$0xff]
    %v5299 = vld [vmem:[#allocation17 + $0x130] sm:$0xff]
    %v5300 = vld [vmem:[#allocation17 + $0x138] sm:$0xff]
    %v5301 = vld [vmem:[#allocation17 + $0x140] sm:$0xff]
    %v5302 = vld [vmem:[#allocation17 + $0x148] sm:$0xff]
    %v5303 = vld [vmem:[#allocation17 + $0x150] sm:$0xff]
    %v5304 = vld [vmem:[#allocation17 + $0x158] sm:$0xff]
    %v5305 = vld [vmem:[#allocation17 + $0x160] sm:$0xff]
    %v5306 = vld [vmem:[#allocation17 + $0x168] sm:$0xff]
    %v5307 = vld [vmem:[#allocation17 + $0x170] sm:$0xff]
    %v5308 = vld [vmem:[#allocation17 + $0x178] sm:$0xff]
    %v5309 = vld [vmem:[#allocation17 + $0x180] sm:$0xff]
    %v5310 = vld [vmem:[#allocation17 + $0x188] sm:$0xff]
    %v5311 = vld [vmem:[#allocation17 + $0x190] sm:$0xff]
    %v5312 = vld [vmem:[#allocation17 + $0x198] sm:$0xff]
    %v5313 = vld [vmem:[#allocation17 + $0x1a0] sm:$0xff]
    %v5314 = vld [vmem:[#allocation17 + $0x1a8] sm:$0xff]
    %v5315 = vld [vmem:[#allocation17 + $0x1b0] sm:$0xff]
    %v5316 = vld [vmem:[#allocation17 + $0x1b8] sm:$0xff]
    %v5317 = vld [vmem:[#allocation17 + $0x1c0] sm:$0xff]
    %v5318 = vld [vmem:[#allocation17 + $0x1c8] sm:$0xff]
    %v5319 = vld [vmem:[#allocation17 + $0x1d0] sm:$0xff]
    %v5320 = vld [vmem:[#allocation17 + $0x1d8] sm:$0xff]
    %v5321 = vld [vmem:[#allocation17 + $0x1e0] sm:$0xff]
    %v5322 = vld [vmem:[#allocation17 + $0x1e8] sm:$0xff]
    %v5323 = vld [vmem:[#allocation17 + $0x1f0] sm:$0xff]
    %v5324 = vld [vmem:[#allocation17 + $0x1f8] sm:$0xff]
    %v5325 = vld [vmem:[#allocation17 + $0x200] sm:$0xff]
    %v5326 = vld [vmem:[#allocation17 + $0x208] sm:$0xff]
    %v5327 = vld [vmem:[#allocation17 + $0x210] sm:$0xff]
    %v5328 = vld [vmem:[#allocation17 + $0x218] sm:$0xff]
    %v5329 = vld [vmem:[#allocation17 + $0x220] sm:$0xff]
    %v5330 = vld [vmem:[#allocation17 + $0x228] sm:$0xff]
    %v5331 = vld [vmem:[#allocation17 + $0x230] sm:$0xff]
    %v5332 = vld [vmem:[#allocation17 + $0x238] sm:$0xff]
    %v5333 = vld [vmem:[#allocation17 + $0x240] sm:$0xff]
    %v5334 = vld [vmem:[#allocation17 + $0x248] sm:$0xff]
    %v5335 = vld [vmem:[#allocation17 + $0x250] sm:$0xff]
    %v5336 = vld [vmem:[#allocation17 + $0x258] sm:$0xff]
    %v5337 = vld [vmem:[#allocation17 + $0x260] sm:$0xff]
    %v5338 = vld [vmem:[#allocation17 + $0x268] sm:$0xff]
    %v5339 = vld [vmem:[#allocation17 + $0x270] sm:$0xff]
    %v5340 = vld [vmem:[#allocation17 + $0x278] sm:$0xff]
    %v5341 = vld [vmem:[#allocation17 + $0x280] sm:$0xff]
    %v5342 = vld [vmem:[#allocation17 + $0x288] sm:$0xff]
    %v5343 = vld [vmem:[#allocation17 + $0x290] sm:$0xff]
    %v5344 = vld [vmem:[#allocation17 + $0x298] sm:$0xff]
    %v5345 = vld [vmem:[#allocation17 + $0x2a0] sm:$0xff]
    %v5346 = vld [vmem:[#allocation17 + $0x2a8] sm:$0xff]
    %v5347 = vld [vmem:[#allocation17 + $0x2b0] sm:$0xff]
    %v5348 = vld [vmem:[#allocation17 + $0x2b8] sm:$0xff]
    %v5349 = vld [vmem:[#allocation17 + $0x2c0] sm:$0xff]
    %v5350 = vld [vmem:[#allocation17 + $0x2c8] sm:$0xff]
    %v5351 = vld [vmem:[#allocation17 + $0x2d0] sm:$0xff]
    %v5352 = vld [vmem:[#allocation17 + $0x2d8] sm:$0xff]
    %v5353 = vld [vmem:[#allocation17 + $0x2e0] sm:$0xff]
    %v5354 = vld [vmem:[#allocation17 + $0x2e8] sm:$0xff]
    %v5355 = vld [vmem:[#allocation17 + $0x2f0] sm:$0xff]
    %v5356 = vld [vmem:[#allocation17 + $0x2f8] sm:$0xff]
    %v5357 = vld [vmem:[#allocation17 + $0x300] sm:$0xff]
    %v5358 = vld [vmem:[#allocation17 + $0x308] sm:$0xff]
    %v5359 = vld [vmem:[#allocation17 + $0x310] sm:$0xff]
    %v5360 = vld [vmem:[#allocation17 + $0x318] sm:$0xff]
    %v5361 = vld [vmem:[#allocation17 + $0x320] sm:$0xff]
    %v5362 = vld [vmem:[#allocation17 + $0x328] sm:$0xff]
    %v5363 = vld [vmem:[#allocation17 + $0x330] sm:$0xff]
    %v5364 = vld [vmem:[#allocation17 + $0x338] sm:$0xff]
    %v5365 = vld [vmem:[#allocation17 + $0x340] sm:$0xff]
    %v5366 = vld [vmem:[#allocation17 + $0x348] sm:$0xff]
    %v5367 = vld [vmem:[#allocation17 + $0x350] sm:$0xff]
    %v5368 = vld [vmem:[#allocation17 + $0x358] sm:$0xff]
    %v5369 = vld [vmem:[#allocation17 + $0x360] sm:$0xff]
    %v5370 = vld [vmem:[#allocation17 + $0x368] sm:$0xff]
    %v5371 = vld [vmem:[#allocation17 + $0x370] sm:$0xff]
    %v5372 = vld [vmem:[#allocation17 + $0x378] sm:$0xff]
    %v5373 = vld [vmem:[#allocation17 + $0x380] sm:$0xff]
    %v5374 = vld [vmem:[#allocation17 + $0x388] sm:$0xff]
    %v5375 = vld [vmem:[#allocation17 + $0x390] sm:$0xff]
    %v5376 = vld [vmem:[#allocation17 + $0x398] sm:$0xff]
    %v5377 = vld [vmem:[#allocation17 + $0x3a0] sm:$0xff]
    %v5378 = vld [vmem:[#allocation17 + $0x3a8] sm:$0xff]
    %v5379 = vld [vmem:[#allocation17 + $0x3b0] sm:$0xff]
    %v5380 = vld [vmem:[#allocation17 + $0x3b8] sm:$0xff]
    %v5381 = vld [vmem:[#allocation17 + $0x3c0] sm:$0xff]
    %v5382 = vld [vmem:[#allocation17 + $0x3c8] sm:$0xff]
    %v5383 = vld [vmem:[#allocation17 + $0x3d0] sm:$0xff]
    %v5384 = vld [vmem:[#allocation17 + $0x3d8] sm:$0xff]
    %v5385 = vld [vmem:[#allocation17 + $0x3e0] sm:$0xff]
    %v5386 = vld [vmem:[#allocation17 + $0x3e8] sm:$0xff]
    %v5387 = vld [vmem:[#allocation17 + $0x3f0] sm:$0xff]
    %v5388 = vld [vmem:[#allocation17 + $0x3f8] sm:$0xff]
    %v5389 = vld [vmem:[#allocation17 + $0x400] sm:$0xff]
    %v5390 = vld [vmem:[#allocation17 + $0x408] sm:$0xff]
    %v5391 = vld [vmem:[#allocation17 + $0x410] sm:$0xff]
    %v5392 = vld [vmem:[#allocation17 + $0x418] sm:$0xff]
    %v5393 = vld [vmem:[#allocation17 + $0x420] sm:$0xff]
    %v5394 = vld [vmem:[#allocation17 + $0x428] sm:$0xff]
    %v5395 = vld [vmem:[#allocation17 + $0x430] sm:$0xff]
    %v5396 = vld [vmem:[#allocation17 + $0x438] sm:$0xff]
    %v5397 = vld [vmem:[#allocation17 + $0x440] sm:$0xff]
    %v5398 = vld [vmem:[#allocation17 + $0x448] sm:$0xff]
    %v5399 = vld [vmem:[#allocation17 + $0x450] sm:$0xff]
    %v5400 = vld [vmem:[#allocation17 + $0x458] sm:$0xff]
    %v5401 = vld [vmem:[#allocation17 + $0x460] sm:$0xff]
    %v5402 = vld [vmem:[#allocation17 + $0x468] sm:$0xff]
    %v5403 = vld [vmem:[#allocation17 + $0x470] sm:$0xff]
    %v5404 = vld [vmem:[#allocation17 + $0x478] sm:$0xff]
    %v5405 = vld [vmem:[#allocation17 + $0x480] sm:$0xff]
    %v5406 = vld [vmem:[#allocation17 + $0x488] sm:$0xff]
    %v5407 = vld [vmem:[#allocation17 + $0x490] sm:$0xff]
    %v5408 = vld [vmem:[#allocation17 + $0x498] sm:$0xff]
    %v5409 = vld [vmem:[#allocation17 + $0x4a0] sm:$0xff]
    %v5410 = vld [vmem:[#allocation17 + $0x4a8] sm:$0xff]
    %v5411 = vld [vmem:[#allocation17 + $0x4b0] sm:$0xff]
    %v5412 = vld [vmem:[#allocation17 + $0x4b8] sm:$0xff]
    %v5413 = vld [vmem:[#allocation17 + $0x4c0] sm:$0xff]
    %v5414 = vld [vmem:[#allocation17 + $0x4c8] sm:$0xff]
    %v5415 = vld [vmem:[#allocation17 + $0x4d0] sm:$0xff]
    %v5416 = vld [vmem:[#allocation17 + $0x4d8] sm:$0xff]
    %v5417 = vld [vmem:[#allocation17 + $0x4e0] sm:$0xff]
    %v5418 = vld [vmem:[#allocation17 + $0x4e8] sm:$0xff]
    %v5419 = vld [vmem:[#allocation17 + $0x4f0] sm:$0xff]
    %v5420 = vld [vmem:[#allocation17 + $0x4f8] sm:$0xff]
    %v5421 = vld [vmem:[#allocation17 + $0x500] sm:$0xff]
    %v5422 = vld [vmem:[#allocation17 + $0x508] sm:$0xff]
    %v5423 = vld [vmem:[#allocation17 + $0x510] sm:$0xff]
    %v5424 = vld [vmem:[#allocation17 + $0x518] sm:$0xff]
    %v5425 = vld [vmem:[#allocation17 + $0x520] sm:$0xff]
    %v5426 = vld [vmem:[#allocation17 + $0x528] sm:$0xff]
    %v5427 = vld [vmem:[#allocation17 + $0x530] sm:$0xff]
    %v5428 = vld [vmem:[#allocation17 + $0x538] sm:$0xff]
    %v5429 = vld [vmem:[#allocation17 + $0x540] sm:$0xff]
    %v5430 = vld [vmem:[#allocation17 + $0x548] sm:$0xff]
    %v5431 = vld [vmem:[#allocation17 + $0x550] sm:$0xff]
    %v5432 = vld [vmem:[#allocation17 + $0x558] sm:$0xff]
    %v5433 = vld [vmem:[#allocation17 + $0x560] sm:$0xff]
    %v5434 = vld [vmem:[#allocation17 + $0x568] sm:$0xff]
    %v5435 = vld [vmem:[#allocation17 + $0x570] sm:$0xff]
    %v5436 = vld [vmem:[#allocation17 + $0x578] sm:$0xff]
    %v5437 = vld [vmem:[#allocation17 + $0x580] sm:$0xff]
    %v5438 = vld [vmem:[#allocation17 + $0x588] sm:$0xff]
    %v5439 = vld [vmem:[#allocation17 + $0x590] sm:$0xff]
    %v5440 = vld [vmem:[#allocation17 + $0x598] sm:$0xff]
    %v5441 = vld [vmem:[#allocation17 + $0x5a0] sm:$0xff]
    %v5442 = vld [vmem:[#allocation17 + $0x5a8] sm:$0xff]
    %v5443 = vld [vmem:[#allocation17 + $0x5b0] sm:$0xff]
    %v5444 = vld [vmem:[#allocation17 + $0x5b8] sm:$0xff]
    %v5445 = vld [vmem:[#allocation17 + $0x5c0] sm:$0xff]
    %v5446 = vld [vmem:[#allocation17 + $0x5c8] sm:$0xff]
    %v5447 = vld [vmem:[#allocation17 + $0x5d0] sm:$0xff]
    %v5448 = vld [vmem:[#allocation17 + $0x5d8] sm:$0xff]
    %v5449 = vld [vmem:[#allocation17 + $0x5e0] sm:$0xff]
    %v5450 = vld [vmem:[#allocation17 + $0x5e8] sm:$0xff]
    %v5451 = vld [vmem:[#allocation17 + $0x5f0] sm:$0xff]
    %v5452 = vld [vmem:[#allocation17 + $0x5f8] sm:$0xff]
    %v5453 = vld [vmem:[#allocation17 + $0x600] sm:$0xff]
    %v5454 = vld [vmem:[#allocation17 + $0x608] sm:$0xff]
    %v5455 = vld [vmem:[#allocation17 + $0x610] sm:$0xff]
    %v5456 = vld [vmem:[#allocation17 + $0x618] sm:$0xff]
    %v5457 = vld [vmem:[#allocation17 + $0x620] sm:$0xff]
    %v5458 = vld [vmem:[#allocation17 + $0x628] sm:$0xff]
    %v5459 = vld [vmem:[#allocation17 + $0x630] sm:$0xff]
    %v5460 = vld [vmem:[#allocation17 + $0x638] sm:$0xff]
    %v5461 = vld [vmem:[#allocation17 + $0x640] sm:$0xff]
    %v5462 = vld [vmem:[#allocation17 + $0x648] sm:$0xff]
    %v5463 = vld [vmem:[#allocation17 + $0x650] sm:$0xff]
    %v5464 = vld [vmem:[#allocation17 + $0x658] sm:$0xff]
    %v5465 = vld [vmem:[#allocation17 + $0x660] sm:$0xff]
    %v5466 = vld [vmem:[#allocation17 + $0x668] sm:$0xff]
    %v5467 = vld [vmem:[#allocation17 + $0x670] sm:$0xff]
    %v5468 = vld [vmem:[#allocation17 + $0x678] sm:$0xff]
    %v5469 = vld [vmem:[#allocation17 + $0x680] sm:$0xff]
    %v5470 = vld [vmem:[#allocation17 + $0x688] sm:$0xff]
    %v5471 = vld [vmem:[#allocation17 + $0x690] sm:$0xff]
    %v5472 = vld [vmem:[#allocation17 + $0x698] sm:$0xff]
    %v5473 = vld [vmem:[#allocation17 + $0x6a0] sm:$0xff]
    %v5474 = vld [vmem:[#allocation17 + $0x6a8] sm:$0xff]
    %v5475 = vld [vmem:[#allocation17 + $0x6b0] sm:$0xff]
    %v5476 = vld [vmem:[#allocation17 + $0x6b8] sm:$0xff]
    %v5477 = vld [vmem:[#allocation17 + $0x6c0] sm:$0xff]
    %v5478 = vld [vmem:[#allocation17 + $0x6c8] sm:$0xff]
    %v5479 = vld [vmem:[#allocation17 + $0x6d0] sm:$0xff]
    %v5480 = vld [vmem:[#allocation17 + $0x6d8] sm:$0xff]
    %v5481 = vld [vmem:[#allocation17 + $0x6e0] sm:$0xff]
    %v5482 = vld [vmem:[#allocation17 + $0x6e8] sm:$0xff]
    %v5483 = vld [vmem:[#allocation17 + $0x6f0] sm:$0xff]
    %v5484 = vld [vmem:[#allocation17 + $0x6f8] sm:$0xff]
    %v5485 = vld [vmem:[#allocation17 + $0x700] sm:$0xff]
    %v5486 = vld [vmem:[#allocation17 + $0x708] sm:$0xff]
    %v5487 = vld [vmem:[#allocation17 + $0x710] sm:$0xff]
    %v5488 = vld [vmem:[#allocation17 + $0x718] sm:$0xff]
    %v5489 = vld [vmem:[#allocation17 + $0x720] sm:$0xff]
    %v5490 = vld [vmem:[#allocation17 + $0x728] sm:$0xff]
    %v5491 = vld [vmem:[#allocation17 + $0x730] sm:$0xff]
    %v5492 = vld [vmem:[#allocation17 + $0x738] sm:$0xff]
    %v5493 = vld [vmem:[#allocation17 + $0x740] sm:$0xff]
    %v5494 = vld [vmem:[#allocation17 + $0x748] sm:$0xff]
    %v5495 = vld [vmem:[#allocation17 + $0x750] sm:$0xff]
    %v5496 = vld [vmem:[#allocation17 + $0x758] sm:$0xff]
    %v5497 = vld [vmem:[#allocation17 + $0x760] sm:$0xff]
    %v5498 = vld [vmem:[#allocation17 + $0x768] sm:$0xff]
    %v5499 = vld [vmem:[#allocation17 + $0x770] sm:$0xff]
    %v5500 = vld [vmem:[#allocation17 + $0x778] sm:$0xff]
    %v5501 = vld [vmem:[#allocation17 + $0x780] sm:$0xff]
    %v5502 = vld [vmem:[#allocation17 + $0x788] sm:$0xff]
    %v5503 = vld [vmem:[#allocation17 + $0x790] sm:$0xff]
    %v5504 = vld [vmem:[#allocation17 + $0x798] sm:$0xff]
    %v5505 = vld [vmem:[#allocation17 + $0x7a0] sm:$0xff]
    %v5506 = vld [vmem:[#allocation17 + $0x7a8] sm:$0xff]
    %v5507 = vld [vmem:[#allocation17 + $0x7b0] sm:$0xff]
    %v5508 = vld [vmem:[#allocation17 + $0x7b8] sm:$0xff]
    %v5509 = vld [vmem:[#allocation17 + $0x7c0] sm:$0xff]
    %v5510 = vld [vmem:[#allocation17 + $0x7c8] sm:$0xff]
    %v5511 = vld [vmem:[#allocation17 + $0x7d0] sm:$0xff]
    %v5512 = vld [vmem:[#allocation17 + $0x7d8] sm:$0xff]
    %v5513 = vld [vmem:[#allocation17 + $0x7e0] sm:$0xff]
    %v5514 = vld [vmem:[#allocation17 + $0x7e8] sm:$0xff]
    %v5515 = vld [vmem:[#allocation17 + $0x7f0] sm:$0xff]
    %v5516 = vld [vmem:[#allocation17 + $0x7f8] sm:$0xff]
    %v5517 = vld [vmem:[#allocation17 + $0x800] sm:$0xff]
    %v5518 = vld [vmem:[#allocation17 + $0x808] sm:$0xff]
    %v5519 = vld [vmem:[#allocation17 + $0x810] sm:$0xff]
    %v5520 = vld [vmem:[#allocation17 + $0x818] sm:$0xff]
    %v5521 = vld [vmem:[#allocation17 + $0x820] sm:$0xff]
    %v5522 = vld [vmem:[#allocation17 + $0x828] sm:$0xff]
    %v5523 = vld [vmem:[#allocation17 + $0x830] sm:$0xff]
    %v5524 = vld [vmem:[#allocation17 + $0x838] sm:$0xff]
    %v5525 = vld [vmem:[#allocation17 + $0x840] sm:$0xff]
    %v5526 = vld [vmem:[#allocation17 + $0x848] sm:$0xff]
    %v5527 = vld [vmem:[#allocation17 + $0x850] sm:$0xff]
    %v5528 = vld [vmem:[#allocation17 + $0x858] sm:$0xff]
    %v5529 = vld [vmem:[#allocation17 + $0x860] sm:$0xff]
    %v5530 = vld [vmem:[#allocation17 + $0x868] sm:$0xff]
    %v5531 = vld [vmem:[#allocation17 + $0x870] sm:$0xff]
    %v5532 = vld [vmem:[#allocation17 + $0x878] sm:$0xff]
    %v5533 = vld [vmem:[#allocation17 + $0x880] sm:$0xff]
    %v5534 = vld [vmem:[#allocation17 + $0x888] sm:$0xff]
    %v5535 = vld [vmem:[#allocation17 + $0x890] sm:$0xff]
    %v5536 = vld [vmem:[#allocation17 + $0x898] sm:$0xff]
    %v5537 = vld [vmem:[#allocation17 + $0x8a0] sm:$0xff]
    %v5538 = vld [vmem:[#allocation17 + $0x8a8] sm:$0xff]
    %v5539 = vld [vmem:[#allocation17 + $0x8b0] sm:$0xff]
    %v5540 = vld [vmem:[#allocation17 + $0x8b8] sm:$0xff]
    %v5541 = vld [vmem:[#allocation17 + $0x8c0] sm:$0xff]
    %v5542 = vld [vmem:[#allocation17 + $0x8c8] sm:$0xff]
    %v5543 = vld [vmem:[#allocation17 + $0x8d0] sm:$0xff]
    %v5544 = vld [vmem:[#allocation17 + $0x8d8] sm:$0xff]
    %v5545 = vld [vmem:[#allocation17 + $0x8e0] sm:$0xff]
    %v5546 = vld [vmem:[#allocation17 + $0x8e8] sm:$0xff]
    %v5547 = vld [vmem:[#allocation17 + $0x8f0] sm:$0xff]
    %v5548 = vld [vmem:[#allocation17 + $0x8f8] sm:$0xff]
    %v5549 = vld [vmem:[#allocation17 + $0x900] sm:$0xff]
    %v5550 = vld [vmem:[#allocation17 + $0x908] sm:$0xff]
    %v5551 = vld [vmem:[#allocation17 + $0x910] sm:$0xff]
    %v5552 = vld [vmem:[#allocation17 + $0x918] sm:$0xff]
    %v5553 = vld [vmem:[#allocation17 + $0x920] sm:$0xff]
    %v5554 = vld [vmem:[#allocation17 + $0x928] sm:$0xff]
    %v5555 = vld [vmem:[#allocation17 + $0x930] sm:$0xff]
    %v5556 = vld [vmem:[#allocation17 + $0x938] sm:$0xff]
    %v5557 = vld [vmem:[#allocation17 + $0x940] sm:$0xff]
    %v5558 = vld [vmem:[#allocation17 + $0x948] sm:$0xff]
    %v5559 = vld [vmem:[#allocation17 + $0x950] sm:$0xff]
    %v5560 = vld [vmem:[#allocation17 + $0x958] sm:$0xff]
    %v5561 = vld [vmem:[#allocation17 + $0x960] sm:$0xff]
    %v5562 = vld [vmem:[#allocation17 + $0x968] sm:$0xff]
    %v5563 = vld [vmem:[#allocation17 + $0x970] sm:$0xff]
    %v5564 = vld [vmem:[#allocation17 + $0x978] sm:$0xff]
    %v5565 = vld [vmem:[#allocation17 + $0x980] sm:$0xff]
    %v5566 = vld [vmem:[#allocation17 + $0x988] sm:$0xff]
    %v5567 = vld [vmem:[#allocation17 + $0x990] sm:$0xff]
    %v5568 = vld [vmem:[#allocation17 + $0x998] sm:$0xff]
    %v5569 = vld [vmem:[#allocation17 + $0x9a0] sm:$0xff]
    %v5570 = vld [vmem:[#allocation17 + $0x9a8] sm:$0xff]
    %v5571 = vld [vmem:[#allocation17 + $0x9b0] sm:$0xff]
    %v5572 = vld [vmem:[#allocation17 + $0x9b8] sm:$0xff]
    %v5573 = vld [vmem:[#allocation17 + $0x9c0] sm:$0xff]
    %v5574 = vld [vmem:[#allocation17 + $0x9c8] sm:$0xff]
    %v5575 = vld [vmem:[#allocation17 + $0x9d0] sm:$0xff]
    %v5576 = vld [vmem:[#allocation17 + $0x9d8] sm:$0xff]
    %v5577 = vld [vmem:[#allocation17 + $0x9e0] sm:$0xff]
    %v5578 = vld [vmem:[#allocation17 + $0x9e8] sm:$0xff]
    %v5579 = vld [vmem:[#allocation17 + $0x9f0] sm:$0xff]
    %v5580 = vld [vmem:[#allocation17 + $0x9f8] sm:$0xff]
    %v5581 = vld [vmem:[#allocation17 + $0xa00] sm:$0xff]
    %v5582 = vld [vmem:[#allocation17 + $0xa08] sm:$0xff]
    %v5583 = vld [vmem:[#allocation17 + $0xa10] sm:$0xff]
    %v5584 = vld [vmem:[#allocation17 + $0xa18] sm:$0xff]
    %v5585 = vld [vmem:[#allocation17 + $0xa20] sm:$0xff]
    %v5586 = vld [vmem:[#allocation17 + $0xa28] sm:$0xff]
    %v5587 = vld [vmem:[#allocation17 + $0xa30] sm:$0xff]
    %v5588 = vld [vmem:[#allocation17 + $0xa38] sm:$0xff]
    %v5589 = vld [vmem:[#allocation17 + $0xa40] sm:$0xff]
    %v5590 = vld [vmem:[#allocation17 + $0xa48] sm:$0xff]
    %v5591 = vld [vmem:[#allocation17 + $0xa50] sm:$0xff]
    %v5592 = vld [vmem:[#allocation17 + $0xa58] sm:$0xff]
    %v5593 = vld [vmem:[#allocation17 + $0xa60] sm:$0xff]
    %v5594 = vld [vmem:[#allocation17 + $0xa68] sm:$0xff]
    %v5595 = vld [vmem:[#allocation17 + $0xa70] sm:$0xff]
    %v5596 = vld [vmem:[#allocation17 + $0xa78] sm:$0xff]
    %v5597 = vld [vmem:[#allocation17 + $0xa80] sm:$0xff]
    %v5598 = vld [vmem:[#allocation17 + $0xa88] sm:$0xff]
    %v5599 = vld [vmem:[#allocation17 + $0xa90] sm:$0xff]
    %v5600 = vld [vmem:[#allocation17 + $0xa98] sm:$0xff]
    %v5601 = vld [vmem:[#allocation17 + $0xaa0] sm:$0xff]
    %v5602 = vld [vmem:[#allocation17 + $0xaa8] sm:$0xff]
    %v5603 = vld [vmem:[#allocation17 + $0xab0] sm:$0xff]
    %v5604 = vld [vmem:[#allocation17 + $0xab8] sm:$0xff]
    %v5605 = vld [vmem:[#allocation17 + $0xac0] sm:$0xff]
    %v5606 = vld [vmem:[#allocation17 + $0xac8] sm:$0xff]
    %v5607 = vld [vmem:[#allocation17 + $0xad0] sm:$0xff]
    %v5608 = vld [vmem:[#allocation17 + $0xad8] sm:$0xff]
    %v5609 = vld [vmem:[#allocation17 + $0xae0] sm:$0xff]
    %v5610 = vld [vmem:[#allocation17 + $0xae8] sm:$0xff]
    %v5611 = vld [vmem:[#allocation17 + $0xaf0] sm:$0xff]
    %v5612 = vld [vmem:[#allocation17 + $0xaf8] sm:$0xff]
    %v5613 = vld [vmem:[#allocation17 + $0xb00] sm:$0xff]
    %v5614 = vld [vmem:[#allocation17 + $0xb08] sm:$0xff]
    %v5615 = vld [vmem:[#allocation17 + $0xb10] sm:$0xff]
    %v5616 = vld [vmem:[#allocation17 + $0xb18] sm:$0xff]
    %v5617 = vld [vmem:[#allocation17 + $0xb20] sm:$0xff]
    %v5618 = vld [vmem:[#allocation17 + $0xb28] sm:$0xff]
    %v5619 = vld [vmem:[#allocation17 + $0xb30] sm:$0xff]
    %v5620 = vld [vmem:[#allocation17 + $0xb38] sm:$0xff]
    %v5621 = vld [vmem:[#allocation17 + $0xb40] sm:$0xff]
    %v5622 = vld [vmem:[#allocation17 + $0xb48] sm:$0xff]
    %v5623 = vld [vmem:[#allocation17 + $0xb50] sm:$0xff]
    %v5624 = vld [vmem:[#allocation17 + $0xb58] sm:$0xff]
    %v5625 = vld [vmem:[#allocation17 + $0xb60] sm:$0xff]
    %v5626 = vld [vmem:[#allocation17 + $0xb68] sm:$0xff]
    %v5627 = vld [vmem:[#allocation17 + $0xb70] sm:$0xff]
    %v5628 = vld [vmem:[#allocation17 + $0xb78] sm:$0xff]
    %v5629 = vld [vmem:[#allocation17 + $0xb80] sm:$0xff]
    %v5630 = vld [vmem:[#allocation17 + $0xb88] sm:$0xff]
    %v5631 = vld [vmem:[#allocation17 + $0xb90] sm:$0xff]
    %v5632 = vld [vmem:[#allocation17 + $0xb98] sm:$0xff]
    %v5633 = vld [vmem:[#allocation17 + $0xba0] sm:$0xff]
    %v5634 = vld [vmem:[#allocation17 + $0xba8] sm:$0xff]
    %v5635 = vld [vmem:[#allocation17 + $0xbb0] sm:$0xff]
    %v5636 = vld [vmem:[#allocation17 + $0xbb8] sm:$0xff]
    %v5637 = vld [vmem:[#allocation17 + $0xbc0] sm:$0xff]
    %v5638 = vld [vmem:[#allocation17 + $0xbc8] sm:$0xff]
    %v5639 = vld [vmem:[#allocation17 + $0xbd0] sm:$0xff]
    %v5640 = vld [vmem:[#allocation17 + $0xbd8] sm:$0xff]
    %v5641 = vld [vmem:[#allocation17 + $0xbe0] sm:$0xff]
    %v5642 = vld [vmem:[#allocation17 + $0xbe8] sm:$0xff]
    %v5643 = vld [vmem:[#allocation17 + $0xbf0] sm:$0xff]
    %v5644 = vld [vmem:[#allocation17 + $0xbf8] sm:$0xff]
    %v5645 = vld [vmem:[#allocation19] sm:$0xf]
    %v5647 = vlaneseq
    %v5648 = vshrl.u32 %v5647, 7
    %v5649 = vsub.s32 0, %v5648
    %v5650 = vrot.slane %v5645, %v5649
    %v5651 = vlaneseq
    %v5652 = vshrl.u32 %v5651, 7
    %v5653 = vsub.s32 1, %v5652
    %v5654 = vrot.slane %v5645, %v5653
    %v5655 = vlaneseq
    %v5656 = vshrl.u32 %v5655, 7
    %v5657 = vsub.s32 2, %v5656
    %v5658 = vrot.slane %v5645, %v5657
    %v5659 = vlaneseq
    %v5660 = vshrl.u32 %v5659, 7
    %v5661 = vsub.s32 3, %v5660
    %v5662 = vrot.slane %v5645, %v5661
    %5667 = vmatprep.subr.mxu0 %v5262
    %5668 = vmatpush1.msra.mxu0 %v5261
    %5669 = vmatprep.subr.mxu0 %v5266
    %5670 = vmatpush1.msra.mxu0 %v5265
    %5671 = vmatprep.subr.mxu0 %v5270
    %5672 = vmatpush1.msra.mxu0 %v5269
    %5673 = vmatprep.subr.mxu0 %v5274
    %5674 = vmatpush1.msra.mxu0 %v5273
    %5675 = vmatprep.subr.mxu0 %v5278
    %5676 = vmatpush1.msra.mxu0 %v5277
    %5677 = vmatprep.subr.mxu0 %v5282
    %5678 = vmatpush1.msra.mxu0 %v5281
    %5679 = vmatprep.subr.mxu0 %v5286
    %5680 = vmatpush1.msra.mxu0 %v5285
    %5681 = vmatprep.subr.mxu0 %v5290
    %5682 = vmatpush1.msra.mxu0 %v5289
    %5683 = vmatprep.subr.mxu0 %v5294
    %5684 = vmatpush1.msra.mxu0 %v5293
    %5685 = vmatprep.subr.mxu0 %v5298
    %5686 = vmatpush1.msra.mxu0 %v5297
    %5687 = vmatprep.subr.mxu0 %v5302
    %5688 = vmatpush1.msra.mxu0 %v5301
    %5689 = vmatprep.subr.mxu0 %v5306
    %5690 = vmatpush1.msra.mxu0 %v5305
    %5691 = vmatprep.subr.mxu0 %v5310
    %5692 = vmatpush1.msra.mxu0 %v5309
    %5693 = vmatprep.subr.mxu0 %v5314
    %5694 = vmatpush1.msra.mxu0 %v5313
    %5695 = vmatprep.subr.mxu0 %v5318
    %5696 = vmatpush1.msra.mxu0 %v5317
    %5697 = vmatprep.subr.mxu0 %v5322
    %5698 = vmatpush1.msra.mxu0 %v5321
    %5699 = vmatprep.subr.mxu0 %v5326
    %5700 = vmatpush1.msra.mxu0 %v5325
    %5701 = vmatprep.subr.mxu0 %v5330
    %5702 = vmatpush1.msra.mxu0 %v5329
    %5703 = vmatprep.subr.mxu0 %v5334
    %5704 = vmatpush1.msra.mxu0 %v5333
    %5705 = vmatprep.subr.mxu0 %v5338
    %5706 = vmatpush1.msra.mxu0 %v5337
    %5707 = vmatprep.subr.mxu0 %v5342
    %5708 = vmatpush1.msra.mxu0 %v5341
    %5709 = vmatprep.subr.mxu0 %v5346
    %5710 = vmatpush1.msra.mxu0 %v5345
    %5711 = vmatprep.subr.mxu0 %v5350
    %5712 = vmatpush1.msra.mxu0 %v5349
    %5713 = vmatprep.subr.mxu0 %v5354
    %5714 = vmatpush1.msra.mxu0 %v5353
    %5715 = vmatprep.subr.mxu0 %v5358
    %5716 = vmatpush1.msra.mxu0 %v5357
    %5717 = vmatprep.subr.mxu0 %v5362
    %5718 = vmatpush1.msra.mxu0 %v5361
    %5719 = vmatprep.subr.mxu0 %v5366
    %5720 = vmatpush1.msra.mxu0 %v5365
    %5721 = vmatprep.subr.mxu0 %v5370
    %5722 = vmatpush1.msra.mxu0 %v5369
    %5723 = vmatprep.subr.mxu0 %v5374
    %5724 = vmatpush1.msra.mxu0 %v5373
    %5725 = vmatprep.subr.mxu0 %v5378
    %5726 = vmatpush1.msra.mxu0 %v5377
    %5727 = vmatprep.subr.mxu0 %v5382
    %5728 = vmatpush1.msra.mxu0 %v5381
    %5729 = vmatprep.subr.mxu0 %v5386
    %5730 = vmatpush1.msra.mxu0 %v5385
    %5731 = vmatprep.mubr.f32.mxu0 %v5256
    %5732 = vmatmul.mubr.f32.gmra.mrb[0].mxu0 %v5255
    %v5733 = vpop.f32.mrb[0].mxu0
    %v5734 = vadd.f32 %v5650, %v5733
    %v5735 = vpop.f32.mrb[0].mxu0
    %v5736 = vadd.f32 %v5654, %v5735
    %5737 = vdwg.mxu0
    %5738 = vmatprep.subr.mxu0 %v5390
    %5739 = vmatpush1.msra.mxu0 %v5389
    %5740 = vmatprep.subr.mxu0 %v5394
    %5741 = vmatpush1.msra.mxu0 %v5393
    %5742 = vmatprep.subr.mxu0 %v5398
    %5743 = vmatpush1.msra.mxu0 %v5397
    %5744 = vmatprep.subr.mxu0 %v5402
    %5745 = vmatpush1.msra.mxu0 %v5401
    %5746 = vmatprep.subr.mxu0 %v5406
    %5747 = vmatpush1.msra.mxu0 %v5405
    %5748 = vmatprep.subr.mxu0 %v5410
    %5749 = vmatpush1.msra.mxu0 %v5409
    %5750 = vmatprep.subr.mxu0 %v5414
    %5751 = vmatpush1.msra.mxu0 %v5413
    %5752 = vmatprep.subr.mxu0 %v5418
    %5753 = vmatpush1.msra.mxu0 %v5417
    %5754 = vmatprep.subr.mxu0 %v5422
    %5755 = vmatpush1.msra.mxu0 %v5421
    %5756 = vmatprep.subr.mxu0 %v5426
    %5757 = vmatpush1.msra.mxu0 %v5425
    %5758 = vmatprep.subr.mxu0 %v5430
    %5759 = vmatpush1.msra.mxu0 %v5429
    %5760 = vmatprep.subr.mxu0 %v5434
    %5761 = vmatpush1.msra.mxu0 %v5433
    %5762 = vmatprep.subr.mxu0 %v5438
    %5763 = vmatpush1.msra.mxu0 %v5437
    %5764 = vmatprep.subr.mxu0 %v5442
    %5765 = vmatpush1.msra.mxu0 %v5441
    %5766 = vmatprep.subr.mxu0 %v5446
    %5767 = vmatpush1.msra.mxu0 %v5445
    %5768 = vmatprep.subr.mxu0 %v5450
    %5769 = vmatpush1.msra.mxu0 %v5449
    %5770 = vmatprep.subr.mxu0 %v5454
    %5771 = vmatpush1.msra.mxu0 %v5453
    %5772 = vmatprep.subr.mxu0 %v5458
    %5773 = vmatpush1.msra.mxu0 %v5457
    %5774 = vmatprep.subr.mxu0 %v5462
    %5775 = vmatpush1.msra.mxu0 %v5461
    %5776 = vmatprep.subr.mxu0 %v5466
    %5777 = vmatpush1.msra.mxu0 %v5465
    %5778 = vmatprep.subr.mxu0 %v5470
    %5779 = vmatpush1.msra.mxu0 %v5469
    %5780 = vmatprep.subr.mxu0 %v5474
    %5781 = vmatpush1.msra.mxu0 %v5473
    %5782 = vmatprep.subr.mxu0 %v5478
    %5783 = vmatpush1.msra.mxu0 %v5477
    %5784 = vmatprep.subr.mxu0 %v5482
    %5785 = vmatpush1.msra.mxu0 %v5481
    %5786 = vmatprep.subr.mxu0 %v5486
    %5787 = vmatpush1.msra.mxu0 %v5485
    %5788 = vmatprep.subr.mxu0 %v5490
    %5789 = vmatpush1.msra.mxu0 %v5489
    %5790 = vmatprep.subr.mxu0 %v5494
    %5791 = vmatpush1.msra.mxu0 %v5493
    %5792 = vmatprep.subr.mxu0 %v5498
    %5793 = vmatpush1.msra.mxu0 %v5497
    %5794 = vmatprep.subr.mxu0 %v5502
    %5795 = vmatpush1.msra.mxu0 %v5501
    %5796 = vmatprep.subr.mxu0 %v5506
    %5797 = vmatpush1.msra.mxu0 %v5505
    %5798 = vmatprep.subr.mxu0 %v5510
    %5799 = vmatpush1.msra.mxu0 %v5509
    %5800 = vmatprep.subr.mxu0 %v5514
    %5801 = vmatpush1.msra.mxu0 %v5513
    %5802 = vmatprep.mubr.f32.mxu0 %v5258
    %5803 = vmatmul.mubr.f32.gmra.mrb[0].mxu0 %v5257
    %v5804 = vpop.f32.mrb[0].mxu0
    %v5805 = vadd.f32 %v5734, %v5804
    %v5806 = vpop.f32.mrb[0].mxu0
    %v5807 = vadd.f32 %v5736, %v5806
    %5808 = vdwg.mxu0
    %5809 = vmatprep.subr.mxu0 %v5518
    %5810 = vmatpush1.msra.mxu0 %v5517
    %5811 = vmatprep.subr.mxu0 %v5522
    %5812 = vmatpush1.msra.mxu0 %v5521
    %5813 = vmatprep.subr.mxu0 %v5526
    %5814 = vmatpush1.msra.mxu0 %v5525
    %5815 = vmatprep.subr.mxu0 %v5530
    %5816 = vmatpush1.msra.mxu0 %v5529
    %5817 = vmatprep.subr.mxu0 %v5534
    %5818 = vmatpush1.msra.mxu0 %v5533
    %5819 = vmatprep.subr.mxu0 %v5538
    %5820 = vmatpush1.msra.mxu0 %v5537
    %5821 = vmatprep.subr.mxu0 %v5542
    %5822 = vmatpush1.msra.mxu0 %v5541
    %5823 = vmatprep.subr.mxu0 %v5546
    %5824 = vmatpush1.msra.mxu0 %v5545
    %5825 = vmatprep.subr.mxu0 %v5550
    %5826 = vmatpush1.msra.mxu0 %v5549
    %5827 = vmatprep.subr.mxu0 %v5554
    %5828 = vmatpush1.msra.mxu0 %v5553
    %5829 = vmatprep.subr.mxu0 %v5558
    %5830 = vmatpush1.msra.mxu0 %v5557
    %5831 = vmatprep.subr.mxu0 %v5562
    %5832 = vmatpush1.msra.mxu0 %v5561
    %5833 = vmatprep.subr.mxu0 %v5566
    %5834 = vmatpush1.msra.mxu0 %v5565
    %5835 = vmatprep.subr.mxu0 %v5570
    %5836 = vmatpush1.msra.mxu0 %v5569
    %5837 = vmatprep.subr.mxu0 %v5574
    %5838 = vmatpush1.msra.mxu0 %v5573
    %5839 = vmatprep.subr.mxu0 %v5578
    %5840 = vmatpush1.msra.mxu0 %v5577
    %5841 = vmatprep.subr.mxu0 %v5582
    %5842 = vmatpush1.msra.mxu0 %v5581
    %5843 = vmatprep.subr.mxu0 %v5586
    %5844 = vmatpush1.msra.mxu0 %v5585
    %5845 = vmatprep.subr.mxu0 %v5590
    %5846 = vmatpush1.msra.mxu0 %v5589
    %5847 = vmatprep.subr.mxu0 %v5594
    %5848 = vmatpush1.msra.mxu0 %v5593
    %5849 = vmatprep.subr.mxu0 %v5598
    %5850 = vmatpush1.msra.mxu0 %v5597
    %5851 = vmatprep.subr.mxu0 %v5602
    %5852 = vmatpush1.msra.mxu0 %v5601
    %5853 = vmatprep.subr.mxu0 %v5606
    %5854 = vmatpush1.msra.mxu0 %v5605
    %5855 = vmatprep.subr.mxu0 %v5610
    %5856 = vmatpush1.msra.mxu0 %v5609
    %5857 = vmatprep.subr.mxu0 %v5614
    %5858 = vmatpush1.msra.mxu0 %v5613
    %5859 = vmatprep.subr.mxu0 %v5618
    %5860 = vmatpush1.msra.mxu0 %v5617
    %5861 = vmatprep.subr.mxu0 %v5622
    %5862 = vmatpush1.msra.mxu0 %v5621
    %5863 = vmatprep.subr.mxu0 %v5626
    %5864 = vmatpush1.msra.mxu0 %v5625
    %5865 = vmatprep.subr.mxu0 %v5630
    %5866 = vmatpush1.msra.mxu0 %v5629
    %5867 = vmatprep.subr.mxu0 %v5634
    %5868 = vmatpush1.msra.mxu0 %v5633
    %5869 = vmatprep.subr.mxu0 %v5638
    %5870 = vmatpush1.msra.mxu0 %v5637
    %5871 = vmatprep.subr.mxu0 %v5642
    %5872 = vmatpush1.msra.mxu0 %v5641
    %5873 = vmatprep.mubr.f32.mxu0 %v5260
    %5874 = vmatmul.mubr.f32.gmra.mrb[0].mxu0 %v5259
    %v5875 = vpop.f32.mrb[0].mxu0
    %v5876 = vadd.f32 %v5805, %v5875
    %v5877 = vpop.f32.mrb[0].mxu0
    %v5878 = vadd.f32 %v5807, %v5877
    %5879 = vdwg.mxu0
    %5880 = vmatprep.subr.mxu0 %v5264
    %5881 = vmatpush1.msra.mxu0 %v5263
    %5882 = vmatprep.subr.mxu0 %v5268
    %5883 = vmatpush1.msra.mxu0 %v5267
    %5884 = vmatprep.subr.mxu0 %v5272
    %5885 = vmatpush1.msra.mxu0 %v5271
    %5886 = vmatprep.subr.mxu0 %v5276
    %5887 = vmatpush1.msra.mxu0 %v5275
    %5888 = vmatprep.subr.mxu0 %v5280
    %5889 = vmatpush1.msra.mxu0 %v5279
    %5890 = vmatprep.subr.mxu0 %v5284
    %5891 = vmatpush1.msra.mxu0 %v5283
    %5892 = vmatprep.subr.mxu0 %v5288
    %5893 = vmatpush1.msra.mxu0 %v5287
    %5894 = vmatprep.subr.mxu0 %v5292
    %5895 = vmatpush1.msra.mxu0 %v5291
    %5896 = vmatprep.subr.mxu0 %v5296
    %5897 = vmatpush1.msra.mxu0 %v5295
    %5898 = vmatprep.subr.mxu0 %v5300
    %5899 = vmatpush1.msra.mxu0 %v5299
    %5900 = vmatprep.subr.mxu0 %v5304
    %5901 = vmatpush1.msra.mxu0 %v5303
    %5902 = vmatprep.subr.mxu0 %v5308
    %5903 = vmatpush1.msra.mxu0 %v5307
    %5904 = vmatprep.subr.mxu0 %v5312
    %5905 = vmatpush1.msra.mxu0 %v5311
    %5906 = vmatprep.subr.mxu0 %v5316
    %5907 = vmatpush1.msra.mxu0 %v5315
    %5908 = vmatprep.subr.mxu0 %v5320
    %5909 = vmatpush1.msra.mxu0 %v5319
    %5910 = vmatprep.subr.mxu0 %v5324
    %5911 = vmatpush1.msra.mxu0 %v5323
    %5912 = vmatprep.subr.mxu0 %v5328
    %5913 = vmatpush1.msra.mxu0 %v5327
    %5914 = vmatprep.subr.mxu0 %v5332
    %5915 = vmatpush1.msra.mxu0 %v5331
    %5916 = vmatprep.subr.mxu0 %v5336
    %5917 = vmatpush1.msra.mxu0 %v5335
    %5918 = vmatprep.subr.mxu0 %v5340
    %5919 = vmatpush1.msra.mxu0 %v5339
    %5920 = vmatprep.subr.mxu0 %v5344
    %5921 = vmatpush1.msra.mxu0 %v5343
    %5922 = vmatprep.subr.mxu0 %v5348
    %5923 = vmatpush1.msra.mxu0 %v5347
    %5924 = vmatprep.subr.mxu0 %v5352
    %5925 = vmatpush1.msra.mxu0 %v5351
    %5926 = vmatprep.subr.mxu0 %v5356
    %5927 = vmatpush1.msra.mxu0 %v5355
    %5928 = vmatprep.subr.mxu0 %v5360
    %5929 = vmatpush1.msra.mxu0 %v5359
    %5930 = vmatprep.subr.mxu0 %v5364
    %5931 = vmatpush1.msra.mxu0 %v5363
    %5932 = vmatprep.subr.mxu0 %v5368
    %5933 = vmatpush1.msra.mxu0 %v5367
    %5934 = vmatprep.subr.mxu0 %v5372
    %5935 = vmatpush1.msra.mxu0 %v5371
    %5936 = vmatprep.subr.mxu0 %v5376
    %5937 = vmatpush1.msra.mxu0 %v5375
    %5938 = vmatprep.subr.mxu0 %v5380
    %5939 = vmatpush1.msra.mxu0 %v5379
    %5940 = vmatprep.subr.mxu0 %v5384
    %5941 = vmatpush1.msra.mxu0 %v5383
    %5942 = vmatprep.subr.mxu0 %v5388
    %5943 = vmatpush1.msra.mxu0 %v5387
    %5944 = vmatprep.mubr.f32.mxu0 %v5256
    %5945 = vmatmul.mubr.f32.gmra.mrb[0].mxu0 %v5255
    %v5946 = vpop.f32.mrb[0].mxu0
    %v5947 = vadd.f32 %v5658, %v5946
    %v5948 = vpop.f32.mrb[0].mxu0
    %v5949 = vadd.f32 %v5662, %v5948
    %5950 = vdwg.mxu0
    %5951 = vmatprep.subr.mxu0 %v5392
    %5952 = vmatpush1.msra.mxu0 %v5391
    %5953 = vmatprep.subr.mxu0 %v5396
    %5954 = vmatpush1.msra.mxu0 %v5395
    %5955 = vmatprep.subr.mxu0 %v5400
    %5956 = vmatpush1.msra.mxu0 %v5399
    %5957 = vmatprep.subr.mxu0 %v5404
    %5958 = vmatpush1.msra.mxu0 %v5403
    %5959 = vmatprep.subr.mxu0 %v5408
    %5960 = vmatpush1.msra.mxu0 %v5407
    %5961 = vmatprep.subr.mxu0 %v5412
    %5962 = vmatpush1.msra.mxu0 %v5411
    %5963 = vmatprep.subr.mxu0 %v5416
    %5964 = vmatpush1.msra.mxu0 %v5415
    %5965 = vmatprep.subr.mxu0 %v5420
    %5966 = vmatpush1.msra.mxu0 %v5419
    %5967 = vmatprep.subr.mxu0 %v5424
    %5968 = vmatpush1.msra.mxu0 %v5423
    %5969 = vmatprep.subr.mxu0 %v5428
    %5970 = vmatpush1.msra.mxu0 %v5427
    %5971 = vmatprep.subr.mxu0 %v5432
    %5972 = vmatpush1.msra.mxu0 %v5431
    %5973 = vmatprep.subr.mxu0 %v5436
    %5974 = vmatpush1.msra.mxu0 %v5435
    %5975 = vmatprep.subr.mxu0 %v5440
    %5976 = vmatpush1.msra.mxu0 %v5439
    %5977 = vmatprep.subr.mxu0 %v5444
    %5978 = vmatpush1.msra.mxu0 %v5443
    %5979 = vmatprep.subr.mxu0 %v5448
    %5980 = vmatpush1.msra.mxu0 %v5447
    %5981 = vmatprep.subr.mxu0 %v5452
    %5982 = vmatpush1.msra.mxu0 %v5451
    %5983 = vmatprep.subr.mxu0 %v5456
    %5984 = vmatpush1.msra.mxu0 %v5455
    %5985 = vmatprep.subr.mxu0 %v5460
    %5986 = vmatpush1.msra.mxu0 %v5459
    %5987 = vmatprep.subr.mxu0 %v5464
    %5988 = vmatpush1.msra.mxu0 %v5463
    %5989 = vmatprep.subr.mxu0 %v5468
    %5990 = vmatpush1.msra.mxu0 %v5467
    %5991 = vmatprep.subr.mxu0 %v5472
    %5992 = vmatpush1.msra.mxu0 %v5471
    %5993 = vmatprep.subr.mxu0 %v5476
    %5994 = vmatpush1.msra.mxu0 %v5475
    %5995 = vmatprep.subr.mxu0 %v5480
    %5996 = vmatpush1.msra.mxu0 %v5479
    %5997 = vmatprep.subr.mxu0 %v5484
    %5998 = vmatpush1.msra.mxu0 %v5483
    %5999 = vmatprep.subr.mxu0 %v5488
    %6000 = vmatpush1.msra.mxu0 %v5487
    %6001 = vmatprep.subr.mxu0 %v5492
    %6002 = vmatpush1.msra.mxu0 %v5491
    %6003 = vmatprep.subr.mxu0 %v5496
    %6004 = vmatpush1.msra.mxu0 %v5495
    %6005 = vmatprep.subr.mxu0 %v5500
    %6006 = vmatpush1.msra.mxu0 %v5499
    %6007 = vmatprep.subr.mxu0 %v5504
    %6008 = vmatpush1.msra.mxu0 %v5503
    %6009 = vmatprep.subr.mxu0 %v5508
    %6010 = vmatpush1.msra.mxu0 %v5507
    %6011 = vmatprep.subr.mxu0 %v5512
    %6012 = vmatpush1.msra.mxu0 %v5511
    %6013 = vmatprep.subr.mxu0 %v5516
    %6014 = vmatpush1.msra.mxu0 %v5515
    %6015 = vmatprep.mubr.f32.mxu0 %v5258
    %6016 = vmatmul.mubr.f32.gmra.mrb[0].mxu0 %v5257
    %v6017 = vpop.f32.mrb[0].mxu0
    %v6018 = vadd.f32 %v5947, %v6017
    %v6019 = vpop.f32.mrb[0].mxu0
    %v6020 = vadd.f32 %v5949, %v6019
    %6021 = vdwg.mxu0
    %6022 = vmatprep.subr.mxu0 %v5520
    %6023 = vmatpush1.msra.mxu0 %v5519
    %6024 = vmatprep.subr.mxu0 %v5524
    %6025 = vmatpush1.msra.mxu0 %v5523
    %6026 = vmatprep.subr.mxu0 %v5528
    %6027 = vmatpush1.msra.mxu0 %v5527
    %6028 = vmatprep.subr.mxu0 %v5532
    %6029 = vmatpush1.msra.mxu0 %v5531
    %6030 = vmatprep.subr.mxu0 %v5536
    %6031 = vmatpush1.msra.mxu0 %v5535
    %6032 = vmatprep.subr.mxu0 %v5540
    %6033 = vmatpush1.msra.mxu0 %v5539
    %6034 = vmatprep.subr.mxu0 %v5544
    %6035 = vmatpush1.msra.mxu0 %v5543
    %6036 = vmatprep.subr.mxu0 %v5548
    %6037 = vmatpush1.msra.mxu0 %v5547
    %6038 = vmatprep.subr.mxu0 %v5552
    %6039 = vmatpush1.msra.mxu0 %v5551
    %6040 = vmatprep.subr.mxu0 %v5556
    %6041 = vmatpush1.msra.mxu0 %v5555
    %6042 = vmatprep.subr.mxu0 %v5560
    %6043 = vmatpush1.msra.mxu0 %v5559
    %6044 = vmatprep.subr.mxu0 %v5564
    %6045 = vmatpush1.msra.mxu0 %v5563
    %6046 = vmatprep.subr.mxu0 %v5568
    %6047 = vmatpush1.msra.mxu0 %v5567
    %6048 = vmatprep.subr.mxu0 %v5572
    %6049 = vmatpush1.msra.mxu0 %v5571
    %6050 = vmatprep.subr.mxu0 %v5576
    %6051 = vmatpush1.msra.mxu0 %v5575
    %6052 = vmatprep.subr.mxu0 %v5580
    %6053 = vmatpush1.msra.mxu0 %v5579
    %6054 = vmatprep.subr.mxu0 %v5584
    %6055 = vmatpush1.msra.mxu0 %v5583
    %6056 = vmatprep.subr.mxu0 %v5588
    %6057 = vmatpush1.msra.mxu0 %v5587
    %6058 = vmatprep.subr.mxu0 %v5592
    %6059 = vmatpush1.msra.mxu0 %v5591
    %6060 = vmatprep.subr.mxu0 %v5596
    %6061 = vmatpush1.msra.mxu0 %v5595
    %6062 = vmatprep.subr.mxu0 %v5600
    %6063 = vmatpush1.msra.mxu0 %v5599
    %6064 = vmatprep.subr.mxu0 %v5604
    %6065 = vmatpush1.msra.mxu0 %v5603
    %6066 = vmatprep.subr.mxu0 %v5608
    %6067 = vmatpush1.msra.mxu0 %v5607
    %6068 = vmatprep.subr.mxu0 %v5612
    %6069 = vmatpush1.msra.mxu0 %v5611
    %6070 = vmatprep.subr.mxu0 %v5616
    %6071 = vmatpush1.msra.mxu0 %v5615
    %6072 = vmatprep.subr.mxu0 %v5620
    %6073 = vmatpush1.msra.mxu0 %v5619
    %6074 = vmatprep.subr.mxu0 %v5624
    %6075 = vmatpush1.msra.mxu0 %v5623
    %6076 = vmatprep.subr.mxu0 %v5628
    %6077 = vmatpush1.msra.mxu0 %v5627
    %6078 = vmatprep.subr.mxu0 %v5632
    %6079 = vmatpush1.msra.mxu0 %v5631
    %6080 = vmatprep.subr.mxu0 %v5636
    %6081 = vmatpush1.msra.mxu0 %v5635
    %6082 = vmatprep.subr.mxu0 %v5640
    %6083 = vmatpush1.msra.mxu0 %v5639
    %6084 = vmatprep.subr.mxu0 %v5644
    %6085 = vmatpush1.msra.mxu0 %v5643
    %6086 = vmatprep.mubr.f32.mxu0 %v5260
    %6087 = vmatmul.mubr.f32.gmra.mrb[0].mxu0 %v5259
    %v6088 = vpop.f32.mrb[0].mxu0
    %v6089 = vadd.f32 %v6018, %v6088
    %v6090 = vpop.f32.mrb[0].mxu0
    %v6091 = vadd.f32 %v6020, %v6090
    %6092 = vdwg.mxu0
    %vm6093 = vcmp.gt.f32.partialorder %v5876, 0.0
    %vm6094 = vcmp.gt.f32.partialorder %v5878, 0.0
    %vm6095 = vcmp.gt.f32.partialorder %v6089, 0.0
    %vm6096 = vcmp.gt.f32.partialorder %v6091, 0.0
    %v6097 = vsel %vm6093, 1.0, -1.0
    %v6098 = vsel %vm6094, 1.0, -1.0
    %v6099 = vsel %vm6095, 1.0, -1.0
    %v6100 = vsel %vm6096, 1.0, -1.0
    %v6101 = vld [vmem:[#allocation20] sm:$0xff]
    %v6102 = vld [vmem:[#allocation20 + $0x8] sm:$0xff]
    %v6103 = vld [vmem:[#allocation20 + $0x10] sm:$0xff]
    %v6104 = vld [vmem:[#allocation20 + $0x18] sm:$0xff]
    %v6105 = vld [vmem:[#allocation20 + $0x20] sm:$0xff]
    %v6106 = vld [vmem:[#allocation20 + $0x28] sm:$0xff]
    %v6107 = vld [vmem:[#allocation20 + $0x30] sm:$0xff]
    %v6108 = vld [vmem:[#allocation20 + $0x38] sm:$0xff]
    %v6109 = vld [vmem:[#allocation20 + $0x40] sm:$0xff]
    %v6110 = vld [vmem:[#allocation20 + $0x48] sm:$0xff]
    %v6111 = vld [vmem:[#allocation20 + $0x50] sm:$0xff]
    %v6112 = vld [vmem:[#allocation20 + $0x58] sm:$0xff]
    %v6113 = vld [vmem:[#allocation20 + $0x60] sm:$0xff]
    %v6114 = vld [vmem:[#allocation20 + $0x68] sm:$0xff]
    %v6115 = vld [vmem:[#allocation20 + $0x70] sm:$0xff]
    %v6116 = vld [vmem:[#allocation20 + $0x78] sm:$0xff]
    %v6117 = vld [vmem:[#allocation20 + $0x80] sm:$0xff]
    %v6118 = vld [vmem:[#allocation20 + $0x88] sm:$0xff]
    %v6119 = vld [vmem:[#allocation20 + $0x90] sm:$0xff]
    %v6120 = vld [vmem:[#allocation20 + $0x98] sm:$0xff]
    %v6121 = vld [vmem:[#allocation20 + $0xa0] sm:$0xff]
    %v6122 = vld [vmem:[#allocation20 + $0xa8] sm:$0xff]
    %v6123 = vld [vmem:[#allocation20 + $0xb0] sm:$0xff]
    %v6124 = vld [vmem:[#allocation20 + $0xb8] sm:$0xff]
    %v6125 = vld [vmem:[#allocation20 + $0xc0] sm:$0xff]
    %v6126 = vld [vmem:[#allocation20 + $0xc8] sm:$0xff]
    %v6127 = vld [vmem:[#allocation20 + $0xd0] sm:$0xff]
    %v6128 = vld [vmem:[#allocation20 + $0xd8] sm:$0xff]
    %v6129 = vld [vmem:[#allocation20 + $0xe0] sm:$0xff]
    %v6130 = vld [vmem:[#allocation20 + $0xe8] sm:$0xff]
    %v6131 = vld [vmem:[#allocation20 + $0xf0] sm:$0xff]
    %v6132 = vld [vmem:[#allocation20 + $0xf8] sm:$0xff]
    %v6133 = vld [vmem:[#allocation20 + $0x100] sm:$0xff]
    %v6134 = vld [vmem:[#allocation20 + $0x108] sm:$0xff]
    %v6135 = vld [vmem:[#allocation20 + $0x110] sm:$0xff]
    %v6136 = vld [vmem:[#allocation20 + $0x118] sm:$0xff]
    %v6137 = vld [vmem:[#allocation20 + $0x120] sm:$0xff]
    %v6138 = vld [vmem:[#allocation20 + $0x128] sm:$0xff]
    %v6139 = vld [vmem:[#allocation20 + $0x130] sm:$0xff]
    %v6140 = vld [vmem:[#allocation20 + $0x138] sm:$0xff]
    %v6141 = vld [vmem:[#allocation20 + $0x140] sm:$0xff]
    %v6142 = vld [vmem:[#allocation20 + $0x148] sm:$0xff]
    %v6143 = vld [vmem:[#allocation20 + $0x150] sm:$0xff]
    %v6144 = vld [vmem:[#allocation20 + $0x158] sm:$0xff]
    %v6145 = vld [vmem:[#allocation20 + $0x160] sm:$0xff]
    %v6146 = vld [vmem:[#allocation20 + $0x168] sm:$0xff]
    %v6147 = vld [vmem:[#allocation20 + $0x170] sm:$0xff]
    %v6148 = vld [vmem:[#allocation20 + $0x178] sm:$0xff]
    %v6149 = vld [vmem:[#allocation20 + $0x180] sm:$0xff]
    %v6150 = vld [vmem:[#allocation20 + $0x188] sm:$0xff]
    %v6151 = vld [vmem:[#allocation20 + $0x190] sm:$0xff]
    %v6152 = vld [vmem:[#allocation20 + $0x198] sm:$0xff]
    %v6153 = vld [vmem:[#allocation20 + $0x1a0] sm:$0xff]
    %v6154 = vld [vmem:[#allocation20 + $0x1a8] sm:$0xff]
    %v6155 = vld [vmem:[#allocation20 + $0x1b0] sm:$0xff]
    %v6156 = vld [vmem:[#allocation20 + $0x1b8] sm:$0xff]
    %v6157 = vld [vmem:[#allocation20 + $0x1c0] sm:$0xff]
    %v6158 = vld [vmem:[#allocation20 + $0x1c8] sm:$0xff]
    %v6159 = vld [vmem:[#allocation20 + $0x1d0] sm:$0xff]
    %v6160 = vld [vmem:[#allocation20 + $0x1d8] sm:$0xff]
    %v6161 = vld [vmem:[#allocation20 + $0x1e0] sm:$0xff]
    %v6162 = vld [vmem:[#allocation20 + $0x1e8] sm:$0xff]
    %v6163 = vld [vmem:[#allocation20 + $0x1f0] sm:$0xff]
    %v6164 = vld [vmem:[#allocation20 + $0x1f8] sm:$0xff]
    %v6165 = vld [vmem:[#allocation20 + $0x200] sm:$0xff]
    %v6166 = vld [vmem:[#allocation20 + $0x208] sm:$0xff]
    %v6167 = vld [vmem:[#allocation20 + $0x210] sm:$0xff]
    %v6168 = vld [vmem:[#allocation20 + $0x218] sm:$0xff]
    %v6169 = vld [vmem:[#allocation20 + $0x220] sm:$0xff]
    %v6170 = vld [vmem:[#allocation20 + $0x228] sm:$0xff]
    %v6171 = vld [vmem:[#allocation20 + $0x230] sm:$0xff]
    %v6172 = vld [vmem:[#allocation20 + $0x238] sm:$0xff]
    %v6173 = vld [vmem:[#allocation20 + $0x240] sm:$0xff]
    %v6174 = vld [vmem:[#allocation20 + $0x248] sm:$0xff]
    %v6175 = vld [vmem:[#allocation20 + $0x250] sm:$0xff]
    %v6176 = vld [vmem:[#allocation20 + $0x258] sm:$0xff]
    %v6177 = vld [vmem:[#allocation20 + $0x260] sm:$0xff]
    %v6178 = vld [vmem:[#allocation20 + $0x268] sm:$0xff]
    %v6179 = vld [vmem:[#allocation20 + $0x270] sm:$0xff]
    %v6180 = vld [vmem:[#allocation20 + $0x278] sm:$0xff]
    %v6181 = vld [vmem:[#allocation20 + $0x280] sm:$0xff]
    %v6182 = vld [vmem:[#allocation20 + $0x288] sm:$0xff]
    %v6183 = vld [vmem:[#allocation20 + $0x290] sm:$0xff]
    %v6184 = vld [vmem:[#allocation20 + $0x298] sm:$0xff]
    %v6185 = vld [vmem:[#allocation20 + $0x2a0] sm:$0xff]
    %v6186 = vld [vmem:[#allocation20 + $0x2a8] sm:$0xff]
    %v6187 = vld [vmem:[#allocation20 + $0x2b0] sm:$0xff]
    %v6188 = vld [vmem:[#allocation20 + $0x2b8] sm:$0xff]
    %v6189 = vld [vmem:[#allocation20 + $0x2c0] sm:$0xff]
    %v6190 = vld [vmem:[#allocation20 + $0x2c8] sm:$0xff]
    %v6191 = vld [vmem:[#allocation20 + $0x2d0] sm:$0xff]
    %v6192 = vld [vmem:[#allocation20 + $0x2d8] sm:$0xff]
    %v6193 = vld [vmem:[#allocation20 + $0x2e0] sm:$0xff]
    %v6194 = vld [vmem:[#allocation20 + $0x2e8] sm:$0xff]
    %v6195 = vld [vmem:[#allocation20 + $0x2f0] sm:$0xff]
    %v6196 = vld [vmem:[#allocation20 + $0x2f8] sm:$0xff]
    %v6197 = vld [vmem:[#allocation20 + $0x300] sm:$0xff]
    %v6198 = vld [vmem:[#allocation20 + $0x308] sm:$0xff]
    %v6199 = vld [vmem:[#allocation20 + $0x310] sm:$0xff]
    %v6200 = vld [vmem:[#allocation20 + $0x318] sm:$0xff]
    %v6201 = vld [vmem:[#allocation20 + $0x320] sm:$0xff]
    %v6202 = vld [vmem:[#allocation20 + $0x328] sm:$0xff]
    %v6203 = vld [vmem:[#allocation20 + $0x330] sm:$0xff]
    %v6204 = vld [vmem:[#allocation20 + $0x338] sm:$0xff]
    %v6205 = vld [vmem:[#allocation20 + $0x340] sm:$0xff]
    %v6206 = vld [vmem:[#allocation20 + $0x348] sm:$0xff]
    %v6207 = vld [vmem:[#allocation20 + $0x350] sm:$0xff]
    %v6208 = vld [vmem:[#allocation20 + $0x358] sm:$0xff]
    %v6209 = vld [vmem:[#allocation20 + $0x360] sm:$0xff]
    %v6210 = vld [vmem:[#allocation20 + $0x368] sm:$0xff]
    %v6211 = vld [vmem:[#allocation20 + $0x370] sm:$0xff]
    %v6212 = vld [vmem:[#allocation20 + $0x378] sm:$0xff]
    %v6213 = vld [vmem:[#allocation20 + $0x380] sm:$0xff]
    %v6214 = vld [vmem:[#allocation20 + $0x388] sm:$0xff]
    %v6215 = vld [vmem:[#allocation20 + $0x390] sm:$0xff]
    %v6216 = vld [vmem:[#allocation20 + $0x398] sm:$0xff]
    %v6217 = vld [vmem:[#allocation20 + $0x3a0] sm:$0xff]
    %v6218 = vld [vmem:[#allocation20 + $0x3a8] sm:$0xff]
    %v6219 = vld [vmem:[#allocation20 + $0x3b0] sm:$0xff]
    %v6220 = vld [vmem:[#allocation20 + $0x3b8] sm:$0xff]
    %v6221 = vld [vmem:[#allocation20 + $0x3c0] sm:$0xff]
    %v6222 = vld [vmem:[#allocation20 + $0x3c8] sm:$0xff]
    %v6223 = vld [vmem:[#allocation20 + $0x3d0] sm:$0xff]
    %v6224 = vld [vmem:[#allocation20 + $0x3d8] sm:$0xff]
    %v6225 = vld [vmem:[#allocation20 + $0x3e0] sm:$0xff]
    %v6226 = vld [vmem:[#allocation20 + $0x3e8] sm:$0xff]
    %v6227 = vld [vmem:[#allocation20 + $0x3f0] sm:$0xff]
    %v6228 = vld [vmem:[#allocation20 + $0x3f8] sm:$0xff]
    %v6229 = vld [vmem:[#allocation22] sm:$0x3]
    %v6231 = vlaneseq
    %v6232 = vshrl.u32 %v6231, 7
    %v6233 = vsub.s32 0, %v6232
    %v6234 = vrot.slane %v6229, %v6233
    %v6235 = vlaneseq
    %v6236 = vshrl.u32 %v6235, 7
    %v6237 = vsub.s32 1, %v6236
    %v6238 = vrot.slane %v6229, %v6237
    %6241 = vmatprep.subr.mxu0 %v6102
    %6242 = vmatpush1.msra.mxu0 %v6101
    %6243 = vmatprep.subr.mxu0 %v6104
    %6244 = vmatpush1.msra.mxu0 %v6103
    %6245 = vmatprep.subr.mxu0 %v6106
    %6246 = vmatpush1.msra.mxu0 %v6105
    %6247 = vmatprep.subr.mxu0 %v6108
    %6248 = vmatpush1.msra.mxu0 %v6107
    %6249 = vmatprep.subr.mxu0 %v6110
    %6250 = vmatpush1.msra.mxu0 %v6109
    %6251 = vmatprep.subr.mxu0 %v6112
    %6252 = vmatpush1.msra.mxu0 %v6111
    %6253 = vmatprep.subr.mxu0 %v6114
    %6254 = vmatpush1.msra.mxu0 %v6113
    %6255 = vmatprep.subr.mxu0 %v6116
    %6256 = vmatpush1.msra.mxu0 %v6115
    %6257 = vmatprep.subr.mxu0 %v6118
    %6258 = vmatpush1.msra.mxu0 %v6117
    %6259 = vmatprep.subr.mxu0 %v6120
    %6260 = vmatpush1.msra.mxu0 %v6119
    %6261 = vmatprep.subr.mxu0 %v6122
    %6262 = vmatpush1.msra.mxu0 %v6121
    %6263 = vmatprep.subr.mxu0 %v6124
    %6264 = vmatpush1.msra.mxu0 %v6123
    %6265 = vmatprep.subr.mxu0 %v6126
    %6266 = vmatpush1.msra.mxu0 %v6125
    %6267 = vmatprep.subr.mxu0 %v6128
    %6268 = vmatpush1.msra.mxu0 %v6127
    %6269 = vmatprep.subr.mxu0 %v6130
    %6270 = vmatpush1.msra.mxu0 %v6129
    %6271 = vmatprep.subr.mxu0 %v6132
    %6272 = vmatpush1.msra.mxu0 %v6131
    %6273 = vmatprep.subr.mxu0 %v6134
    %6274 = vmatpush1.msra.mxu0 %v6133
    %6275 = vmatprep.subr.mxu0 %v6136
    %6276 = vmatpush1.msra.mxu0 %v6135
    %6277 = vmatprep.subr.mxu0 %v6138
    %6278 = vmatpush1.msra.mxu0 %v6137
    %6279 = vmatprep.subr.mxu0 %v6140
    %6280 = vmatpush1.msra.mxu0 %v6139
    %6281 = vmatprep.subr.mxu0 %v6142
    %6282 = vmatpush1.msra.mxu0 %v6141
    %6283 = vmatprep.subr.mxu0 %v6144
    %6284 = vmatpush1.msra.mxu0 %v6143
    %6285 = vmatprep.subr.mxu0 %v6146
    %6286 = vmatpush1.msra.mxu0 %v6145
    %6287 = vmatprep.subr.mxu0 %v6148
    %6288 = vmatpush1.msra.mxu0 %v6147
    %6289 = vmatprep.subr.mxu0 %v6150
    %6290 = vmatpush1.msra.mxu0 %v6149
    %6291 = vmatprep.subr.mxu0 %v6152
    %6292 = vmatpush1.msra.mxu0 %v6151
    %6293 = vmatprep.subr.mxu0 %v6154
    %6294 = vmatpush1.msra.mxu0 %v6153
    %6295 = vmatprep.subr.mxu0 %v6156
    %6296 = vmatpush1.msra.mxu0 %v6155
    %6297 = vmatprep.subr.mxu0 %v6158
    %6298 = vmatpush1.msra.mxu0 %v6157
    %6299 = vmatprep.subr.mxu0 %v6160
    %6300 = vmatpush1.msra.mxu0 %v6159
    %6301 = vmatprep.subr.mxu0 %v6162
    %6302 = vmatpush1.msra.mxu0 %v6161
    %6303 = vmatprep.subr.mxu0 %v6164
    %6304 = vmatpush1.msra.mxu0 %v6163
    %6305 = vmatprep.mubr.f32.mxu0 %v6098
    %6306 = vmatmul.mubr.f32.gmra.mrb[0].mxu0 %v6097
    %v6307 = vpop.f32.mrb[0].mxu0
    %v6308 = vadd.f32 %v6234, %v6307
    %v6309 = vpop.f32.mrb[0].mxu0
    %v6310 = vadd.f32 %v6238, %v6309
    %6311 = vdwg.mxu0
    %6312 = vmatprep.subr.mxu0 %v6166
    %6313 = vmatpush1.msra.mxu0 %v6165
    %6314 = vmatprep.subr.mxu0 %v6168
    %6315 = vmatpush1.msra.mxu0 %v6167
    %6316 = vmatprep.subr.mxu0 %v6170
    %6317 = vmatpush1.msra.mxu0 %v6169
    %6318 = vmatprep.subr.mxu0 %v6172
    %6319 = vmatpush1.msra.mxu0 %v6171
    %6320 = vmatprep.subr.mxu0 %v6174
    %6321 = vmatpush1.msra.mxu0 %v6173
    %6322 = vmatprep.subr.mxu0 %v6176
    %6323 = vmatpush1.msra.mxu0 %v6175
    %6324 = vmatprep.subr.mxu0 %v6178
    %6325 = vmatpush1.msra.mxu0 %v6177
    %6326 = vmatprep.subr.mxu0 %v6180
    %6327 = vmatpush1.msra.mxu0 %v6179
    %6328 = vmatprep.subr.mxu0 %v6182
    %6329 = vmatpush1.msra.mxu0 %v6181
    %6330 = vmatprep.subr.mxu0 %v6184
    %6331 = vmatpush1.msra.mxu0 %v6183
    %6332 = vmatprep.subr.mxu0 %v6186
    %6333 = vmatpush1.msra.mxu0 %v6185
    %6334 = vmatprep.subr.mxu0 %v6188
    %6335 = vmatpush1.msra.mxu0 %v6187
    %6336 = vmatprep.subr.mxu0 %v6190
    %6337 = vmatpush1.msra.mxu0 %v6189
    %6338 = vmatprep.subr.mxu0 %v6192
    %6339 = vmatpush1.msra.mxu0 %v6191
    %6340 = vmatprep.subr.mxu0 %v6194
    %6341 = vmatpush1.msra.mxu0 %v6193
    %6342 = vmatprep.subr.mxu0 %v6196
    %6343 = vmatpush1.msra.mxu0 %v6195
    %6344 = vmatprep.subr.mxu0 %v6198
    %6345 = vmatpush1.msra.mxu0 %v6197
    %6346 = vmatprep.subr.mxu0 %v6200
    %6347 = vmatpush1.msra.mxu0 %v6199
    %6348 = vmatprep.subr.mxu0 %v6202
    %6349 = vmatpush1.msra.mxu0 %v6201
    %6350 = vmatprep.subr.mxu0 %v6204
    %6351 = vmatpush1.msra.mxu0 %v6203
    %6352 = vmatprep.subr.mxu0 %v6206
    %6353 = vmatpush1.msra.mxu0 %v6205
    %6354 = vmatprep.subr.mxu0 %v6208
    %6355 = vmatpush1.msra.mxu0 %v6207
    %6356 = vmatprep.subr.mxu0 %v6210
    %6357 = vmatpush1.msra.mxu0 %v6209
    %6358 = vmatprep.subr.mxu0 %v6212
    %6359 = vmatpush1.msra.mxu0 %v6211
    %6360 = vmatprep.subr.mxu0 %v6214
    %6361 = vmatpush1.msra.mxu0 %v6213
    %6362 = vmatprep.subr.mxu0 %v6216
    %6363 = vmatpush1.msra.mxu0 %v6215
    %6364 = vmatprep.subr.mxu0 %v6218
    %6365 = vmatpush1.msra.mxu0 %v6217
    %6366 = vmatprep.subr.mxu0 %v6220
    %6367 = vmatpush1.msra.mxu0 %v6219
    %6368 = vmatprep.subr.mxu0 %v6222
    %6369 = vmatpush1.msra.mxu0 %v6221
    %6370 = vmatprep.subr.mxu0 %v6224
    %6371 = vmatpush1.msra.mxu0 %v6223
    %6372 = vmatprep.subr.mxu0 %v6226
    %6373 = vmatpush1.msra.mxu0 %v6225
    %6374 = vmatprep.subr.mxu0 %v6228
    %6375 = vmatpush1.msra.mxu0 %v6227
    %6376 = vmatprep.mubr.f32.mxu0 %v6100
    %6377 = vmatmul.mubr.f32.gmra.mrb[0].mxu0 %v6099
    %v6378 = vpop.f32.mrb[0].mxu0
    %v6379 = vadd.f32 %v6308, %v6378
    %v6380 = vpop.f32.mrb[0].mxu0
    %v6381 = vadd.f32 %v6310, %v6380
    %6382 = vdwg.mxu0
    %vm6383 = vcmp.gt.f32.partialorder %v6379, 0.0
    %vm6384 = vcmp.gt.f32.partialorder %v6381, 0.0
    %v6385 = vsel %vm6383, 1.0, 0.0
    %v6386 = vsel %vm6384, 1.0, 0.0
    %6387 = vst [vmem:[#allocation23] sm:$0xff] %v6385
    %6388 = vst [vmem:[#allocation23 + $0x8] sm:$0xff] %v6386
    // Predicated region
    $region106: #{tpu_custom_call.1} parent=1 // pred_check
      _
    $region107: #{tpu_custom_call.1} parent=1 // pred_check_branch
      %6390 = sbr.rel (0) target = $region109
    $region108: #{tpu_custom_call.1} parent=1 // pred_region
      %s6392 = ssub.s32 256, 256
      %6393 = vsyncadd [#allocation4], %s6392
      %s6395 = sshll.u32 [#allocation23], 4
      %s6396 = int_to_ptr.vmem [resolvable:$true] %s6395
      %6398 = dma.vmem_to_hbm [thread:$0]  %s6396, 256, %s13, [#allocation4]
    $region109: #{tpu_custom_call.1} parent=1 // pred_fallthru
      _
    // Predicated region
    $region110: #{tpu_custom_call.1} parent=1 // pred_check
      _
    $region111: #{tpu_custom_call.1} parent=1 // pred_check_branch
      %6400 = sbr.rel (0) target = $region113
    $region112: #{tpu_custom_call.1} parent=1 // pred_region
      %6401 = dma.done [#allocation4], 256
    $region113: #{tpu_custom_call.1} parent=1 // pred_fallthru
      _
    %6402 = vsyncpa [#allocation3], 1
    %6403 = vsyncpa [#allocation6], 1
    %6404 = vsyncpa [#allocation9], 1
    %6405 = vsyncpa [#allocation12], 1
    %6406 = vsyncpa [#allocation15], 1
    %6407 = vsyncpa [#allocation18], 1
    %6408 = vsyncpa [#allocation21], 1
    %6409 = vsyncpa [#allocation4], 1

</llo_original>
